<compile_context>
chip_gen: v7x
topology: tpu7x:2x2x1
jax: 0.10.0
libtpu: 0.0.40
codegen_flags: <defaults>
</compile_context>

<pallas_src>
import jax
import jax.numpy as jnp
from jax.experimental import pallas as pl
from jax.experimental.pallas import tpu as pltpu

EPS = 1e-5


def _conv3x3_bn(pad_ref, w_ref, b_ref, g_ref, be_ref, src, N, H, W, C):
    """3x3 'same' conv (with bias) + training-mode BatchNorm.

    `pad_ref` is an (N, H+2, W+2, C) f32 VMEM scratch whose 1-pixel halo is
    already zero. The interior is (re)written with `src` (an (N, H, W, C) f32
    value), then the conv is computed as 9 shifted MXU matmuls with bf16
    operands and f32 accumulation. Returns the normalized (N*H*W, C) f32 result.
    """
    nhw = N * H * W

    # Interior write; the zero halo persists across both conv stages.
    pad_ref[:, 1:H + 1, 1:W + 1, :] = src

    # 9 shifted (N*H*W, C) x (C, C) matmuls, accumulated in f32.
    # TODO(synk): fold into a single im2col (N*H*W, 9C) @ (9C, C) matmul once the
    # Mosaic version in use guarantees unaligned lane-dim concatenation (with C
    # on the lane axis the 9C-wide concat is not tile-aligned).
    acc = jnp.zeros((nhw, C), jnp.float32)
    for ky in range(3):
        for kx in range(3):
            xs = pad_ref[:, ky:ky + H, kx:kx + W, :].reshape(nhw, C)
            acc = acc + jnp.dot(xs.astype(jnp.bfloat16), w_ref[ky, kx],
                                preferred_element_type=jnp.float32)
    y = acc + b_ref[0, :][None, :]

    # BatchNorm2d (training): single sweep for sum / sum-of-squares, all f32.
    inv_n = 1.0 / float(nhw)
    mean = jnp.sum(y, axis=0, keepdims=True) * inv_n
    ex2 = jnp.sum(y * y, axis=0, keepdims=True) * inv_n
    var = jnp.maximum(ex2 - mean * mean, 0.0)          # biased batch variance
    scale = jax.lax.rsqrt(var + EPS) * g_ref[0, :][None, :]
    return (y - mean) * scale + be_ref[0, :][None, :]


def _residual_block_kernel(x_ref, w1_ref, b1_ref, g1_ref, be1_ref,
                           w2_ref, b2_ref, g2_ref, be2_ref, a_ref,
                           out_ref, pad_ref):
    N, Hp, Wp, C = pad_ref.shape
    H, W = Hp - 2, Wp - 2

    x = x_ref[...]                                       # (N, H, W, C) f32

    # Zero the padded scratch once; both conv stages only rewrite the interior.
    pad_ref[...] = jnp.zeros(pad_ref.shape, jnp.float32)

    # Stage 1: conv1 -> bn1 -> PReLU.
    y = _conv3x3_bn(pad_ref, w1_ref, b1_ref, g1_ref, be1_ref, x, N, H, W, C)
    a = a_ref[0]
    y = jnp.where(y > 0, y, a * y)

    # Stage 2: conv2 -> bn2, reading the PReLU output straight from VMEM.
    r = _conv3x3_bn(pad_ref, w2_ref, b2_ref, g2_ref, be2_ref,
                    y.reshape(N, H, W, C), N, H, W, C)

    # Residual add (identity path stays f32); output aliases x's HBM buffer.
    out_ref[...] = x + r.reshape(N, H, W, C)


def residual_block(x_nchw, params):
    """ResidualBlock forward. Input/output are NCHW like PyTorch."""
    x = jnp.transpose(x_nchw, (0, 2, 3, 1)).astype(jnp.float32)  # NCHW -> NHWC
    N, H, W, C = x.shape

    # MXU operands in bf16 (halves weight bytes); accumulation stays f32.
    w1 = params["w1"].astype(jnp.bfloat16)
    w2 = params["w2"].astype(jnp.bfloat16)

    vmem = pl.BlockSpec(memory_space=pltpu.MemorySpace.VMEM)
    smem = pl.BlockSpec(memory_space=pltpu.MemorySpace.SMEM)

    # VMEM budget: x + out + padded scratch + conv temporaries + weights, with
    # headroom, clamped so the request is valid on v5e/v6e/v7x.
    act_bytes = N * H * W * C * 4
    pad_bytes = N * (H + 2) * (W + 2) * C * 4
    est = 6 * act_bytes + 2 * pad_bytes + 4 * (w1.size + w2.size)
    vmem_limit = int(min(max(est, 32 << 20), 56 << 20))

    out = pl.pallas_call(
        _residual_block_kernel,
        out_shape=jax.ShapeDtypeStruct((N, H, W, C), jnp.float32),
        in_specs=[vmem] * 9 + [smem],
        out_specs=vmem,
        scratch_shapes=[pltpu.VMEM((N, H + 2, W + 2, C), jnp.float32)],
        input_output_aliases={0: 0},                     # out reuses x's buffer
        compiler_params=pltpu.CompilerParams(vmem_limit_bytes=vmem_limit),
    )(x, w1, params["b1"], params["g1"], params["be1"],
      w2, params["b2"], params["g2"], params["be2"], params["a"])

    return jnp.transpose(out, (0, 3, 1, 2))              # NHWC -> NCHW


def init_params(key, channels):
    """Parameter init mirroring the PyTorch module's shapes.

    Conv weights are stored HWIO (3, 3, Cin, Cout). BatchNorm: gamma=1, beta=0
    (PyTorch default). PReLU: a=0.25 (PyTorch default).
    """
    k1, k2, kb1, kb2 = jax.random.split(key, 4)
    C = channels
    bound = 1.0 / ((C * 9) ** 0.5)
    return dict(
        w1=jax.random.uniform(k1, (3, 3, C, C), jnp.float32, -bound, bound),
        b1=jax.random.uniform(kb1, (1, C), jnp.float32, -bound, bound),
        g1=jnp.ones((1, C), jnp.float32),
        be1=jnp.zeros((1, C), jnp.float32),
        a=jnp.full((1,), 0.25, jnp.float32),
        w2=jax.random.uniform(k2, (3, 3, C, C), jnp.float32, -bound, bound),
        b2=jax.random.uniform(kb2, (1, C), jnp.float32, -bound, bound),
        g2=jnp.ones((1, C), jnp.float32),
        be2=jnp.zeros((1, C), jnp.float32),
    )


def _reference(x_nchw, params):
    """Pure-JAX f32 reference (PyTorch training-mode semantics)."""
    x = jnp.transpose(x_nchw, (0, 2, 3, 1)).astype(jnp.float32)

    def conv(z, w, b):
        y = jax.lax.conv_general_dilated(
            z, w, window_strides=(1, 1), padding="SAME",
            dimension_numbers=("NHWC", "HWIO", "NHWC"))
        return y + b[0]

    def bn(y, g, be):
        mean = jnp.mean(y, axis=(0, 1, 2), keepdims=True)
        var = jnp.mean((y - mean) ** 2, axis=(0, 1, 2), keepdims=True)
        return (y - mean) * jax.lax.rsqrt(var + EPS) * g[0] + be[0]

    y = bn(conv(x, params["w1"], params["b1"]), params["g1"], params["be1"])
    y = jnp.where(y > 0, y, params["a"][0] * y)
    r = bn(conv(y, params["w2"], params["b2"]), params["g2"], params["be2"])
    return jnp.transpose(x + r, (0, 3, 1, 2))


if __name__ == "__main__":
    key = jax.random.PRNGKey(0)
    kx, kp = jax.random.split(key)

    N, C, H, W = 2, 4, 16, 16
    x = jax.random.normal(kx, (N, C, H, W), jnp.float32)  # NCHW like PyTorch
    params = init_params(kp, C)

    out = jax.block_until_ready(residual_block(x, params))

    assert out.shape == (N, C, H, W)
    assert out.dtype == jnp.float32
    assert bool(jnp.all(jnp.isfinite(out)))

    # Numerical check vs. pure-JAX f32 reference (tolerance covers bf16 MXU operands).
    ref = jax.block_until_ready(_reference(x, params))
    max_err = float(jnp.max(jnp.abs(out - ref)))
    assert max_err < 1e-1, f"max abs error too large: {max_err}"

    # TODO(synk): BatchNorm running_mean/running_var buffer updates (training-mode
    # side effect in PyTorch) are not materialized; only the forward output is.
    print("KERNEL_OK")
</pallas_src>

<mosaic_0001>
module attributes {stable_mosaic.version = 11 : i64} {
  func.func @_residual_block_kernel(%arg0: memref<2x16x16x4xf32, #tpu.memory_space<vmem>>, %arg1: memref<3x3x4x4xbf16, #tpu.memory_space<vmem>>, %arg2: memref<1x4xf32, #tpu.memory_space<vmem>>, %arg3: memref<1x4xf32, #tpu.memory_space<vmem>>, %arg4: memref<1x4xf32, #tpu.memory_space<vmem>>, %arg5: memref<3x3x4x4xbf16, #tpu.memory_space<vmem>>, %arg6: memref<1x4xf32, #tpu.memory_space<vmem>>, %arg7: memref<1x4xf32, #tpu.memory_space<vmem>>, %arg8: memref<1x4xf32, #tpu.memory_space<vmem>>, %arg9: memref<1xf32, #tpu.memory_space<smem>>, %arg10: memref<2x16x16x4xf32, #tpu.memory_space<vmem>>, %arg11: memref<2x18x18x4xf32, #tpu.memory_space<vmem>>) attributes {dimension_semantics = [], scalar_prefetch = 0 : i64, scratch_operands = 1 : i64, tpu.core_type = #tpu.core_type<tc>} {
    %c0 = arith.constant 0 : index
    %c0_0 = arith.constant 0 : index
    %c0_1 = arith.constant 0 : index
    %c0_2 = arith.constant 0 : index
    %0 = vector.load %arg0[%c0, %c0_0, %c0_1, %c0_2] : memref<2x16x16x4xf32, #tpu.memory_space<vmem>>, vector<2x16x16x4xf32>
    %cst = arith.constant 0.000000e+00 : f32
    %1 = vector.broadcast %cst : f32 to vector<2x18x18x4xf32>
    %c0_3 = arith.constant 0 : index
    %c0_4 = arith.constant 0 : index
    %c0_5 = arith.constant 0 : index
    %c0_6 = arith.constant 0 : index
    %2 = vector.load %arg11[%c0_3, %c0_4, %c0_5, %c0_6] : memref<2x18x18x4xf32, #tpu.memory_space<vmem>>, vector<2x18x18x4xf32>
    tpu.vector_store %arg11[%c0_3, %c0_4, %c0_5, %c0_6], %1 {strides = array<i32>} : memref<2x18x18x4xf32, #tpu.memory_space<vmem>>, vector<2x18x18x4xf32>,
    %c0_7 = arith.constant 0 : index
    %c1 = arith.constant 1 : index
    %c1_8 = arith.constant 1 : index
    %c0_9 = arith.constant 0 : index
    %3 = vector.load %arg11[%c0_7, %c1, %c1_8, %c0_9] : memref<2x18x18x4xf32, #tpu.memory_space<vmem>>, vector<2x16x16x4xf32>
    tpu.vector_store %arg11[%c0_7, %c1, %c1_8, %c0_9], %0 {strides = array<i32>} : memref<2x18x18x4xf32, #tpu.memory_space<vmem>>, vector<2x16x16x4xf32>,
    %cst_10 = arith.constant 0.000000e+00 : f32
    %4 = vector.broadcast %cst_10 : f32 to vector<512x4xf32>
    %c0_11 = arith.constant 0 : index
    %c0_12 = arith.constant 0 : index
    %c0_13 = arith.constant 0 : index
    %c0_14 = arith.constant 0 : index
    %5 = vector.load %arg11[%c0_11, %c0_12, %c0_13, %c0_14] : memref<2x18x18x4xf32, #tpu.memory_space<vmem>>, vector<2x16x16x4xf32>
    %6 = vector.shape_cast %5 : vector<2x16x16x4xf32> to vector<512x4xf32>
    %7 = arith.truncf %6 : vector<512x4xf32> to vector<512x4xbf16>
    %c0_15 = arith.constant 0 : index
    %c0_16 = arith.constant 0 : index
    %c0_17 = arith.constant 0 : index
    %c0_18 = arith.constant 0 : index
    %8 = vector.load %arg1[%c0_15, %c0_16, %c0_17, %c0_18] : memref<3x3x4x4xbf16, #tpu.memory_space<vmem>>, vector<1x1x4x4xbf16>
    %9 = vector.shape_cast %8 : vector<1x1x4x4xbf16> to vector<4x4xbf16>
    %cst_19 = arith.constant dense<0.000000e+00> : vector<512x4xf32>
    %10 = tpu.matmul %7, %9, %cst_19 {dimension_numbers = #tpu.dot_dimension_numbers<[1], [0], [0], [1], [0, 0, 1, 1], [], []>} : vector<512x4xbf16>, vector<4x4xbf16>, vector<512x4xf32> -> vector<512x4xf32>
    %11 = arith.addf %4, %10 : vector<512x4xf32>
    %c0_20 = arith.constant 0 : index
    %c0_21 = arith.constant 0 : index
    %c1_22 = arith.constant 1 : index
    %c0_23 = arith.constant 0 : index
    %12 = vector.load %arg11[%c0_20, %c0_21, %c1_22, %c0_23] : memref<2x18x18x4xf32, #tpu.memory_space<vmem>>, vector<2x16x16x4xf32>
    %13 = vector.shape_cast %12 : vector<2x16x16x4xf32> to vector<512x4xf32>
    %14 = arith.truncf %13 : vector<512x4xf32> to vector<512x4xbf16>
    %c0_24 = arith.constant 0 : index
    %c1_25 = arith.constant 1 : index
    %c0_26 = arith.constant 0 : index
    %c0_27 = arith.constant 0 : index
    %15 = vector.load %arg1[%c0_24, %c1_25, %c0_26, %c0_27] : memref<3x3x4x4xbf16, #tpu.memory_space<vmem>>, vector<1x1x4x4xbf16>
    %16 = vector.shape_cast %15 : vector<1x1x4x4xbf16> to vector<4x4xbf16>
    %cst_28 = arith.constant dense<0.000000e+00> : vector<512x4xf32>
    %17 = tpu.matmul %14, %16, %cst_28 {dimension_numbers = #tpu.dot_dimension_numbers<[1], [0], [0], [1], [0, 0, 1, 1], [], []>} : vector<512x4xbf16>, vector<4x4xbf16>, vector<512x4xf32> -> vector<512x4xf32>
    %18 = arith.addf %11, %17 : vector<512x4xf32>
    %c0_29 = arith.constant 0 : index
    %c0_30 = arith.constant 0 : index
    %c2 = arith.constant 2 : index
    %c0_31 = arith.constant 0 : index
    %19 = vector.load %arg11[%c0_29, %c0_30, %c2, %c0_31] : memref<2x18x18x4xf32, #tpu.memory_space<vmem>>, vector<2x16x16x4xf32>
    %20 = vector.shape_cast %19 : vector<2x16x16x4xf32> to vector<512x4xf32>
    %21 = arith.truncf %20 : vector<512x4xf32> to vector<512x4xbf16>
    %c0_32 = arith.constant 0 : index
    %c2_33 = arith.constant 2 : index
    %c0_34 = arith.constant 0 : index
    %c0_35 = arith.constant 0 : index
    %22 = vector.load %arg1[%c0_32, %c2_33, %c0_34, %c0_35] : memref<3x3x4x4xbf16, #tpu.memory_space<vmem>>, vector<1x1x4x4xbf16>
    %23 = vector.shape_cast %22 : vector<1x1x4x4xbf16> to vector<4x4xbf16>
    %cst_36 = arith.constant dense<0.000000e+00> : vector<512x4xf32>
    %24 = tpu.matmul %21, %23, %cst_36 {dimension_numbers = #tpu.dot_dimension_numbers<[1], [0], [0], [1], [0, 0, 1, 1], [], []>} : vector<512x4xbf16>, vector<4x4xbf16>, vector<512x4xf32> -> vector<512x4xf32>
    %25 = arith.addf %18, %24 : vector<512x4xf32>
    %c0_37 = arith.constant 0 : index
    %c1_38 = arith.constant 1 : index
    %c0_39 = arith.constant 0 : index
    %c0_40 = arith.constant 0 : index
    %26 = vector.load %arg11[%c0_37, %c1_38, %c0_39, %c0_40] : memref<2x18x18x4xf32, #tpu.memory_space<vmem>>, vector<2x16x16x4xf32>
    %27 = vector.shape_cast %26 : vector<2x16x16x4xf32> to vector<512x4xf32>
    %28 = arith.truncf %27 : vector<512x4xf32> to vector<512x4xbf16>
    %c1_41 = arith.constant 1 : index
    %c0_42 = arith.constant 0 : index
    %c0_43 = arith.constant 0 : index
    %c0_44 = arith.constant 0 : index
    %29 = vector.load %arg1[%c1_41, %c0_42, %c0_43, %c0_44] : memref<3x3x4x4xbf16, #tpu.memory_space<vmem>>, vector<1x1x4x4xbf16>
    %30 = vector.shape_cast %29 : vector<1x1x4x4xbf16> to vector<4x4xbf16>
    %cst_45 = arith.constant dense<0.000000e+00> : vector<512x4xf32>
    %31 = tpu.matmul %28, %30, %cst_45 {dimension_numbers = #tpu.dot_dimension_numbers<[1], [0], [0], [1], [0, 0, 1, 1], [], []>} : vector<512x4xbf16>, vector<4x4xbf16>, vector<512x4xf32> -> vector<512x4xf32>
    %32 = arith.addf %25, %31 : vector<512x4xf32>
    %c0_46 = arith.constant 0 : index
    %c1_47 = arith.constant 1 : index
    %c1_48 = arith.constant 1 : index
    %c0_49 = arith.constant 0 : index
    %33 = vector.load %arg11[%c0_46, %c1_47, %c1_48, %c0_49] : memref<2x18x18x4xf32, #tpu.memory_space<vmem>>, vector<2x16x16x4xf32>
    %34 = vector.shape_cast %33 : vector<2x16x16x4xf32> to vector<512x4xf32>
    %35 = arith.truncf %34 : vector<512x4xf32> to vector<512x4xbf16>
    %c1_50 = arith.constant 1 : index
    %c1_51 = arith.constant 1 : index
    %c0_52 = arith.constant 0 : index
    %c0_53 = arith.constant 0 : index
    %36 = vector.load %arg1[%c1_50, %c1_51, %c0_52, %c0_53] : memref<3x3x4x4xbf16, #tpu.memory_space<vmem>>, vector<1x1x4x4xbf16>
    %37 = vector.shape_cast %36 : vector<1x1x4x4xbf16> to vector<4x4xbf16>
    %cst_54 = arith.constant dense<0.000000e+00> : vector<512x4xf32>
    %38 = tpu.matmul %35, %37, %cst_54 {dimension_numbers = #tpu.dot_dimension_numbers<[1], [0], [0], [1], [0, 0, 1, 1], [], []>} : vector<512x4xbf16>, vector<4x4xbf16>, vector<512x4xf32> -> vector<512x4xf32>
    %39 = arith.addf %32, %38 : vector<512x4xf32>
    %c0_55 = arith.constant 0 : index
    %c1_56 = arith.constant 1 : index
    %c2_57 = arith.constant 2 : index
    %c0_58 = arith.constant 0 : index
    %40 = vector.load %arg11[%c0_55, %c1_56, %c2_57, %c0_58] : memref<2x18x18x4xf32, #tpu.memory_space<vmem>>, vector<2x16x16x4xf32>
    %41 = vector.shape_cast %40 : vector<2x16x16x4xf32> to vector<512x4xf32>
    %42 = arith.truncf %41 : vector<512x4xf32> to vector<512x4xbf16>
    %c1_59 = arith.constant 1 : index
    %c2_60 = arith.constant 2 : index
    %c0_61 = arith.constant 0 : index
    %c0_62 = arith.constant 0 : index
    %43 = vector.load %arg1[%c1_59, %c2_60, %c0_61, %c0_62] : memref<3x3x4x4xbf16, #tpu.memory_space<vmem>>, vector<1x1x4x4xbf16>
    %44 = vector.shape_cast %43 : vector<1x1x4x4xbf16> to vector<4x4xbf16>
    %cst_63 = arith.constant dense<0.000000e+00> : vector<512x4xf32>
    %45 = tpu.matmul %42, %44, %cst_63 {dimension_numbers = #tpu.dot_dimension_numbers<[1], [0], [0], [1], [0, 0, 1, 1], [], []>} : vector<512x4xbf16>, vector<4x4xbf16>, vector<512x4xf32> -> vector<512x4xf32>
    %46 = arith.addf %39, %45 : vector<512x4xf32>
    %c0_64 = arith.constant 0 : index
    %c2_65 = arith.constant 2 : index
    %c0_66 = arith.constant 0 : index
    %c0_67 = arith.constant 0 : index
    %47 = vector.load %arg11[%c0_64, %c2_65, %c0_66, %c0_67] : memref<2x18x18x4xf32, #tpu.memory_space<vmem>>, vector<2x16x16x4xf32>
    %48 = vector.shape_cast %47 : vector<2x16x16x4xf32> to vector<512x4xf32>
    %49 = arith.truncf %48 : vector<512x4xf32> to vector<512x4xbf16>
    %c2_68 = arith.constant 2 : index
    %c0_69 = arith.constant 0 : index
    %c0_70 = arith.constant 0 : index
    %c0_71 = arith.constant 0 : index
    %50 = vector.load %arg1[%c2_68, %c0_69, %c0_70, %c0_71] : memref<3x3x4x4xbf16, #tpu.memory_space<vmem>>, vector<1x1x4x4xbf16>
    %51 = vector.shape_cast %50 : vector<1x1x4x4xbf16> to vector<4x4xbf16>
    %cst_72 = arith.constant dense<0.000000e+00> : vector<512x4xf32>
    %52 = tpu.matmul %49, %51, %cst_72 {dimension_numbers = #tpu.dot_dimension_numbers<[1], [0], [0], [1], [0, 0, 1, 1], [], []>} : vector<512x4xbf16>, vector<4x4xbf16>, vector<512x4xf32> -> vector<512x4xf32>
    %53 = arith.addf %46, %52 : vector<512x4xf32>
    %c0_73 = arith.constant 0 : index
    %c2_74 = arith.constant 2 : index
    %c1_75 = arith.constant 1 : index
    %c0_76 = arith.constant 0 : index
    %54 = vector.load %arg11[%c0_73, %c2_74, %c1_75, %c0_76] : memref<2x18x18x4xf32, #tpu.memory_space<vmem>>, vector<2x16x16x4xf32>
    %55 = vector.shape_cast %54 : vector<2x16x16x4xf32> to vector<512x4xf32>
    %56 = arith.truncf %55 : vector<512x4xf32> to vector<512x4xbf16>
    %c2_77 = arith.constant 2 : index
    %c1_78 = arith.constant 1 : index
    %c0_79 = arith.constant 0 : index
    %c0_80 = arith.constant 0 : index
    %57 = vector.load %arg1[%c2_77, %c1_78, %c0_79, %c0_80] : memref<3x3x4x4xbf16, #tpu.memory_space<vmem>>, vector<1x1x4x4xbf16>
    %58 = vector.shape_cast %57 : vector<1x1x4x4xbf16> to vector<4x4xbf16>
    %cst_81 = arith.constant dense<0.000000e+00> : vector<512x4xf32>
    %59 = tpu.matmul %56, %58, %cst_81 {dimension_numbers = #tpu.dot_dimension_numbers<[1], [0], [0], [1], [0, 0, 1, 1], [], []>} : vector<512x4xbf16>, vector<4x4xbf16>, vector<512x4xf32> -> vector<512x4xf32>
    %60 = arith.addf %53, %59 : vector<512x4xf32>
    %c0_82 = arith.constant 0 : index
    %c2_83 = arith.constant 2 : index
    %c2_84 = arith.constant 2 : index
    %c0_85 = arith.constant 0 : index
    %61 = vector.load %arg11[%c0_82, %c2_83, %c2_84, %c0_85] : memref<2x18x18x4xf32, #tpu.memory_space<vmem>>, vector<2x16x16x4xf32>
    %62 = vector.shape_cast %61 : vector<2x16x16x4xf32> to vector<512x4xf32>
    %63 = arith.truncf %62 : vector<512x4xf32> to vector<512x4xbf16>
    %c2_86 = arith.constant 2 : index
    %c2_87 = arith.constant 2 : index
    %c0_88 = arith.constant 0 : index
    %c0_89 = arith.constant 0 : index
    %64 = vector.load %arg1[%c2_86, %c2_87, %c0_88, %c0_89] : memref<3x3x4x4xbf16, #tpu.memory_space<vmem>>, vector<1x1x4x4xbf16>
    %65 = vector.shape_cast %64 : vector<1x1x4x4xbf16> to vector<4x4xbf16>
    %cst_90 = arith.constant dense<0.000000e+00> : vector<512x4xf32>
    %66 = tpu.matmul %63, %65, %cst_90 {dimension_numbers = #tpu.dot_dimension_numbers<[1], [0], [0], [1], [0, 0, 1, 1], [], []>} : vector<512x4xbf16>, vector<4x4xbf16>, vector<512x4xf32> -> vector<512x4xf32>
    %67 = arith.addf %60, %66 : vector<512x4xf32>
    %c0_91 = arith.constant 0 : index
    %c0_92 = arith.constant 0 : index
    %68 = vector.load %arg2[%c0_91, %c0_92] : memref<1x4xf32, #tpu.memory_space<vmem>>, vector<1x4xf32>
    %69 = vector.shape_cast %68 : vector<1x4xf32> to vector<4xf32>
    %70 = vector.shape_cast %69 : vector<4xf32> to vector<1x4xf32>
    %71 = vector.broadcast %70 : vector<1x4xf32> to vector<512x4xf32>
    %72 = arith.addf %67, %71 : vector<512x4xf32>
    %cst_93 = arith.constant dense<0.000000e+00> : vector<4xf32>
    %73 = vector.multi_reduction <add>, %72, %cst_93 [0] : vector<512x4xf32> to vector<4xf32>
    %74 = vector.shape_cast %73 : vector<4xf32> to vector<1x4xf32>
    %cst_94 = arith.constant 0.001953125 : f32
    %75 = vector.broadcast %cst_94 : f32 to vector<1x4xf32>
    %76 = arith.mulf %74, %75 : vector<1x4xf32>
    %77 = arith.mulf %72, %72 : vector<512x4xf32>
    %cst_95 = arith.constant dense<0.000000e+00> : vector<4xf32>
    %78 = vector.multi_reduction <add>, %77, %cst_95 [0] : vector<512x4xf32> to vector<4xf32>
    %79 = vector.shape_cast %78 : vector<4xf32> to vector<1x4xf32>
    %cst_96 = arith.constant 0.001953125 : f32
    %80 = vector.broadcast %cst_96 : f32 to vector<1x4xf32>
    %81 = arith.mulf %79, %80 : vector<1x4xf32>
    %82 = arith.mulf %76, %76 : vector<1x4xf32>
    %83 = arith.subf %81, %82 : vector<1x4xf32>
    %cst_97 = arith.constant 0.000000e+00 : f32
    %84 = vector.broadcast %cst_97 : f32 to vector<1x4xf32>
    %85 = arith.maximumf %83, %84 : vector<1x4xf32>
    %cst_98 = arith.constant 9.99999974E-6 : f32
    %86 = vector.broadcast %cst_98 : f32 to vector<1x4xf32>
    %87 = arith.addf %85, %86 : vector<1x4xf32>
    %88 = math.rsqrt %87 : vector<1x4xf32>
    %c0_99 = arith.constant 0 : index
    %c0_100 = arith.constant 0 : index
    %89 = vector.load %arg3[%c0_99, %c0_100] : memref<1x4xf32, #tpu.memory_space<vmem>>, vector<1x4xf32>
    %90 = vector.shape_cast %89 : vector<1x4xf32> to vector<4xf32>
    %91 = vector.shape_cast %90 : vector<4xf32> to vector<1x4xf32>
    %92 = arith.mulf %88, %91 : vector<1x4xf32>
    %93 = vector.broadcast %76 : vector<1x4xf32> to vector<512x4xf32>
    %94 = arith.subf %72, %93 : vector<512x4xf32>
    %95 = vector.broadcast %92 : vector<1x4xf32> to vector<512x4xf32>
    %96 = arith.mulf %94, %95 : vector<512x4xf32>
    %c0_101 = arith.constant 0 : index
    %c0_102 = arith.constant 0 : index
    %97 = vector.load %arg4[%c0_101, %c0_102] : memref<1x4xf32, #tpu.memory_space<vmem>>, vector<1x4xf32>
    %98 = vector.shape_cast %97 : vector<1x4xf32> to vector<4xf32>
    %99 = vector.shape_cast %98 : vector<4xf32> to vector<1x4xf32>
    %100 = vector.broadcast %99 : vector<1x4xf32> to vector<512x4xf32>
    %101 = arith.addf %96, %100 : vector<512x4xf32>
    %c0_103 = arith.constant 0 : index
    %102 = memref.load %arg9[%c0_103] : memref<1xf32, #tpu.memory_space<smem>>
    %cst_104 = arith.constant 0.000000e+00 : f32
    %103 = vector.broadcast %cst_104 : f32 to vector<512x4xf32>
    %104 = arith.cmpf ogt, %101, %103 : vector<512x4xf32>
    %105 = vector.broadcast %102 : f32 to vector<512x4xf32>
    %106 = arith.mulf %105, %101 : vector<512x4xf32>
    %107 = arith.select %104, %101, %106 : vector<512x4xi1>, vector<512x4xf32>
    %108 = vector.shape_cast %107 : vector<512x4xf32> to vector<2x16x16x4xf32>
    %c0_105 = arith.constant 0 : index
    %c1_106 = arith.constant 1 : index
    %c1_107 = arith.constant 1 : index
    %c0_108 = arith.constant 0 : index
    %109 = vector.load %arg11[%c0_105, %c1_106, %c1_107, %c0_108] : memref<2x18x18x4xf32, #tpu.memory_space<vmem>>, vector<2x16x16x4xf32>
    tpu.vector_store %arg11[%c0_105, %c1_106, %c1_107, %c0_108], %108 {strides = array<i32>} : memref<2x18x18x4xf32, #tpu.memory_space<vmem>>, vector<2x16x16x4xf32>,
    %cst_109 = arith.constant 0.000000e+00 : f32
    %110 = vector.broadcast %cst_109 : f32 to vector<512x4xf32>
    %c0_110 = arith.constant 0 : index
    %c0_111 = arith.constant 0 : index
    %c0_112 = arith.constant 0 : index
    %c0_113 = arith.constant 0 : index
    %111 = vector.load %arg11[%c0_110, %c0_111, %c0_112, %c0_113] : memref<2x18x18x4xf32, #tpu.memory_space<vmem>>, vector<2x16x16x4xf32>
    %112 = vector.shape_cast %111 : vector<2x16x16x4xf32> to vector<512x4xf32>
    %113 = arith.truncf %112 : vector<512x4xf32> to vector<512x4xbf16>
    %c0_114 = arith.constant 0 : index
    %c0_115 = arith.constant 0 : index
    %c0_116 = arith.constant 0 : index
    %c0_117 = arith.constant 0 : index
    %114 = vector.load %arg5[%c0_114, %c0_115, %c0_116, %c0_117] : memref<3x3x4x4xbf16, #tpu.memory_space<vmem>>, vector<1x1x4x4xbf16>
    %115 = vector.shape_cast %114 : vector<1x1x4x4xbf16> to vector<4x4xbf16>
    %cst_118 = arith.constant dense<0.000000e+00> : vector<512x4xf32>
    %116 = tpu.matmul %113, %115, %cst_118 {dimension_numbers = #tpu.dot_dimension_numbers<[1], [0], [0], [1], [0, 0, 1, 1], [], []>} : vector<512x4xbf16>, vector<4x4xbf16>, vector<512x4xf32> -> vector<512x4xf32>
    %117 = arith.addf %110, %116 : vector<512x4xf32>
    %c0_119 = arith.constant 0 : index
    %c0_120 = arith.constant 0 : index
    %c1_121 = arith.constant 1 : index
    %c0_122 = arith.constant 0 : index
    %118 = vector.load %arg11[%c0_119, %c0_120, %c1_121, %c0_122] : memref<2x18x18x4xf32, #tpu.memory_space<vmem>>, vector<2x16x16x4xf32>
    %119 = vector.shape_cast %118 : vector<2x16x16x4xf32> to vector<512x4xf32>
    %120 = arith.truncf %119 : vector<512x4xf32> to vector<512x4xbf16>
    %c0_123 = arith.constant 0 : index
    %c1_124 = arith.constant 1 : index
    %c0_125 = arith.constant 0 : index
    %c0_126 = arith.constant 0 : index
    %121 = vector.load %arg5[%c0_123, %c1_124, %c0_125, %c0_126] : memref<3x3x4x4xbf16, #tpu.memory_space<vmem>>, vector<1x1x4x4xbf16>
    %122 = vector.shape_cast %121 : vector<1x1x4x4xbf16> to vector<4x4xbf16>
    %cst_127 = arith.constant dense<0.000000e+00> : vector<512x4xf32>
    %123 = tpu.matmul %120, %122, %cst_127 {dimension_numbers = #tpu.dot_dimension_numbers<[1], [0], [0], [1], [0, 0, 1, 1], [], []>} : vector<512x4xbf16>, vector<4x4xbf16>, vector<512x4xf32> -> vector<512x4xf32>
    %124 = arith.addf %117, %123 : vector<512x4xf32>
    %c0_128 = arith.constant 0 : index
    %c0_129 = arith.constant 0 : index
    %c2_130 = arith.constant 2 : index
    %c0_131 = arith.constant 0 : index
    %125 = vector.load %arg11[%c0_128, %c0_129, %c2_130, %c0_131] : memref<2x18x18x4xf32, #tpu.memory_space<vmem>>, vector<2x16x16x4xf32>
    %126 = vector.shape_cast %125 : vector<2x16x16x4xf32> to vector<512x4xf32>
    %127 = arith.truncf %126 : vector<512x4xf32> to vector<512x4xbf16>
    %c0_132 = arith.constant 0 : index
    %c2_133 = arith.constant 2 : index
    %c0_134 = arith.constant 0 : index
    %c0_135 = arith.constant 0 : index
    %128 = vector.load %arg5[%c0_132, %c2_133, %c0_134, %c0_135] : memref<3x3x4x4xbf16, #tpu.memory_space<vmem>>, vector<1x1x4x4xbf16>
    %129 = vector.shape_cast %128 : vector<1x1x4x4xbf16> to vector<4x4xbf16>
    %cst_136 = arith.constant dense<0.000000e+00> : vector<512x4xf32>
    %130 = tpu.matmul %127, %129, %cst_136 {dimension_numbers = #tpu.dot_dimension_numbers<[1], [0], [0], [1], [0, 0, 1, 1], [], []>} : vector<512x4xbf16>, vector<4x4xbf16>, vector<512x4xf32> -> vector<512x4xf32>
    %131 = arith.addf %124, %130 : vector<512x4xf32>
    %c0_137 = arith.constant 0 : index
    %c1_138 = arith.constant 1 : index
    %c0_139 = arith.constant 0 : index
    %c0_140 = arith.constant 0 : index
    %132 = vector.load %arg11[%c0_137, %c1_138, %c0_139, %c0_140] : memref<2x18x18x4xf32, #tpu.memory_space<vmem>>, vector<2x16x16x4xf32>
    %133 = vector.shape_cast %132 : vector<2x16x16x4xf32> to vector<512x4xf32>
    %134 = arith.truncf %133 : vector<512x4xf32> to vector<512x4xbf16>
    %c1_141 = arith.constant 1 : index
    %c0_142 = arith.constant 0 : index
    %c0_143 = arith.constant 0 : index
    %c0_144 = arith.constant 0 : index
    %135 = vector.load %arg5[%c1_141, %c0_142, %c0_143, %c0_144] : memref<3x3x4x4xbf16, #tpu.memory_space<vmem>>, vector<1x1x4x4xbf16>
    %136 = vector.shape_cast %135 : vector<1x1x4x4xbf16> to vector<4x4xbf16>
    %cst_145 = arith.constant dense<0.000000e+00> : vector<512x4xf32>
    %137 = tpu.matmul %134, %136, %cst_145 {dimension_numbers = #tpu.dot_dimension_numbers<[1], [0], [0], [1], [0, 0, 1, 1], [], []>} : vector<512x4xbf16>, vector<4x4xbf16>, vector<512x4xf32> -> vector<512x4xf32>
    %138 = arith.addf %131, %137 : vector<512x4xf32>
    %c0_146 = arith.constant 0 : index
    %c1_147 = arith.constant 1 : index
    %c1_148 = arith.constant 1 : index
    %c0_149 = arith.constant 0 : index
    %139 = vector.load %arg11[%c0_146, %c1_147, %c1_148, %c0_149] : memref<2x18x18x4xf32, #tpu.memory_space<vmem>>, vector<2x16x16x4xf32>
    %140 = vector.shape_cast %139 : vector<2x16x16x4xf32> to vector<512x4xf32>
    %141 = arith.truncf %140 : vector<512x4xf32> to vector<512x4xbf16>
    %c1_150 = arith.constant 1 : index
    %c1_151 = arith.constant 1 : index
    %c0_152 = arith.constant 0 : index
    %c0_153 = arith.constant 0 : index
    %142 = vector.load %arg5[%c1_150, %c1_151, %c0_152, %c0_153] : memref<3x3x4x4xbf16, #tpu.memory_space<vmem>>, vector<1x1x4x4xbf16>
    %143 = vector.shape_cast %142 : vector<1x1x4x4xbf16> to vector<4x4xbf16>
    %cst_154 = arith.constant dense<0.000000e+00> : vector<512x4xf32>
    %144 = tpu.matmul %141, %143, %cst_154 {dimension_numbers = #tpu.dot_dimension_numbers<[1], [0], [0], [1], [0, 0, 1, 1], [], []>} : vector<512x4xbf16>, vector<4x4xbf16>, vector<512x4xf32> -> vector<512x4xf32>
    %145 = arith.addf %138, %144 : vector<512x4xf32>
    %c0_155 = arith.constant 0 : index
    %c1_156 = arith.constant 1 : index
    %c2_157 = arith.constant 2 : index
    %c0_158 = arith.constant 0 : index
    %146 = vector.load %arg11[%c0_155, %c1_156, %c2_157, %c0_158] : memref<2x18x18x4xf32, #tpu.memory_space<vmem>>, vector<2x16x16x4xf32>
    %147 = vector.shape_cast %146 : vector<2x16x16x4xf32> to vector<512x4xf32>
    %148 = arith.truncf %147 : vector<512x4xf32> to vector<512x4xbf16>
    %c1_159 = arith.constant 1 : index
    %c2_160 = arith.constant 2 : index
    %c0_161 = arith.constant 0 : index
    %c0_162 = arith.constant 0 : index
    %149 = vector.load %arg5[%c1_159, %c2_160, %c0_161, %c0_162] : memref<3x3x4x4xbf16, #tpu.memory_space<vmem>>, vector<1x1x4x4xbf16>
    %150 = vector.shape_cast %149 : vector<1x1x4x4xbf16> to vector<4x4xbf16>
    %cst_163 = arith.constant dense<0.000000e+00> : vector<512x4xf32>
    %151 = tpu.matmul %148, %150, %cst_163 {dimension_numbers = #tpu.dot_dimension_numbers<[1], [0], [0], [1], [0, 0, 1, 1], [], []>} : vector<512x4xbf16>, vector<4x4xbf16>, vector<512x4xf32> -> vector<512x4xf32>
    %152 = arith.addf %145, %151 : vector<512x4xf32>
    %c0_164 = arith.constant 0 : index
    %c2_165 = arith.constant 2 : index
    %c0_166 = arith.constant 0 : index
    %c0_167 = arith.constant 0 : index
    %153 = vector.load %arg11[%c0_164, %c2_165, %c0_166, %c0_167] : memref<2x18x18x4xf32, #tpu.memory_space<vmem>>, vector<2x16x16x4xf32>
    %154 = vector.shape_cast %153 : vector<2x16x16x4xf32> to vector<512x4xf32>
    %155 = arith.truncf %154 : vector<512x4xf32> to vector<512x4xbf16>
    %c2_168 = arith.constant 2 : index
    %c0_169 = arith.constant 0 : index
    %c0_170 = arith.constant 0 : index
    %c0_171 = arith.constant 0 : index
    %156 = vector.load %arg5[%c2_168, %c0_169, %c0_170, %c0_171] : memref<3x3x4x4xbf16, #tpu.memory_space<vmem>>, vector<1x1x4x4xbf16>
    %157 = vector.shape_cast %156 : vector<1x1x4x4xbf16> to vector<4x4xbf16>
    %cst_172 = arith.constant dense<0.000000e+00> : vector<512x4xf32>
    %158 = tpu.matmul %155, %157, %cst_172 {dimension_numbers = #tpu.dot_dimension_numbers<[1], [0], [0], [1], [0, 0, 1, 1], [], []>} : vector<512x4xbf16>, vector<4x4xbf16>, vector<512x4xf32> -> vector<512x4xf32>
    %159 = arith.addf %152, %158 : vector<512x4xf32>
    %c0_173 = arith.constant 0 : index
    %c2_174 = arith.constant 2 : index
    %c1_175 = arith.constant 1 : index
    %c0_176 = arith.constant 0 : index
    %160 = vector.load %arg11[%c0_173, %c2_174, %c1_175, %c0_176] : memref<2x18x18x4xf32, #tpu.memory_space<vmem>>, vector<2x16x16x4xf32>
    %161 = vector.shape_cast %160 : vector<2x16x16x4xf32> to vector<512x4xf32>
    %162 = arith.truncf %161 : vector<512x4xf32> to vector<512x4xbf16>
    %c2_177 = arith.constant 2 : index
    %c1_178 = arith.constant 1 : index
    %c0_179 = arith.constant 0 : index
    %c0_180 = arith.constant 0 : index
    %163 = vector.load %arg5[%c2_177, %c1_178, %c0_179, %c0_180] : memref<3x3x4x4xbf16, #tpu.memory_space<vmem>>, vector<1x1x4x4xbf16>
    %164 = vector.shape_cast %163 : vector<1x1x4x4xbf16> to vector<4x4xbf16>
    %cst_181 = arith.constant dense<0.000000e+00> : vector<512x4xf32>
    %165 = tpu.matmul %162, %164, %cst_181 {dimension_numbers = #tpu.dot_dimension_numbers<[1], [0], [0], [1], [0, 0, 1, 1], [], []>} : vector<512x4xbf16>, vector<4x4xbf16>, vector<512x4xf32> -> vector<512x4xf32>
    %166 = arith.addf %159, %165 : vector<512x4xf32>
    %c0_182 = arith.constant 0 : index
    %c2_183 = arith.constant 2 : index
    %c2_184 = arith.constant 2 : index
    %c0_185 = arith.constant 0 : index
    %167 = vector.load %arg11[%c0_182, %c2_183, %c2_184, %c0_185] : memref<2x18x18x4xf32, #tpu.memory_space<vmem>>, vector<2x16x16x4xf32>
    %168 = vector.shape_cast %167 : vector<2x16x16x4xf32> to vector<512x4xf32>
    %169 = arith.truncf %168 : vector<512x4xf32> to vector<512x4xbf16>
    %c2_186 = arith.constant 2 : index
    %c2_187 = arith.constant 2 : index
    %c0_188 = arith.constant 0 : index
    %c0_189 = arith.constant 0 : index
    %170 = vector.load %arg5[%c2_186, %c2_187, %c0_188, %c0_189] : memref<3x3x4x4xbf16, #tpu.memory_space<vmem>>, vector<1x1x4x4xbf16>
    %171 = vector.shape_cast %170 : vector<1x1x4x4xbf16> to vector<4x4xbf16>
    %cst_190 = arith.constant dense<0.000000e+00> : vector<512x4xf32>
    %172 = tpu.matmul %169, %171, %cst_190 {dimension_numbers = #tpu.dot_dimension_numbers<[1], [0], [0], [1], [0, 0, 1, 1], [], []>} : vector<512x4xbf16>, vector<4x4xbf16>, vector<512x4xf32> -> vector<512x4xf32>
    %173 = arith.addf %166, %172 : vector<512x4xf32>
    %c0_191 = arith.constant 0 : index
    %c0_192 = arith.constant 0 : index
    %174 = vector.load %arg6[%c0_191, %c0_192] : memref<1x4xf32, #tpu.memory_space<vmem>>, vector<1x4xf32>
    %175 = vector.shape_cast %174 : vector<1x4xf32> to vector<4xf32>
    %176 = vector.shape_cast %175 : vector<4xf32> to vector<1x4xf32>
    %177 = vector.broadcast %176 : vector<1x4xf32> to vector<512x4xf32>
    %178 = arith.addf %173, %177 : vector<512x4xf32>
    %cst_193 = arith.constant dense<0.000000e+00> : vector<4xf32>
    %179 = vector.multi_reduction <add>, %178, %cst_193 [0] : vector<512x4xf32> to vector<4xf32>
    %180 = vector.shape_cast %179 : vector<4xf32> to vector<1x4xf32>
    %cst_194 = arith.constant 0.001953125 : f32
    %181 = vector.broadcast %cst_194 : f32 to vector<1x4xf32>
    %182 = arith.mulf %180, %181 : vector<1x4xf32>
    %183 = arith.mulf %178, %178 : vector<512x4xf32>
    %cst_195 = arith.constant dense<0.000000e+00> : vector<4xf32>
    %184 = vector.multi_reduction <add>, %183, %cst_195 [0] : vector<512x4xf32> to vector<4xf32>
    %185 = vector.shape_cast %184 : vector<4xf32> to vector<1x4xf32>
    %cst_196 = arith.constant 0.001953125 : f32
    %186 = vector.broadcast %cst_196 : f32 to vector<1x4xf32>
    %187 = arith.mulf %185, %186 : vector<1x4xf32>
    %188 = arith.mulf %182, %182 : vector<1x4xf32>
    %189 = arith.subf %187, %188 : vector<1x4xf32>
    %cst_197 = arith.constant 0.000000e+00 : f32
    %190 = vector.broadcast %cst_197 : f32 to vector<1x4xf32>
    %191 = arith.maximumf %189, %190 : vector<1x4xf32>
    %cst_198 = arith.constant 9.99999974E-6 : f32
    %192 = vector.broadcast %cst_198 : f32 to vector<1x4xf32>
    %193 = arith.addf %191, %192 : vector<1x4xf32>
    %194 = math.rsqrt %193 : vector<1x4xf32>
    %c0_199 = arith.constant 0 : index
    %c0_200 = arith.constant 0 : index
    %195 = vector.load %arg7[%c0_199, %c0_200] : memref<1x4xf32, #tpu.memory_space<vmem>>, vector<1x4xf32>
    %196 = vector.shape_cast %195 : vector<1x4xf32> to vector<4xf32>
    %197 = vector.shape_cast %196 : vector<4xf32> to vector<1x4xf32>
    %198 = arith.mulf %194, %197 : vector<1x4xf32>
    %199 = vector.broadcast %182 : vector<1x4xf32> to vector<512x4xf32>
    %200 = arith.subf %178, %199 : vector<512x4xf32>
    %201 = vector.broadcast %198 : vector<1x4xf32> to vector<512x4xf32>
    %202 = arith.mulf %200, %201 : vector<512x4xf32>
    %c0_201 = arith.constant 0 : index
    %c0_202 = arith.constant 0 : index
    %203 = vector.load %arg8[%c0_201, %c0_202] : memref<1x4xf32, #tpu.memory_space<vmem>>, vector<1x4xf32>
    %204 = vector.shape_cast %203 : vector<1x4xf32> to vector<4xf32>
    %205 = vector.shape_cast %204 : vector<4xf32> to vector<1x4xf32>
    %206 = vector.broadcast %205 : vector<1x4xf32> to vector<512x4xf32>
    %207 = arith.addf %202, %206 : vector<512x4xf32>
    %208 = vector.shape_cast %207 : vector<512x4xf32> to vector<2x16x16x4xf32>
    %209 = arith.addf %0, %208 : vector<2x16x16x4xf32>
    %c0_203 = arith.constant 0 : index
    %c0_204 = arith.constant 0 : index
    %c0_205 = arith.constant 0 : index
    %c0_206 = arith.constant 0 : index
    %210 = vector.load %arg10[%c0_203, %c0_204, %c0_205, %c0_206] : memref<2x16x16x4xf32, #tpu.memory_space<vmem>>, vector<2x16x16x4xf32>
    tpu.vector_store %arg10[%c0_203, %c0_204, %c0_205, %c0_206], %209 {strides = array<i32>} : memref<2x16x16x4xf32, #tpu.memory_space<vmem>>, vector<2x16x16x4xf32>,
    return
  }
}

</mosaic_0001>

<llo_original>
// kernel: tpu_custom_call.1
$region0: #{tpu_custom_call.1}
  #allocation0 [shape = 'u32[]', space=smem, size = 0x4, offset = 0x4, fixed_abs, tag = 'smem constant byte address 0x4 - core index']
  #allocation1 [shape = 'u32[144,128]{1,0:T(1,128)}', space=vmem, size = 0x12000, scoped, tag = 'internal scratch']
  #allocation2 [shape = 'f32[2,18,18,4]{3,2,1,0:T(8,128)}', space=vmem, size = 0x6c000, scoped, tag = 'scratch operand']
  #allocation3 [shape = 'f32[1]{0:T(128)S(6)}', space=smem, size = 0x200, scoped, tag = 'scoped memory for tpu_custom_call.1']
  %s0 = inlined_call_operand.vmem [shape: f32[2,16,16,4], index: 0, kind: input, shape index: {}, may-alias: {0,10}]
  %s1 = inlined_call_operand.vmem [shape: bf16[3,3,4,4], index: 1, kind: input, shape index: {}]
  %s2 = inlined_call_operand.vmem [shape: f32[1,4], index: 2, kind: input, shape index: {}]
  %s3 = inlined_call_operand.vmem [shape: f32[1,4], index: 3, kind: input, shape index: {}]
  %s4 = inlined_call_operand.vmem [shape: f32[1,4], index: 4, kind: input, shape index: {}]
  %s5 = inlined_call_operand.vmem [shape: bf16[3,3,4,4], index: 5, kind: input, shape index: {}]
  %s6 = inlined_call_operand.vmem [shape: f32[1,4], index: 6, kind: input, shape index: {}]
  %s7 = inlined_call_operand.vmem [shape: f32[1,4], index: 7, kind: input, shape index: {}]
  %s8 = inlined_call_operand.vmem [shape: f32[1,4], index: 8, kind: input, shape index: {}]
  %s9 = inlined_call_operand.<no memory space> [shape: f32[1], index: 9, kind: input, shape index: {}]
  %s10 = inlined_call_operand.vmem [shape: f32[2,16,16,4], index: 10, kind: output, shape index: {}, may-alias: {0,10}]
  %s11 = sld [smem:[#allocation0]]
  $region50: #{tpu_custom_call.1} parent=0
    _
  %s13 = ssub.s32 1, %s11
  %s14 = scalar_select 0, %s13, %s11
  %15 = sst [smem:[#allocation3]] %s9
  // Predicated region
  $region2: #{tpu_custom_call.1} parent=0 // pred_check
    _
  $region3: #{tpu_custom_call.1} parent=0 // pred_check_branch
    %17 = sbr.rel (0) target = $region5
  $region4: #{tpu_custom_call.1} parent=0 // pred_region
    _
  $region5: #{tpu_custom_call.1} parent=0 // pred_fallthru
    _
  // Predicated region
  $region6: #{tpu_custom_call.1} parent=0 // pred_check
    _
  $region7: #{tpu_custom_call.1} parent=0 // pred_check_branch
    %19 = sbr.rel (0) target = $region9
  $region8: #{tpu_custom_call.1} parent=0 // pred_region
    _
  $region9: #{tpu_custom_call.1} parent=0 // pred_fallthru
    _
  // Predicated region
  $region10: #{tpu_custom_call.1} parent=0 // pred_check
    _
  $region11: #{tpu_custom_call.1} parent=0 // pred_check_branch
    %21 = sbr.rel (0) target = $region13
  $region12: #{tpu_custom_call.1} parent=0 // pred_region
    _
  $region13: #{tpu_custom_call.1} parent=0 // pred_fallthru
    _
  // Predicated region
  $region14: #{tpu_custom_call.1} parent=0 // pred_check
    _
  $region15: #{tpu_custom_call.1} parent=0 // pred_check_branch
    %23 = sbr.rel (0) target = $region17
  $region16: #{tpu_custom_call.1} parent=0 // pred_region
    _
  $region17: #{tpu_custom_call.1} parent=0 // pred_fallthru
    _
  // Predicated region
  $region18: #{tpu_custom_call.1} parent=0 // pred_check
    _
  $region19: #{tpu_custom_call.1} parent=0 // pred_check_branch
    %25 = sbr.rel (0) target = $region21
  $region20: #{tpu_custom_call.1} parent=0 // pred_region
    _
  $region21: #{tpu_custom_call.1} parent=0 // pred_fallthru
    _
  // Predicated region
  $region22: #{tpu_custom_call.1} parent=0 // pred_check
    _
  $region23: #{tpu_custom_call.1} parent=0 // pred_check_branch
    %27 = sbr.rel (0) target = $region25
  $region24: #{tpu_custom_call.1} parent=0 // pred_region
    _
  $region25: #{tpu_custom_call.1} parent=0 // pred_fallthru
    _
  // Predicated region
  $region26: #{tpu_custom_call.1} parent=0 // pred_check
    _
  $region27: #{tpu_custom_call.1} parent=0 // pred_check_branch
    %29 = sbr.rel (0) target = $region29
  $region28: #{tpu_custom_call.1} parent=0 // pred_region
    _
  $region29: #{tpu_custom_call.1} parent=0 // pred_fallthru
    _
  // Predicated region
  $region30: #{tpu_custom_call.1} parent=0 // pred_check
    _
  $region31: #{tpu_custom_call.1} parent=0 // pred_check_branch
    %31 = sbr.rel (0) target = $region33
  $region32: #{tpu_custom_call.1} parent=0 // pred_region
    _
  $region33: #{tpu_custom_call.1} parent=0 // pred_fallthru
    _
  // Predicated region
  $region34: #{tpu_custom_call.1} parent=0 // pred_check
    _
  $region35: #{tpu_custom_call.1} parent=0 // pred_check_branch
    %33 = sbr.rel (0) target = $region37
  $region36: #{tpu_custom_call.1} parent=0 // pred_region
    _
  $region37: #{tpu_custom_call.1} parent=0 // pred_fallthru
    _
  // Predicated region
  $region38: #{tpu_custom_call.1} parent=0 // pred_check
    _
  $region39: #{tpu_custom_call.1} parent=0 // pred_check_branch
    %35 = sbr.rel (0) target = $region41
  $region40: #{tpu_custom_call.1} parent=0 // pred_region
    _
  $region41: #{tpu_custom_call.1} parent=0 // pred_fallthru
    _
  %v37 = vld [vmem:[%s0] sm:$0xff]
  %v38 = vld [vmem:[%s0 + $0x8] sm:$0xff]
  %v39 = vld [vmem:[%s0 + $0x10] sm:$0xff]
  %v40 = vld [vmem:[%s0 + $0x18] sm:$0xff]
  %v41 = vld [vmem:[%s0 + $0x20] sm:$0xff]
  %v42 = vld [vmem:[%s0 + $0x28] sm:$0xff]
  %v43 = vld [vmem:[%s0 + $0x30] sm:$0xff]
  %v44 = vld [vmem:[%s0 + $0x38] sm:$0xff]
  %v45 = vld [vmem:[%s0 + $0x40] sm:$0xff]
  %v46 = vld [vmem:[%s0 + $0x48] sm:$0xff]
  %v47 = vld [vmem:[%s0 + $0x50] sm:$0xff]
  %v48 = vld [vmem:[%s0 + $0x58] sm:$0xff]
  %v49 = vld [vmem:[%s0 + $0x60] sm:$0xff]
  %v50 = vld [vmem:[%s0 + $0x68] sm:$0xff]
  %v51 = vld [vmem:[%s0 + $0x70] sm:$0xff]
  %v52 = vld [vmem:[%s0 + $0x78] sm:$0xff]
  %v53 = vld [vmem:[%s0 + $0x80] sm:$0xff]
  %v54 = vld [vmem:[%s0 + $0x88] sm:$0xff]
  %v55 = vld [vmem:[%s0 + $0x90] sm:$0xff]
  %v56 = vld [vmem:[%s0 + $0x98] sm:$0xff]
  %v57 = vld [vmem:[%s0 + $0xa0] sm:$0xff]
  %v58 = vld [vmem:[%s0 + $0xa8] sm:$0xff]
  %v59 = vld [vmem:[%s0 + $0xb0] sm:$0xff]
  %v60 = vld [vmem:[%s0 + $0xb8] sm:$0xff]
  %v61 = vld [vmem:[%s0 + $0xc0] sm:$0xff]
  %v62 = vld [vmem:[%s0 + $0xc8] sm:$0xff]
  %v63 = vld [vmem:[%s0 + $0xd0] sm:$0xff]
  %v64 = vld [vmem:[%s0 + $0xd8] sm:$0xff]
  %v65 = vld [vmem:[%s0 + $0xe0] sm:$0xff]
  %v66 = vld [vmem:[%s0 + $0xe8] sm:$0xff]
  %v67 = vld [vmem:[%s0 + $0xf0] sm:$0xff]
  %v68 = vld [vmem:[%s0 + $0xf8] sm:$0xff]
  %v69 = vld [vmem:[%s0 + $0x100] sm:$0xff]
  %v70 = vld [vmem:[%s0 + $0x108] sm:$0xff]
  %v71 = vld [vmem:[%s0 + $0x110] sm:$0xff]
  %v72 = vld [vmem:[%s0 + $0x118] sm:$0xff]
  %v73 = vld [vmem:[%s0 + $0x120] sm:$0xff]
  %v74 = vld [vmem:[%s0 + $0x128] sm:$0xff]
  %v75 = vld [vmem:[%s0 + $0x130] sm:$0xff]
  %v76 = vld [vmem:[%s0 + $0x138] sm:$0xff]
  %v77 = vld [vmem:[%s0 + $0x140] sm:$0xff]
  %v78 = vld [vmem:[%s0 + $0x148] sm:$0xff]
  %v79 = vld [vmem:[%s0 + $0x150] sm:$0xff]
  %v80 = vld [vmem:[%s0 + $0x158] sm:$0xff]
  %v81 = vld [vmem:[%s0 + $0x160] sm:$0xff]
  %v82 = vld [vmem:[%s0 + $0x168] sm:$0xff]
  %v83 = vld [vmem:[%s0 + $0x170] sm:$0xff]
  %v84 = vld [vmem:[%s0 + $0x178] sm:$0xff]
  %v85 = vld [vmem:[%s0 + $0x180] sm:$0xff]
  %v86 = vld [vmem:[%s0 + $0x188] sm:$0xff]
  %v87 = vld [vmem:[%s0 + $0x190] sm:$0xff]
  %v88 = vld [vmem:[%s0 + $0x198] sm:$0xff]
  %v89 = vld [vmem:[%s0 + $0x1a0] sm:$0xff]
  %v90 = vld [vmem:[%s0 + $0x1a8] sm:$0xff]
  %v91 = vld [vmem:[%s0 + $0x1b0] sm:$0xff]
  %v92 = vld [vmem:[%s0 + $0x1b8] sm:$0xff]
  %v93 = vld [vmem:[%s0 + $0x1c0] sm:$0xff]
  %v94 = vld [vmem:[%s0 + $0x1c8] sm:$0xff]
  %v95 = vld [vmem:[%s0 + $0x1d0] sm:$0xff]
  %v96 = vld [vmem:[%s0 + $0x1d8] sm:$0xff]
  %v97 = vld [vmem:[%s0 + $0x1e0] sm:$0xff]
  %v98 = vld [vmem:[%s0 + $0x1e8] sm:$0xff]
  %v99 = vld [vmem:[%s0 + $0x1f0] sm:$0xff]
  %v100 = vld [vmem:[%s0 + $0x1f8] sm:$0xff]
  %vm101 = vcmask 31744
  %102 = vst.msk [vmem:[#allocation2] sm:$0xff] %vm101, 0.0
  %103 = vst.msk [vmem:[#allocation2 + $0x8] sm:$0xff] %vm101, 0.0
  %vm104 = vcmask 25600
  %105 = vst.msk [vmem:[#allocation2 + $0x10] sm:$0x3] %vm104, 0.0
  %106 = vst.msk [vmem:[#allocation2 + $0x18] sm:$0xff] %vm101, 0.0
  %107 = vst.msk [vmem:[#allocation2 + $0x20] sm:$0xff] %vm101, 0.0
  %108 = vst.msk [vmem:[#allocation2 + $0x28] sm:$0x3] %vm104, 0.0
  %109 = vst.msk [vmem:[#allocation2 + $0x30] sm:$0xff] %vm101, 0.0
  %110 = vst.msk [vmem:[#allocation2 + $0x38] sm:$0xff] %vm101, 0.0
  %111 = vst.msk [vmem:[#allocation2 + $0x40] sm:$0x3] %vm104, 0.0
  %112 = vst.msk [vmem:[#allocation2 + $0x48] sm:$0xff] %vm101, 0.0
  %113 = vst.msk [vmem:[#allocation2 + $0x50] sm:$0xff] %vm101, 0.0
  %114 = vst.msk [vmem:[#allocation2 + $0x58] sm:$0x3] %vm104, 0.0
  %115 = vst.msk [vmem:[#allocation2 + $0x60] sm:$0xff] %vm101, 0.0
  %116 = vst.msk [vmem:[#allocation2 + $0x68] sm:$0xff] %vm101, 0.0
  %117 = vst.msk [vmem:[#allocation2 + $0x70] sm:$0x3] %vm104, 0.0
  %118 = vst.msk [vmem:[#allocation2 + $0x78] sm:$0xff] %vm101, 0.0
  %119 = vst.msk [vmem:[#allocation2 + $0x80] sm:$0xff] %vm101, 0.0
  %120 = vst.msk [vmem:[#allocation2 + $0x88] sm:$0x3] %vm104, 0.0
  %121 = vst.msk [vmem:[#allocation2 + $0x90] sm:$0xff] %vm101, 0.0
  %122 = vst.msk [vmem:[#allocation2 + $0x98] sm:$0xff] %vm101, 0.0
  %123 = vst.msk [vmem:[#allocation2 + $0xa0] sm:$0x3] %vm104, 0.0
  %124 = vst.msk [vmem:[#allocation2 + $0xa8] sm:$0xff] %vm101, 0.0
  %125 = vst.msk [vmem:[#allocation2 + $0xb0] sm:$0xff] %vm101, 0.0
  %126 = vst.msk [vmem:[#allocation2 + $0xb8] sm:$0x3] %vm104, 0.0
  %127 = vst.msk [vmem:[#allocation2 + $0xc0] sm:$0xff] %vm101, 0.0
  %128 = vst.msk [vmem:[#allocation2 + $0xc8] sm:$0xff] %vm101, 0.0
  %129 = vst.msk [vmem:[#allocation2 + $0xd0] sm:$0x3] %vm104, 0.0
  %130 = vst.msk [vmem:[#allocation2 + $0xd8] sm:$0xff] %vm101, 0.0
  %131 = vst.msk [vmem:[#allocation2 + $0xe0] sm:$0xff] %vm101, 0.0
  %132 = vst.msk [vmem:[#allocation2 + $0xe8] sm:$0x3] %vm104, 0.0
  %133 = vst.msk [vmem:[#allocation2 + $0xf0] sm:$0xff] %vm101, 0.0
  %134 = vst.msk [vmem:[#allocation2 + $0xf8] sm:$0xff] %vm101, 0.0
  %135 = vst.msk [vmem:[#allocation2 + $0x100] sm:$0x3] %vm104, 0.0
  %136 = vst.msk [vmem:[#allocation2 + $0x108] sm:$0xff] %vm101, 0.0
  %137 = vst.msk [vmem:[#allocation2 + $0x110] sm:$0xff] %vm101, 0.0
  %138 = vst.msk [vmem:[#allocation2 + $0x118] sm:$0x3] %vm104, 0.0
  %139 = vst.msk [vmem:[#allocation2 + $0x120] sm:$0xff] %vm101, 0.0
  %140 = vst.msk [vmem:[#allocation2 + $0x128] sm:$0xff] %vm101, 0.0
  %141 = vst.msk [vmem:[#allocation2 + $0x130] sm:$0x3] %vm104, 0.0
  %142 = vst.msk [vmem:[#allocation2 + $0x138] sm:$0xff] %vm101, 0.0
  %143 = vst.msk [vmem:[#allocation2 + $0x140] sm:$0xff] %vm101, 0.0
  %144 = vst.msk [vmem:[#allocation2 + $0x148] sm:$0x3] %vm104, 0.0
  %145 = vst.msk [vmem:[#allocation2 + $0x150] sm:$0xff] %vm101, 0.0
  %146 = vst.msk [vmem:[#allocation2 + $0x158] sm:$0xff] %vm101, 0.0
  %147 = vst.msk [vmem:[#allocation2 + $0x160] sm:$0x3] %vm104, 0.0
  %148 = vst.msk [vmem:[#allocation2 + $0x168] sm:$0xff] %vm101, 0.0
  %149 = vst.msk [vmem:[#allocation2 + $0x170] sm:$0xff] %vm101, 0.0
  %150 = vst.msk [vmem:[#allocation2 + $0x178] sm:$0x3] %vm104, 0.0
  %151 = vst.msk [vmem:[#allocation2 + $0x180] sm:$0xff] %vm101, 0.0
  %152 = vst.msk [vmem:[#allocation2 + $0x188] sm:$0xff] %vm101, 0.0
  %153 = vst.msk [vmem:[#allocation2 + $0x190] sm:$0x3] %vm104, 0.0
  %154 = vst.msk [vmem:[#allocation2 + $0x198] sm:$0xff] %vm101, 0.0
  %155 = vst.msk [vmem:[#allocation2 + $0x1a0] sm:$0xff] %vm101, 0.0
  %156 = vst.msk [vmem:[#allocation2 + $0x1a8] sm:$0x3] %vm104, 0.0
  %157 = vst.msk [vmem:[#allocation2 + $0x1b0] sm:$0xff] %vm101, 0.0
  %158 = vst.msk [vmem:[#allocation2 + $0x1b8] sm:$0xff] %vm101, 0.0
  %159 = vst.msk [vmem:[#allocation2 + $0x1c0] sm:$0x3] %vm104, 0.0
  %160 = vst.msk [vmem:[#allocation2 + $0x1c8] sm:$0xff] %vm101, 0.0
  %161 = vst.msk [vmem:[#allocation2 + $0x1d0] sm:$0xff] %vm101, 0.0
  %162 = vst.msk [vmem:[#allocation2 + $0x1d8] sm:$0x3] %vm104, 0.0
  %163 = vst.msk [vmem:[#allocation2 + $0x1e0] sm:$0xff] %vm101, 0.0
  %164 = vst.msk [vmem:[#allocation2 + $0x1e8] sm:$0xff] %vm101, 0.0
  %165 = vst.msk [vmem:[#allocation2 + $0x1f0] sm:$0x3] %vm104, 0.0
  %166 = vst.msk [vmem:[#allocation2 + $0x1f8] sm:$0xff] %vm101, 0.0
  %167 = vst.msk [vmem:[#allocation2 + $0x200] sm:$0xff] %vm101, 0.0
  %168 = vst.msk [vmem:[#allocation2 + $0x208] sm:$0x3] %vm104, 0.0
  %169 = vst.msk [vmem:[#allocation2 + $0x210] sm:$0xff] %vm101, 0.0
  %170 = vst.msk [vmem:[#allocation2 + $0x218] sm:$0xff] %vm101, 0.0
  %171 = vst.msk [vmem:[#allocation2 + $0x220] sm:$0x3] %vm104, 0.0
  %172 = vst.msk [vmem:[#allocation2 + $0x228] sm:$0xff] %vm101, 0.0
  %173 = vst.msk [vmem:[#allocation2 + $0x230] sm:$0xff] %vm101, 0.0
  %174 = vst.msk [vmem:[#allocation2 + $0x238] sm:$0x3] %vm104, 0.0
  %175 = vst.msk [vmem:[#allocation2 + $0x240] sm:$0xff] %vm101, 0.0
  %176 = vst.msk [vmem:[#allocation2 + $0x248] sm:$0xff] %vm101, 0.0
  %177 = vst.msk [vmem:[#allocation2 + $0x250] sm:$0x3] %vm104, 0.0
  %178 = vst.msk [vmem:[#allocation2 + $0x258] sm:$0xff] %vm101, 0.0
  %179 = vst.msk [vmem:[#allocation2 + $0x260] sm:$0xff] %vm101, 0.0
  %180 = vst.msk [vmem:[#allocation2 + $0x268] sm:$0x3] %vm104, 0.0
  %181 = vst.msk [vmem:[#allocation2 + $0x270] sm:$0xff] %vm101, 0.0
  %182 = vst.msk [vmem:[#allocation2 + $0x278] sm:$0xff] %vm101, 0.0
  %183 = vst.msk [vmem:[#allocation2 + $0x280] sm:$0x3] %vm104, 0.0
  %184 = vst.msk [vmem:[#allocation2 + $0x288] sm:$0xff] %vm101, 0.0
  %185 = vst.msk [vmem:[#allocation2 + $0x290] sm:$0xff] %vm101, 0.0
  %186 = vst.msk [vmem:[#allocation2 + $0x298] sm:$0x3] %vm104, 0.0
  %187 = vst.msk [vmem:[#allocation2 + $0x2a0] sm:$0xff] %vm101, 0.0
  %188 = vst.msk [vmem:[#allocation2 + $0x2a8] sm:$0xff] %vm101, 0.0
  %189 = vst.msk [vmem:[#allocation2 + $0x2b0] sm:$0x3] %vm104, 0.0
  %190 = vst.msk [vmem:[#allocation2 + $0x2b8] sm:$0xff] %vm101, 0.0
  %191 = vst.msk [vmem:[#allocation2 + $0x2c0] sm:$0xff] %vm101, 0.0
  %192 = vst.msk [vmem:[#allocation2 + $0x2c8] sm:$0x3] %vm104, 0.0
  %193 = vst.msk [vmem:[#allocation2 + $0x2d0] sm:$0xff] %vm101, 0.0
  %194 = vst.msk [vmem:[#allocation2 + $0x2d8] sm:$0xff] %vm101, 0.0
  %195 = vst.msk [vmem:[#allocation2 + $0x2e0] sm:$0x3] %vm104, 0.0
  %196 = vst.msk [vmem:[#allocation2 + $0x2e8] sm:$0xff] %vm101, 0.0
  %197 = vst.msk [vmem:[#allocation2 + $0x2f0] sm:$0xff] %vm101, 0.0
  %198 = vst.msk [vmem:[#allocation2 + $0x2f8] sm:$0x3] %vm104, 0.0
  %199 = vst.msk [vmem:[#allocation2 + $0x300] sm:$0xff] %vm101, 0.0
  %200 = vst.msk [vmem:[#allocation2 + $0x308] sm:$0xff] %vm101, 0.0
  %201 = vst.msk [vmem:[#allocation2 + $0x310] sm:$0x3] %vm104, 0.0
  %202 = vst.msk [vmem:[#allocation2 + $0x318] sm:$0xff] %vm101, 0.0
  %203 = vst.msk [vmem:[#allocation2 + $0x320] sm:$0xff] %vm101, 0.0
  %204 = vst.msk [vmem:[#allocation2 + $0x328] sm:$0x3] %vm104, 0.0
  %205 = vst.msk [vmem:[#allocation2 + $0x330] sm:$0xff] %vm101, 0.0
  %206 = vst.msk [vmem:[#allocation2 + $0x338] sm:$0xff] %vm101, 0.0
  %207 = vst.msk [vmem:[#allocation2 + $0x340] sm:$0x3] %vm104, 0.0
  %208 = vst.msk [vmem:[#allocation2 + $0x348] sm:$0xff] %vm101, 0.0
  %209 = vst.msk [vmem:[#allocation2 + $0x350] sm:$0xff] %vm101, 0.0
  %210 = vst.msk [vmem:[#allocation2 + $0x358] sm:$0x3] %vm104, 0.0
  %s211 = scalar_lea.vmem [#allocation2], 24
  %212 = vst.msk [vmem:[%s211 + $0x1] sm:$0xff] %vm101, %v37
  %213 = vst.msk [vmem:[%s211 + $0x9] sm:$0xff] %vm101, %v38
  %214 = vst.msk [vmem:[%s211 + $0x19] sm:$0xff] %vm101, %v39
  %215 = vst.msk [vmem:[%s211 + $0x21] sm:$0xff] %vm101, %v40
  %216 = vst.msk [vmem:[%s211 + $0x31] sm:$0xff] %vm101, %v41
  %217 = vst.msk [vmem:[%s211 + $0x39] sm:$0xff] %vm101, %v42
  %218 = vst.msk [vmem:[%s211 + $0x49] sm:$0xff] %vm101, %v43
  %219 = vst.msk [vmem:[%s211 + $0x51] sm:$0xff] %vm101, %v44
  %220 = vst.msk [vmem:[%s211 + $0x61] sm:$0xff] %vm101, %v45
  %221 = vst.msk [vmem:[%s211 + $0x69] sm:$0xff] %vm101, %v46
  %222 = vst.msk [vmem:[%s211 + $0x79] sm:$0xff] %vm101, %v47
  %223 = vst.msk [vmem:[%s211 + $0x81] sm:$0xff] %vm101, %v48
  %224 = vst.msk [vmem:[%s211 + $0x91] sm:$0xff] %vm101, %v49
  %225 = vst.msk [vmem:[%s211 + $0x99] sm:$0xff] %vm101, %v50
  %226 = vst.msk [vmem:[%s211 + $0xa9] sm:$0xff] %vm101, %v51
  %227 = vst.msk [vmem:[%s211 + $0xb1] sm:$0xff] %vm101, %v52
  %228 = vst.msk [vmem:[%s211 + $0xc1] sm:$0xff] %vm101, %v53
  %229 = vst.msk [vmem:[%s211 + $0xc9] sm:$0xff] %vm101, %v54
  %230 = vst.msk [vmem:[%s211 + $0xd9] sm:$0xff] %vm101, %v55
  %231 = vst.msk [vmem:[%s211 + $0xe1] sm:$0xff] %vm101, %v56
  %232 = vst.msk [vmem:[%s211 + $0xf1] sm:$0xff] %vm101, %v57
  %233 = vst.msk [vmem:[%s211 + $0xf9] sm:$0xff] %vm101, %v58
  %234 = vst.msk [vmem:[%s211 + $0x109] sm:$0xff] %vm101, %v59
  %235 = vst.msk [vmem:[%s211 + $0x111] sm:$0xff] %vm101, %v60
  %236 = vst.msk [vmem:[%s211 + $0x121] sm:$0xff] %vm101, %v61
  %237 = vst.msk [vmem:[%s211 + $0x129] sm:$0xff] %vm101, %v62
  %238 = vst.msk [vmem:[%s211 + $0x139] sm:$0xff] %vm101, %v63
  %239 = vst.msk [vmem:[%s211 + $0x141] sm:$0xff] %vm101, %v64
  %240 = vst.msk [vmem:[%s211 + $0x151] sm:$0xff] %vm101, %v65
  %241 = vst.msk [vmem:[%s211 + $0x159] sm:$0xff] %vm101, %v66
  %242 = vst.msk [vmem:[%s211 + $0x169] sm:$0xff] %vm101, %v67
  %243 = vst.msk [vmem:[%s211 + $0x171] sm:$0xff] %vm101, %v68
  %244 = vst.msk [vmem:[%s211 + $0x1b1] sm:$0xff] %vm101, %v69
  %245 = vst.msk [vmem:[%s211 + $0x1b9] sm:$0xff] %vm101, %v70
  %246 = vst.msk [vmem:[%s211 + $0x1c9] sm:$0xff] %vm101, %v71
  %247 = vst.msk [vmem:[%s211 + $0x1d1] sm:$0xff] %vm101, %v72
  %248 = vst.msk [vmem:[%s211 + $0x1e1] sm:$0xff] %vm101, %v73
  %249 = vst.msk [vmem:[%s211 + $0x1e9] sm:$0xff] %vm101, %v74
  %250 = vst.msk [vmem:[%s211 + $0x1f9] sm:$0xff] %vm101, %v75
  %251 = vst.msk [vmem:[%s211 + $0x201] sm:$0xff] %vm101, %v76
  %252 = vst.msk [vmem:[%s211 + $0x211] sm:$0xff] %vm101, %v77
  %253 = vst.msk [vmem:[%s211 + $0x219] sm:$0xff] %vm101, %v78
  %254 = vst.msk [vmem:[%s211 + $0x229] sm:$0xff] %vm101, %v79
  %255 = vst.msk [vmem:[%s211 + $0x231] sm:$0xff] %vm101, %v80
  %256 = vst.msk [vmem:[%s211 + $0x241] sm:$0xff] %vm101, %v81
  %257 = vst.msk [vmem:[%s211 + $0x249] sm:$0xff] %vm101, %v82
  %258 = vst.msk [vmem:[%s211 + $0x259] sm:$0xff] %vm101, %v83
  %259 = vst.msk [vmem:[%s211 + $0x261] sm:$0xff] %vm101, %v84
  %260 = vst.msk [vmem:[%s211 + $0x271] sm:$0xff] %vm101, %v85
  %261 = vst.msk [vmem:[%s211 + $0x279] sm:$0xff] %vm101, %v86
  %262 = vst.msk [vmem:[%s211 + $0x289] sm:$0xff] %vm101, %v87
  %263 = vst.msk [vmem:[%s211 + $0x291] sm:$0xff] %vm101, %v88
  %264 = vst.msk [vmem:[%s211 + $0x2a1] sm:$0xff] %vm101, %v89
  %265 = vst.msk [vmem:[%s211 + $0x2a9] sm:$0xff] %vm101, %v90
  %266 = vst.msk [vmem:[%s211 + $0x2b9] sm:$0xff] %vm101, %v91
  %267 = vst.msk [vmem:[%s211 + $0x2c1] sm:$0xff] %vm101, %v92
  %268 = vst.msk [vmem:[%s211 + $0x2d1] sm:$0xff] %vm101, %v93
  %269 = vst.msk [vmem:[%s211 + $0x2d9] sm:$0xff] %vm101, %v94
  %270 = vst.msk [vmem:[%s211 + $0x2e9] sm:$0xff] %vm101, %v95
  %271 = vst.msk [vmem:[%s211 + $0x2f1] sm:$0xff] %vm101, %v96
  %272 = vst.msk [vmem:[%s211 + $0x301] sm:$0xff] %vm101, %v97
  %273 = vst.msk [vmem:[%s211 + $0x309] sm:$0xff] %vm101, %v98
  %274 = vst.msk [vmem:[%s211 + $0x319] sm:$0xff] %vm101, %v99
  %275 = vst.msk [vmem:[%s211 + $0x321] sm:$0xff] %vm101, %v100
  %v276 = vld [vmem:[#allocation2] sm:$0xff]
  %v277 = vld [vmem:[#allocation2 + $0x8] sm:$0xff]
  %v278 = vld [vmem:[#allocation2 + $0x18] sm:$0xff]
  %v279 = vld [vmem:[#allocation2 + $0x20] sm:$0xff]
  %v280 = vld [vmem:[#allocation2 + $0x30] sm:$0xff]
  %v281 = vld [vmem:[#allocation2 + $0x38] sm:$0xff]
  %v282 = vld [vmem:[#allocation2 + $0x48] sm:$0xff]
  %v283 = vld [vmem:[#allocation2 + $0x50] sm:$0xff]
  %v284 = vld [vmem:[#allocation2 + $0x60] sm:$0xff]
  %v285 = vld [vmem:[#allocation2 + $0x68] sm:$0xff]
  %v286 = vld [vmem:[#allocation2 + $0x78] sm:$0xff]
  %v287 = vld [vmem:[#allocation2 + $0x80] sm:$0xff]
  %v288 = vld [vmem:[#allocation2 + $0x90] sm:$0xff]
  %v289 = vld [vmem:[#allocation2 + $0x98] sm:$0xff]
  %v290 = vld [vmem:[#allocation2 + $0xa8] sm:$0xff]
  %v291 = vld [vmem:[#allocation2 + $0xb0] sm:$0xff]
  %v292 = vld [vmem:[#allocation2 + $0xc0] sm:$0xff]
  %v293 = vld [vmem:[#allocation2 + $0xc8] sm:$0xff]
  %v294 = vld [vmem:[#allocation2 + $0xd8] sm:$0xff]
  %v295 = vld [vmem:[#allocation2 + $0xe0] sm:$0xff]
  %v296 = vld [vmem:[#allocation2 + $0xf0] sm:$0xff]
  %v297 = vld [vmem:[#allocation2 + $0xf8] sm:$0xff]
  %v298 = vld [vmem:[#allocation2 + $0x108] sm:$0xff]
  %v299 = vld [vmem:[#allocation2 + $0x110] sm:$0xff]
  %v300 = vld [vmem:[#allocation2 + $0x120] sm:$0xff]
  %v301 = vld [vmem:[#allocation2 + $0x128] sm:$0xff]
  %v302 = vld [vmem:[#allocation2 + $0x138] sm:$0xff]
  %v303 = vld [vmem:[#allocation2 + $0x140] sm:$0xff]
  %v304 = vld [vmem:[#allocation2 + $0x150] sm:$0xff]
  %v305 = vld [vmem:[#allocation2 + $0x158] sm:$0xff]
  %v306 = vld [vmem:[#allocation2 + $0x168] sm:$0xff]
  %v307 = vld [vmem:[#allocation2 + $0x170] sm:$0xff]
  %v308 = vld [vmem:[#allocation2 + $0x1b0] sm:$0xff]
  %v309 = vld [vmem:[#allocation2 + $0x1b8] sm:$0xff]
  %v310 = vld [vmem:[#allocation2 + $0x1c8] sm:$0xff]
  %v311 = vld [vmem:[#allocation2 + $0x1d0] sm:$0xff]
  %v312 = vld [vmem:[#allocation2 + $0x1e0] sm:$0xff]
  %v313 = vld [vmem:[#allocation2 + $0x1e8] sm:$0xff]
  %v314 = vld [vmem:[#allocation2 + $0x1f8] sm:$0xff]
  %v315 = vld [vmem:[#allocation2 + $0x200] sm:$0xff]
  %v316 = vld [vmem:[#allocation2 + $0x210] sm:$0xff]
  %v317 = vld [vmem:[#allocation2 + $0x218] sm:$0xff]
  %v318 = vld [vmem:[#allocation2 + $0x228] sm:$0xff]
  %v319 = vld [vmem:[#allocation2 + $0x230] sm:$0xff]
  %v320 = vld [vmem:[#allocation2 + $0x240] sm:$0xff]
  %v321 = vld [vmem:[#allocation2 + $0x248] sm:$0xff]
  %v322 = vld [vmem:[#allocation2 + $0x258] sm:$0xff]
  %v323 = vld [vmem:[#allocation2 + $0x260] sm:$0xff]
  %v324 = vld [vmem:[#allocation2 + $0x270] sm:$0xff]
  %v325 = vld [vmem:[#allocation2 + $0x278] sm:$0xff]
  %v326 = vld [vmem:[#allocation2 + $0x288] sm:$0xff]
  %v327 = vld [vmem:[#allocation2 + $0x290] sm:$0xff]
  %v328 = vld [vmem:[#allocation2 + $0x2a0] sm:$0xff]
  %v329 = vld [vmem:[#allocation2 + $0x2a8] sm:$0xff]
  %v330 = vld [vmem:[#allocation2 + $0x2b8] sm:$0xff]
  %v331 = vld [vmem:[#allocation2 + $0x2c0] sm:$0xff]
  %v332 = vld [vmem:[#allocation2 + $0x2d0] sm:$0xff]
  %v333 = vld [vmem:[#allocation2 + $0x2d8] sm:$0xff]
  %v334 = vld [vmem:[#allocation2 + $0x2e8] sm:$0xff]
  %v335 = vld [vmem:[#allocation2 + $0x2f0] sm:$0xff]
  %v336 = vld [vmem:[#allocation2 + $0x300] sm:$0xff]
  %v337 = vld [vmem:[#allocation2 + $0x308] sm:$0xff]
  %v338 = vld [vmem:[#allocation2 + $0x318] sm:$0xff]
  %v339 = vld [vmem:[#allocation2 + $0x320] sm:$0xff]
  %v340 = vpack.c.bf16 %v277, %v276
  %v341 = vpack.c.bf16 %v279, %v278
  %v342 = vpack.c.bf16 %v281, %v280
  %v343 = vpack.c.bf16 %v283, %v282
  %v344 = vpack.c.bf16 %v285, %v284
  %v345 = vpack.c.bf16 %v287, %v286
  %v346 = vpack.c.bf16 %v289, %v288
  %v347 = vpack.c.bf16 %v291, %v290
  %v348 = vpack.c.bf16 %v293, %v292
  %v349 = vpack.c.bf16 %v295, %v294
  %v350 = vpack.c.bf16 %v297, %v296
  %v351 = vpack.c.bf16 %v299, %v298
  %v352 = vpack.c.bf16 %v301, %v300
  %v353 = vpack.c.bf16 %v303, %v302
  %v354 = vpack.c.bf16 %v305, %v304
  %v355 = vpack.c.bf16 %v307, %v306
  %v356 = vpack.c.bf16 %v309, %v308
  %v357 = vpack.c.bf16 %v311, %v310
  %v358 = vpack.c.bf16 %v313, %v312
  %v359 = vpack.c.bf16 %v315, %v314
  %v360 = vpack.c.bf16 %v317, %v316
  %v361 = vpack.c.bf16 %v319, %v318
  %v362 = vpack.c.bf16 %v321, %v320
  %v363 = vpack.c.bf16 %v323, %v322
  %v364 = vpack.c.bf16 %v325, %v324
  %v365 = vpack.c.bf16 %v327, %v326
  %v366 = vpack.c.bf16 %v329, %v328
  %v367 = vpack.c.bf16 %v331, %v330
  %v368 = vpack.c.bf16 %v333, %v332
  %v369 = vpack.c.bf16 %v335, %v334
  %v370 = vpack.c.bf16 %v337, %v336
  %v371 = vpack.c.bf16 %v339, %v338
  %v372 = vld [vmem:[%s1] sm:$0x3]
  %v373 = vld [vmem:[#allocation2 + $0x1] sm:$0xff]
  %v374 = vld [vmem:[#allocation2 + $0x9] sm:$0xff]
  %v375 = vld [vmem:[#allocation2 + $0x19] sm:$0xff]
  %v376 = vld [vmem:[#allocation2 + $0x21] sm:$0xff]
  %v377 = vld [vmem:[#allocation2 + $0x31] sm:$0xff]
  %v378 = vld [vmem:[#allocation2 + $0x39] sm:$0xff]
  %v379 = vld [vmem:[#allocation2 + $0x49] sm:$0xff]
  %v380 = vld [vmem:[#allocation2 + $0x51] sm:$0xff]
  %v381 = vld [vmem:[#allocation2 + $0x61] sm:$0xff]
  %v382 = vld [vmem:[#allocation2 + $0x69] sm:$0xff]
  %v383 = vld [vmem:[#allocation2 + $0x79] sm:$0xff]
  %v384 = vld [vmem:[#allocation2 + $0x81] sm:$0xff]
  %v385 = vld [vmem:[#allocation2 + $0x91] sm:$0xff]
  %v386 = vld [vmem:[#allocation2 + $0x99] sm:$0xff]
  %v387 = vld [vmem:[#allocation2 + $0xa9] sm:$0xff]
  %v388 = vld [vmem:[#allocation2 + $0xb1] sm:$0xff]
  %v389 = vld [vmem:[#allocation2 + $0xc1] sm:$0xff]
  %v390 = vld [vmem:[#allocation2 + $0xc9] sm:$0xff]
  %v391 = vld [vmem:[#allocation2 + $0xd9] sm:$0xff]
  %v392 = vld [vmem:[#allocation2 + $0xe1] sm:$0xff]
  %v393 = vld [vmem:[#allocation2 + $0xf1] sm:$0xff]
  %v394 = vld [vmem:[#allocation2 + $0xf9] sm:$0xff]
  %v395 = vld [vmem:[#allocation2 + $0x109] sm:$0xff]
  %v396 = vld [vmem:[#allocation2 + $0x111] sm:$0xff]
  %v397 = vld [vmem:[#allocation2 + $0x121] sm:$0xff]
  %v398 = vld [vmem:[#allocation2 + $0x129] sm:$0xff]
  %v399 = vld [vmem:[#allocation2 + $0x139] sm:$0xff]
  %v400 = vld [vmem:[#allocation2 + $0x141] sm:$0xff]
  %v401 = vld [vmem:[#allocation2 + $0x151] sm:$0xff]
  %v402 = vld [vmem:[#allocation2 + $0x159] sm:$0xff]
  %v403 = vld [vmem:[#allocation2 + $0x169] sm:$0xff]
  %v404 = vld [vmem:[#allocation2 + $0x171] sm:$0xff]
  %v405 = vld [vmem:[#allocation2 + $0x1b1] sm:$0xff]
  %v406 = vld [vmem:[#allocation2 + $0x1b9] sm:$0xff]
  %v407 = vld [vmem:[#allocation2 + $0x1c9] sm:$0xff]
  %v408 = vld [vmem:[#allocation2 + $0x1d1] sm:$0xff]
  %v409 = vld [vmem:[#allocation2 + $0x1e1] sm:$0xff]
  %v410 = vld [vmem:[#allocation2 + $0x1e9] sm:$0xff]
  %v411 = vld [vmem:[#allocation2 + $0x1f9] sm:$0xff]
  %v412 = vld [vmem:[#allocation2 + $0x201] sm:$0xff]
  %v413 = vld [vmem:[#allocation2 + $0x211] sm:$0xff]
  %v414 = vld [vmem:[#allocation2 + $0x219] sm:$0xff]
  %v415 = vld [vmem:[#allocation2 + $0x229] sm:$0xff]
  %v416 = vld [vmem:[#allocation2 + $0x231] sm:$0xff]
  %v417 = vld [vmem:[#allocation2 + $0x241] sm:$0xff]
  %v418 = vld [vmem:[#allocation2 + $0x249] sm:$0xff]
  %v419 = vld [vmem:[#allocation2 + $0x259] sm:$0xff]
  %v420 = vld [vmem:[#allocation2 + $0x261] sm:$0xff]
  %v421 = vld [vmem:[#allocation2 + $0x271] sm:$0xff]
  %v422 = vld [vmem:[#allocation2 + $0x279] sm:$0xff]
  %v423 = vld [vmem:[#allocation2 + $0x289] sm:$0xff]
  %v424 = vld [vmem:[#allocation2 + $0x291] sm:$0xff]
  %v425 = vld [vmem:[#allocation2 + $0x2a1] sm:$0xff]
  %v426 = vld [vmem:[#allocation2 + $0x2a9] sm:$0xff]
  %v427 = vld [vmem:[#allocation2 + $0x2b9] sm:$0xff]
  %v428 = vld [vmem:[#allocation2 + $0x2c1] sm:$0xff]
  %v429 = vld [vmem:[#allocation2 + $0x2d1] sm:$0xff]
  %v430 = vld [vmem:[#allocation2 + $0x2d9] sm:$0xff]
  %v431 = vld [vmem:[#allocation2 + $0x2e9] sm:$0xff]
  %v432 = vld [vmem:[#allocation2 + $0x2f1] sm:$0xff]
  %v433 = vld [vmem:[#allocation2 + $0x301] sm:$0xff]
  %v434 = vld [vmem:[#allocation2 + $0x309] sm:$0xff]
  %v435 = vld [vmem:[#allocation2 + $0x319] sm:$0xff]
  %v436 = vld [vmem:[#allocation2 + $0x321] sm:$0xff]
  %v437 = vpack.c.bf16 %v374, %v373
  %v438 = vpack.c.bf16 %v376, %v375
  %v439 = vpack.c.bf16 %v378, %v377
  %v440 = vpack.c.bf16 %v380, %v379
  %v441 = vpack.c.bf16 %v382, %v381
  %v442 = vpack.c.bf16 %v384, %v383
  %v443 = vpack.c.bf16 %v386, %v385
  %v444 = vpack.c.bf16 %v388, %v387
  %v445 = vpack.c.bf16 %v390, %v389
  %v446 = vpack.c.bf16 %v392, %v391
  %v447 = vpack.c.bf16 %v394, %v393
  %v448 = vpack.c.bf16 %v396, %v395
  %v449 = vpack.c.bf16 %v398, %v397
  %v450 = vpack.c.bf16 %v400, %v399
  %v451 = vpack.c.bf16 %v402, %v401
  %v452 = vpack.c.bf16 %v404, %v403
  %v453 = vpack.c.bf16 %v406, %v405
  %v454 = vpack.c.bf16 %v408, %v407
  %v455 = vpack.c.bf16 %v410, %v409
  %v456 = vpack.c.bf16 %v412, %v411
  %v457 = vpack.c.bf16 %v414, %v413
  %v458 = vpack.c.bf16 %v416, %v415
  %v459 = vpack.c.bf16 %v418, %v417
  %v460 = vpack.c.bf16 %v420, %v419
  %v461 = vpack.c.bf16 %v422, %v421
  %v462 = vpack.c.bf16 %v424, %v423
  %v463 = vpack.c.bf16 %v426, %v425
  %v464 = vpack.c.bf16 %v428, %v427
  %v465 = vpack.c.bf16 %v430, %v429
  %v466 = vpack.c.bf16 %v432, %v431
  %v467 = vpack.c.bf16 %v434, %v433
  %v468 = vpack.c.bf16 %v436, %v435
  %s469 = scalar_lea.vmem %s1, 2
  %v470 = vld [vmem:[%s469] sm:$0x3]
  %v472 = vsel %vm101, %v437, 0
  %v475 = vsel %vm101, %v438, 0
  %v478 = vsel %vm101, %v439, 0
  %v481 = vsel %vm101, %v440, 0
  %v484 = vsel %vm101, %v441, 0
  %v487 = vsel %vm101, %v442, 0
  %v490 = vsel %vm101, %v443, 0
  %v493 = vsel %vm101, %v444, 0
  %v496 = vsel %vm101, %v445, 0
  %v499 = vsel %vm101, %v446, 0
  %v502 = vsel %vm101, %v447, 0
  %v505 = vsel %vm101, %v448, 0
  %v508 = vsel %vm101, %v449, 0
  %v511 = vsel %vm101, %v450, 0
  %v514 = vsel %vm101, %v451, 0
  %v517 = vsel %vm101, %v452, 0
  %v520 = vsel %vm101, %v453, 0
  %v523 = vsel %vm101, %v454, 0
  %v526 = vsel %vm101, %v455, 0
  %v529 = vsel %vm101, %v456, 0
  %v532 = vsel %vm101, %v457, 0
  %v535 = vsel %vm101, %v458, 0
  %v538 = vsel %vm101, %v459, 0
  %v541 = vsel %vm101, %v460, 0
  %v544 = vsel %vm101, %v461, 0
  %v547 = vsel %vm101, %v462, 0
  %v550 = vsel %vm101, %v463, 0
  %v553 = vsel %vm101, %v464, 0
  %v556 = vsel %vm101, %v465, 0
  %v559 = vsel %vm101, %v466, 0
  %v562 = vsel %vm101, %v467, 0
  %v565 = vsel %vm101, %v468, 0
  %vm567 = vcmask 1041408
  %v569 = vsel %vm567, %v470, 0
  %571 = vmatprep.subr.bf16.mxu0 0
  %572 = vmatpush1.bf16.msra.mxu0 %v569
  %573 = vmatprep.subr.bf16.mxu0 0
  %574 = vmatpush1.bf16.msra.mxu0 0
  %575 = vmatprep.subr.bf16.mxu0 0
  %576 = vmatpush1.bf16.msra.mxu0 0
  %577 = vmatprep.subr.bf16.mxu0 0
  %578 = vmatpush1.bf16.msra.mxu0 0
  %579 = vmatprep.subr.bf16.mxu0 0
  %580 = vmatpush1.bf16.msra.mxu0 0
  %581 = vmatprep.subr.bf16.mxu0 0
  %582 = vmatpush1.bf16.msra.mxu0 0
  %583 = vmatprep.subr.bf16.mxu0 0
  %584 = vmatpush1.bf16.msra.mxu0 0
  %585 = vmatprep.subr.bf16.mxu0 0
  %586 = vmatpush1.bf16.msra.mxu0 0
  %587 = vmatprep.subr.bf16.mxu0 0
  %588 = vmatpush1.bf16.msra.mxu0 0
  %589 = vmatprep.subr.bf16.mxu0 0
  %590 = vmatpush1.bf16.msra.mxu0 0
  %591 = vmatprep.subr.bf16.mxu0 0
  %592 = vmatpush1.bf16.msra.mxu0 0
  %593 = vmatprep.subr.bf16.mxu0 0
  %594 = vmatpush1.bf16.msra.mxu0 0
  %595 = vmatprep.subr.bf16.mxu0 0
  %596 = vmatpush1.bf16.msra.mxu0 0
  %597 = vmatprep.subr.bf16.mxu0 0
  %598 = vmatpush1.bf16.msra.mxu0 0
  %599 = vmatprep.subr.bf16.mxu0 0
  %600 = vmatpush1.bf16.msra.mxu0 0
  %601 = vmatprep.subr.bf16.mxu0 0
  %602 = vmatpush1.bf16.msra.mxu0 0
  %603 = vmatprep.mubr.bf16.mxu0 0
  %604 = vmatmul.mubr.bf16.gmra.mrb[0].mxu0 %v472
  %v605 = vpop.f32.mrb[0].mxu0
  %v606 = vadd.f32 0.0, %v605
  %v607 = vpop.f32.mrb[0].mxu0
  %v608 = vpop.f32.mrb[0].mxu0
  %v609 = vadd.f32 0.0, %v608
  %v610 = vpop.f32.mrb[0].mxu0
  %611 = vmatprep.mubr.bf16.mxu0 0
  %612 = vmatmul.mubr.bf16.gmra.mrb[0].mxu0 %v475
  %v613 = vpop.f32.mrb[0].mxu0
  %v614 = vadd.f32 0.0, %v613
  %v615 = vpop.f32.mrb[0].mxu0
  %v616 = vpop.f32.mrb[0].mxu0
  %v617 = vadd.f32 0.0, %v616
  %v618 = vpop.f32.mrb[0].mxu0
  %619 = vmatprep.mubr.bf16.mxu0 0
  %620 = vmatmul.mubr.bf16.gmra.mrb[0].mxu0 %v478
  %v621 = vpop.f32.mrb[0].mxu0
  %v622 = vadd.f32 0.0, %v621
  %v623 = vpop.f32.mrb[0].mxu0
  %v624 = vpop.f32.mrb[0].mxu0
  %v625 = vadd.f32 0.0, %v624
  %v626 = vpop.f32.mrb[0].mxu0
  %627 = vmatprep.mubr.bf16.mxu0 0
  %628 = vmatmul.mubr.bf16.gmra.mrb[0].mxu0 %v481
  %v629 = vpop.f32.mrb[0].mxu0
  %v630 = vadd.f32 0.0, %v629
  %v631 = vpop.f32.mrb[0].mxu0
  %v632 = vpop.f32.mrb[0].mxu0
  %v633 = vadd.f32 0.0, %v632
  %v634 = vpop.f32.mrb[0].mxu0
  %635 = vmatprep.mubr.bf16.mxu0 0
  %636 = vmatmul.mubr.bf16.gmra.mrb[0].mxu0 %v484
  %v637 = vpop.f32.mrb[0].mxu0
  %v638 = vadd.f32 0.0, %v637
  %v639 = vpop.f32.mrb[0].mxu0
  %v640 = vpop.f32.mrb[0].mxu0
  %v641 = vadd.f32 0.0, %v640
  %v642 = vpop.f32.mrb[0].mxu0
  %643 = vmatprep.mubr.bf16.mxu0 0
  %644 = vmatmul.mubr.bf16.gmra.mrb[0].mxu0 %v487
  %v645 = vpop.f32.mrb[0].mxu0
  %v646 = vadd.f32 0.0, %v645
  %v647 = vpop.f32.mrb[0].mxu0
  %v648 = vpop.f32.mrb[0].mxu0
  %v649 = vadd.f32 0.0, %v648
  %v650 = vpop.f32.mrb[0].mxu0
  %651 = vmatprep.mubr.bf16.mxu0 0
  %652 = vmatmul.mubr.bf16.gmra.mrb[0].mxu0 %v490
  %v653 = vpop.f32.mrb[0].mxu0
  %v654 = vadd.f32 0.0, %v653
  %v655 = vpop.f32.mrb[0].mxu0
  %v656 = vpop.f32.mrb[0].mxu0
  %v657 = vadd.f32 0.0, %v656
  %v658 = vpop.f32.mrb[0].mxu0
  %659 = vmatprep.mubr.bf16.mxu0 0
  %660 = vmatmul.mubr.bf16.gmra.mrb[0].mxu0 %v493
  %v661 = vpop.f32.mrb[0].mxu0
  %v662 = vadd.f32 0.0, %v661
  %v663 = vpop.f32.mrb[0].mxu0
  %v664 = vpop.f32.mrb[0].mxu0
  %v665 = vadd.f32 0.0, %v664
  %v666 = vpop.f32.mrb[0].mxu0
  %667 = vmatprep.mubr.bf16.mxu0 0
  %668 = vmatmul.mubr.bf16.gmra.mrb[0].mxu0 %v496
  %v669 = vpop.f32.mrb[0].mxu0
  %v670 = vadd.f32 0.0, %v669
  %v671 = vpop.f32.mrb[0].mxu0
  %v672 = vpop.f32.mrb[0].mxu0
  %v673 = vadd.f32 0.0, %v672
  %v674 = vpop.f32.mrb[0].mxu0
  %675 = vmatprep.mubr.bf16.mxu0 0
  %676 = vmatmul.mubr.bf16.gmra.mrb[0].mxu0 %v499
  %v677 = vpop.f32.mrb[0].mxu0
  %v678 = vadd.f32 0.0, %v677
  %v679 = vpop.f32.mrb[0].mxu0
  %v680 = vpop.f32.mrb[0].mxu0
  %v681 = vadd.f32 0.0, %v680
  %v682 = vpop.f32.mrb[0].mxu0
  %683 = vmatprep.mubr.bf16.mxu0 0
  %684 = vmatmul.mubr.bf16.gmra.mrb[0].mxu0 %v502
  %v685 = vpop.f32.mrb[0].mxu0
  %v686 = vadd.f32 0.0, %v685
  %v687 = vpop.f32.mrb[0].mxu0
  %v688 = vpop.f32.mrb[0].mxu0
  %v689 = vadd.f32 0.0, %v688
  %v690 = vpop.f32.mrb[0].mxu0
  %691 = vmatprep.mubr.bf16.mxu0 0
  %692 = vmatmul.mubr.bf16.gmra.mrb[0].mxu0 %v505
  %v693 = vpop.f32.mrb[0].mxu0
  %v694 = vadd.f32 0.0, %v693
  %v695 = vpop.f32.mrb[0].mxu0
  %v696 = vpop.f32.mrb[0].mxu0
  %v697 = vadd.f32 0.0, %v696
  %v698 = vpop.f32.mrb[0].mxu0
  %699 = vmatprep.mubr.bf16.mxu0 0
  %700 = vmatmul.mubr.bf16.gmra.mrb[0].mxu0 %v508
  %v701 = vpop.f32.mrb[0].mxu0
  %v702 = vadd.f32 0.0, %v701
  %v703 = vpop.f32.mrb[0].mxu0
  %v704 = vpop.f32.mrb[0].mxu0
  %v705 = vadd.f32 0.0, %v704
  %v706 = vpop.f32.mrb[0].mxu0
  %707 = vmatprep.mubr.bf16.mxu0 0
  %708 = vmatmul.mubr.bf16.gmra.mrb[0].mxu0 %v511
  %v709 = vpop.f32.mrb[0].mxu0
  %v710 = vadd.f32 0.0, %v709
  %v711 = vpop.f32.mrb[0].mxu0
  %v712 = vpop.f32.mrb[0].mxu0
  %v713 = vadd.f32 0.0, %v712
  %v714 = vpop.f32.mrb[0].mxu0
  %715 = vmatprep.mubr.bf16.mxu0 0
  %716 = vmatmul.mubr.bf16.gmra.mrb[0].mxu0 %v514
  %v717 = vpop.f32.mrb[0].mxu0
  %v718 = vadd.f32 0.0, %v717
  %v719 = vpop.f32.mrb[0].mxu0
  %v720 = vpop.f32.mrb[0].mxu0
  %v721 = vadd.f32 0.0, %v720
  %v722 = vpop.f32.mrb[0].mxu0
  %723 = vmatprep.mubr.bf16.mxu0 0
  %724 = vmatmul.mubr.bf16.gmra.mrb[0].mxu0 %v517
  %v725 = vpop.f32.mrb[0].mxu0
  %v726 = vadd.f32 0.0, %v725
  %v727 = vpop.f32.mrb[0].mxu0
  %v728 = vpop.f32.mrb[0].mxu0
  %v729 = vadd.f32 0.0, %v728
  %v730 = vpop.f32.mrb[0].mxu0
  %731 = vmatprep.mubr.bf16.mxu0 0
  %732 = vmatmul.mubr.bf16.gmra.mrb[0].mxu0 %v520
  %v733 = vpop.f32.mrb[0].mxu0
  %v734 = vadd.f32 0.0, %v733
  %v735 = vpop.f32.mrb[0].mxu0
  %v736 = vpop.f32.mrb[0].mxu0
  %v737 = vadd.f32 0.0, %v736
  %v738 = vpop.f32.mrb[0].mxu0
  %739 = vmatprep.mubr.bf16.mxu0 0
  %740 = vmatmul.mubr.bf16.gmra.mrb[0].mxu0 %v523
  %v741 = vpop.f32.mrb[0].mxu0
  %v742 = vadd.f32 0.0, %v741
  %v743 = vpop.f32.mrb[0].mxu0
  %v744 = vpop.f32.mrb[0].mxu0
  %v745 = vadd.f32 0.0, %v744
  %v746 = vpop.f32.mrb[0].mxu0
  %747 = vmatprep.mubr.bf16.mxu0 0
  %748 = vmatmul.mubr.bf16.gmra.mrb[0].mxu0 %v526
  %v749 = vpop.f32.mrb[0].mxu0
  %v750 = vadd.f32 0.0, %v749
  %v751 = vpop.f32.mrb[0].mxu0
  %v752 = vpop.f32.mrb[0].mxu0
  %v753 = vadd.f32 0.0, %v752
  %v754 = vpop.f32.mrb[0].mxu0
  %755 = vmatprep.mubr.bf16.mxu0 0
  %756 = vmatmul.mubr.bf16.gmra.mrb[0].mxu0 %v529
  %v757 = vpop.f32.mrb[0].mxu0
  %v758 = vadd.f32 0.0, %v757
  %v759 = vpop.f32.mrb[0].mxu0
  %v760 = vpop.f32.mrb[0].mxu0
  %v761 = vadd.f32 0.0, %v760
  %v762 = vpop.f32.mrb[0].mxu0
  %763 = vmatprep.mubr.bf16.mxu0 0
  %764 = vmatmul.mubr.bf16.gmra.mrb[0].mxu0 %v532
  %v765 = vpop.f32.mrb[0].mxu0
  %v766 = vadd.f32 0.0, %v765
  %v767 = vpop.f32.mrb[0].mxu0
  %v768 = vpop.f32.mrb[0].mxu0
  %v769 = vadd.f32 0.0, %v768
  %v770 = vpop.f32.mrb[0].mxu0
  %771 = vmatprep.mubr.bf16.mxu0 0
  %772 = vmatmul.mubr.bf16.gmra.mrb[0].mxu0 %v535
  %v773 = vpop.f32.mrb[0].mxu0
  %v774 = vadd.f32 0.0, %v773
  %v775 = vpop.f32.mrb[0].mxu0
  %v776 = vpop.f32.mrb[0].mxu0
  %v777 = vadd.f32 0.0, %v776
  %v778 = vpop.f32.mrb[0].mxu0
  %779 = vmatprep.mubr.bf16.mxu0 0
  %780 = vmatmul.mubr.bf16.gmra.mrb[0].mxu0 %v538
  %v781 = vpop.f32.mrb[0].mxu0
  %v782 = vadd.f32 0.0, %v781
  %v783 = vpop.f32.mrb[0].mxu0
  %v784 = vpop.f32.mrb[0].mxu0
  %v785 = vadd.f32 0.0, %v784
  %v786 = vpop.f32.mrb[0].mxu0
  %787 = vmatprep.mubr.bf16.mxu0 0
  %788 = vmatmul.mubr.bf16.gmra.mrb[0].mxu0 %v541
  %v789 = vpop.f32.mrb[0].mxu0
  %v790 = vadd.f32 0.0, %v789
  %v791 = vpop.f32.mrb[0].mxu0
  %v792 = vpop.f32.mrb[0].mxu0
  %v793 = vadd.f32 0.0, %v792
  %v794 = vpop.f32.mrb[0].mxu0
  %795 = vmatprep.mubr.bf16.mxu0 0
  %796 = vmatmul.mubr.bf16.gmra.mrb[0].mxu0 %v544
  %v797 = vpop.f32.mrb[0].mxu0
  %v798 = vadd.f32 0.0, %v797
  %v799 = vpop.f32.mrb[0].mxu0
  %v800 = vpop.f32.mrb[0].mxu0
  %v801 = vadd.f32 0.0, %v800
  %v802 = vpop.f32.mrb[0].mxu0
  %803 = vmatprep.mubr.bf16.mxu0 0
  %804 = vmatmul.mubr.bf16.gmra.mrb[0].mxu0 %v547
  %v805 = vpop.f32.mrb[0].mxu0
  %v806 = vadd.f32 0.0, %v805
  %v807 = vpop.f32.mrb[0].mxu0
  %v808 = vpop.f32.mrb[0].mxu0
  %v809 = vadd.f32 0.0, %v808
  %v810 = vpop.f32.mrb[0].mxu0
  %811 = vmatprep.mubr.bf16.mxu0 0
  %812 = vmatmul.mubr.bf16.gmra.mrb[0].mxu0 %v550
  %v813 = vpop.f32.mrb[0].mxu0
  %v814 = vadd.f32 0.0, %v813
  %v815 = vpop.f32.mrb[0].mxu0
  %v816 = vpop.f32.mrb[0].mxu0
  %v817 = vadd.f32 0.0, %v816
  %v818 = vpop.f32.mrb[0].mxu0
  %819 = vmatprep.mubr.bf16.mxu0 0
  %820 = vmatmul.mubr.bf16.gmra.mrb[0].mxu0 %v553
  %v821 = vpop.f32.mrb[0].mxu0
  %v822 = vadd.f32 0.0, %v821
  %v823 = vpop.f32.mrb[0].mxu0
  %v824 = vpop.f32.mrb[0].mxu0
  %v825 = vadd.f32 0.0, %v824
  %v826 = vpop.f32.mrb[0].mxu0
  %827 = vmatprep.mubr.bf16.mxu0 0
  %828 = vmatmul.mubr.bf16.gmra.mrb[0].mxu0 %v556
  %v829 = vpop.f32.mrb[0].mxu0
  %v830 = vadd.f32 0.0, %v829
  %v831 = vpop.f32.mrb[0].mxu0
  %v832 = vpop.f32.mrb[0].mxu0
  %v833 = vadd.f32 0.0, %v832
  %v834 = vpop.f32.mrb[0].mxu0
  %835 = vmatprep.mubr.bf16.mxu0 0
  %836 = vmatmul.mubr.bf16.gmra.mrb[0].mxu0 %v559
  %v837 = vpop.f32.mrb[0].mxu0
  %v838 = vadd.f32 0.0, %v837
  %v839 = vpop.f32.mrb[0].mxu0
  %v840 = vpop.f32.mrb[0].mxu0
  %v841 = vadd.f32 0.0, %v840
  %v842 = vpop.f32.mrb[0].mxu0
  %843 = vmatprep.mubr.bf16.mxu0 0
  %844 = vmatmul.mubr.bf16.gmra.mrb[0].mxu0 %v562
  %v845 = vpop.f32.mrb[0].mxu0
  %v846 = vadd.f32 0.0, %v845
  %v847 = vpop.f32.mrb[0].mxu0
  %v848 = vpop.f32.mrb[0].mxu0
  %v849 = vadd.f32 0.0, %v848
  %v850 = vpop.f32.mrb[0].mxu0
  %851 = vmatprep.mubr.bf16.mxu0 0
  %852 = vmatmul.mubr.bf16.gmra.mrb[0].mxu0 %v565
  %v853 = vpop.f32.mrb[0].mxu0
  %v854 = vadd.f32 0.0, %v853
  %v855 = vpop.f32.mrb[0].mxu0
  %v856 = vpop.f32.mrb[0].mxu0
  %v857 = vadd.f32 0.0, %v856
  %v858 = vpop.f32.mrb[0].mxu0
  %859 = vdwg.mxu0
  %v861 = vsel %vm101, %v340, 0
  %v864 = vsel %vm101, %v341, 0
  %v867 = vsel %vm101, %v342, 0
  %v870 = vsel %vm101, %v343, 0
  %v873 = vsel %vm101, %v344, 0
  %v876 = vsel %vm101, %v345, 0
  %v879 = vsel %vm101, %v346, 0
  %v882 = vsel %vm101, %v347, 0
  %v885 = vsel %vm101, %v348, 0
  %v888 = vsel %vm101, %v349, 0
  %v891 = vsel %vm101, %v350, 0
  %v894 = vsel %vm101, %v351, 0
  %v897 = vsel %vm101, %v352, 0
  %v900 = vsel %vm101, %v353, 0
  %v903 = vsel %vm101, %v354, 0
  %v906 = vsel %vm101, %v355, 0
  %v909 = vsel %vm101, %v356, 0
  %v912 = vsel %vm101, %v357, 0
  %v915 = vsel %vm101, %v358, 0
  %v918 = vsel %vm101, %v359, 0
  %v921 = vsel %vm101, %v360, 0
  %v924 = vsel %vm101, %v361, 0
  %v927 = vsel %vm101, %v362, 0
  %v930 = vsel %vm101, %v363, 0
  %v933 = vsel %vm101, %v364, 0
  %v936 = vsel %vm101, %v365, 0
  %v939 = vsel %vm101, %v366, 0
  %v942 = vsel %vm101, %v367, 0
  %v945 = vsel %vm101, %v368, 0
  %v948 = vsel %vm101, %v369, 0
  %v951 = vsel %vm101, %v370, 0
  %v954 = vsel %vm101, %v371, 0
  %v957 = vsel %vm567, %v372, 0
  %959 = vmatprep.subr.bf16.mxu0 0
  %960 = vmatpush1.bf16.msra.mxu0 %v957
  %961 = vmatprep.subr.bf16.mxu0 0
  %962 = vmatpush1.bf16.msra.mxu0 0
  %963 = vmatprep.subr.bf16.mxu0 0
  %964 = vmatpush1.bf16.msra.mxu0 0
  %965 = vmatprep.subr.bf16.mxu0 0
  %966 = vmatpush1.bf16.msra.mxu0 0
  %967 = vmatprep.subr.bf16.mxu0 0
  %968 = vmatpush1.bf16.msra.mxu0 0
  %969 = vmatprep.subr.bf16.mxu0 0
  %970 = vmatpush1.bf16.msra.mxu0 0
  %971 = vmatprep.subr.bf16.mxu0 0
  %972 = vmatpush1.bf16.msra.mxu0 0
  %973 = vmatprep.subr.bf16.mxu0 0
  %974 = vmatpush1.bf16.msra.mxu0 0
  %975 = vmatprep.subr.bf16.mxu0 0
  %976 = vmatpush1.bf16.msra.mxu0 0
  %977 = vmatprep.subr.bf16.mxu0 0
  %978 = vmatpush1.bf16.msra.mxu0 0
  %979 = vmatprep.subr.bf16.mxu0 0
  %980 = vmatpush1.bf16.msra.mxu0 0
  %981 = vmatprep.subr.bf16.mxu0 0
  %982 = vmatpush1.bf16.msra.mxu0 0
  %983 = vmatprep.subr.bf16.mxu0 0
  %984 = vmatpush1.bf16.msra.mxu0 0
  %985 = vmatprep.subr.bf16.mxu0 0
  %986 = vmatpush1.bf16.msra.mxu0 0
  %987 = vmatprep.subr.bf16.mxu0 0
  %988 = vmatpush1.bf16.msra.mxu0 0
  %989 = vmatprep.subr.bf16.mxu0 0
  %990 = vmatpush1.bf16.msra.mxu0 0
  %991 = vmatprep.mubr.bf16.mxu0 0
  %992 = vmatmul.mubr.bf16.gmra.mrb[0].mxu0 %v861
  %v993 = vpop.f32.mrb[0].mxu0
  %v994 = vadd.f32 %v606, %v993
  %v995 = vpop.f32.mrb[0].mxu0
  %v996 = vpop.f32.mrb[0].mxu0
  %v997 = vadd.f32 %v609, %v996
  %v998 = vpop.f32.mrb[0].mxu0
  %999 = vmatprep.mubr.bf16.mxu0 0
  %1000 = vmatmul.mubr.bf16.gmra.mrb[0].mxu0 %v864
  %v1001 = vpop.f32.mrb[0].mxu0
  %v1002 = vadd.f32 %v614, %v1001
  %v1003 = vpop.f32.mrb[0].mxu0
  %v1004 = vpop.f32.mrb[0].mxu0
  %v1005 = vadd.f32 %v617, %v1004
  %v1006 = vpop.f32.mrb[0].mxu0
  %1007 = vmatprep.mubr.bf16.mxu0 0
  %1008 = vmatmul.mubr.bf16.gmra.mrb[0].mxu0 %v867
  %v1009 = vpop.f32.mrb[0].mxu0
  %v1010 = vadd.f32 %v622, %v1009
  %v1011 = vpop.f32.mrb[0].mxu0
  %v1012 = vpop.f32.mrb[0].mxu0
  %v1013 = vadd.f32 %v625, %v1012
  %v1014 = vpop.f32.mrb[0].mxu0
  %1015 = vmatprep.mubr.bf16.mxu0 0
  %1016 = vmatmul.mubr.bf16.gmra.mrb[0].mxu0 %v870
  %v1017 = vpop.f32.mrb[0].mxu0
  %v1018 = vadd.f32 %v630, %v1017
  %v1019 = vpop.f32.mrb[0].mxu0
  %v1020 = vpop.f32.mrb[0].mxu0
  %v1021 = vadd.f32 %v633, %v1020
  %v1022 = vpop.f32.mrb[0].mxu0
  %1023 = vmatprep.mubr.bf16.mxu0 0
  %1024 = vmatmul.mubr.bf16.gmra.mrb[0].mxu0 %v873
  %v1025 = vpop.f32.mrb[0].mxu0
  %v1026 = vadd.f32 %v638, %v1025
  %v1027 = vpop.f32.mrb[0].mxu0
  %v1028 = vpop.f32.mrb[0].mxu0
  %v1029 = vadd.f32 %v641, %v1028
  %v1030 = vpop.f32.mrb[0].mxu0
  %1031 = vmatprep.mubr.bf16.mxu0 0
  %1032 = vmatmul.mubr.bf16.gmra.mrb[0].mxu0 %v876
  %v1033 = vpop.f32.mrb[0].mxu0
  %v1034 = vadd.f32 %v646, %v1033
  %v1035 = vpop.f32.mrb[0].mxu0
  %v1036 = vpop.f32.mrb[0].mxu0
  %v1037 = vadd.f32 %v649, %v1036
  %v1038 = vpop.f32.mrb[0].mxu0
  %1039 = vmatprep.mubr.bf16.mxu0 0
  %1040 = vmatmul.mubr.bf16.gmra.mrb[0].mxu0 %v879
  %v1041 = vpop.f32.mrb[0].mxu0
  %v1042 = vadd.f32 %v654, %v1041
  %v1043 = vpop.f32.mrb[0].mxu0
  %v1044 = vpop.f32.mrb[0].mxu0
  %v1045 = vadd.f32 %v657, %v1044
  %v1046 = vpop.f32.mrb[0].mxu0
  %1047 = vmatprep.mubr.bf16.mxu0 0
  %1048 = vmatmul.mubr.bf16.gmra.mrb[0].mxu0 %v882
  %v1049 = vpop.f32.mrb[0].mxu0
  %v1050 = vadd.f32 %v662, %v1049
  %v1051 = vpop.f32.mrb[0].mxu0
  %v1052 = vpop.f32.mrb[0].mxu0
  %v1053 = vadd.f32 %v665, %v1052
  %v1054 = vpop.f32.mrb[0].mxu0
  %1055 = vmatprep.mubr.bf16.mxu0 0
  %1056 = vmatmul.mubr.bf16.gmra.mrb[0].mxu0 %v885
  %v1057 = vpop.f32.mrb[0].mxu0
  %v1058 = vadd.f32 %v670, %v1057
  %v1059 = vpop.f32.mrb[0].mxu0
  %v1060 = vpop.f32.mrb[0].mxu0
  %v1061 = vadd.f32 %v673, %v1060
  %v1062 = vpop.f32.mrb[0].mxu0
  %1063 = vmatprep.mubr.bf16.mxu0 0
  %1064 = vmatmul.mubr.bf16.gmra.mrb[0].mxu0 %v888
  %v1065 = vpop.f32.mrb[0].mxu0
  %v1066 = vadd.f32 %v678, %v1065
  %v1067 = vpop.f32.mrb[0].mxu0
  %v1068 = vpop.f32.mrb[0].mxu0
  %v1069 = vadd.f32 %v681, %v1068
  %v1070 = vpop.f32.mrb[0].mxu0
  %1071 = vmatprep.mubr.bf16.mxu0 0
  %1072 = vmatmul.mubr.bf16.gmra.mrb[0].mxu0 %v891
  %v1073 = vpop.f32.mrb[0].mxu0
  %v1074 = vadd.f32 %v686, %v1073
  %v1075 = vpop.f32.mrb[0].mxu0
  %v1076 = vpop.f32.mrb[0].mxu0
  %v1077 = vadd.f32 %v689, %v1076
  %v1078 = vpop.f32.mrb[0].mxu0
  %1079 = vmatprep.mubr.bf16.mxu0 0
  %1080 = vmatmul.mubr.bf16.gmra.mrb[0].mxu0 %v894
  %v1081 = vpop.f32.mrb[0].mxu0
  %v1082 = vadd.f32 %v694, %v1081
  %v1083 = vpop.f32.mrb[0].mxu0
  %v1084 = vpop.f32.mrb[0].mxu0
  %v1085 = vadd.f32 %v697, %v1084
  %v1086 = vpop.f32.mrb[0].mxu0
  %1087 = vmatprep.mubr.bf16.mxu0 0
  %1088 = vmatmul.mubr.bf16.gmra.mrb[0].mxu0 %v897
  %v1089 = vpop.f32.mrb[0].mxu0
  %v1090 = vadd.f32 %v702, %v1089
  %v1091 = vpop.f32.mrb[0].mxu0
  %v1092 = vpop.f32.mrb[0].mxu0
  %v1093 = vadd.f32 %v705, %v1092
  %v1094 = vpop.f32.mrb[0].mxu0
  %1095 = vmatprep.mubr.bf16.mxu0 0
  %1096 = vmatmul.mubr.bf16.gmra.mrb[0].mxu0 %v900
  %v1097 = vpop.f32.mrb[0].mxu0
  %v1098 = vadd.f32 %v710, %v1097
  %v1099 = vpop.f32.mrb[0].mxu0
  %v1100 = vpop.f32.mrb[0].mxu0
  %v1101 = vadd.f32 %v713, %v1100
  %v1102 = vpop.f32.mrb[0].mxu0
  %1103 = vmatprep.mubr.bf16.mxu0 0
  %1104 = vmatmul.mubr.bf16.gmra.mrb[0].mxu0 %v903
  %v1105 = vpop.f32.mrb[0].mxu0
  %v1106 = vadd.f32 %v718, %v1105
  %v1107 = vpop.f32.mrb[0].mxu0
  %v1108 = vpop.f32.mrb[0].mxu0
  %v1109 = vadd.f32 %v721, %v1108
  %v1110 = vpop.f32.mrb[0].mxu0
  %1111 = vmatprep.mubr.bf16.mxu0 0
  %1112 = vmatmul.mubr.bf16.gmra.mrb[0].mxu0 %v906
  %v1113 = vpop.f32.mrb[0].mxu0
  %v1114 = vadd.f32 %v726, %v1113
  %v1115 = vpop.f32.mrb[0].mxu0
  %v1116 = vpop.f32.mrb[0].mxu0
  %v1117 = vadd.f32 %v729, %v1116
  %v1118 = vpop.f32.mrb[0].mxu0
  %1119 = vmatprep.mubr.bf16.mxu0 0
  %1120 = vmatmul.mubr.bf16.gmra.mrb[0].mxu0 %v909
  %v1121 = vpop.f32.mrb[0].mxu0
  %v1122 = vadd.f32 %v734, %v1121
  %v1123 = vpop.f32.mrb[0].mxu0
  %v1124 = vpop.f32.mrb[0].mxu0
  %v1125 = vadd.f32 %v737, %v1124
  %v1126 = vpop.f32.mrb[0].mxu0
  %1127 = vmatprep.mubr.bf16.mxu0 0
  %1128 = vmatmul.mubr.bf16.gmra.mrb[0].mxu0 %v912
  %v1129 = vpop.f32.mrb[0].mxu0
  %v1130 = vadd.f32 %v742, %v1129
  %v1131 = vpop.f32.mrb[0].mxu0
  %v1132 = vpop.f32.mrb[0].mxu0
  %v1133 = vadd.f32 %v745, %v1132
  %v1134 = vpop.f32.mrb[0].mxu0
  %1135 = vmatprep.mubr.bf16.mxu0 0
  %1136 = vmatmul.mubr.bf16.gmra.mrb[0].mxu0 %v915
  %v1137 = vpop.f32.mrb[0].mxu0
  %v1138 = vadd.f32 %v750, %v1137
  %v1139 = vpop.f32.mrb[0].mxu0
  %v1140 = vpop.f32.mrb[0].mxu0
  %v1141 = vadd.f32 %v753, %v1140
  %v1142 = vpop.f32.mrb[0].mxu0
  %1143 = vmatprep.mubr.bf16.mxu0 0
  %1144 = vmatmul.mubr.bf16.gmra.mrb[0].mxu0 %v918
  %v1145 = vpop.f32.mrb[0].mxu0
  %v1146 = vadd.f32 %v758, %v1145
  %v1147 = vpop.f32.mrb[0].mxu0
  %v1148 = vpop.f32.mrb[0].mxu0
  %v1149 = vadd.f32 %v761, %v1148
  %v1150 = vpop.f32.mrb[0].mxu0
  %1151 = vmatprep.mubr.bf16.mxu0 0
  %1152 = vmatmul.mubr.bf16.gmra.mrb[0].mxu0 %v921
  %v1153 = vpop.f32.mrb[0].mxu0
  %v1154 = vadd.f32 %v766, %v1153
  %v1155 = vpop.f32.mrb[0].mxu0
  %v1156 = vpop.f32.mrb[0].mxu0
  %v1157 = vadd.f32 %v769, %v1156
  %v1158 = vpop.f32.mrb[0].mxu0
  %1159 = vmatprep.mubr.bf16.mxu0 0
  %1160 = vmatmul.mubr.bf16.gmra.mrb[0].mxu0 %v924
  %v1161 = vpop.f32.mrb[0].mxu0
  %v1162 = vadd.f32 %v774, %v1161
  %v1163 = vpop.f32.mrb[0].mxu0
  %v1164 = vpop.f32.mrb[0].mxu0
  %v1165 = vadd.f32 %v777, %v1164
  %v1166 = vpop.f32.mrb[0].mxu0
  %1167 = vmatprep.mubr.bf16.mxu0 0
  %1168 = vmatmul.mubr.bf16.gmra.mrb[0].mxu0 %v927
  %v1169 = vpop.f32.mrb[0].mxu0
  %v1170 = vadd.f32 %v782, %v1169
  %v1171 = vpop.f32.mrb[0].mxu0
  %v1172 = vpop.f32.mrb[0].mxu0
  %v1173 = vadd.f32 %v785, %v1172
  %v1174 = vpop.f32.mrb[0].mxu0
  %1175 = vmatprep.mubr.bf16.mxu0 0
  %1176 = vmatmul.mubr.bf16.gmra.mrb[0].mxu0 %v930
  %v1177 = vpop.f32.mrb[0].mxu0
  %v1178 = vadd.f32 %v790, %v1177
  %v1179 = vpop.f32.mrb[0].mxu0
  %v1180 = vpop.f32.mrb[0].mxu0
  %v1181 = vadd.f32 %v793, %v1180
  %v1182 = vpop.f32.mrb[0].mxu0
  %1183 = vmatprep.mubr.bf16.mxu0 0
  %1184 = vmatmul.mubr.bf16.gmra.mrb[0].mxu0 %v933
  %v1185 = vpop.f32.mrb[0].mxu0
  %v1186 = vadd.f32 %v798, %v1185
  %v1187 = vpop.f32.mrb[0].mxu0
  %v1188 = vpop.f32.mrb[0].mxu0
  %v1189 = vadd.f32 %v801, %v1188
  %v1190 = vpop.f32.mrb[0].mxu0
  %1191 = vmatprep.mubr.bf16.mxu0 0
  %1192 = vmatmul.mubr.bf16.gmra.mrb[0].mxu0 %v936
  %v1193 = vpop.f32.mrb[0].mxu0
  %v1194 = vadd.f32 %v806, %v1193
  %v1195 = vpop.f32.mrb[0].mxu0
  %v1196 = vpop.f32.mrb[0].mxu0
  %v1197 = vadd.f32 %v809, %v1196
  %v1198 = vpop.f32.mrb[0].mxu0
  %1199 = vmatprep.mubr.bf16.mxu0 0
  %1200 = vmatmul.mubr.bf16.gmra.mrb[0].mxu0 %v939
  %v1201 = vpop.f32.mrb[0].mxu0
  %v1202 = vadd.f32 %v814, %v1201
  %v1203 = vpop.f32.mrb[0].mxu0
  %v1204 = vpop.f32.mrb[0].mxu0
  %v1205 = vadd.f32 %v817, %v1204
  %v1206 = vpop.f32.mrb[0].mxu0
  %1207 = vmatprep.mubr.bf16.mxu0 0
  %1208 = vmatmul.mubr.bf16.gmra.mrb[0].mxu0 %v942
  %v1209 = vpop.f32.mrb[0].mxu0
  %v1210 = vadd.f32 %v822, %v1209
  %v1211 = vpop.f32.mrb[0].mxu0
  %v1212 = vpop.f32.mrb[0].mxu0
  %v1213 = vadd.f32 %v825, %v1212
  %v1214 = vpop.f32.mrb[0].mxu0
  %1215 = vmatprep.mubr.bf16.mxu0 0
  %1216 = vmatmul.mubr.bf16.gmra.mrb[0].mxu0 %v945
  %v1217 = vpop.f32.mrb[0].mxu0
  %v1218 = vadd.f32 %v830, %v1217
  %v1219 = vpop.f32.mrb[0].mxu0
  %v1220 = vpop.f32.mrb[0].mxu0
  %v1221 = vadd.f32 %v833, %v1220
  %v1222 = vpop.f32.mrb[0].mxu0
  %1223 = vmatprep.mubr.bf16.mxu0 0
  %1224 = vmatmul.mubr.bf16.gmra.mrb[0].mxu0 %v948
  %v1225 = vpop.f32.mrb[0].mxu0
  %v1226 = vadd.f32 %v838, %v1225
  %v1227 = vpop.f32.mrb[0].mxu0
  %v1228 = vpop.f32.mrb[0].mxu0
  %v1229 = vadd.f32 %v841, %v1228
  %v1230 = vpop.f32.mrb[0].mxu0
  %1231 = vmatprep.mubr.bf16.mxu0 0
  %1232 = vmatmul.mubr.bf16.gmra.mrb[0].mxu0 %v951
  %v1233 = vpop.f32.mrb[0].mxu0
  %v1234 = vadd.f32 %v846, %v1233
  %v1235 = vpop.f32.mrb[0].mxu0
  %v1236 = vpop.f32.mrb[0].mxu0
  %v1237 = vadd.f32 %v849, %v1236
  %v1238 = vpop.f32.mrb[0].mxu0
  %1239 = vmatprep.mubr.bf16.mxu0 0
  %1240 = vmatmul.mubr.bf16.gmra.mrb[0].mxu0 %v954
  %v1241 = vpop.f32.mrb[0].mxu0
  %v1242 = vadd.f32 %v854, %v1241
  %v1243 = vpop.f32.mrb[0].mxu0
  %v1244 = vpop.f32.mrb[0].mxu0
  %v1245 = vadd.f32 %v857, %v1244
  %v1246 = vpop.f32.mrb[0].mxu0
  %1247 = vdwg.mxu0
  %v1248 = vld [vmem:[#allocation2 + $0x2] sm:$0xff]
  %v1249 = vld [vmem:[#allocation2 + $0xa] sm:$0xff]
  %v1250 = vld [vmem:[#allocation2 + $0x1a] sm:$0xff]
  %v1251 = vld [vmem:[#allocation2 + $0x22] sm:$0xff]
  %v1252 = vld [vmem:[#allocation2 + $0x32] sm:$0xff]
  %v1253 = vld [vmem:[#allocation2 + $0x3a] sm:$0xff]
  %v1254 = vld [vmem:[#allocation2 + $0x4a] sm:$0xff]
  %v1255 = vld [vmem:[#allocation2 + $0x52] sm:$0xff]
  %v1256 = vld [vmem:[#allocation2 + $0x62] sm:$0xff]
  %v1257 = vld [vmem:[#allocation2 + $0x6a] sm:$0xff]
  %v1258 = vld [vmem:[#allocation2 + $0x7a] sm:$0xff]
  %v1259 = vld [vmem:[#allocation2 + $0x82] sm:$0xff]
  %v1260 = vld [vmem:[#allocation2 + $0x92] sm:$0xff]
  %v1261 = vld [vmem:[#allocation2 + $0x9a] sm:$0xff]
  %v1262 = vld [vmem:[#allocation2 + $0xaa] sm:$0xff]
  %v1263 = vld [vmem:[#allocation2 + $0xb2] sm:$0xff]
  %v1264 = vld [vmem:[#allocation2 + $0xc2] sm:$0xff]
  %v1265 = vld [vmem:[#allocation2 + $0xca] sm:$0xff]
  %v1266 = vld [vmem:[#allocation2 + $0xda] sm:$0xff]
  %v1267 = vld [vmem:[#allocation2 + $0xe2] sm:$0xff]
  %v1268 = vld [vmem:[#allocation2 + $0xf2] sm:$0xff]
  %v1269 = vld [vmem:[#allocation2 + $0xfa] sm:$0xff]
  %v1270 = vld [vmem:[#allocation2 + $0x10a] sm:$0xff]
  %v1271 = vld [vmem:[#allocation2 + $0x112] sm:$0xff]
  %v1272 = vld [vmem:[#allocation2 + $0x122] sm:$0xff]
  %v1273 = vld [vmem:[#allocation2 + $0x12a] sm:$0xff]
  %v1274 = vld [vmem:[#allocation2 + $0x13a] sm:$0xff]
  %v1275 = vld [vmem:[#allocation2 + $0x142] sm:$0xff]
  %v1276 = vld [vmem:[#allocation2 + $0x152] sm:$0xff]
  %v1277 = vld [vmem:[#allocation2 + $0x15a] sm:$0xff]
  %v1278 = vld [vmem:[#allocation2 + $0x16a] sm:$0xff]
  %v1279 = vld [vmem:[#allocation2 + $0x172] sm:$0xff]
  %v1280 = vld [vmem:[#allocation2 + $0x1b2] sm:$0xff]
  %v1281 = vld [vmem:[#allocation2 + $0x1ba] sm:$0xff]
  %v1282 = vld [vmem:[#allocation2 + $0x1ca] sm:$0xff]
  %v1283 = vld [vmem:[#allocation2 + $0x1d2] sm:$0xff]
  %v1284 = vld [vmem:[#allocation2 + $0x1e2] sm:$0xff]
  %v1285 = vld [vmem:[#allocation2 + $0x1ea] sm:$0xff]
  %v1286 = vld [vmem:[#allocation2 + $0x1fa] sm:$0xff]
  %v1287 = vld [vmem:[#allocation2 + $0x202] sm:$0xff]
  %v1288 = vld [vmem:[#allocation2 + $0x212] sm:$0xff]
  %v1289 = vld [vmem:[#allocation2 + $0x21a] sm:$0xff]
  %v1290 = vld [vmem:[#allocation2 + $0x22a] sm:$0xff]
  %v1291 = vld [vmem:[#allocation2 + $0x232] sm:$0xff]
  %v1292 = vld [vmem:[#allocation2 + $0x242] sm:$0xff]
  %v1293 = vld [vmem:[#allocation2 + $0x24a] sm:$0xff]
  %v1294 = vld [vmem:[#allocation2 + $0x25a] sm:$0xff]
  %v1295 = vld [vmem:[#allocation2 + $0x262] sm:$0xff]
  %v1296 = vld [vmem:[#allocation2 + $0x272] sm:$0xff]
  %v1297 = vld [vmem:[#allocation2 + $0x27a] sm:$0xff]
  %v1298 = vld [vmem:[#allocation2 + $0x28a] sm:$0xff]
  %v1299 = vld [vmem:[#allocation2 + $0x292] sm:$0xff]
  %v1300 = vld [vmem:[#allocation2 + $0x2a2] sm:$0xff]
  %v1301 = vld [vmem:[#allocation2 + $0x2aa] sm:$0xff]
  %v1302 = vld [vmem:[#allocation2 + $0x2ba] sm:$0xff]
  %v1303 = vld [vmem:[#allocation2 + $0x2c2] sm:$0xff]
  %v1304 = vld [vmem:[#allocation2 + $0x2d2] sm:$0xff]
  %v1305 = vld [vmem:[#allocation2 + $0x2da] sm:$0xff]
  %v1306 = vld [vmem:[#allocation2 + $0x2ea] sm:$0xff]
  %v1307 = vld [vmem:[#allocation2 + $0x2f2] sm:$0xff]
  %v1308 = vld [vmem:[#allocation2 + $0x302] sm:$0xff]
  %v1309 = vld [vmem:[#allocation2 + $0x30a] sm:$0xff]
  %v1310 = vld [vmem:[#allocation2 + $0x31a] sm:$0xff]
  %v1311 = vld [vmem:[#allocation2 + $0x322] sm:$0xff]
  %v1312 = vpack.c.bf16 %v1249, %v1248
  %v1313 = vpack.c.bf16 %v1251, %v1250
  %v1314 = vpack.c.bf16 %v1253, %v1252
  %v1315 = vpack.c.bf16 %v1255, %v1254
  %v1316 = vpack.c.bf16 %v1257, %v1256
  %v1317 = vpack.c.bf16 %v1259, %v1258
  %v1318 = vpack.c.bf16 %v1261, %v1260
  %v1319 = vpack.c.bf16 %v1263, %v1262
  %v1320 = vpack.c.bf16 %v1265, %v1264
  %v1321 = vpack.c.bf16 %v1267, %v1266
  %v1322 = vpack.c.bf16 %v1269, %v1268
  %v1323 = vpack.c.bf16 %v1271, %v1270
  %v1324 = vpack.c.bf16 %v1273, %v1272
  %v1325 = vpack.c.bf16 %v1275, %v1274
  %v1326 = vpack.c.bf16 %v1277, %v1276
  %v1327 = vpack.c.bf16 %v1279, %v1278
  %v1328 = vpack.c.bf16 %v1281, %v1280
  %v1329 = vpack.c.bf16 %v1283, %v1282
  %v1330 = vpack.c.bf16 %v1285, %v1284
  %v1331 = vpack.c.bf16 %v1287, %v1286
  %v1332 = vpack.c.bf16 %v1289, %v1288
  %v1333 = vpack.c.bf16 %v1291, %v1290
  %v1334 = vpack.c.bf16 %v1293, %v1292
  %v1335 = vpack.c.bf16 %v1295, %v1294
  %v1336 = vpack.c.bf16 %v1297, %v1296
  %v1337 = vpack.c.bf16 %v1299, %v1298
  %v1338 = vpack.c.bf16 %v1301, %v1300
  %v1339 = vpack.c.bf16 %v1303, %v1302
  %v1340 = vpack.c.bf16 %v1305, %v1304
  %v1341 = vpack.c.bf16 %v1307, %v1306
  %v1342 = vpack.c.bf16 %v1309, %v1308
  %v1343 = vpack.c.bf16 %v1311, %v1310
  %s1344 = scalar_lea.vmem %s1, 4
  %v1345 = vld [vmem:[%s1344] sm:$0x3]
  %v1347 = vsel %vm101, %v1312, 0
  %v1350 = vsel %vm101, %v1313, 0
  %v1353 = vsel %vm101, %v1314, 0
  %v1356 = vsel %vm101, %v1315, 0
  %v1359 = vsel %vm101, %v1316, 0
  %v1362 = vsel %vm101, %v1317, 0
  %v1365 = vsel %vm101, %v1318, 0
  %v1368 = vsel %vm101, %v1319, 0
  %v1371 = vsel %vm101, %v1320, 0
  %v1374 = vsel %vm101, %v1321, 0
  %v1377 = vsel %vm101, %v1322, 0
  %v1380 = vsel %vm101, %v1323, 0
  %v1383 = vsel %vm101, %v1324, 0
  %v1386 = vsel %vm101, %v1325, 0
  %v1389 = vsel %vm101, %v1326, 0
  %v1392 = vsel %vm101, %v1327, 0
  %v1395 = vsel %vm101, %v1328, 0
  %v1398 = vsel %vm101, %v1329, 0
  %v1401 = vsel %vm101, %v1330, 0
  %v1404 = vsel %vm101, %v1331, 0
  %v1407 = vsel %vm101, %v1332, 0
  %v1410 = vsel %vm101, %v1333, 0
  %v1413 = vsel %vm101, %v1334, 0
  %v1416 = vsel %vm101, %v1335, 0
  %v1419 = vsel %vm101, %v1336, 0
  %v1422 = vsel %vm101, %v1337, 0
  %v1425 = vsel %vm101, %v1338, 0
  %v1428 = vsel %vm101, %v1339, 0
  %v1431 = vsel %vm101, %v1340, 0
  %v1434 = vsel %vm101, %v1341, 0
  %v1437 = vsel %vm101, %v1342, 0
  %v1440 = vsel %vm101, %v1343, 0
  %v1443 = vsel %vm567, %v1345, 0
  %1445 = vmatprep.subr.bf16.mxu0 0
  %1446 = vmatpush1.bf16.msra.mxu0 %v1443
  %1447 = vmatprep.subr.bf16.mxu0 0
  %1448 = vmatpush1.bf16.msra.mxu0 0
  %1449 = vmatprep.subr.bf16.mxu0 0
  %1450 = vmatpush1.bf16.msra.mxu0 0
  %1451 = vmatprep.subr.bf16.mxu0 0
  %1452 = vmatpush1.bf16.msra.mxu0 0
  %1453 = vmatprep.subr.bf16.mxu0 0
  %1454 = vmatpush1.bf16.msra.mxu0 0
  %1455 = vmatprep.subr.bf16.mxu0 0
  %1456 = vmatpush1.bf16.msra.mxu0 0
  %1457 = vmatprep.subr.bf16.mxu0 0
  %1458 = vmatpush1.bf16.msra.mxu0 0
  %1459 = vmatprep.subr.bf16.mxu0 0
  %1460 = vmatpush1.bf16.msra.mxu0 0
  %1461 = vmatprep.subr.bf16.mxu0 0
  %1462 = vmatpush1.bf16.msra.mxu0 0
  %1463 = vmatprep.subr.bf16.mxu0 0
  %1464 = vmatpush1.bf16.msra.mxu0 0
  %1465 = vmatprep.subr.bf16.mxu0 0
  %1466 = vmatpush1.bf16.msra.mxu0 0
  %1467 = vmatprep.subr.bf16.mxu0 0
  %1468 = vmatpush1.bf16.msra.mxu0 0
  %1469 = vmatprep.subr.bf16.mxu0 0
  %1470 = vmatpush1.bf16.msra.mxu0 0
  %1471 = vmatprep.subr.bf16.mxu0 0
  %1472 = vmatpush1.bf16.msra.mxu0 0
  %1473 = vmatprep.subr.bf16.mxu0 0
  %1474 = vmatpush1.bf16.msra.mxu0 0
  %1475 = vmatprep.subr.bf16.mxu0 0
  %1476 = vmatpush1.bf16.msra.mxu0 0
  %1477 = vmatprep.mubr.bf16.mxu0 0
  %1478 = vmatmul.mubr.bf16.gmra.mrb[0].mxu0 %v1347
  %v1479 = vpop.f32.mrb[0].mxu0
  %v1480 = vadd.f32 0.0, %v1479
  %v1481 = vpop.f32.mrb[0].mxu0
  %v1482 = vpop.f32.mrb[0].mxu0
  %v1483 = vadd.f32 0.0, %v1482
  %v1484 = vpop.f32.mrb[0].mxu0
  %1485 = vmatprep.mubr.bf16.mxu0 0
  %1486 = vmatmul.mubr.bf16.gmra.mrb[0].mxu0 %v1350
  %v1487 = vpop.f32.mrb[0].mxu0
  %v1488 = vadd.f32 0.0, %v1487
  %v1489 = vpop.f32.mrb[0].mxu0
  %v1490 = vpop.f32.mrb[0].mxu0
  %v1491 = vadd.f32 0.0, %v1490
  %v1492 = vpop.f32.mrb[0].mxu0
  %1493 = vmatprep.mubr.bf16.mxu0 0
  %1494 = vmatmul.mubr.bf16.gmra.mrb[0].mxu0 %v1353
  %v1495 = vpop.f32.mrb[0].mxu0
  %v1496 = vadd.f32 0.0, %v1495
  %v1497 = vpop.f32.mrb[0].mxu0
  %v1498 = vpop.f32.mrb[0].mxu0
  %v1499 = vadd.f32 0.0, %v1498
  %v1500 = vpop.f32.mrb[0].mxu0
  %1501 = vmatprep.mubr.bf16.mxu0 0
  %1502 = vmatmul.mubr.bf16.gmra.mrb[0].mxu0 %v1356
  %v1503 = vpop.f32.mrb[0].mxu0
  %v1504 = vadd.f32 0.0, %v1503
  %v1505 = vpop.f32.mrb[0].mxu0
  %v1506 = vpop.f32.mrb[0].mxu0
  %v1507 = vadd.f32 0.0, %v1506
  %v1508 = vpop.f32.mrb[0].mxu0
  %1509 = vmatprep.mubr.bf16.mxu0 0
  %1510 = vmatmul.mubr.bf16.gmra.mrb[0].mxu0 %v1359
  %v1511 = vpop.f32.mrb[0].mxu0
  %v1512 = vadd.f32 0.0, %v1511
  %v1513 = vpop.f32.mrb[0].mxu0
  %v1514 = vpop.f32.mrb[0].mxu0
  %v1515 = vadd.f32 0.0, %v1514
  %v1516 = vpop.f32.mrb[0].mxu0
  %1517 = vmatprep.mubr.bf16.mxu0 0
  %1518 = vmatmul.mubr.bf16.gmra.mrb[0].mxu0 %v1362
  %v1519 = vpop.f32.mrb[0].mxu0
  %v1520 = vadd.f32 0.0, %v1519
  %v1521 = vpop.f32.mrb[0].mxu0
  %v1522 = vpop.f32.mrb[0].mxu0
  %v1523 = vadd.f32 0.0, %v1522
  %v1524 = vpop.f32.mrb[0].mxu0
  %1525 = vmatprep.mubr.bf16.mxu0 0
  %1526 = vmatmul.mubr.bf16.gmra.mrb[0].mxu0 %v1365
  %v1527 = vpop.f32.mrb[0].mxu0
  %v1528 = vadd.f32 0.0, %v1527
  %v1529 = vpop.f32.mrb[0].mxu0
  %v1530 = vpop.f32.mrb[0].mxu0
  %v1531 = vadd.f32 0.0, %v1530
  %v1532 = vpop.f32.mrb[0].mxu0
  %1533 = vmatprep.mubr.bf16.mxu0 0
  %1534 = vmatmul.mubr.bf16.gmra.mrb[0].mxu0 %v1368
  %v1535 = vpop.f32.mrb[0].mxu0
  %v1536 = vadd.f32 0.0, %v1535
  %v1537 = vpop.f32.mrb[0].mxu0
  %v1538 = vpop.f32.mrb[0].mxu0
  %v1539 = vadd.f32 0.0, %v1538
  %v1540 = vpop.f32.mrb[0].mxu0
  %1541 = vmatprep.mubr.bf16.mxu0 0
  %1542 = vmatmul.mubr.bf16.gmra.mrb[0].mxu0 %v1371
  %v1543 = vpop.f32.mrb[0].mxu0
  %v1544 = vadd.f32 0.0, %v1543
  %v1545 = vpop.f32.mrb[0].mxu0
  %v1546 = vpop.f32.mrb[0].mxu0
  %v1547 = vadd.f32 0.0, %v1546
  %v1548 = vpop.f32.mrb[0].mxu0
  %1549 = vmatprep.mubr.bf16.mxu0 0
  %1550 = vmatmul.mubr.bf16.gmra.mrb[0].mxu0 %v1374
  %v1551 = vpop.f32.mrb[0].mxu0
  %v1552 = vadd.f32 0.0, %v1551
  %v1553 = vpop.f32.mrb[0].mxu0
  %v1554 = vpop.f32.mrb[0].mxu0
  %v1555 = vadd.f32 0.0, %v1554
  %v1556 = vpop.f32.mrb[0].mxu0
  %1557 = vmatprep.mubr.bf16.mxu0 0
  %1558 = vmatmul.mubr.bf16.gmra.mrb[0].mxu0 %v1377
  %v1559 = vpop.f32.mrb[0].mxu0
  %v1560 = vadd.f32 0.0, %v1559
  %v1561 = vpop.f32.mrb[0].mxu0
  %v1562 = vpop.f32.mrb[0].mxu0
  %v1563 = vadd.f32 0.0, %v1562
  %v1564 = vpop.f32.mrb[0].mxu0
  %1565 = vmatprep.mubr.bf16.mxu0 0
  %1566 = vmatmul.mubr.bf16.gmra.mrb[0].mxu0 %v1380
  %v1567 = vpop.f32.mrb[0].mxu0
  %v1568 = vadd.f32 0.0, %v1567
  %v1569 = vpop.f32.mrb[0].mxu0
  %v1570 = vpop.f32.mrb[0].mxu0
  %v1571 = vadd.f32 0.0, %v1570
  %v1572 = vpop.f32.mrb[0].mxu0
  %1573 = vmatprep.mubr.bf16.mxu0 0
  %1574 = vmatmul.mubr.bf16.gmra.mrb[0].mxu0 %v1383
  %v1575 = vpop.f32.mrb[0].mxu0
  %v1576 = vadd.f32 0.0, %v1575
  %v1577 = vpop.f32.mrb[0].mxu0
  %v1578 = vpop.f32.mrb[0].mxu0
  %v1579 = vadd.f32 0.0, %v1578
  %v1580 = vpop.f32.mrb[0].mxu0
  %1581 = vmatprep.mubr.bf16.mxu0 0
  %1582 = vmatmul.mubr.bf16.gmra.mrb[0].mxu0 %v1386
  %v1583 = vpop.f32.mrb[0].mxu0
  %v1584 = vadd.f32 0.0, %v1583
  %v1585 = vpop.f32.mrb[0].mxu0
  %v1586 = vpop.f32.mrb[0].mxu0
  %v1587 = vadd.f32 0.0, %v1586
  %v1588 = vpop.f32.mrb[0].mxu0
  %1589 = vmatprep.mubr.bf16.mxu0 0
  %1590 = vmatmul.mubr.bf16.gmra.mrb[0].mxu0 %v1389
  %v1591 = vpop.f32.mrb[0].mxu0
  %v1592 = vadd.f32 0.0, %v1591
  %v1593 = vpop.f32.mrb[0].mxu0
  %v1594 = vpop.f32.mrb[0].mxu0
  %v1595 = vadd.f32 0.0, %v1594
  %v1596 = vpop.f32.mrb[0].mxu0
  %1597 = vmatprep.mubr.bf16.mxu0 0
  %1598 = vmatmul.mubr.bf16.gmra.mrb[0].mxu0 %v1392
  %v1599 = vpop.f32.mrb[0].mxu0
  %v1600 = vadd.f32 0.0, %v1599
  %v1601 = vpop.f32.mrb[0].mxu0
  %v1602 = vpop.f32.mrb[0].mxu0
  %v1603 = vadd.f32 0.0, %v1602
  %v1604 = vpop.f32.mrb[0].mxu0
  %1605 = vmatprep.mubr.bf16.mxu0 0
  %1606 = vmatmul.mubr.bf16.gmra.mrb[0].mxu0 %v1395
  %v1607 = vpop.f32.mrb[0].mxu0
  %v1608 = vadd.f32 0.0, %v1607
  %v1609 = vpop.f32.mrb[0].mxu0
  %v1610 = vpop.f32.mrb[0].mxu0
  %v1611 = vadd.f32 0.0, %v1610
  %v1612 = vpop.f32.mrb[0].mxu0
  %1613 = vmatprep.mubr.bf16.mxu0 0
  %1614 = vmatmul.mubr.bf16.gmra.mrb[0].mxu0 %v1398
  %v1615 = vpop.f32.mrb[0].mxu0
  %v1616 = vadd.f32 0.0, %v1615
  %v1617 = vpop.f32.mrb[0].mxu0
  %v1618 = vpop.f32.mrb[0].mxu0
  %v1619 = vadd.f32 0.0, %v1618
  %v1620 = vpop.f32.mrb[0].mxu0
  %1621 = vmatprep.mubr.bf16.mxu0 0
  %1622 = vmatmul.mubr.bf16.gmra.mrb[0].mxu0 %v1401
  %v1623 = vpop.f32.mrb[0].mxu0
  %v1624 = vadd.f32 0.0, %v1623
  %v1625 = vpop.f32.mrb[0].mxu0
  %v1626 = vpop.f32.mrb[0].mxu0
  %v1627 = vadd.f32 0.0, %v1626
  %v1628 = vpop.f32.mrb[0].mxu0
  %1629 = vmatprep.mubr.bf16.mxu0 0
  %1630 = vmatmul.mubr.bf16.gmra.mrb[0].mxu0 %v1404
  %v1631 = vpop.f32.mrb[0].mxu0
  %v1632 = vadd.f32 0.0, %v1631
  %v1633 = vpop.f32.mrb[0].mxu0
  %v1634 = vpop.f32.mrb[0].mxu0
  %v1635 = vadd.f32 0.0, %v1634
  %v1636 = vpop.f32.mrb[0].mxu0
  %1637 = vmatprep.mubr.bf16.mxu0 0
  %1638 = vmatmul.mubr.bf16.gmra.mrb[0].mxu0 %v1407
  %v1639 = vpop.f32.mrb[0].mxu0
  %v1640 = vadd.f32 0.0, %v1639
  %v1641 = vpop.f32.mrb[0].mxu0
  %v1642 = vpop.f32.mrb[0].mxu0
  %v1643 = vadd.f32 0.0, %v1642
  %v1644 = vpop.f32.mrb[0].mxu0
  %1645 = vmatprep.mubr.bf16.mxu0 0
  %1646 = vmatmul.mubr.bf16.gmra.mrb[0].mxu0 %v1410
  %v1647 = vpop.f32.mrb[0].mxu0
  %v1648 = vadd.f32 0.0, %v1647
  %v1649 = vpop.f32.mrb[0].mxu0
  %v1650 = vpop.f32.mrb[0].mxu0
  %v1651 = vadd.f32 0.0, %v1650
  %v1652 = vpop.f32.mrb[0].mxu0
  %1653 = vmatprep.mubr.bf16.mxu0 0
  %1654 = vmatmul.mubr.bf16.gmra.mrb[0].mxu0 %v1413
  %v1655 = vpop.f32.mrb[0].mxu0
  %v1656 = vadd.f32 0.0, %v1655
  %v1657 = vpop.f32.mrb[0].mxu0
  %v1658 = vpop.f32.mrb[0].mxu0
  %v1659 = vadd.f32 0.0, %v1658
  %v1660 = vpop.f32.mrb[0].mxu0
  %1661 = vmatprep.mubr.bf16.mxu0 0
  %1662 = vmatmul.mubr.bf16.gmra.mrb[0].mxu0 %v1416
  %v1663 = vpop.f32.mrb[0].mxu0
  %v1664 = vadd.f32 0.0, %v1663
  %v1665 = vpop.f32.mrb[0].mxu0
  %v1666 = vpop.f32.mrb[0].mxu0
  %v1667 = vadd.f32 0.0, %v1666
  %v1668 = vpop.f32.mrb[0].mxu0
  %1669 = vmatprep.mubr.bf16.mxu0 0
  %1670 = vmatmul.mubr.bf16.gmra.mrb[0].mxu0 %v1419
  %v1671 = vpop.f32.mrb[0].mxu0
  %v1672 = vadd.f32 0.0, %v1671
  %v1673 = vpop.f32.mrb[0].mxu0
  %v1674 = vpop.f32.mrb[0].mxu0
  %v1675 = vadd.f32 0.0, %v1674
  %v1676 = vpop.f32.mrb[0].mxu0
  %1677 = vmatprep.mubr.bf16.mxu0 0
  %1678 = vmatmul.mubr.bf16.gmra.mrb[0].mxu0 %v1422
  %v1679 = vpop.f32.mrb[0].mxu0
  %v1680 = vadd.f32 0.0, %v1679
  %v1681 = vpop.f32.mrb[0].mxu0
  %v1682 = vpop.f32.mrb[0].mxu0
  %v1683 = vadd.f32 0.0, %v1682
  %v1684 = vpop.f32.mrb[0].mxu0
  %1685 = vmatprep.mubr.bf16.mxu0 0
  %1686 = vmatmul.mubr.bf16.gmra.mrb[0].mxu0 %v1425
  %v1687 = vpop.f32.mrb[0].mxu0
  %v1688 = vadd.f32 0.0, %v1687
  %v1689 = vpop.f32.mrb[0].mxu0
  %v1690 = vpop.f32.mrb[0].mxu0
  %v1691 = vadd.f32 0.0, %v1690
  %v1692 = vpop.f32.mrb[0].mxu0
  %1693 = vmatprep.mubr.bf16.mxu0 0
  %1694 = vmatmul.mubr.bf16.gmra.mrb[0].mxu0 %v1428
  %v1695 = vpop.f32.mrb[0].mxu0
  %v1696 = vadd.f32 0.0, %v1695
  %v1697 = vpop.f32.mrb[0].mxu0
  %v1698 = vpop.f32.mrb[0].mxu0
  %v1699 = vadd.f32 0.0, %v1698
  %v1700 = vpop.f32.mrb[0].mxu0
  %1701 = vmatprep.mubr.bf16.mxu0 0
  %1702 = vmatmul.mubr.bf16.gmra.mrb[0].mxu0 %v1431
  %v1703 = vpop.f32.mrb[0].mxu0
  %v1704 = vadd.f32 0.0, %v1703
  %v1705 = vpop.f32.mrb[0].mxu0
  %v1706 = vpop.f32.mrb[0].mxu0
  %v1707 = vadd.f32 0.0, %v1706
  %v1708 = vpop.f32.mrb[0].mxu0
  %1709 = vmatprep.mubr.bf16.mxu0 0
  %1710 = vmatmul.mubr.bf16.gmra.mrb[0].mxu0 %v1434
  %v1711 = vpop.f32.mrb[0].mxu0
  %v1712 = vadd.f32 0.0, %v1711
  %v1713 = vpop.f32.mrb[0].mxu0
  %v1714 = vpop.f32.mrb[0].mxu0
  %v1715 = vadd.f32 0.0, %v1714
  %v1716 = vpop.f32.mrb[0].mxu0
  %1717 = vmatprep.mubr.bf16.mxu0 0
  %1718 = vmatmul.mubr.bf16.gmra.mrb[0].mxu0 %v1437
  %v1719 = vpop.f32.mrb[0].mxu0
  %v1720 = vadd.f32 0.0, %v1719
  %v1721 = vpop.f32.mrb[0].mxu0
  %v1722 = vpop.f32.mrb[0].mxu0
  %v1723 = vadd.f32 0.0, %v1722
  %v1724 = vpop.f32.mrb[0].mxu0
  %1725 = vmatprep.mubr.bf16.mxu0 0
  %1726 = vmatmul.mubr.bf16.gmra.mrb[0].mxu0 %v1440
  %v1727 = vpop.f32.mrb[0].mxu0
  %v1728 = vadd.f32 0.0, %v1727
  %v1729 = vpop.f32.mrb[0].mxu0
  %v1730 = vpop.f32.mrb[0].mxu0
  %v1731 = vadd.f32 0.0, %v1730
  %v1732 = vpop.f32.mrb[0].mxu0
  %1733 = vdwg.mxu0
  %v1734 = vadd.f32 %v994, %v1480
  %v1735 = vadd.f32 %v997, %v1483
  %v1736 = vadd.f32 %v1002, %v1488
  %v1737 = vadd.f32 %v1005, %v1491
  %v1738 = vadd.f32 %v1010, %v1496
  %v1739 = vadd.f32 %v1013, %v1499
  %v1740 = vadd.f32 %v1018, %v1504
  %v1741 = vadd.f32 %v1021, %v1507
  %v1742 = vadd.f32 %v1026, %v1512
  %v1743 = vadd.f32 %v1029, %v1515
  %v1744 = vadd.f32 %v1034, %v1520
  %v1745 = vadd.f32 %v1037, %v1523
  %v1746 = vadd.f32 %v1042, %v1528
  %v1747 = vadd.f32 %v1045, %v1531
  %v1748 = vadd.f32 %v1050, %v1536
  %v1749 = vadd.f32 %v1053, %v1539
  %v1750 = vadd.f32 %v1058, %v1544
  %v1751 = vadd.f32 %v1061, %v1547
  %v1752 = vadd.f32 %v1066, %v1552
  %v1753 = vadd.f32 %v1069, %v1555
  %v1754 = vadd.f32 %v1074, %v1560
  %v1755 = vadd.f32 %v1077, %v1563
  %v1756 = vadd.f32 %v1082, %v1568
  %v1757 = vadd.f32 %v1085, %v1571
  %v1758 = vadd.f32 %v1090, %v1576
  %v1759 = vadd.f32 %v1093, %v1579
  %v1760 = vadd.f32 %v1098, %v1584
  %v1761 = vadd.f32 %v1101, %v1587
  %v1762 = vadd.f32 %v1106, %v1592
  %v1763 = vadd.f32 %v1109, %v1595
  %v1764 = vadd.f32 %v1114, %v1600
  %v1765 = vadd.f32 %v1117, %v1603
  %v1766 = vadd.f32 %v1122, %v1608
  %v1767 = vadd.f32 %v1125, %v1611
  %v1768 = vadd.f32 %v1130, %v1616
  %v1769 = vadd.f32 %v1133, %v1619
  %v1770 = vadd.f32 %v1138, %v1624
  %v1771 = vadd.f32 %v1141, %v1627
  %v1772 = vadd.f32 %v1146, %v1632
  %v1773 = vadd.f32 %v1149, %v1635
  %v1774 = vadd.f32 %v1154, %v1640
  %v1775 = vadd.f32 %v1157, %v1643
  %v1776 = vadd.f32 %v1162, %v1648
  %v1777 = vadd.f32 %v1165, %v1651
  %v1778 = vadd.f32 %v1170, %v1656
  %v1779 = vadd.f32 %v1173, %v1659
  %v1780 = vadd.f32 %v1178, %v1664
  %v1781 = vadd.f32 %v1181, %v1667
  %v1782 = vadd.f32 %v1186, %v1672
  %v1783 = vadd.f32 %v1189, %v1675
  %v1784 = vadd.f32 %v1194, %v1680
  %v1785 = vadd.f32 %v1197, %v1683
  %v1786 = vadd.f32 %v1202, %v1688
  %v1787 = vadd.f32 %v1205, %v1691
  %v1788 = vadd.f32 %v1210, %v1696
  %v1789 = vadd.f32 %v1213, %v1699
  %v1790 = vadd.f32 %v1218, %v1704
  %v1791 = vadd.f32 %v1221, %v1707
  %v1792 = vadd.f32 %v1226, %v1712
  %v1793 = vadd.f32 %v1229, %v1715
  %v1794 = vadd.f32 %v1234, %v1720
  %v1795 = vadd.f32 %v1237, %v1723
  %v1796 = vadd.f32 %v1242, %v1728
  %v1797 = vadd.f32 %v1245, %v1731
  %v1798 = vld [vmem:[%s211] sm:$0xff]
  %v1799 = vld [vmem:[%s211 + $0x8] sm:$0xff]
  %v1800 = vld [vmem:[%s211 + $0x18] sm:$0xff]
  %v1801 = vld [vmem:[%s211 + $0x20] sm:$0xff]
  %v1802 = vld [vmem:[%s211 + $0x30] sm:$0xff]
  %v1803 = vld [vmem:[%s211 + $0x38] sm:$0xff]
  %v1804 = vld [vmem:[%s211 + $0x48] sm:$0xff]
  %v1805 = vld [vmem:[%s211 + $0x50] sm:$0xff]
  %v1806 = vld [vmem:[%s211 + $0x60] sm:$0xff]
  %v1807 = vld [vmem:[%s211 + $0x68] sm:$0xff]
  %v1808 = vld [vmem:[%s211 + $0x78] sm:$0xff]
  %v1809 = vld [vmem:[%s211 + $0x80] sm:$0xff]
  %v1810 = vld [vmem:[%s211 + $0x90] sm:$0xff]
  %v1811 = vld [vmem:[%s211 + $0x98] sm:$0xff]
  %v1812 = vld [vmem:[%s211 + $0xa8] sm:$0xff]
  %v1813 = vld [vmem:[%s211 + $0xb0] sm:$0xff]
  %v1814 = vld [vmem:[%s211 + $0xc0] sm:$0xff]
  %v1815 = vld [vmem:[%s211 + $0xc8] sm:$0xff]
  %v1816 = vld [vmem:[%s211 + $0xd8] sm:$0xff]
  %v1817 = vld [vmem:[%s211 + $0xe0] sm:$0xff]
  %v1818 = vld [vmem:[%s211 + $0xf0] sm:$0xff]
  %v1819 = vld [vmem:[%s211 + $0xf8] sm:$0xff]
  %v1820 = vld [vmem:[%s211 + $0x108] sm:$0xff]
  %v1821 = vld [vmem:[%s211 + $0x110] sm:$0xff]
  %v1822 = vld [vmem:[%s211 + $0x120] sm:$0xff]
  %v1823 = vld [vmem:[%s211 + $0x128] sm:$0xff]
  %v1824 = vld [vmem:[%s211 + $0x138] sm:$0xff]
  %v1825 = vld [vmem:[%s211 + $0x140] sm:$0xff]
  %v1826 = vld [vmem:[%s211 + $0x150] sm:$0xff]
  %v1827 = vld [vmem:[%s211 + $0x158] sm:$0xff]
  %v1828 = vld [vmem:[%s211 + $0x168] sm:$0xff]
  %v1829 = vld [vmem:[%s211 + $0x170] sm:$0xff]
  %v1830 = vld [vmem:[%s211 + $0x1b0] sm:$0xff]
  %v1831 = vld [vmem:[%s211 + $0x1b8] sm:$0xff]
  %v1832 = vld [vmem:[%s211 + $0x1c8] sm:$0xff]
  %v1833 = vld [vmem:[%s211 + $0x1d0] sm:$0xff]
  %v1834 = vld [vmem:[%s211 + $0x1e0] sm:$0xff]
  %v1835 = vld [vmem:[%s211 + $0x1e8] sm:$0xff]
  %v1836 = vld [vmem:[%s211 + $0x1f8] sm:$0xff]
  %v1837 = vld [vmem:[%s211 + $0x200] sm:$0xff]
  %v1838 = vld [vmem:[%s211 + $0x210] sm:$0xff]
  %v1839 = vld [vmem:[%s211 + $0x218] sm:$0xff]
  %v1840 = vld [vmem:[%s211 + $0x228] sm:$0xff]
  %v1841 = vld [vmem:[%s211 + $0x230] sm:$0xff]
  %v1842 = vld [vmem:[%s211 + $0x240] sm:$0xff]
  %v1843 = vld [vmem:[%s211 + $0x248] sm:$0xff]
  %v1844 = vld [vmem:[%s211 + $0x258] sm:$0xff]
  %v1845 = vld [vmem:[%s211 + $0x260] sm:$0xff]
  %v1846 = vld [vmem:[%s211 + $0x270] sm:$0xff]
  %v1847 = vld [vmem:[%s211 + $0x278] sm:$0xff]
  %v1848 = vld [vmem:[%s211 + $0x288] sm:$0xff]
  %v1849 = vld [vmem:[%s211 + $0x290] sm:$0xff]
  %v1850 = vld [vmem:[%s211 + $0x2a0] sm:$0xff]
  %v1851 = vld [vmem:[%s211 + $0x2a8] sm:$0xff]
  %v1852 = vld [vmem:[%s211 + $0x2b8] sm:$0xff]
  %v1853 = vld [vmem:[%s211 + $0x2c0] sm:$0xff]
  %v1854 = vld [vmem:[%s211 + $0x2d0] sm:$0xff]
  %v1855 = vld [vmem:[%s211 + $0x2d8] sm:$0xff]
  %v1856 = vld [vmem:[%s211 + $0x2e8] sm:$0xff]
  %v1857 = vld [vmem:[%s211 + $0x2f0] sm:$0xff]
  %v1858 = vld [vmem:[%s211 + $0x300] sm:$0xff]
  %v1859 = vld [vmem:[%s211 + $0x308] sm:$0xff]
  %v1860 = vld [vmem:[%s211 + $0x318] sm:$0xff]
  %v1861 = vld [vmem:[%s211 + $0x320] sm:$0xff]
  %v1862 = vpack.c.bf16 %v1799, %v1798
  %v1863 = vpack.c.bf16 %v1801, %v1800
  %v1864 = vpack.c.bf16 %v1803, %v1802
  %v1865 = vpack.c.bf16 %v1805, %v1804
  %v1866 = vpack.c.bf16 %v1807, %v1806
  %v1867 = vpack.c.bf16 %v1809, %v1808
  %v1868 = vpack.c.bf16 %v1811, %v1810
  %v1869 = vpack.c.bf16 %v1813, %v1812
  %v1870 = vpack.c.bf16 %v1815, %v1814
  %v1871 = vpack.c.bf16 %v1817, %v1816
  %v1872 = vpack.c.bf16 %v1819, %v1818
  %v1873 = vpack.c.bf16 %v1821, %v1820
  %v1874 = vpack.c.bf16 %v1823, %v1822
  %v1875 = vpack.c.bf16 %v1825, %v1824
  %v1876 = vpack.c.bf16 %v1827, %v1826
  %v1877 = vpack.c.bf16 %v1829, %v1828
  %v1878 = vpack.c.bf16 %v1831, %v1830
  %v1879 = vpack.c.bf16 %v1833, %v1832
  %v1880 = vpack.c.bf16 %v1835, %v1834
  %v1881 = vpack.c.bf16 %v1837, %v1836
  %v1882 = vpack.c.bf16 %v1839, %v1838
  %v1883 = vpack.c.bf16 %v1841, %v1840
  %v1884 = vpack.c.bf16 %v1843, %v1842
  %v1885 = vpack.c.bf16 %v1845, %v1844
  %v1886 = vpack.c.bf16 %v1847, %v1846
  %v1887 = vpack.c.bf16 %v1849, %v1848
  %v1888 = vpack.c.bf16 %v1851, %v1850
  %v1889 = vpack.c.bf16 %v1853, %v1852
  %v1890 = vpack.c.bf16 %v1855, %v1854
  %v1891 = vpack.c.bf16 %v1857, %v1856
  %v1892 = vpack.c.bf16 %v1859, %v1858
  %v1893 = vpack.c.bf16 %v1861, %v1860
  %s1894 = scalar_lea.vmem %s1, 6
  %v1895 = vld [vmem:[%s1894] sm:$0x3]
  %v1897 = vsel %vm101, %v1862, 0
  %v1900 = vsel %vm101, %v1863, 0
  %v1903 = vsel %vm101, %v1864, 0
  %v1906 = vsel %vm101, %v1865, 0
  %v1909 = vsel %vm101, %v1866, 0
  %v1912 = vsel %vm101, %v1867, 0
  %v1915 = vsel %vm101, %v1868, 0
  %v1918 = vsel %vm101, %v1869, 0
  %v1921 = vsel %vm101, %v1870, 0
  %v1924 = vsel %vm101, %v1871, 0
  %v1927 = vsel %vm101, %v1872, 0
  %v1930 = vsel %vm101, %v1873, 0
  %v1933 = vsel %vm101, %v1874, 0
  %v1936 = vsel %vm101, %v1875, 0
  %v1939 = vsel %vm101, %v1876, 0
  %v1942 = vsel %vm101, %v1877, 0
  %v1945 = vsel %vm101, %v1878, 0
  %v1948 = vsel %vm101, %v1879, 0
  %v1951 = vsel %vm101, %v1880, 0
  %v1954 = vsel %vm101, %v1881, 0
  %v1957 = vsel %vm101, %v1882, 0
  %v1960 = vsel %vm101, %v1883, 0
  %v1963 = vsel %vm101, %v1884, 0
  %v1966 = vsel %vm101, %v1885, 0
  %v1969 = vsel %vm101, %v1886, 0
  %v1972 = vsel %vm101, %v1887, 0
  %v1975 = vsel %vm101, %v1888, 0
  %v1978 = vsel %vm101, %v1889, 0
  %v1981 = vsel %vm101, %v1890, 0
  %v1984 = vsel %vm101, %v1891, 0
  %v1987 = vsel %vm101, %v1892, 0
  %v1990 = vsel %vm101, %v1893, 0
  %v1993 = vsel %vm567, %v1895, 0
  %1995 = vmatprep.subr.bf16.mxu0 0
  %1996 = vmatpush1.bf16.msra.mxu0 %v1993
  %1997 = vmatprep.subr.bf16.mxu0 0
  %1998 = vmatpush1.bf16.msra.mxu0 0
  %1999 = vmatprep.subr.bf16.mxu0 0
  %2000 = vmatpush1.bf16.msra.mxu0 0
  %2001 = vmatprep.subr.bf16.mxu0 0
  %2002 = vmatpush1.bf16.msra.mxu0 0
  %2003 = vmatprep.subr.bf16.mxu0 0
  %2004 = vmatpush1.bf16.msra.mxu0 0
  %2005 = vmatprep.subr.bf16.mxu0 0
  %2006 = vmatpush1.bf16.msra.mxu0 0
  %2007 = vmatprep.subr.bf16.mxu0 0
  %2008 = vmatpush1.bf16.msra.mxu0 0
  %2009 = vmatprep.subr.bf16.mxu0 0
  %2010 = vmatpush1.bf16.msra.mxu0 0
  %2011 = vmatprep.subr.bf16.mxu0 0
  %2012 = vmatpush1.bf16.msra.mxu0 0
  %2013 = vmatprep.subr.bf16.mxu0 0
  %2014 = vmatpush1.bf16.msra.mxu0 0
  %2015 = vmatprep.subr.bf16.mxu0 0
  %2016 = vmatpush1.bf16.msra.mxu0 0
  %2017 = vmatprep.subr.bf16.mxu0 0
  %2018 = vmatpush1.bf16.msra.mxu0 0
  %2019 = vmatprep.subr.bf16.mxu0 0
  %2020 = vmatpush1.bf16.msra.mxu0 0
  %2021 = vmatprep.subr.bf16.mxu0 0
  %2022 = vmatpush1.bf16.msra.mxu0 0
  %2023 = vmatprep.subr.bf16.mxu0 0
  %2024 = vmatpush1.bf16.msra.mxu0 0
  %2025 = vmatprep.subr.bf16.mxu0 0
  %2026 = vmatpush1.bf16.msra.mxu0 0
  %2027 = vmatprep.mubr.bf16.mxu0 0
  %2028 = vmatmul.mubr.bf16.gmra.mrb[0].mxu0 %v1897
  %v2029 = vpop.f32.mrb[0].mxu0
  %v2030 = vadd.f32 0.0, %v2029
  %v2031 = vpop.f32.mrb[0].mxu0
  %v2032 = vpop.f32.mrb[0].mxu0
  %v2033 = vadd.f32 0.0, %v2032
  %v2034 = vpop.f32.mrb[0].mxu0
  %2035 = vmatprep.mubr.bf16.mxu0 0
  %2036 = vmatmul.mubr.bf16.gmra.mrb[0].mxu0 %v1900
  %v2037 = vpop.f32.mrb[0].mxu0
  %v2038 = vadd.f32 0.0, %v2037
  %v2039 = vpop.f32.mrb[0].mxu0
  %v2040 = vpop.f32.mrb[0].mxu0
  %v2041 = vadd.f32 0.0, %v2040
  %v2042 = vpop.f32.mrb[0].mxu0
  %2043 = vmatprep.mubr.bf16.mxu0 0
  %2044 = vmatmul.mubr.bf16.gmra.mrb[0].mxu0 %v1903
  %v2045 = vpop.f32.mrb[0].mxu0
  %v2046 = vadd.f32 0.0, %v2045
  %v2047 = vpop.f32.mrb[0].mxu0
  %v2048 = vpop.f32.mrb[0].mxu0
  %v2049 = vadd.f32 0.0, %v2048
  %v2050 = vpop.f32.mrb[0].mxu0
  %2051 = vmatprep.mubr.bf16.mxu0 0
  %2052 = vmatmul.mubr.bf16.gmra.mrb[0].mxu0 %v1906
  %v2053 = vpop.f32.mrb[0].mxu0
  %v2054 = vadd.f32 0.0, %v2053
  %v2055 = vpop.f32.mrb[0].mxu0
  %v2056 = vpop.f32.mrb[0].mxu0
  %v2057 = vadd.f32 0.0, %v2056
  %v2058 = vpop.f32.mrb[0].mxu0
  %2059 = vmatprep.mubr.bf16.mxu0 0
  %2060 = vmatmul.mubr.bf16.gmra.mrb[0].mxu0 %v1909
  %v2061 = vpop.f32.mrb[0].mxu0
  %v2062 = vadd.f32 0.0, %v2061
  %v2063 = vpop.f32.mrb[0].mxu0
  %v2064 = vpop.f32.mrb[0].mxu0
  %v2065 = vadd.f32 0.0, %v2064
  %v2066 = vpop.f32.mrb[0].mxu0
  %2067 = vmatprep.mubr.bf16.mxu0 0
  %2068 = vmatmul.mubr.bf16.gmra.mrb[0].mxu0 %v1912
  %v2069 = vpop.f32.mrb[0].mxu0
  %v2070 = vadd.f32 0.0, %v2069
  %v2071 = vpop.f32.mrb[0].mxu0
  %v2072 = vpop.f32.mrb[0].mxu0
  %v2073 = vadd.f32 0.0, %v2072
  %v2074 = vpop.f32.mrb[0].mxu0
  %2075 = vmatprep.mubr.bf16.mxu0 0
  %2076 = vmatmul.mubr.bf16.gmra.mrb[0].mxu0 %v1915
  %v2077 = vpop.f32.mrb[0].mxu0
  %v2078 = vadd.f32 0.0, %v2077
  %v2079 = vpop.f32.mrb[0].mxu0
  %v2080 = vpop.f32.mrb[0].mxu0
  %v2081 = vadd.f32 0.0, %v2080
  %v2082 = vpop.f32.mrb[0].mxu0
  %2083 = vmatprep.mubr.bf16.mxu0 0
  %2084 = vmatmul.mubr.bf16.gmra.mrb[0].mxu0 %v1918
  %v2085 = vpop.f32.mrb[0].mxu0
  %v2086 = vadd.f32 0.0, %v2085
  %v2087 = vpop.f32.mrb[0].mxu0
  %v2088 = vpop.f32.mrb[0].mxu0
  %v2089 = vadd.f32 0.0, %v2088
  %v2090 = vpop.f32.mrb[0].mxu0
  %2091 = vmatprep.mubr.bf16.mxu0 0
  %2092 = vmatmul.mubr.bf16.gmra.mrb[0].mxu0 %v1921
  %v2093 = vpop.f32.mrb[0].mxu0
  %v2094 = vadd.f32 0.0, %v2093
  %v2095 = vpop.f32.mrb[0].mxu0
  %v2096 = vpop.f32.mrb[0].mxu0
  %v2097 = vadd.f32 0.0, %v2096
  %v2098 = vpop.f32.mrb[0].mxu0
  %2099 = vmatprep.mubr.bf16.mxu0 0
  %2100 = vmatmul.mubr.bf16.gmra.mrb[0].mxu0 %v1924
  %v2101 = vpop.f32.mrb[0].mxu0
  %v2102 = vadd.f32 0.0, %v2101
  %v2103 = vpop.f32.mrb[0].mxu0
  %v2104 = vpop.f32.mrb[0].mxu0
  %v2105 = vadd.f32 0.0, %v2104
  %v2106 = vpop.f32.mrb[0].mxu0
  %2107 = vmatprep.mubr.bf16.mxu0 0
  %2108 = vmatmul.mubr.bf16.gmra.mrb[0].mxu0 %v1927
  %v2109 = vpop.f32.mrb[0].mxu0
  %v2110 = vadd.f32 0.0, %v2109
  %v2111 = vpop.f32.mrb[0].mxu0
  %v2112 = vpop.f32.mrb[0].mxu0
  %v2113 = vadd.f32 0.0, %v2112
  %v2114 = vpop.f32.mrb[0].mxu0
  %2115 = vmatprep.mubr.bf16.mxu0 0
  %2116 = vmatmul.mubr.bf16.gmra.mrb[0].mxu0 %v1930
  %v2117 = vpop.f32.mrb[0].mxu0
  %v2118 = vadd.f32 0.0, %v2117
  %v2119 = vpop.f32.mrb[0].mxu0
  %v2120 = vpop.f32.mrb[0].mxu0
  %v2121 = vadd.f32 0.0, %v2120
  %v2122 = vpop.f32.mrb[0].mxu0
  %2123 = vmatprep.mubr.bf16.mxu0 0
  %2124 = vmatmul.mubr.bf16.gmra.mrb[0].mxu0 %v1933
  %v2125 = vpop.f32.mrb[0].mxu0
  %v2126 = vadd.f32 0.0, %v2125
  %v2127 = vpop.f32.mrb[0].mxu0
  %v2128 = vpop.f32.mrb[0].mxu0
  %v2129 = vadd.f32 0.0, %v2128
  %v2130 = vpop.f32.mrb[0].mxu0
  %2131 = vmatprep.mubr.bf16.mxu0 0
  %2132 = vmatmul.mubr.bf16.gmra.mrb[0].mxu0 %v1936
  %v2133 = vpop.f32.mrb[0].mxu0
  %v2134 = vadd.f32 0.0, %v2133
  %v2135 = vpop.f32.mrb[0].mxu0
  %v2136 = vpop.f32.mrb[0].mxu0
  %v2137 = vadd.f32 0.0, %v2136
  %v2138 = vpop.f32.mrb[0].mxu0
  %2139 = vmatprep.mubr.bf16.mxu0 0
  %2140 = vmatmul.mubr.bf16.gmra.mrb[0].mxu0 %v1939
  %v2141 = vpop.f32.mrb[0].mxu0
  %v2142 = vadd.f32 0.0, %v2141
  %v2143 = vpop.f32.mrb[0].mxu0
  %v2144 = vpop.f32.mrb[0].mxu0
  %v2145 = vadd.f32 0.0, %v2144
  %v2146 = vpop.f32.mrb[0].mxu0
  %2147 = vmatprep.mubr.bf16.mxu0 0
  %2148 = vmatmul.mubr.bf16.gmra.mrb[0].mxu0 %v1942
  %v2149 = vpop.f32.mrb[0].mxu0
  %v2150 = vadd.f32 0.0, %v2149
  %v2151 = vpop.f32.mrb[0].mxu0
  %v2152 = vpop.f32.mrb[0].mxu0
  %v2153 = vadd.f32 0.0, %v2152
  %v2154 = vpop.f32.mrb[0].mxu0
  %2155 = vmatprep.mubr.bf16.mxu0 0
  %2156 = vmatmul.mubr.bf16.gmra.mrb[0].mxu0 %v1945
  %v2157 = vpop.f32.mrb[0].mxu0
  %v2158 = vadd.f32 0.0, %v2157
  %v2159 = vpop.f32.mrb[0].mxu0
  %v2160 = vpop.f32.mrb[0].mxu0
  %v2161 = vadd.f32 0.0, %v2160
  %v2162 = vpop.f32.mrb[0].mxu0
  %2163 = vmatprep.mubr.bf16.mxu0 0
  %2164 = vmatmul.mubr.bf16.gmra.mrb[0].mxu0 %v1948
  %v2165 = vpop.f32.mrb[0].mxu0
  %v2166 = vadd.f32 0.0, %v2165
  %v2167 = vpop.f32.mrb[0].mxu0
  %v2168 = vpop.f32.mrb[0].mxu0
  %v2169 = vadd.f32 0.0, %v2168
  %v2170 = vpop.f32.mrb[0].mxu0
  %2171 = vmatprep.mubr.bf16.mxu0 0
  %2172 = vmatmul.mubr.bf16.gmra.mrb[0].mxu0 %v1951
  %v2173 = vpop.f32.mrb[0].mxu0
  %v2174 = vadd.f32 0.0, %v2173
  %v2175 = vpop.f32.mrb[0].mxu0
  %v2176 = vpop.f32.mrb[0].mxu0
  %v2177 = vadd.f32 0.0, %v2176
  %v2178 = vpop.f32.mrb[0].mxu0
  %2179 = vmatprep.mubr.bf16.mxu0 0
  %2180 = vmatmul.mubr.bf16.gmra.mrb[0].mxu0 %v1954
  %v2181 = vpop.f32.mrb[0].mxu0
  %v2182 = vadd.f32 0.0, %v2181
  %v2183 = vpop.f32.mrb[0].mxu0
  %v2184 = vpop.f32.mrb[0].mxu0
  %v2185 = vadd.f32 0.0, %v2184
  %v2186 = vpop.f32.mrb[0].mxu0
  %2187 = vmatprep.mubr.bf16.mxu0 0
  %2188 = vmatmul.mubr.bf16.gmra.mrb[0].mxu0 %v1957
  %v2189 = vpop.f32.mrb[0].mxu0
  %v2190 = vadd.f32 0.0, %v2189
  %v2191 = vpop.f32.mrb[0].mxu0
  %v2192 = vpop.f32.mrb[0].mxu0
  %v2193 = vadd.f32 0.0, %v2192
  %v2194 = vpop.f32.mrb[0].mxu0
  %2195 = vmatprep.mubr.bf16.mxu0 0
  %2196 = vmatmul.mubr.bf16.gmra.mrb[0].mxu0 %v1960
  %v2197 = vpop.f32.mrb[0].mxu0
  %v2198 = vadd.f32 0.0, %v2197
  %v2199 = vpop.f32.mrb[0].mxu0
  %v2200 = vpop.f32.mrb[0].mxu0
  %v2201 = vadd.f32 0.0, %v2200
  %v2202 = vpop.f32.mrb[0].mxu0
  %2203 = vmatprep.mubr.bf16.mxu0 0
  %2204 = vmatmul.mubr.bf16.gmra.mrb[0].mxu0 %v1963
  %v2205 = vpop.f32.mrb[0].mxu0
  %v2206 = vadd.f32 0.0, %v2205
  %v2207 = vpop.f32.mrb[0].mxu0
  %v2208 = vpop.f32.mrb[0].mxu0
  %v2209 = vadd.f32 0.0, %v2208
  %v2210 = vpop.f32.mrb[0].mxu0
  %2211 = vmatprep.mubr.bf16.mxu0 0
  %2212 = vmatmul.mubr.bf16.gmra.mrb[0].mxu0 %v1966
  %v2213 = vpop.f32.mrb[0].mxu0
  %v2214 = vadd.f32 0.0, %v2213
  %v2215 = vpop.f32.mrb[0].mxu0
  %v2216 = vpop.f32.mrb[0].mxu0
  %v2217 = vadd.f32 0.0, %v2216
  %v2218 = vpop.f32.mrb[0].mxu0
  %2219 = vmatprep.mubr.bf16.mxu0 0
  %2220 = vmatmul.mubr.bf16.gmra.mrb[0].mxu0 %v1969
  %v2221 = vpop.f32.mrb[0].mxu0
  %v2222 = vadd.f32 0.0, %v2221
  %v2223 = vpop.f32.mrb[0].mxu0
  %v2224 = vpop.f32.mrb[0].mxu0
  %v2225 = vadd.f32 0.0, %v2224
  %v2226 = vpop.f32.mrb[0].mxu0
  %2227 = vmatprep.mubr.bf16.mxu0 0
  %2228 = vmatmul.mubr.bf16.gmra.mrb[0].mxu0 %v1972
  %v2229 = vpop.f32.mrb[0].mxu0
  %v2230 = vadd.f32 0.0, %v2229
  %v2231 = vpop.f32.mrb[0].mxu0
  %v2232 = vpop.f32.mrb[0].mxu0
  %v2233 = vadd.f32 0.0, %v2232
  %v2234 = vpop.f32.mrb[0].mxu0
  %2235 = vmatprep.mubr.bf16.mxu0 0
  %2236 = vmatmul.mubr.bf16.gmra.mrb[0].mxu0 %v1975
  %v2237 = vpop.f32.mrb[0].mxu0
  %v2238 = vadd.f32 0.0, %v2237
  %v2239 = vpop.f32.mrb[0].mxu0
  %v2240 = vpop.f32.mrb[0].mxu0
  %v2241 = vadd.f32 0.0, %v2240
  %v2242 = vpop.f32.mrb[0].mxu0
  %2243 = vmatprep.mubr.bf16.mxu0 0
  %2244 = vmatmul.mubr.bf16.gmra.mrb[0].mxu0 %v1978
  %v2245 = vpop.f32.mrb[0].mxu0
  %v2246 = vadd.f32 0.0, %v2245
  %v2247 = vpop.f32.mrb[0].mxu0
  %v2248 = vpop.f32.mrb[0].mxu0
  %v2249 = vadd.f32 0.0, %v2248
  %v2250 = vpop.f32.mrb[0].mxu0
  %2251 = vmatprep.mubr.bf16.mxu0 0
  %2252 = vmatmul.mubr.bf16.gmra.mrb[0].mxu0 %v1981
  %v2253 = vpop.f32.mrb[0].mxu0
  %v2254 = vadd.f32 0.0, %v2253
  %v2255 = vpop.f32.mrb[0].mxu0
  %v2256 = vpop.f32.mrb[0].mxu0
  %v2257 = vadd.f32 0.0, %v2256
  %v2258 = vpop.f32.mrb[0].mxu0
  %2259 = vmatprep.mubr.bf16.mxu0 0
  %2260 = vmatmul.mubr.bf16.gmra.mrb[0].mxu0 %v1984
  %v2261 = vpop.f32.mrb[0].mxu0
  %v2262 = vadd.f32 0.0, %v2261
  %v2263 = vpop.f32.mrb[0].mxu0
  %v2264 = vpop.f32.mrb[0].mxu0
  %v2265 = vadd.f32 0.0, %v2264
  %v2266 = vpop.f32.mrb[0].mxu0
  %2267 = vmatprep.mubr.bf16.mxu0 0
  %2268 = vmatmul.mubr.bf16.gmra.mrb[0].mxu0 %v1987
  %v2269 = vpop.f32.mrb[0].mxu0
  %v2270 = vadd.f32 0.0, %v2269
  %v2271 = vpop.f32.mrb[0].mxu0
  %v2272 = vpop.f32.mrb[0].mxu0
  %v2273 = vadd.f32 0.0, %v2272
  %v2274 = vpop.f32.mrb[0].mxu0
  %2275 = vmatprep.mubr.bf16.mxu0 0
  %2276 = vmatmul.mubr.bf16.gmra.mrb[0].mxu0 %v1990
  %v2277 = vpop.f32.mrb[0].mxu0
  %v2278 = vadd.f32 0.0, %v2277
  %v2279 = vpop.f32.mrb[0].mxu0
  %v2280 = vpop.f32.mrb[0].mxu0
  %v2281 = vadd.f32 0.0, %v2280
  %v2282 = vpop.f32.mrb[0].mxu0
  %2283 = vdwg.mxu0
  %v2284 = vadd.f32 %v1734, %v2030
  %v2285 = vadd.f32 %v1735, %v2033
  %v2286 = vadd.f32 %v1736, %v2038
  %v2287 = vadd.f32 %v1737, %v2041
  %v2288 = vadd.f32 %v1738, %v2046
  %v2289 = vadd.f32 %v1739, %v2049
  %v2290 = vadd.f32 %v1740, %v2054
  %v2291 = vadd.f32 %v1741, %v2057
  %v2292 = vadd.f32 %v1742, %v2062
  %v2293 = vadd.f32 %v1743, %v2065
  %v2294 = vadd.f32 %v1744, %v2070
  %v2295 = vadd.f32 %v1745, %v2073
  %v2296 = vadd.f32 %v1746, %v2078
  %v2297 = vadd.f32 %v1747, %v2081
  %v2298 = vadd.f32 %v1748, %v2086
  %v2299 = vadd.f32 %v1749, %v2089
  %v2300 = vadd.f32 %v1750, %v2094
  %v2301 = vadd.f32 %v1751, %v2097
  %v2302 = vadd.f32 %v1752, %v2102
  %v2303 = vadd.f32 %v1753, %v2105
  %v2304 = vadd.f32 %v1754, %v2110
  %v2305 = vadd.f32 %v1755, %v2113
  %v2306 = vadd.f32 %v1756, %v2118
  %v2307 = vadd.f32 %v1757, %v2121
  %v2308 = vadd.f32 %v1758, %v2126
  %v2309 = vadd.f32 %v1759, %v2129
  %v2310 = vadd.f32 %v1760, %v2134
  %v2311 = vadd.f32 %v1761, %v2137
  %v2312 = vadd.f32 %v1762, %v2142
  %v2313 = vadd.f32 %v1763, %v2145
  %v2314 = vadd.f32 %v1764, %v2150
  %v2315 = vadd.f32 %v1765, %v2153
  %v2316 = vadd.f32 %v1766, %v2158
  %v2317 = vadd.f32 %v1767, %v2161
  %v2318 = vadd.f32 %v1768, %v2166
  %v2319 = vadd.f32 %v1769, %v2169
  %v2320 = vadd.f32 %v1770, %v2174
  %v2321 = vadd.f32 %v1771, %v2177
  %v2322 = vadd.f32 %v1772, %v2182
  %v2323 = vadd.f32 %v1773, %v2185
  %v2324 = vadd.f32 %v1774, %v2190
  %v2325 = vadd.f32 %v1775, %v2193
  %v2326 = vadd.f32 %v1776, %v2198
  %v2327 = vadd.f32 %v1777, %v2201
  %v2328 = vadd.f32 %v1778, %v2206
  %v2329 = vadd.f32 %v1779, %v2209
  %v2330 = vadd.f32 %v1780, %v2214
  %v2331 = vadd.f32 %v1781, %v2217
  %v2332 = vadd.f32 %v1782, %v2222
  %v2333 = vadd.f32 %v1783, %v2225
  %v2334 = vadd.f32 %v1784, %v2230
  %v2335 = vadd.f32 %v1785, %v2233
  %v2336 = vadd.f32 %v1786, %v2238
  %v2337 = vadd.f32 %v1787, %v2241
  %v2338 = vadd.f32 %v1788, %v2246
  %v2339 = vadd.f32 %v1789, %v2249
  %v2340 = vadd.f32 %v1790, %v2254
  %v2341 = vadd.f32 %v1791, %v2257
  %v2342 = vadd.f32 %v1792, %v2262
  %v2343 = vadd.f32 %v1793, %v2265
  %v2344 = vadd.f32 %v1794, %v2270
  %v2345 = vadd.f32 %v1795, %v2273
  %v2346 = vadd.f32 %v1796, %v2278
  %v2347 = vadd.f32 %v1797, %v2281
  %v2348 = vld [vmem:[%s211 + $0x1] sm:$0xff]
  %v2349 = vld [vmem:[%s211 + $0x9] sm:$0xff]
  %v2350 = vld [vmem:[%s211 + $0x19] sm:$0xff]
  %v2351 = vld [vmem:[%s211 + $0x21] sm:$0xff]
  %v2352 = vld [vmem:[%s211 + $0x31] sm:$0xff]
  %v2353 = vld [vmem:[%s211 + $0x39] sm:$0xff]
  %v2354 = vld [vmem:[%s211 + $0x49] sm:$0xff]
  %v2355 = vld [vmem:[%s211 + $0x51] sm:$0xff]
  %v2356 = vld [vmem:[%s211 + $0x61] sm:$0xff]
  %v2357 = vld [vmem:[%s211 + $0x69] sm:$0xff]
  %v2358 = vld [vmem:[%s211 + $0x79] sm:$0xff]
  %v2359 = vld [vmem:[%s211 + $0x81] sm:$0xff]
  %v2360 = vld [vmem:[%s211 + $0x91] sm:$0xff]
  %v2361 = vld [vmem:[%s211 + $0x99] sm:$0xff]
  %v2362 = vld [vmem:[%s211 + $0xa9] sm:$0xff]
  %v2363 = vld [vmem:[%s211 + $0xb1] sm:$0xff]
  %v2364 = vld [vmem:[%s211 + $0xc1] sm:$0xff]
  %v2365 = vld [vmem:[%s211 + $0xc9] sm:$0xff]
  %v2366 = vld [vmem:[%s211 + $0xd9] sm:$0xff]
  %v2367 = vld [vmem:[%s211 + $0xe1] sm:$0xff]
  %v2368 = vld [vmem:[%s211 + $0xf1] sm:$0xff]
  %v2369 = vld [vmem:[%s211 + $0xf9] sm:$0xff]
  %v2370 = vld [vmem:[%s211 + $0x109] sm:$0xff]
  %v2371 = vld [vmem:[%s211 + $0x111] sm:$0xff]
  %v2372 = vld [vmem:[%s211 + $0x121] sm:$0xff]
  %v2373 = vld [vmem:[%s211 + $0x129] sm:$0xff]
  %v2374 = vld [vmem:[%s211 + $0x139] sm:$0xff]
  %v2375 = vld [vmem:[%s211 + $0x141] sm:$0xff]
  %v2376 = vld [vmem:[%s211 + $0x151] sm:$0xff]
  %v2377 = vld [vmem:[%s211 + $0x159] sm:$0xff]
  %v2378 = vld [vmem:[%s211 + $0x169] sm:$0xff]
  %v2379 = vld [vmem:[%s211 + $0x171] sm:$0xff]
  %v2380 = vld [vmem:[%s211 + $0x1b1] sm:$0xff]
  %v2381 = vld [vmem:[%s211 + $0x1b9] sm:$0xff]
  %v2382 = vld [vmem:[%s211 + $0x1c9] sm:$0xff]
  %v2383 = vld [vmem:[%s211 + $0x1d1] sm:$0xff]
  %v2384 = vld [vmem:[%s211 + $0x1e1] sm:$0xff]
  %v2385 = vld [vmem:[%s211 + $0x1e9] sm:$0xff]
  %v2386 = vld [vmem:[%s211 + $0x1f9] sm:$0xff]
  %v2387 = vld [vmem:[%s211 + $0x201] sm:$0xff]
  %v2388 = vld [vmem:[%s211 + $0x211] sm:$0xff]
  %v2389 = vld [vmem:[%s211 + $0x219] sm:$0xff]
  %v2390 = vld [vmem:[%s211 + $0x229] sm:$0xff]
  %v2391 = vld [vmem:[%s211 + $0x231] sm:$0xff]
  %v2392 = vld [vmem:[%s211 + $0x241] sm:$0xff]
  %v2393 = vld [vmem:[%s211 + $0x249] sm:$0xff]
  %v2394 = vld [vmem:[%s211 + $0x259] sm:$0xff]
  %v2395 = vld [vmem:[%s211 + $0x261] sm:$0xff]
  %v2396 = vld [vmem:[%s211 + $0x271] sm:$0xff]
  %v2397 = vld [vmem:[%s211 + $0x279] sm:$0xff]
  %v2398 = vld [vmem:[%s211 + $0x289] sm:$0xff]
  %v2399 = vld [vmem:[%s211 + $0x291] sm:$0xff]
  %v2400 = vld [vmem:[%s211 + $0x2a1] sm:$0xff]
  %v2401 = vld [vmem:[%s211 + $0x2a9] sm:$0xff]
  %v2402 = vld [vmem:[%s211 + $0x2b9] sm:$0xff]
  %v2403 = vld [vmem:[%s211 + $0x2c1] sm:$0xff]
  %v2404 = vld [vmem:[%s211 + $0x2d1] sm:$0xff]
  %v2405 = vld [vmem:[%s211 + $0x2d9] sm:$0xff]
  %v2406 = vld [vmem:[%s211 + $0x2e9] sm:$0xff]
  %v2407 = vld [vmem:[%s211 + $0x2f1] sm:$0xff]
  %v2408 = vld [vmem:[%s211 + $0x301] sm:$0xff]
  %v2409 = vld [vmem:[%s211 + $0x309] sm:$0xff]
  %v2410 = vld [vmem:[%s211 + $0x319] sm:$0xff]
  %v2411 = vld [vmem:[%s211 + $0x321] sm:$0xff]
  %v2412 = vpack.c.bf16 %v2349, %v2348
  %v2413 = vpack.c.bf16 %v2351, %v2350
  %v2414 = vpack.c.bf16 %v2353, %v2352
  %v2415 = vpack.c.bf16 %v2355, %v2354
  %v2416 = vpack.c.bf16 %v2357, %v2356
  %v2417 = vpack.c.bf16 %v2359, %v2358
  %v2418 = vpack.c.bf16 %v2361, %v2360
  %v2419 = vpack.c.bf16 %v2363, %v2362
  %v2420 = vpack.c.bf16 %v2365, %v2364
  %v2421 = vpack.c.bf16 %v2367, %v2366
  %v2422 = vpack.c.bf16 %v2369, %v2368
  %v2423 = vpack.c.bf16 %v2371, %v2370
  %v2424 = vpack.c.bf16 %v2373, %v2372
  %v2425 = vpack.c.bf16 %v2375, %v2374
  %v2426 = vpack.c.bf16 %v2377, %v2376
  %v2427 = vpack.c.bf16 %v2379, %v2378
  %v2428 = vpack.c.bf16 %v2381, %v2380
  %v2429 = vpack.c.bf16 %v2383, %v2382
  %v2430 = vpack.c.bf16 %v2385, %v2384
  %v2431 = vpack.c.bf16 %v2387, %v2386
  %v2432 = vpack.c.bf16 %v2389, %v2388
  %v2433 = vpack.c.bf16 %v2391, %v2390
  %v2434 = vpack.c.bf16 %v2393, %v2392
  %v2435 = vpack.c.bf16 %v2395, %v2394
  %v2436 = vpack.c.bf16 %v2397, %v2396
  %v2437 = vpack.c.bf16 %v2399, %v2398
  %v2438 = vpack.c.bf16 %v2401, %v2400
  %v2439 = vpack.c.bf16 %v2403, %v2402
  %v2440 = vpack.c.bf16 %v2405, %v2404
  %v2441 = vpack.c.bf16 %v2407, %v2406
  %v2442 = vpack.c.bf16 %v2409, %v2408
  %v2443 = vpack.c.bf16 %v2411, %v2410
  %s2444 = scalar_lea.vmem %s1, 8
  %v2445 = vld [vmem:[%s2444] sm:$0x3]
  %v2447 = vsel %vm101, %v2412, 0
  %v2450 = vsel %vm101, %v2413, 0
  %v2453 = vsel %vm101, %v2414, 0
  %v2456 = vsel %vm101, %v2415, 0
  %v2459 = vsel %vm101, %v2416, 0
  %v2462 = vsel %vm101, %v2417, 0
  %v2465 = vsel %vm101, %v2418, 0
  %v2468 = vsel %vm101, %v2419, 0
  %v2471 = vsel %vm101, %v2420, 0
  %v2474 = vsel %vm101, %v2421, 0
  %v2477 = vsel %vm101, %v2422, 0
  %v2480 = vsel %vm101, %v2423, 0
  %v2483 = vsel %vm101, %v2424, 0
  %v2486 = vsel %vm101, %v2425, 0
  %v2489 = vsel %vm101, %v2426, 0
  %v2492 = vsel %vm101, %v2427, 0
  %v2495 = vsel %vm101, %v2428, 0
  %v2498 = vsel %vm101, %v2429, 0
  %v2501 = vsel %vm101, %v2430, 0
  %v2504 = vsel %vm101, %v2431, 0
  %v2507 = vsel %vm101, %v2432, 0
  %v2510 = vsel %vm101, %v2433, 0
  %v2513 = vsel %vm101, %v2434, 0
  %v2516 = vsel %vm101, %v2435, 0
  %v2519 = vsel %vm101, %v2436, 0
  %v2522 = vsel %vm101, %v2437, 0
  %v2525 = vsel %vm101, %v2438, 0
  %v2528 = vsel %vm101, %v2439, 0
  %v2531 = vsel %vm101, %v2440, 0
  %v2534 = vsel %vm101, %v2441, 0
  %v2537 = vsel %vm101, %v2442, 0
  %v2540 = vsel %vm101, %v2443, 0
  %v2543 = vsel %vm567, %v2445, 0
  %2545 = vmatprep.subr.bf16.mxu0 0
  %2546 = vmatpush1.bf16.msra.mxu0 %v2543
  %2547 = vmatprep.subr.bf16.mxu0 0
  %2548 = vmatpush1.bf16.msra.mxu0 0
  %2549 = vmatprep.subr.bf16.mxu0 0
  %2550 = vmatpush1.bf16.msra.mxu0 0
  %2551 = vmatprep.subr.bf16.mxu0 0
  %2552 = vmatpush1.bf16.msra.mxu0 0
  %2553 = vmatprep.subr.bf16.mxu0 0
  %2554 = vmatpush1.bf16.msra.mxu0 0
  %2555 = vmatprep.subr.bf16.mxu0 0
  %2556 = vmatpush1.bf16.msra.mxu0 0
  %2557 = vmatprep.subr.bf16.mxu0 0
  %2558 = vmatpush1.bf16.msra.mxu0 0
  %2559 = vmatprep.subr.bf16.mxu0 0
  %2560 = vmatpush1.bf16.msra.mxu0 0
  %2561 = vmatprep.subr.bf16.mxu0 0
  %2562 = vmatpush1.bf16.msra.mxu0 0
  %2563 = vmatprep.subr.bf16.mxu0 0
  %2564 = vmatpush1.bf16.msra.mxu0 0
  %2565 = vmatprep.subr.bf16.mxu0 0
  %2566 = vmatpush1.bf16.msra.mxu0 0
  %2567 = vmatprep.subr.bf16.mxu0 0
  %2568 = vmatpush1.bf16.msra.mxu0 0
  %2569 = vmatprep.subr.bf16.mxu0 0
  %2570 = vmatpush1.bf16.msra.mxu0 0
  %2571 = vmatprep.subr.bf16.mxu0 0
  %2572 = vmatpush1.bf16.msra.mxu0 0
  %2573 = vmatprep.subr.bf16.mxu0 0
  %2574 = vmatpush1.bf16.msra.mxu0 0
  %2575 = vmatprep.subr.bf16.mxu0 0
  %2576 = vmatpush1.bf16.msra.mxu0 0
  %2577 = vmatprep.mubr.bf16.mxu0 0
  %2578 = vmatmul.mubr.bf16.gmra.mrb[0].mxu0 %v2447
  %v2579 = vpop.f32.mrb[0].mxu0
  %v2580 = vadd.f32 0.0, %v2579
  %v2581 = vpop.f32.mrb[0].mxu0
  %v2582 = vpop.f32.mrb[0].mxu0
  %v2583 = vadd.f32 0.0, %v2582
  %v2584 = vpop.f32.mrb[0].mxu0
  %2585 = vmatprep.mubr.bf16.mxu0 0
  %2586 = vmatmul.mubr.bf16.gmra.mrb[0].mxu0 %v2450
  %v2587 = vpop.f32.mrb[0].mxu0
  %v2588 = vadd.f32 0.0, %v2587
  %v2589 = vpop.f32.mrb[0].mxu0
  %v2590 = vpop.f32.mrb[0].mxu0
  %v2591 = vadd.f32 0.0, %v2590
  %v2592 = vpop.f32.mrb[0].mxu0
  %2593 = vmatprep.mubr.bf16.mxu0 0
  %2594 = vmatmul.mubr.bf16.gmra.mrb[0].mxu0 %v2453
  %v2595 = vpop.f32.mrb[0].mxu0
  %v2596 = vadd.f32 0.0, %v2595
  %v2597 = vpop.f32.mrb[0].mxu0
  %v2598 = vpop.f32.mrb[0].mxu0
  %v2599 = vadd.f32 0.0, %v2598
  %v2600 = vpop.f32.mrb[0].mxu0
  %2601 = vmatprep.mubr.bf16.mxu0 0
  %2602 = vmatmul.mubr.bf16.gmra.mrb[0].mxu0 %v2456
  %v2603 = vpop.f32.mrb[0].mxu0
  %v2604 = vadd.f32 0.0, %v2603
  %v2605 = vpop.f32.mrb[0].mxu0
  %v2606 = vpop.f32.mrb[0].mxu0
  %v2607 = vadd.f32 0.0, %v2606
  %v2608 = vpop.f32.mrb[0].mxu0
  %2609 = vmatprep.mubr.bf16.mxu0 0
  %2610 = vmatmul.mubr.bf16.gmra.mrb[0].mxu0 %v2459
  %v2611 = vpop.f32.mrb[0].mxu0
  %v2612 = vadd.f32 0.0, %v2611
  %v2613 = vpop.f32.mrb[0].mxu0
  %v2614 = vpop.f32.mrb[0].mxu0
  %v2615 = vadd.f32 0.0, %v2614
  %v2616 = vpop.f32.mrb[0].mxu0
  %2617 = vmatprep.mubr.bf16.mxu0 0
  %2618 = vmatmul.mubr.bf16.gmra.mrb[0].mxu0 %v2462
  %v2619 = vpop.f32.mrb[0].mxu0
  %v2620 = vadd.f32 0.0, %v2619
  %v2621 = vpop.f32.mrb[0].mxu0
  %v2622 = vpop.f32.mrb[0].mxu0
  %v2623 = vadd.f32 0.0, %v2622
  %v2624 = vpop.f32.mrb[0].mxu0
  %2625 = vmatprep.mubr.bf16.mxu0 0
  %2626 = vmatmul.mubr.bf16.gmra.mrb[0].mxu0 %v2465
  %v2627 = vpop.f32.mrb[0].mxu0
  %v2628 = vadd.f32 0.0, %v2627
  %v2629 = vpop.f32.mrb[0].mxu0
  %v2630 = vpop.f32.mrb[0].mxu0
  %v2631 = vadd.f32 0.0, %v2630
  %v2632 = vpop.f32.mrb[0].mxu0
  %2633 = vmatprep.mubr.bf16.mxu0 0
  %2634 = vmatmul.mubr.bf16.gmra.mrb[0].mxu0 %v2468
  %v2635 = vpop.f32.mrb[0].mxu0
  %v2636 = vadd.f32 0.0, %v2635
  %v2637 = vpop.f32.mrb[0].mxu0
  %v2638 = vpop.f32.mrb[0].mxu0
  %v2639 = vadd.f32 0.0, %v2638
  %v2640 = vpop.f32.mrb[0].mxu0
  %2641 = vmatprep.mubr.bf16.mxu0 0
  %2642 = vmatmul.mubr.bf16.gmra.mrb[0].mxu0 %v2471
  %v2643 = vpop.f32.mrb[0].mxu0
  %v2644 = vadd.f32 0.0, %v2643
  %v2645 = vpop.f32.mrb[0].mxu0
  %v2646 = vpop.f32.mrb[0].mxu0
  %v2647 = vadd.f32 0.0, %v2646
  %v2648 = vpop.f32.mrb[0].mxu0
  %2649 = vmatprep.mubr.bf16.mxu0 0
  %2650 = vmatmul.mubr.bf16.gmra.mrb[0].mxu0 %v2474
  %v2651 = vpop.f32.mrb[0].mxu0
  %v2652 = vadd.f32 0.0, %v2651
  %v2653 = vpop.f32.mrb[0].mxu0
  %v2654 = vpop.f32.mrb[0].mxu0
  %v2655 = vadd.f32 0.0, %v2654
  %v2656 = vpop.f32.mrb[0].mxu0
  %2657 = vmatprep.mubr.bf16.mxu0 0
  %2658 = vmatmul.mubr.bf16.gmra.mrb[0].mxu0 %v2477
  %v2659 = vpop.f32.mrb[0].mxu0
  %v2660 = vadd.f32 0.0, %v2659
  %v2661 = vpop.f32.mrb[0].mxu0
  %v2662 = vpop.f32.mrb[0].mxu0
  %v2663 = vadd.f32 0.0, %v2662
  %v2664 = vpop.f32.mrb[0].mxu0
  %2665 = vmatprep.mubr.bf16.mxu0 0
  %2666 = vmatmul.mubr.bf16.gmra.mrb[0].mxu0 %v2480
  %v2667 = vpop.f32.mrb[0].mxu0
  %v2668 = vadd.f32 0.0, %v2667
  %v2669 = vpop.f32.mrb[0].mxu0
  %v2670 = vpop.f32.mrb[0].mxu0
  %v2671 = vadd.f32 0.0, %v2670
  %v2672 = vpop.f32.mrb[0].mxu0
  %2673 = vmatprep.mubr.bf16.mxu0 0
  %2674 = vmatmul.mubr.bf16.gmra.mrb[0].mxu0 %v2483
  %v2675 = vpop.f32.mrb[0].mxu0
  %v2676 = vadd.f32 0.0, %v2675
  %v2677 = vpop.f32.mrb[0].mxu0
  %v2678 = vpop.f32.mrb[0].mxu0
  %v2679 = vadd.f32 0.0, %v2678
  %v2680 = vpop.f32.mrb[0].mxu0
  %2681 = vmatprep.mubr.bf16.mxu0 0
  %2682 = vmatmul.mubr.bf16.gmra.mrb[0].mxu0 %v2486
  %v2683 = vpop.f32.mrb[0].mxu0
  %v2684 = vadd.f32 0.0, %v2683
  %v2685 = vpop.f32.mrb[0].mxu0
  %v2686 = vpop.f32.mrb[0].mxu0
  %v2687 = vadd.f32 0.0, %v2686
  %v2688 = vpop.f32.mrb[0].mxu0
  %2689 = vmatprep.mubr.bf16.mxu0 0
  %2690 = vmatmul.mubr.bf16.gmra.mrb[0].mxu0 %v2489
  %v2691 = vpop.f32.mrb[0].mxu0
  %v2692 = vadd.f32 0.0, %v2691
  %v2693 = vpop.f32.mrb[0].mxu0
  %v2694 = vpop.f32.mrb[0].mxu0
  %v2695 = vadd.f32 0.0, %v2694
  %v2696 = vpop.f32.mrb[0].mxu0
  %2697 = vmatprep.mubr.bf16.mxu0 0
  %2698 = vmatmul.mubr.bf16.gmra.mrb[0].mxu0 %v2492
  %v2699 = vpop.f32.mrb[0].mxu0
  %v2700 = vadd.f32 0.0, %v2699
  %v2701 = vpop.f32.mrb[0].mxu0
  %v2702 = vpop.f32.mrb[0].mxu0
  %v2703 = vadd.f32 0.0, %v2702
  %v2704 = vpop.f32.mrb[0].mxu0
  %2705 = vmatprep.mubr.bf16.mxu0 0
  %2706 = vmatmul.mubr.bf16.gmra.mrb[0].mxu0 %v2495
  %v2707 = vpop.f32.mrb[0].mxu0
  %v2708 = vadd.f32 0.0, %v2707
  %v2709 = vpop.f32.mrb[0].mxu0
  %v2710 = vpop.f32.mrb[0].mxu0
  %v2711 = vadd.f32 0.0, %v2710
  %v2712 = vpop.f32.mrb[0].mxu0
  %2713 = vmatprep.mubr.bf16.mxu0 0
  %2714 = vmatmul.mubr.bf16.gmra.mrb[0].mxu0 %v2498
  %v2715 = vpop.f32.mrb[0].mxu0
  %v2716 = vadd.f32 0.0, %v2715
  %v2717 = vpop.f32.mrb[0].mxu0
  %v2718 = vpop.f32.mrb[0].mxu0
  %v2719 = vadd.f32 0.0, %v2718
  %v2720 = vpop.f32.mrb[0].mxu0
  %2721 = vmatprep.mubr.bf16.mxu0 0
  %2722 = vmatmul.mubr.bf16.gmra.mrb[0].mxu0 %v2501
  %v2723 = vpop.f32.mrb[0].mxu0
  %v2724 = vadd.f32 0.0, %v2723
  %v2725 = vpop.f32.mrb[0].mxu0
  %v2726 = vpop.f32.mrb[0].mxu0
  %v2727 = vadd.f32 0.0, %v2726
  %v2728 = vpop.f32.mrb[0].mxu0
  %2729 = vmatprep.mubr.bf16.mxu0 0
  %2730 = vmatmul.mubr.bf16.gmra.mrb[0].mxu0 %v2504
  %v2731 = vpop.f32.mrb[0].mxu0
  %v2732 = vadd.f32 0.0, %v2731
  %v2733 = vpop.f32.mrb[0].mxu0
  %v2734 = vpop.f32.mrb[0].mxu0
  %v2735 = vadd.f32 0.0, %v2734
  %v2736 = vpop.f32.mrb[0].mxu0
  %2737 = vmatprep.mubr.bf16.mxu0 0
  %2738 = vmatmul.mubr.bf16.gmra.mrb[0].mxu0 %v2507
  %v2739 = vpop.f32.mrb[0].mxu0
  %v2740 = vadd.f32 0.0, %v2739
  %v2741 = vpop.f32.mrb[0].mxu0
  %v2742 = vpop.f32.mrb[0].mxu0
  %v2743 = vadd.f32 0.0, %v2742
  %v2744 = vpop.f32.mrb[0].mxu0
  %2745 = vmatprep.mubr.bf16.mxu0 0
  %2746 = vmatmul.mubr.bf16.gmra.mrb[0].mxu0 %v2510
  %v2747 = vpop.f32.mrb[0].mxu0
  %v2748 = vadd.f32 0.0, %v2747
  %v2749 = vpop.f32.mrb[0].mxu0
  %v2750 = vpop.f32.mrb[0].mxu0
  %v2751 = vadd.f32 0.0, %v2750
  %v2752 = vpop.f32.mrb[0].mxu0
  %2753 = vmatprep.mubr.bf16.mxu0 0
  %2754 = vmatmul.mubr.bf16.gmra.mrb[0].mxu0 %v2513
  %v2755 = vpop.f32.mrb[0].mxu0
  %v2756 = vadd.f32 0.0, %v2755
  %v2757 = vpop.f32.mrb[0].mxu0
  %v2758 = vpop.f32.mrb[0].mxu0
  %v2759 = vadd.f32 0.0, %v2758
  %v2760 = vpop.f32.mrb[0].mxu0
  %2761 = vmatprep.mubr.bf16.mxu0 0
  %2762 = vmatmul.mubr.bf16.gmra.mrb[0].mxu0 %v2516
  %v2763 = vpop.f32.mrb[0].mxu0
  %v2764 = vadd.f32 0.0, %v2763
  %v2765 = vpop.f32.mrb[0].mxu0
  %v2766 = vpop.f32.mrb[0].mxu0
  %v2767 = vadd.f32 0.0, %v2766
  %v2768 = vpop.f32.mrb[0].mxu0
  %2769 = vmatprep.mubr.bf16.mxu0 0
  %2770 = vmatmul.mubr.bf16.gmra.mrb[0].mxu0 %v2519
  %v2771 = vpop.f32.mrb[0].mxu0
  %v2772 = vadd.f32 0.0, %v2771
  %v2773 = vpop.f32.mrb[0].mxu0
  %v2774 = vpop.f32.mrb[0].mxu0
  %v2775 = vadd.f32 0.0, %v2774
  %v2776 = vpop.f32.mrb[0].mxu0
  %2777 = vmatprep.mubr.bf16.mxu0 0
  %2778 = vmatmul.mubr.bf16.gmra.mrb[0].mxu0 %v2522
  %v2779 = vpop.f32.mrb[0].mxu0
  %v2780 = vadd.f32 0.0, %v2779
  %v2781 = vpop.f32.mrb[0].mxu0
  %v2782 = vpop.f32.mrb[0].mxu0
  %v2783 = vadd.f32 0.0, %v2782
  %v2784 = vpop.f32.mrb[0].mxu0
  %2785 = vmatprep.mubr.bf16.mxu0 0
  %2786 = vmatmul.mubr.bf16.gmra.mrb[0].mxu0 %v2525
  %v2787 = vpop.f32.mrb[0].mxu0
  %v2788 = vadd.f32 0.0, %v2787
  %v2789 = vpop.f32.mrb[0].mxu0
  %v2790 = vpop.f32.mrb[0].mxu0
  %v2791 = vadd.f32 0.0, %v2790
  %v2792 = vpop.f32.mrb[0].mxu0
  %2793 = vmatprep.mubr.bf16.mxu0 0
  %2794 = vmatmul.mubr.bf16.gmra.mrb[0].mxu0 %v2528
  %v2795 = vpop.f32.mrb[0].mxu0
  %v2796 = vadd.f32 0.0, %v2795
  %v2797 = vpop.f32.mrb[0].mxu0
  %v2798 = vpop.f32.mrb[0].mxu0
  %v2799 = vadd.f32 0.0, %v2798
  %v2800 = vpop.f32.mrb[0].mxu0
  %2801 = vmatprep.mubr.bf16.mxu0 0
  %2802 = vmatmul.mubr.bf16.gmra.mrb[0].mxu0 %v2531
  %v2803 = vpop.f32.mrb[0].mxu0
  %v2804 = vadd.f32 0.0, %v2803
  %v2805 = vpop.f32.mrb[0].mxu0
  %v2806 = vpop.f32.mrb[0].mxu0
  %v2807 = vadd.f32 0.0, %v2806
  %v2808 = vpop.f32.mrb[0].mxu0
  %2809 = vmatprep.mubr.bf16.mxu0 0
  %2810 = vmatmul.mubr.bf16.gmra.mrb[0].mxu0 %v2534
  %v2811 = vpop.f32.mrb[0].mxu0
  %v2812 = vadd.f32 0.0, %v2811
  %v2813 = vpop.f32.mrb[0].mxu0
  %v2814 = vpop.f32.mrb[0].mxu0
  %v2815 = vadd.f32 0.0, %v2814
  %v2816 = vpop.f32.mrb[0].mxu0
  %2817 = vmatprep.mubr.bf16.mxu0 0
  %2818 = vmatmul.mubr.bf16.gmra.mrb[0].mxu0 %v2537
  %v2819 = vpop.f32.mrb[0].mxu0
  %v2820 = vadd.f32 0.0, %v2819
  %v2821 = vpop.f32.mrb[0].mxu0
  %v2822 = vpop.f32.mrb[0].mxu0
  %v2823 = vadd.f32 0.0, %v2822
  %v2824 = vpop.f32.mrb[0].mxu0
  %2825 = vmatprep.mubr.bf16.mxu0 0
  %2826 = vmatmul.mubr.bf16.gmra.mrb[0].mxu0 %v2540
  %v2827 = vpop.f32.mrb[0].mxu0
  %v2828 = vadd.f32 0.0, %v2827
  %v2829 = vpop.f32.mrb[0].mxu0
  %v2830 = vpop.f32.mrb[0].mxu0
  %v2831 = vadd.f32 0.0, %v2830
  %v2832 = vpop.f32.mrb[0].mxu0
  %2833 = vdwg.mxu0
  %v2834 = vadd.f32 %v2284, %v2580
  %v2835 = vadd.f32 %v2285, %v2583
  %v2836 = vadd.f32 %v2286, %v2588
  %v2837 = vadd.f32 %v2287, %v2591
  %v2838 = vadd.f32 %v2288, %v2596
  %v2839 = vadd.f32 %v2289, %v2599
  %v2840 = vadd.f32 %v2290, %v2604
  %v2841 = vadd.f32 %v2291, %v2607
  %v2842 = vadd.f32 %v2292, %v2612
  %v2843 = vadd.f32 %v2293, %v2615
  %v2844 = vadd.f32 %v2294, %v2620
  %v2845 = vadd.f32 %v2295, %v2623
  %v2846 = vadd.f32 %v2296, %v2628
  %v2847 = vadd.f32 %v2297, %v2631
  %v2848 = vadd.f32 %v2298, %v2636
  %v2849 = vadd.f32 %v2299, %v2639
  %v2850 = vadd.f32 %v2300, %v2644
  %v2851 = vadd.f32 %v2301, %v2647
  %v2852 = vadd.f32 %v2302, %v2652
  %v2853 = vadd.f32 %v2303, %v2655
  %v2854 = vadd.f32 %v2304, %v2660
  %v2855 = vadd.f32 %v2305, %v2663
  %v2856 = vadd.f32 %v2306, %v2668
  %v2857 = vadd.f32 %v2307, %v2671
  %v2858 = vadd.f32 %v2308, %v2676
  %v2859 = vadd.f32 %v2309, %v2679
  %v2860 = vadd.f32 %v2310, %v2684
  %v2861 = vadd.f32 %v2311, %v2687
  %v2862 = vadd.f32 %v2312, %v2692
  %v2863 = vadd.f32 %v2313, %v2695
  %v2864 = vadd.f32 %v2314, %v2700
  %v2865 = vadd.f32 %v2315, %v2703
  %v2866 = vadd.f32 %v2316, %v2708
  %v2867 = vadd.f32 %v2317, %v2711
  %v2868 = vadd.f32 %v2318, %v2716
  %v2869 = vadd.f32 %v2319, %v2719
  %v2870 = vadd.f32 %v2320, %v2724
  %v2871 = vadd.f32 %v2321, %v2727
  %v2872 = vadd.f32 %v2322, %v2732
  %v2873 = vadd.f32 %v2323, %v2735
  %v2874 = vadd.f32 %v2324, %v2740
  %v2875 = vadd.f32 %v2325, %v2743
  %v2876 = vadd.f32 %v2326, %v2748
  %v2877 = vadd.f32 %v2327, %v2751
  %v2878 = vadd.f32 %v2328, %v2756
  %v2879 = vadd.f32 %v2329, %v2759
  %v2880 = vadd.f32 %v2330, %v2764
  %v2881 = vadd.f32 %v2331, %v2767
  %v2882 = vadd.f32 %v2332, %v2772
  %v2883 = vadd.f32 %v2333, %v2775
  %v2884 = vadd.f32 %v2334, %v2780
  %v2885 = vadd.f32 %v2335, %v2783
  %v2886 = vadd.f32 %v2336, %v2788
  %v2887 = vadd.f32 %v2337, %v2791
  %v2888 = vadd.f32 %v2338, %v2796
  %v2889 = vadd.f32 %v2339, %v2799
  %v2890 = vadd.f32 %v2340, %v2804
  %v2891 = vadd.f32 %v2341, %v2807
  %v2892 = vadd.f32 %v2342, %v2812
  %v2893 = vadd.f32 %v2343, %v2815
  %v2894 = vadd.f32 %v2344, %v2820
  %v2895 = vadd.f32 %v2345, %v2823
  %v2896 = vadd.f32 %v2346, %v2828
  %v2897 = vadd.f32 %v2347, %v2831
  %v2898 = vld [vmem:[%s211 + $0x2] sm:$0xff]
  %v2899 = vld [vmem:[%s211 + $0xa] sm:$0xff]
  %v2900 = vld [vmem:[%s211 + $0x1a] sm:$0xff]
  %v2901 = vld [vmem:[%s211 + $0x22] sm:$0xff]
  %v2902 = vld [vmem:[%s211 + $0x32] sm:$0xff]
  %v2903 = vld [vmem:[%s211 + $0x3a] sm:$0xff]
  %v2904 = vld [vmem:[%s211 + $0x4a] sm:$0xff]
  %v2905 = vld [vmem:[%s211 + $0x52] sm:$0xff]
  %v2906 = vld [vmem:[%s211 + $0x62] sm:$0xff]
  %v2907 = vld [vmem:[%s211 + $0x6a] sm:$0xff]
  %v2908 = vld [vmem:[%s211 + $0x7a] sm:$0xff]
  %v2909 = vld [vmem:[%s211 + $0x82] sm:$0xff]
  %v2910 = vld [vmem:[%s211 + $0x92] sm:$0xff]
  %v2911 = vld [vmem:[%s211 + $0x9a] sm:$0xff]
  %v2912 = vld [vmem:[%s211 + $0xaa] sm:$0xff]
  %v2913 = vld [vmem:[%s211 + $0xb2] sm:$0xff]
  %v2914 = vld [vmem:[%s211 + $0xc2] sm:$0xff]
  %v2915 = vld [vmem:[%s211 + $0xca] sm:$0xff]
  %v2916 = vld [vmem:[%s211 + $0xda] sm:$0xff]
  %v2917 = vld [vmem:[%s211 + $0xe2] sm:$0xff]
  %v2918 = vld [vmem:[%s211 + $0xf2] sm:$0xff]
  %v2919 = vld [vmem:[%s211 + $0xfa] sm:$0xff]
  %v2920 = vld [vmem:[%s211 + $0x10a] sm:$0xff]
  %v2921 = vld [vmem:[%s211 + $0x112] sm:$0xff]
  %v2922 = vld [vmem:[%s211 + $0x122] sm:$0xff]
  %v2923 = vld [vmem:[%s211 + $0x12a] sm:$0xff]
  %v2924 = vld [vmem:[%s211 + $0x13a] sm:$0xff]
  %v2925 = vld [vmem:[%s211 + $0x142] sm:$0xff]
  %v2926 = vld [vmem:[%s211 + $0x152] sm:$0xff]
  %v2927 = vld [vmem:[%s211 + $0x15a] sm:$0xff]
  %v2928 = vld [vmem:[%s211 + $0x16a] sm:$0xff]
  %v2929 = vld [vmem:[%s211 + $0x172] sm:$0xff]
  %v2930 = vld [vmem:[%s211 + $0x1b2] sm:$0xff]
  %v2931 = vld [vmem:[%s211 + $0x1ba] sm:$0xff]
  %v2932 = vld [vmem:[%s211 + $0x1ca] sm:$0xff]
  %v2933 = vld [vmem:[%s211 + $0x1d2] sm:$0xff]
  %v2934 = vld [vmem:[%s211 + $0x1e2] sm:$0xff]
  %v2935 = vld [vmem:[%s211 + $0x1ea] sm:$0xff]
  %v2936 = vld [vmem:[%s211 + $0x1fa] sm:$0xff]
  %v2937 = vld [vmem:[%s211 + $0x202] sm:$0xff]
  %v2938 = vld [vmem:[%s211 + $0x212] sm:$0xff]
  %v2939 = vld [vmem:[%s211 + $0x21a] sm:$0xff]
  %v2940 = vld [vmem:[%s211 + $0x22a] sm:$0xff]
  %v2941 = vld [vmem:[%s211 + $0x232] sm:$0xff]
  %v2942 = vld [vmem:[%s211 + $0x242] sm:$0xff]
  %v2943 = vld [vmem:[%s211 + $0x24a] sm:$0xff]
  %v2944 = vld [vmem:[%s211 + $0x25a] sm:$0xff]
  %v2945 = vld [vmem:[%s211 + $0x262] sm:$0xff]
  %v2946 = vld [vmem:[%s211 + $0x272] sm:$0xff]
  %v2947 = vld [vmem:[%s211 + $0x27a] sm:$0xff]
  %v2948 = vld [vmem:[%s211 + $0x28a] sm:$0xff]
  %v2949 = vld [vmem:[%s211 + $0x292] sm:$0xff]
  %v2950 = vld [vmem:[%s211 + $0x2a2] sm:$0xff]
  %v2951 = vld [vmem:[%s211 + $0x2aa] sm:$0xff]
  %v2952 = vld [vmem:[%s211 + $0x2ba] sm:$0xff]
  %v2953 = vld [vmem:[%s211 + $0x2c2] sm:$0xff]
  %v2954 = vld [vmem:[%s211 + $0x2d2] sm:$0xff]
  %v2955 = vld [vmem:[%s211 + $0x2da] sm:$0xff]
  %v2956 = vld [vmem:[%s211 + $0x2ea] sm:$0xff]
  %v2957 = vld [vmem:[%s211 + $0x2f2] sm:$0xff]
  %v2958 = vld [vmem:[%s211 + $0x302] sm:$0xff]
  %v2959 = vld [vmem:[%s211 + $0x30a] sm:$0xff]
  %v2960 = vld [vmem:[%s211 + $0x31a] sm:$0xff]
  %v2961 = vld [vmem:[%s211 + $0x322] sm:$0xff]
  %v2962 = vpack.c.bf16 %v2899, %v2898
  %v2963 = vpack.c.bf16 %v2901, %v2900
  %v2964 = vpack.c.bf16 %v2903, %v2902
  %v2965 = vpack.c.bf16 %v2905, %v2904
  %v2966 = vpack.c.bf16 %v2907, %v2906
  %v2967 = vpack.c.bf16 %v2909, %v2908
  %v2968 = vpack.c.bf16 %v2911, %v2910
  %v2969 = vpack.c.bf16 %v2913, %v2912
  %v2970 = vpack.c.bf16 %v2915, %v2914
  %v2971 = vpack.c.bf16 %v2917, %v2916
  %v2972 = vpack.c.bf16 %v2919, %v2918
  %v2973 = vpack.c.bf16 %v2921, %v2920
  %v2974 = vpack.c.bf16 %v2923, %v2922
  %v2975 = vpack.c.bf16 %v2925, %v2924
  %v2976 = vpack.c.bf16 %v2927, %v2926
  %v2977 = vpack.c.bf16 %v2929, %v2928
  %v2978 = vpack.c.bf16 %v2931, %v2930
  %v2979 = vpack.c.bf16 %v2933, %v2932
  %v2980 = vpack.c.bf16 %v2935, %v2934
  %v2981 = vpack.c.bf16 %v2937, %v2936
  %v2982 = vpack.c.bf16 %v2939, %v2938
  %v2983 = vpack.c.bf16 %v2941, %v2940
  %v2984 = vpack.c.bf16 %v2943, %v2942
  %v2985 = vpack.c.bf16 %v2945, %v2944
  %v2986 = vpack.c.bf16 %v2947, %v2946
  %v2987 = vpack.c.bf16 %v2949, %v2948
  %v2988 = vpack.c.bf16 %v2951, %v2950
  %v2989 = vpack.c.bf16 %v2953, %v2952
  %v2990 = vpack.c.bf16 %v2955, %v2954
  %v2991 = vpack.c.bf16 %v2957, %v2956
  %v2992 = vpack.c.bf16 %v2959, %v2958
  %v2993 = vpack.c.bf16 %v2961, %v2960
  %s2994 = scalar_lea.vmem %s1, 10
  %v2995 = vld [vmem:[%s2994] sm:$0x3]
  %v2997 = vsel %vm101, %v2962, 0
  %v3000 = vsel %vm101, %v2963, 0
  %v3003 = vsel %vm101, %v2964, 0
  %v3006 = vsel %vm101, %v2965, 0
  %v3009 = vsel %vm101, %v2966, 0
  %v3012 = vsel %vm101, %v2967, 0
  %v3015 = vsel %vm101, %v2968, 0
  %v3018 = vsel %vm101, %v2969, 0
  %v3021 = vsel %vm101, %v2970, 0
  %v3024 = vsel %vm101, %v2971, 0
  %v3027 = vsel %vm101, %v2972, 0
  %v3030 = vsel %vm101, %v2973, 0
  %v3033 = vsel %vm101, %v2974, 0
  %v3036 = vsel %vm101, %v2975, 0
  %v3039 = vsel %vm101, %v2976, 0
  %v3042 = vsel %vm101, %v2977, 0
  %v3045 = vsel %vm101, %v2978, 0
  %v3048 = vsel %vm101, %v2979, 0
  %v3051 = vsel %vm101, %v2980, 0
  %v3054 = vsel %vm101, %v2981, 0
  %v3057 = vsel %vm101, %v2982, 0
  %v3060 = vsel %vm101, %v2983, 0
  %v3063 = vsel %vm101, %v2984, 0
  %v3066 = vsel %vm101, %v2985, 0
  %v3069 = vsel %vm101, %v2986, 0
  %v3072 = vsel %vm101, %v2987, 0
  %v3075 = vsel %vm101, %v2988, 0
  %v3078 = vsel %vm101, %v2989, 0
  %v3081 = vsel %vm101, %v2990, 0
  %v3084 = vsel %vm101, %v2991, 0
  %v3087 = vsel %vm101, %v2992, 0
  %v3090 = vsel %vm101, %v2993, 0
  %v3093 = vsel %vm567, %v2995, 0
  %3095 = vmatprep.subr.bf16.mxu0 0
  %3096 = vmatpush1.bf16.msra.mxu0 %v3093
  %3097 = vmatprep.subr.bf16.mxu0 0
  %3098 = vmatpush1.bf16.msra.mxu0 0
  %3099 = vmatprep.subr.bf16.mxu0 0
  %3100 = vmatpush1.bf16.msra.mxu0 0
  %3101 = vmatprep.subr.bf16.mxu0 0
  %3102 = vmatpush1.bf16.msra.mxu0 0
  %3103 = vmatprep.subr.bf16.mxu0 0
  %3104 = vmatpush1.bf16.msra.mxu0 0
  %3105 = vmatprep.subr.bf16.mxu0 0
  %3106 = vmatpush1.bf16.msra.mxu0 0
  %3107 = vmatprep.subr.bf16.mxu0 0
  %3108 = vmatpush1.bf16.msra.mxu0 0
  %3109 = vmatprep.subr.bf16.mxu0 0
  %3110 = vmatpush1.bf16.msra.mxu0 0
  %3111 = vmatprep.subr.bf16.mxu0 0
  %3112 = vmatpush1.bf16.msra.mxu0 0
  %3113 = vmatprep.subr.bf16.mxu0 0
  %3114 = vmatpush1.bf16.msra.mxu0 0
  %3115 = vmatprep.subr.bf16.mxu0 0
  %3116 = vmatpush1.bf16.msra.mxu0 0
  %3117 = vmatprep.subr.bf16.mxu0 0
  %3118 = vmatpush1.bf16.msra.mxu0 0
  %3119 = vmatprep.subr.bf16.mxu0 0
  %3120 = vmatpush1.bf16.msra.mxu0 0
  %3121 = vmatprep.subr.bf16.mxu0 0
  %3122 = vmatpush1.bf16.msra.mxu0 0
  %3123 = vmatprep.subr.bf16.mxu0 0
  %3124 = vmatpush1.bf16.msra.mxu0 0
  %3125 = vmatprep.subr.bf16.mxu0 0
  %3126 = vmatpush1.bf16.msra.mxu0 0
  %3127 = vmatprep.mubr.bf16.mxu0 0
  %3128 = vmatmul.mubr.bf16.gmra.mrb[0].mxu0 %v2997
  %v3129 = vpop.f32.mrb[0].mxu0
  %v3130 = vadd.f32 0.0, %v3129
  %v3131 = vpop.f32.mrb[0].mxu0
  %v3132 = vpop.f32.mrb[0].mxu0
  %v3133 = vadd.f32 0.0, %v3132
  %v3134 = vpop.f32.mrb[0].mxu0
  %3135 = vmatprep.mubr.bf16.mxu0 0
  %3136 = vmatmul.mubr.bf16.gmra.mrb[0].mxu0 %v3000
  %v3137 = vpop.f32.mrb[0].mxu0
  %v3138 = vadd.f32 0.0, %v3137
  %v3139 = vpop.f32.mrb[0].mxu0
  %v3140 = vpop.f32.mrb[0].mxu0
  %v3141 = vadd.f32 0.0, %v3140
  %v3142 = vpop.f32.mrb[0].mxu0
  %3143 = vmatprep.mubr.bf16.mxu0 0
  %3144 = vmatmul.mubr.bf16.gmra.mrb[0].mxu0 %v3003
  %v3145 = vpop.f32.mrb[0].mxu0
  %v3146 = vadd.f32 0.0, %v3145
  %v3147 = vpop.f32.mrb[0].mxu0
  %v3148 = vpop.f32.mrb[0].mxu0
  %v3149 = vadd.f32 0.0, %v3148
  %v3150 = vpop.f32.mrb[0].mxu0
  %3151 = vmatprep.mubr.bf16.mxu0 0
  %3152 = vmatmul.mubr.bf16.gmra.mrb[0].mxu0 %v3006
  %v3153 = vpop.f32.mrb[0].mxu0
  %v3154 = vadd.f32 0.0, %v3153
  %v3155 = vpop.f32.mrb[0].mxu0
  %v3156 = vpop.f32.mrb[0].mxu0
  %v3157 = vadd.f32 0.0, %v3156
  %v3158 = vpop.f32.mrb[0].mxu0
  %3159 = vmatprep.mubr.bf16.mxu0 0
  %3160 = vmatmul.mubr.bf16.gmra.mrb[0].mxu0 %v3009
  %v3161 = vpop.f32.mrb[0].mxu0
  %v3162 = vadd.f32 0.0, %v3161
  %v3163 = vpop.f32.mrb[0].mxu0
  %v3164 = vpop.f32.mrb[0].mxu0
  %v3165 = vadd.f32 0.0, %v3164
  %v3166 = vpop.f32.mrb[0].mxu0
  %3167 = vmatprep.mubr.bf16.mxu0 0
  %3168 = vmatmul.mubr.bf16.gmra.mrb[0].mxu0 %v3012
  %v3169 = vpop.f32.mrb[0].mxu0
  %v3170 = vadd.f32 0.0, %v3169
  %v3171 = vpop.f32.mrb[0].mxu0
  %v3172 = vpop.f32.mrb[0].mxu0
  %v3173 = vadd.f32 0.0, %v3172
  %v3174 = vpop.f32.mrb[0].mxu0
  %3175 = vmatprep.mubr.bf16.mxu0 0
  %3176 = vmatmul.mubr.bf16.gmra.mrb[0].mxu0 %v3015
  %v3177 = vpop.f32.mrb[0].mxu0
  %v3178 = vadd.f32 0.0, %v3177
  %v3179 = vpop.f32.mrb[0].mxu0
  %v3180 = vpop.f32.mrb[0].mxu0
  %v3181 = vadd.f32 0.0, %v3180
  %v3182 = vpop.f32.mrb[0].mxu0
  %3183 = vmatprep.mubr.bf16.mxu0 0
  %3184 = vmatmul.mubr.bf16.gmra.mrb[0].mxu0 %v3018
  %v3185 = vpop.f32.mrb[0].mxu0
  %v3186 = vadd.f32 0.0, %v3185
  %v3187 = vpop.f32.mrb[0].mxu0
  %v3188 = vpop.f32.mrb[0].mxu0
  %v3189 = vadd.f32 0.0, %v3188
  %v3190 = vpop.f32.mrb[0].mxu0
  %3191 = vmatprep.mubr.bf16.mxu0 0
  %3192 = vmatmul.mubr.bf16.gmra.mrb[0].mxu0 %v3021
  %v3193 = vpop.f32.mrb[0].mxu0
  %v3194 = vadd.f32 0.0, %v3193
  %v3195 = vpop.f32.mrb[0].mxu0
  %v3196 = vpop.f32.mrb[0].mxu0
  %v3197 = vadd.f32 0.0, %v3196
  %v3198 = vpop.f32.mrb[0].mxu0
  %3199 = vmatprep.mubr.bf16.mxu0 0
  %3200 = vmatmul.mubr.bf16.gmra.mrb[0].mxu0 %v3024
  %v3201 = vpop.f32.mrb[0].mxu0
  %v3202 = vadd.f32 0.0, %v3201
  %v3203 = vpop.f32.mrb[0].mxu0
  %v3204 = vpop.f32.mrb[0].mxu0
  %v3205 = vadd.f32 0.0, %v3204
  %v3206 = vpop.f32.mrb[0].mxu0
  %3207 = vmatprep.mubr.bf16.mxu0 0
  %3208 = vmatmul.mubr.bf16.gmra.mrb[0].mxu0 %v3027
  %v3209 = vpop.f32.mrb[0].mxu0
  %v3210 = vadd.f32 0.0, %v3209
  %v3211 = vpop.f32.mrb[0].mxu0
  %v3212 = vpop.f32.mrb[0].mxu0
  %v3213 = vadd.f32 0.0, %v3212
  %v3214 = vpop.f32.mrb[0].mxu0
  %3215 = vmatprep.mubr.bf16.mxu0 0
  %3216 = vmatmul.mubr.bf16.gmra.mrb[0].mxu0 %v3030
  %v3217 = vpop.f32.mrb[0].mxu0
  %v3218 = vadd.f32 0.0, %v3217
  %v3219 = vpop.f32.mrb[0].mxu0
  %v3220 = vpop.f32.mrb[0].mxu0
  %v3221 = vadd.f32 0.0, %v3220
  %v3222 = vpop.f32.mrb[0].mxu0
  %3223 = vmatprep.mubr.bf16.mxu0 0
  %3224 = vmatmul.mubr.bf16.gmra.mrb[0].mxu0 %v3033
  %v3225 = vpop.f32.mrb[0].mxu0
  %v3226 = vadd.f32 0.0, %v3225
  %v3227 = vpop.f32.mrb[0].mxu0
  %v3228 = vpop.f32.mrb[0].mxu0
  %v3229 = vadd.f32 0.0, %v3228
  %v3230 = vpop.f32.mrb[0].mxu0
  %3231 = vmatprep.mubr.bf16.mxu0 0
  %3232 = vmatmul.mubr.bf16.gmra.mrb[0].mxu0 %v3036
  %v3233 = vpop.f32.mrb[0].mxu0
  %v3234 = vadd.f32 0.0, %v3233
  %v3235 = vpop.f32.mrb[0].mxu0
  %v3236 = vpop.f32.mrb[0].mxu0
  %v3237 = vadd.f32 0.0, %v3236
  %v3238 = vpop.f32.mrb[0].mxu0
  %3239 = vmatprep.mubr.bf16.mxu0 0
  %3240 = vmatmul.mubr.bf16.gmra.mrb[0].mxu0 %v3039
  %v3241 = vpop.f32.mrb[0].mxu0
  %v3242 = vadd.f32 0.0, %v3241
  %v3243 = vpop.f32.mrb[0].mxu0
  %v3244 = vpop.f32.mrb[0].mxu0
  %v3245 = vadd.f32 0.0, %v3244
  %v3246 = vpop.f32.mrb[0].mxu0
  %3247 = vmatprep.mubr.bf16.mxu0 0
  %3248 = vmatmul.mubr.bf16.gmra.mrb[0].mxu0 %v3042
  %v3249 = vpop.f32.mrb[0].mxu0
  %v3250 = vadd.f32 0.0, %v3249
  %v3251 = vpop.f32.mrb[0].mxu0
  %v3252 = vpop.f32.mrb[0].mxu0
  %v3253 = vadd.f32 0.0, %v3252
  %v3254 = vpop.f32.mrb[0].mxu0
  %3255 = vmatprep.mubr.bf16.mxu0 0
  %3256 = vmatmul.mubr.bf16.gmra.mrb[0].mxu0 %v3045
  %v3257 = vpop.f32.mrb[0].mxu0
  %v3258 = vadd.f32 0.0, %v3257
  %v3259 = vpop.f32.mrb[0].mxu0
  %v3260 = vpop.f32.mrb[0].mxu0
  %v3261 = vadd.f32 0.0, %v3260
  %v3262 = vpop.f32.mrb[0].mxu0
  %3263 = vmatprep.mubr.bf16.mxu0 0
  %3264 = vmatmul.mubr.bf16.gmra.mrb[0].mxu0 %v3048
  %v3265 = vpop.f32.mrb[0].mxu0
  %v3266 = vadd.f32 0.0, %v3265
  %v3267 = vpop.f32.mrb[0].mxu0
  %v3268 = vpop.f32.mrb[0].mxu0
  %v3269 = vadd.f32 0.0, %v3268
  %v3270 = vpop.f32.mrb[0].mxu0
  %3271 = vmatprep.mubr.bf16.mxu0 0
  %3272 = vmatmul.mubr.bf16.gmra.mrb[0].mxu0 %v3051
  %v3273 = vpop.f32.mrb[0].mxu0
  %v3274 = vadd.f32 0.0, %v3273
  %v3275 = vpop.f32.mrb[0].mxu0
  %v3276 = vpop.f32.mrb[0].mxu0
  %v3277 = vadd.f32 0.0, %v3276
  %v3278 = vpop.f32.mrb[0].mxu0
  %3279 = vmatprep.mubr.bf16.mxu0 0
  %3280 = vmatmul.mubr.bf16.gmra.mrb[0].mxu0 %v3054
  %v3281 = vpop.f32.mrb[0].mxu0
  %v3282 = vadd.f32 0.0, %v3281
  %v3283 = vpop.f32.mrb[0].mxu0
  %v3284 = vpop.f32.mrb[0].mxu0
  %v3285 = vadd.f32 0.0, %v3284
  %v3286 = vpop.f32.mrb[0].mxu0
  %3287 = vmatprep.mubr.bf16.mxu0 0
  %3288 = vmatmul.mubr.bf16.gmra.mrb[0].mxu0 %v3057
  %v3289 = vpop.f32.mrb[0].mxu0
  %v3290 = vadd.f32 0.0, %v3289
  %v3291 = vpop.f32.mrb[0].mxu0
  %v3292 = vpop.f32.mrb[0].mxu0
  %v3293 = vadd.f32 0.0, %v3292
  %v3294 = vpop.f32.mrb[0].mxu0
  %3295 = vmatprep.mubr.bf16.mxu0 0
  %3296 = vmatmul.mubr.bf16.gmra.mrb[0].mxu0 %v3060
  %v3297 = vpop.f32.mrb[0].mxu0
  %v3298 = vadd.f32 0.0, %v3297
  %v3299 = vpop.f32.mrb[0].mxu0
  %v3300 = vpop.f32.mrb[0].mxu0
  %v3301 = vadd.f32 0.0, %v3300
  %v3302 = vpop.f32.mrb[0].mxu0
  %3303 = vmatprep.mubr.bf16.mxu0 0
  %3304 = vmatmul.mubr.bf16.gmra.mrb[0].mxu0 %v3063
  %v3305 = vpop.f32.mrb[0].mxu0
  %v3306 = vadd.f32 0.0, %v3305
  %v3307 = vpop.f32.mrb[0].mxu0
  %v3308 = vpop.f32.mrb[0].mxu0
  %v3309 = vadd.f32 0.0, %v3308
  %v3310 = vpop.f32.mrb[0].mxu0
  %3311 = vmatprep.mubr.bf16.mxu0 0
  %3312 = vmatmul.mubr.bf16.gmra.mrb[0].mxu0 %v3066
  %v3313 = vpop.f32.mrb[0].mxu0
  %v3314 = vadd.f32 0.0, %v3313
  %v3315 = vpop.f32.mrb[0].mxu0
  %v3316 = vpop.f32.mrb[0].mxu0
  %v3317 = vadd.f32 0.0, %v3316
  %v3318 = vpop.f32.mrb[0].mxu0
  %3319 = vmatprep.mubr.bf16.mxu0 0
  %3320 = vmatmul.mubr.bf16.gmra.mrb[0].mxu0 %v3069
  %v3321 = vpop.f32.mrb[0].mxu0
  %v3322 = vadd.f32 0.0, %v3321
  %v3323 = vpop.f32.mrb[0].mxu0
  %v3324 = vpop.f32.mrb[0].mxu0
  %v3325 = vadd.f32 0.0, %v3324
  %v3326 = vpop.f32.mrb[0].mxu0
  %3327 = vmatprep.mubr.bf16.mxu0 0
  %3328 = vmatmul.mubr.bf16.gmra.mrb[0].mxu0 %v3072
  %v3329 = vpop.f32.mrb[0].mxu0
  %v3330 = vadd.f32 0.0, %v3329
  %v3331 = vpop.f32.mrb[0].mxu0
  %v3332 = vpop.f32.mrb[0].mxu0
  %v3333 = vadd.f32 0.0, %v3332
  %v3334 = vpop.f32.mrb[0].mxu0
  %3335 = vmatprep.mubr.bf16.mxu0 0
  %3336 = vmatmul.mubr.bf16.gmra.mrb[0].mxu0 %v3075
  %v3337 = vpop.f32.mrb[0].mxu0
  %v3338 = vadd.f32 0.0, %v3337
  %v3339 = vpop.f32.mrb[0].mxu0
  %v3340 = vpop.f32.mrb[0].mxu0
  %v3341 = vadd.f32 0.0, %v3340
  %v3342 = vpop.f32.mrb[0].mxu0
  %3343 = vmatprep.mubr.bf16.mxu0 0
  %3344 = vmatmul.mubr.bf16.gmra.mrb[0].mxu0 %v3078
  %v3345 = vpop.f32.mrb[0].mxu0
  %v3346 = vadd.f32 0.0, %v3345
  %v3347 = vpop.f32.mrb[0].mxu0
  %v3348 = vpop.f32.mrb[0].mxu0
  %v3349 = vadd.f32 0.0, %v3348
  %v3350 = vpop.f32.mrb[0].mxu0
  %3351 = vmatprep.mubr.bf16.mxu0 0
  %3352 = vmatmul.mubr.bf16.gmra.mrb[0].mxu0 %v3081
  %v3353 = vpop.f32.mrb[0].mxu0
  %v3354 = vadd.f32 0.0, %v3353
  %v3355 = vpop.f32.mrb[0].mxu0
  %v3356 = vpop.f32.mrb[0].mxu0
  %v3357 = vadd.f32 0.0, %v3356
  %v3358 = vpop.f32.mrb[0].mxu0
  %3359 = vmatprep.mubr.bf16.mxu0 0
  %3360 = vmatmul.mubr.bf16.gmra.mrb[0].mxu0 %v3084
  %v3361 = vpop.f32.mrb[0].mxu0
  %v3362 = vadd.f32 0.0, %v3361
  %v3363 = vpop.f32.mrb[0].mxu0
  %v3364 = vpop.f32.mrb[0].mxu0
  %v3365 = vadd.f32 0.0, %v3364
  %v3366 = vpop.f32.mrb[0].mxu0
  %3367 = vmatprep.mubr.bf16.mxu0 0
  %3368 = vmatmul.mubr.bf16.gmra.mrb[0].mxu0 %v3087
  %v3369 = vpop.f32.mrb[0].mxu0
  %v3370 = vadd.f32 0.0, %v3369
  %v3371 = vpop.f32.mrb[0].mxu0
  %v3372 = vpop.f32.mrb[0].mxu0
  %v3373 = vadd.f32 0.0, %v3372
  %v3374 = vpop.f32.mrb[0].mxu0
  %3375 = vmatprep.mubr.bf16.mxu0 0
  %3376 = vmatmul.mubr.bf16.gmra.mrb[0].mxu0 %v3090
  %v3377 = vpop.f32.mrb[0].mxu0
  %v3378 = vadd.f32 0.0, %v3377
  %v3379 = vpop.f32.mrb[0].mxu0
  %v3380 = vpop.f32.mrb[0].mxu0
  %v3381 = vadd.f32 0.0, %v3380
  %v3382 = vpop.f32.mrb[0].mxu0
  %3383 = vdwg.mxu0
  %v3384 = vadd.f32 %v2834, %v3130
  %v3385 = vadd.f32 %v2835, %v3133
  %v3386 = vadd.f32 %v2836, %v3138
  %v3387 = vadd.f32 %v2837, %v3141
  %v3388 = vadd.f32 %v2838, %v3146
  %v3389 = vadd.f32 %v2839, %v3149
  %v3390 = vadd.f32 %v2840, %v3154
  %v3391 = vadd.f32 %v2841, %v3157
  %v3392 = vadd.f32 %v2842, %v3162
  %v3393 = vadd.f32 %v2843, %v3165
  %v3394 = vadd.f32 %v2844, %v3170
  %v3395 = vadd.f32 %v2845, %v3173
  %v3396 = vadd.f32 %v2846, %v3178
  %v3397 = vadd.f32 %v2847, %v3181
  %v3398 = vadd.f32 %v2848, %v3186
  %v3399 = vadd.f32 %v2849, %v3189
  %v3400 = vadd.f32 %v2850, %v3194
  %v3401 = vadd.f32 %v2851, %v3197
  %v3402 = vadd.f32 %v2852, %v3202
  %v3403 = vadd.f32 %v2853, %v3205
  %v3404 = vadd.f32 %v2854, %v3210
  %v3405 = vadd.f32 %v2855, %v3213
  %v3406 = vadd.f32 %v2856, %v3218
  %v3407 = vadd.f32 %v2857, %v3221
  %v3408 = vadd.f32 %v2858, %v3226
  %v3409 = vadd.f32 %v2859, %v3229
  %v3410 = vadd.f32 %v2860, %v3234
  %v3411 = vadd.f32 %v2861, %v3237
  %v3412 = vadd.f32 %v2862, %v3242
  %v3413 = vadd.f32 %v2863, %v3245
  %v3414 = vadd.f32 %v2864, %v3250
  %v3415 = vadd.f32 %v2865, %v3253
  %v3416 = vadd.f32 %v2866, %v3258
  %v3417 = vadd.f32 %v2867, %v3261
  %v3418 = vadd.f32 %v2868, %v3266
  %v3419 = vadd.f32 %v2869, %v3269
  %v3420 = vadd.f32 %v2870, %v3274
  %v3421 = vadd.f32 %v2871, %v3277
  %v3422 = vadd.f32 %v2872, %v3282
  %v3423 = vadd.f32 %v2873, %v3285
  %v3424 = vadd.f32 %v2874, %v3290
  %v3425 = vadd.f32 %v2875, %v3293
  %v3426 = vadd.f32 %v2876, %v3298
  %v3427 = vadd.f32 %v2877, %v3301
  %v3428 = vadd.f32 %v2878, %v3306
  %v3429 = vadd.f32 %v2879, %v3309
  %v3430 = vadd.f32 %v2880, %v3314
  %v3431 = vadd.f32 %v2881, %v3317
  %v3432 = vadd.f32 %v2882, %v3322
  %v3433 = vadd.f32 %v2883, %v3325
  %v3434 = vadd.f32 %v2884, %v3330
  %v3435 = vadd.f32 %v2885, %v3333
  %v3436 = vadd.f32 %v2886, %v3338
  %v3437 = vadd.f32 %v2887, %v3341
  %v3438 = vadd.f32 %v2888, %v3346
  %v3439 = vadd.f32 %v2889, %v3349
  %v3440 = vadd.f32 %v2890, %v3354
  %v3441 = vadd.f32 %v2891, %v3357
  %v3442 = vadd.f32 %v2892, %v3362
  %v3443 = vadd.f32 %v2893, %v3365
  %v3444 = vadd.f32 %v2894, %v3370
  %v3445 = vadd.f32 %v2895, %v3373
  %v3446 = vadd.f32 %v2896, %v3378
  %v3447 = vadd.f32 %v2897, %v3381
  %s3448 = scalar_lea.vmem [#allocation2], 48
  %v3449 = vld [vmem:[%s3448] sm:$0xff]
  %v3450 = vld [vmem:[%s3448 + $0x8] sm:$0xff]
  %v3451 = vld [vmem:[%s3448 + $0x18] sm:$0xff]
  %v3452 = vld [vmem:[%s3448 + $0x20] sm:$0xff]
  %v3453 = vld [vmem:[%s3448 + $0x30] sm:$0xff]
  %v3454 = vld [vmem:[%s3448 + $0x38] sm:$0xff]
  %v3455 = vld [vmem:[%s3448 + $0x48] sm:$0xff]
  %v3456 = vld [vmem:[%s3448 + $0x50] sm:$0xff]
  %v3457 = vld [vmem:[%s3448 + $0x60] sm:$0xff]
  %v3458 = vld [vmem:[%s3448 + $0x68] sm:$0xff]
  %v3459 = vld [vmem:[%s3448 + $0x78] sm:$0xff]
  %v3460 = vld [vmem:[%s3448 + $0x80] sm:$0xff]
  %v3461 = vld [vmem:[%s3448 + $0x90] sm:$0xff]
  %v3462 = vld [vmem:[%s3448 + $0x98] sm:$0xff]
  %v3463 = vld [vmem:[%s3448 + $0xa8] sm:$0xff]
  %v3464 = vld [vmem:[%s3448 + $0xb0] sm:$0xff]
  %v3465 = vld [vmem:[%s3448 + $0xc0] sm:$0xff]
  %v3466 = vld [vmem:[%s3448 + $0xc8] sm:$0xff]
  %v3467 = vld [vmem:[%s3448 + $0xd8] sm:$0xff]
  %v3468 = vld [vmem:[%s3448 + $0xe0] sm:$0xff]
  %v3469 = vld [vmem:[%s3448 + $0xf0] sm:$0xff]
  %v3470 = vld [vmem:[%s3448 + $0xf8] sm:$0xff]
  %v3471 = vld [vmem:[%s3448 + $0x108] sm:$0xff]
  %v3472 = vld [vmem:[%s3448 + $0x110] sm:$0xff]
  %v3473 = vld [vmem:[%s3448 + $0x120] sm:$0xff]
  %v3474 = vld [vmem:[%s3448 + $0x128] sm:$0xff]
  %v3475 = vld [vmem:[%s3448 + $0x138] sm:$0xff]
  %v3476 = vld [vmem:[%s3448 + $0x140] sm:$0xff]
  %v3477 = vld [vmem:[%s3448 + $0x150] sm:$0xff]
  %v3478 = vld [vmem:[%s3448 + $0x158] sm:$0xff]
  %v3479 = vld [vmem:[%s3448 + $0x168] sm:$0xff]
  %v3480 = vld [vmem:[%s3448 + $0x170] sm:$0xff]
  %v3481 = vld [vmem:[%s3448 + $0x1b0] sm:$0xff]
  %v3482 = vld [vmem:[%s3448 + $0x1b8] sm:$0xff]
  %v3483 = vld [vmem:[%s3448 + $0x1c8] sm:$0xff]
  %v3484 = vld [vmem:[%s3448 + $0x1d0] sm:$0xff]
  %v3485 = vld [vmem:[%s3448 + $0x1e0] sm:$0xff]
  %v3486 = vld [vmem:[%s3448 + $0x1e8] sm:$0xff]
  %v3487 = vld [vmem:[%s3448 + $0x1f8] sm:$0xff]
  %v3488 = vld [vmem:[%s3448 + $0x200] sm:$0xff]
  %v3489 = vld [vmem:[%s3448 + $0x210] sm:$0xff]
  %v3490 = vld [vmem:[%s3448 + $0x218] sm:$0xff]
  %v3491 = vld [vmem:[%s3448 + $0x228] sm:$0xff]
  %v3492 = vld [vmem:[%s3448 + $0x230] sm:$0xff]
  %v3493 = vld [vmem:[%s3448 + $0x240] sm:$0xff]
  %v3494 = vld [vmem:[%s3448 + $0x248] sm:$0xff]
  %v3495 = vld [vmem:[%s3448 + $0x258] sm:$0xff]
  %v3496 = vld [vmem:[%s3448 + $0x260] sm:$0xff]
  %v3497 = vld [vmem:[%s3448 + $0x270] sm:$0xff]
  %v3498 = vld [vmem:[%s3448 + $0x278] sm:$0xff]
  %v3499 = vld [vmem:[%s3448 + $0x288] sm:$0xff]
  %v3500 = vld [vmem:[%s3448 + $0x290] sm:$0xff]
  %v3501 = vld [vmem:[%s3448 + $0x2a0] sm:$0xff]
  %v3502 = vld [vmem:[%s3448 + $0x2a8] sm:$0xff]
  %v3503 = vld [vmem:[%s3448 + $0x2b8] sm:$0xff]
  %v3504 = vld [vmem:[%s3448 + $0x2c0] sm:$0xff]
  %v3505 = vld [vmem:[%s3448 + $0x2d0] sm:$0xff]
  %v3506 = vld [vmem:[%s3448 + $0x2d8] sm:$0xff]
  %v3507 = vld [vmem:[%s3448 + $0x2e8] sm:$0xff]
  %v3508 = vld [vmem:[%s3448 + $0x2f0] sm:$0xff]
  %v3509 = vld [vmem:[%s3448 + $0x300] sm:$0xff]
  %v3510 = vld [vmem:[%s3448 + $0x308] sm:$0xff]
  %v3511 = vld [vmem:[%s3448 + $0x318] sm:$0xff]
  %v3512 = vld [vmem:[%s3448 + $0x320] sm:$0xff]
  %v3513 = vpack.c.bf16 %v3450, %v3449
  %v3514 = vpack.c.bf16 %v3452, %v3451
  %v3515 = vpack.c.bf16 %v3454, %v3453
  %v3516 = vpack.c.bf16 %v3456, %v3455
  %v3517 = vpack.c.bf16 %v3458, %v3457
  %v3518 = vpack.c.bf16 %v3460, %v3459
  %v3519 = vpack.c.bf16 %v3462, %v3461
  %v3520 = vpack.c.bf16 %v3464, %v3463
  %v3521 = vpack.c.bf16 %v3466, %v3465
  %v3522 = vpack.c.bf16 %v3468, %v3467
  %v3523 = vpack.c.bf16 %v3470, %v3469
  %v3524 = vpack.c.bf16 %v3472, %v3471
  %v3525 = vpack.c.bf16 %v3474, %v3473
  %v3526 = vpack.c.bf16 %v3476, %v3475
  %v3527 = vpack.c.bf16 %v3478, %v3477
  %v3528 = vpack.c.bf16 %v3480, %v3479
  %v3529 = vpack.c.bf16 %v3482, %v3481
  %v3530 = vpack.c.bf16 %v3484, %v3483
  %v3531 = vpack.c.bf16 %v3486, %v3485
  %v3532 = vpack.c.bf16 %v3488, %v3487
  %v3533 = vpack.c.bf16 %v3490, %v3489
  %v3534 = vpack.c.bf16 %v3492, %v3491
  %v3535 = vpack.c.bf16 %v3494, %v3493
  %v3536 = vpack.c.bf16 %v3496, %v3495
  %v3537 = vpack.c.bf16 %v3498, %v3497
  %v3538 = vpack.c.bf16 %v3500, %v3499
  %v3539 = vpack.c.bf16 %v3502, %v3501
  %v3540 = vpack.c.bf16 %v3504, %v3503
  %v3541 = vpack.c.bf16 %v3506, %v3505
  %v3542 = vpack.c.bf16 %v3508, %v3507
  %v3543 = vpack.c.bf16 %v3510, %v3509
  %v3544 = vpack.c.bf16 %v3512, %v3511
  %s3545 = scalar_lea.vmem %s1, 12
  %v3546 = vld [vmem:[%s3545] sm:$0x3]
  %v3548 = vsel %vm101, %v3513, 0
  %v3551 = vsel %vm101, %v3514, 0
  %v3554 = vsel %vm101, %v3515, 0
  %v3557 = vsel %vm101, %v3516, 0
  %v3560 = vsel %vm101, %v3517, 0
  %v3563 = vsel %vm101, %v3518, 0
  %v3566 = vsel %vm101, %v3519, 0
  %v3569 = vsel %vm101, %v3520, 0
  %v3572 = vsel %vm101, %v3521, 0
  %v3575 = vsel %vm101, %v3522, 0
  %v3578 = vsel %vm101, %v3523, 0
  %v3581 = vsel %vm101, %v3524, 0
  %v3584 = vsel %vm101, %v3525, 0
  %v3587 = vsel %vm101, %v3526, 0
  %v3590 = vsel %vm101, %v3527, 0
  %v3593 = vsel %vm101, %v3528, 0
  %v3596 = vsel %vm101, %v3529, 0
  %v3599 = vsel %vm101, %v3530, 0
  %v3602 = vsel %vm101, %v3531, 0
  %v3605 = vsel %vm101, %v3532, 0
  %v3608 = vsel %vm101, %v3533, 0
  %v3611 = vsel %vm101, %v3534, 0
  %v3614 = vsel %vm101, %v3535, 0
  %v3617 = vsel %vm101, %v3536, 0
  %v3620 = vsel %vm101, %v3537, 0
  %v3623 = vsel %vm101, %v3538, 0
  %v3626 = vsel %vm101, %v3539, 0
  %v3629 = vsel %vm101, %v3540, 0
  %v3632 = vsel %vm101, %v3541, 0
  %v3635 = vsel %vm101, %v3542, 0
  %v3638 = vsel %vm101, %v3543, 0
  %v3641 = vsel %vm101, %v3544, 0
  %v3644 = vsel %vm567, %v3546, 0
  %3646 = vmatprep.subr.bf16.mxu0 0
  %3647 = vmatpush1.bf16.msra.mxu0 %v3644
  %3648 = vmatprep.subr.bf16.mxu0 0
  %3649 = vmatpush1.bf16.msra.mxu0 0
  %3650 = vmatprep.subr.bf16.mxu0 0
  %3651 = vmatpush1.bf16.msra.mxu0 0
  %3652 = vmatprep.subr.bf16.mxu0 0
  %3653 = vmatpush1.bf16.msra.mxu0 0
  %3654 = vmatprep.subr.bf16.mxu0 0
  %3655 = vmatpush1.bf16.msra.mxu0 0
  %3656 = vmatprep.subr.bf16.mxu0 0
  %3657 = vmatpush1.bf16.msra.mxu0 0
  %3658 = vmatprep.subr.bf16.mxu0 0
  %3659 = vmatpush1.bf16.msra.mxu0 0
  %3660 = vmatprep.subr.bf16.mxu0 0
  %3661 = vmatpush1.bf16.msra.mxu0 0
  %3662 = vmatprep.subr.bf16.mxu0 0
  %3663 = vmatpush1.bf16.msra.mxu0 0
  %3664 = vmatprep.subr.bf16.mxu0 0
  %3665 = vmatpush1.bf16.msra.mxu0 0
  %3666 = vmatprep.subr.bf16.mxu0 0
  %3667 = vmatpush1.bf16.msra.mxu0 0
  %3668 = vmatprep.subr.bf16.mxu0 0
  %3669 = vmatpush1.bf16.msra.mxu0 0
  %3670 = vmatprep.subr.bf16.mxu0 0
  %3671 = vmatpush1.bf16.msra.mxu0 0
  %3672 = vmatprep.subr.bf16.mxu0 0
  %3673 = vmatpush1.bf16.msra.mxu0 0
  %3674 = vmatprep.subr.bf16.mxu0 0
  %3675 = vmatpush1.bf16.msra.mxu0 0
  %3676 = vmatprep.subr.bf16.mxu0 0
  %3677 = vmatpush1.bf16.msra.mxu0 0
  %3678 = vmatprep.mubr.bf16.mxu0 0
  %3679 = vmatmul.mubr.bf16.gmra.mrb[0].mxu0 %v3548
  %v3680 = vpop.f32.mrb[0].mxu0
  %v3681 = vadd.f32 0.0, %v3680
  %v3682 = vpop.f32.mrb[0].mxu0
  %v3683 = vpop.f32.mrb[0].mxu0
  %v3684 = vadd.f32 0.0, %v3683
  %v3685 = vpop.f32.mrb[0].mxu0
  %3686 = vmatprep.mubr.bf16.mxu0 0
  %3687 = vmatmul.mubr.bf16.gmra.mrb[0].mxu0 %v3551
  %v3688 = vpop.f32.mrb[0].mxu0
  %v3689 = vadd.f32 0.0, %v3688
  %v3690 = vpop.f32.mrb[0].mxu0
  %v3691 = vpop.f32.mrb[0].mxu0
  %v3692 = vadd.f32 0.0, %v3691
  %v3693 = vpop.f32.mrb[0].mxu0
  %3694 = vmatprep.mubr.bf16.mxu0 0
  %3695 = vmatmul.mubr.bf16.gmra.mrb[0].mxu0 %v3554
  %v3696 = vpop.f32.mrb[0].mxu0
  %v3697 = vadd.f32 0.0, %v3696
  %v3698 = vpop.f32.mrb[0].mxu0
  %v3699 = vpop.f32.mrb[0].mxu0
  %v3700 = vadd.f32 0.0, %v3699
  %v3701 = vpop.f32.mrb[0].mxu0
  %3702 = vmatprep.mubr.bf16.mxu0 0
  %3703 = vmatmul.mubr.bf16.gmra.mrb[0].mxu0 %v3557
  %v3704 = vpop.f32.mrb[0].mxu0
  %v3705 = vadd.f32 0.0, %v3704
  %v3706 = vpop.f32.mrb[0].mxu0
  %v3707 = vpop.f32.mrb[0].mxu0
  %v3708 = vadd.f32 0.0, %v3707
  %v3709 = vpop.f32.mrb[0].mxu0
  %3710 = vmatprep.mubr.bf16.mxu0 0
  %3711 = vmatmul.mubr.bf16.gmra.mrb[0].mxu0 %v3560
  %v3712 = vpop.f32.mrb[0].mxu0
  %v3713 = vadd.f32 0.0, %v3712
  %v3714 = vpop.f32.mrb[0].mxu0
  %v3715 = vpop.f32.mrb[0].mxu0
  %v3716 = vadd.f32 0.0, %v3715
  %v3717 = vpop.f32.mrb[0].mxu0
  %3718 = vmatprep.mubr.bf16.mxu0 0
  %3719 = vmatmul.mubr.bf16.gmra.mrb[0].mxu0 %v3563
  %v3720 = vpop.f32.mrb[0].mxu0
  %v3721 = vadd.f32 0.0, %v3720
  %v3722 = vpop.f32.mrb[0].mxu0
  %v3723 = vpop.f32.mrb[0].mxu0
  %v3724 = vadd.f32 0.0, %v3723
  %v3725 = vpop.f32.mrb[0].mxu0
  %3726 = vmatprep.mubr.bf16.mxu0 0
  %3727 = vmatmul.mubr.bf16.gmra.mrb[0].mxu0 %v3566
  %v3728 = vpop.f32.mrb[0].mxu0
  %v3729 = vadd.f32 0.0, %v3728
  %v3730 = vpop.f32.mrb[0].mxu0
  %v3731 = vpop.f32.mrb[0].mxu0
  %v3732 = vadd.f32 0.0, %v3731
  %v3733 = vpop.f32.mrb[0].mxu0
  %3734 = vmatprep.mubr.bf16.mxu0 0
  %3735 = vmatmul.mubr.bf16.gmra.mrb[0].mxu0 %v3569
  %v3736 = vpop.f32.mrb[0].mxu0
  %v3737 = vadd.f32 0.0, %v3736
  %v3738 = vpop.f32.mrb[0].mxu0
  %v3739 = vpop.f32.mrb[0].mxu0
  %v3740 = vadd.f32 0.0, %v3739
  %v3741 = vpop.f32.mrb[0].mxu0
  %3742 = vmatprep.mubr.bf16.mxu0 0
  %3743 = vmatmul.mubr.bf16.gmra.mrb[0].mxu0 %v3572
  %v3744 = vpop.f32.mrb[0].mxu0
  %v3745 = vadd.f32 0.0, %v3744
  %v3746 = vpop.f32.mrb[0].mxu0
  %v3747 = vpop.f32.mrb[0].mxu0
  %v3748 = vadd.f32 0.0, %v3747
  %v3749 = vpop.f32.mrb[0].mxu0
  %3750 = vmatprep.mubr.bf16.mxu0 0
  %3751 = vmatmul.mubr.bf16.gmra.mrb[0].mxu0 %v3575
  %v3752 = vpop.f32.mrb[0].mxu0
  %v3753 = vadd.f32 0.0, %v3752
  %v3754 = vpop.f32.mrb[0].mxu0
  %v3755 = vpop.f32.mrb[0].mxu0
  %v3756 = vadd.f32 0.0, %v3755
  %v3757 = vpop.f32.mrb[0].mxu0
  %3758 = vmatprep.mubr.bf16.mxu0 0
  %3759 = vmatmul.mubr.bf16.gmra.mrb[0].mxu0 %v3578
  %v3760 = vpop.f32.mrb[0].mxu0
  %v3761 = vadd.f32 0.0, %v3760
  %v3762 = vpop.f32.mrb[0].mxu0
  %v3763 = vpop.f32.mrb[0].mxu0
  %v3764 = vadd.f32 0.0, %v3763
  %v3765 = vpop.f32.mrb[0].mxu0
  %3766 = vmatprep.mubr.bf16.mxu0 0
  %3767 = vmatmul.mubr.bf16.gmra.mrb[0].mxu0 %v3581
  %v3768 = vpop.f32.mrb[0].mxu0
  %v3769 = vadd.f32 0.0, %v3768
  %v3770 = vpop.f32.mrb[0].mxu0
  %v3771 = vpop.f32.mrb[0].mxu0
  %v3772 = vadd.f32 0.0, %v3771
  %v3773 = vpop.f32.mrb[0].mxu0
  %3774 = vmatprep.mubr.bf16.mxu0 0
  %3775 = vmatmul.mubr.bf16.gmra.mrb[0].mxu0 %v3584
  %v3776 = vpop.f32.mrb[0].mxu0
  %v3777 = vadd.f32 0.0, %v3776
  %v3778 = vpop.f32.mrb[0].mxu0
  %v3779 = vpop.f32.mrb[0].mxu0
  %v3780 = vadd.f32 0.0, %v3779
  %v3781 = vpop.f32.mrb[0].mxu0
  %3782 = vmatprep.mubr.bf16.mxu0 0
  %3783 = vmatmul.mubr.bf16.gmra.mrb[0].mxu0 %v3587
  %v3784 = vpop.f32.mrb[0].mxu0
  %v3785 = vadd.f32 0.0, %v3784
  %v3786 = vpop.f32.mrb[0].mxu0
  %v3787 = vpop.f32.mrb[0].mxu0
  %v3788 = vadd.f32 0.0, %v3787
  %v3789 = vpop.f32.mrb[0].mxu0
  %3790 = vmatprep.mubr.bf16.mxu0 0
  %3791 = vmatmul.mubr.bf16.gmra.mrb[0].mxu0 %v3590
  %v3792 = vpop.f32.mrb[0].mxu0
  %v3793 = vadd.f32 0.0, %v3792
  %v3794 = vpop.f32.mrb[0].mxu0
  %v3795 = vpop.f32.mrb[0].mxu0
  %v3796 = vadd.f32 0.0, %v3795
  %v3797 = vpop.f32.mrb[0].mxu0
  %3798 = vmatprep.mubr.bf16.mxu0 0
  %3799 = vmatmul.mubr.bf16.gmra.mrb[0].mxu0 %v3593
  %v3800 = vpop.f32.mrb[0].mxu0
  %v3801 = vadd.f32 0.0, %v3800
  %v3802 = vpop.f32.mrb[0].mxu0
  %v3803 = vpop.f32.mrb[0].mxu0
  %v3804 = vadd.f32 0.0, %v3803
  %v3805 = vpop.f32.mrb[0].mxu0
  %3806 = vmatprep.mubr.bf16.mxu0 0
  %3807 = vmatmul.mubr.bf16.gmra.mrb[0].mxu0 %v3596
  %v3808 = vpop.f32.mrb[0].mxu0
  %v3809 = vadd.f32 0.0, %v3808
  %v3810 = vpop.f32.mrb[0].mxu0
  %v3811 = vpop.f32.mrb[0].mxu0
  %v3812 = vadd.f32 0.0, %v3811
  %v3813 = vpop.f32.mrb[0].mxu0
  %3814 = vmatprep.mubr.bf16.mxu0 0
  %3815 = vmatmul.mubr.bf16.gmra.mrb[0].mxu0 %v3599
  %v3816 = vpop.f32.mrb[0].mxu0
  %v3817 = vadd.f32 0.0, %v3816
  %v3818 = vpop.f32.mrb[0].mxu0
  %v3819 = vpop.f32.mrb[0].mxu0
  %v3820 = vadd.f32 0.0, %v3819
  %v3821 = vpop.f32.mrb[0].mxu0
  %3822 = vmatprep.mubr.bf16.mxu0 0
  %3823 = vmatmul.mubr.bf16.gmra.mrb[0].mxu0 %v3602
  %v3824 = vpop.f32.mrb[0].mxu0
  %v3825 = vadd.f32 0.0, %v3824
  %v3826 = vpop.f32.mrb[0].mxu0
  %v3827 = vpop.f32.mrb[0].mxu0
  %v3828 = vadd.f32 0.0, %v3827
  %v3829 = vpop.f32.mrb[0].mxu0
  %3830 = vmatprep.mubr.bf16.mxu0 0
  %3831 = vmatmul.mubr.bf16.gmra.mrb[0].mxu0 %v3605
  %v3832 = vpop.f32.mrb[0].mxu0
  %v3833 = vadd.f32 0.0, %v3832
  %v3834 = vpop.f32.mrb[0].mxu0
  %v3835 = vpop.f32.mrb[0].mxu0
  %v3836 = vadd.f32 0.0, %v3835
  %v3837 = vpop.f32.mrb[0].mxu0
  %3838 = vmatprep.mubr.bf16.mxu0 0
  %3839 = vmatmul.mubr.bf16.gmra.mrb[0].mxu0 %v3608
  %v3840 = vpop.f32.mrb[0].mxu0
  %v3841 = vadd.f32 0.0, %v3840
  %v3842 = vpop.f32.mrb[0].mxu0
  %v3843 = vpop.f32.mrb[0].mxu0
  %v3844 = vadd.f32 0.0, %v3843
  %v3845 = vpop.f32.mrb[0].mxu0
  %3846 = vmatprep.mubr.bf16.mxu0 0
  %3847 = vmatmul.mubr.bf16.gmra.mrb[0].mxu0 %v3611
  %v3848 = vpop.f32.mrb[0].mxu0
  %v3849 = vadd.f32 0.0, %v3848
  %v3850 = vpop.f32.mrb[0].mxu0
  %v3851 = vpop.f32.mrb[0].mxu0
  %v3852 = vadd.f32 0.0, %v3851
  %v3853 = vpop.f32.mrb[0].mxu0
  %3854 = vmatprep.mubr.bf16.mxu0 0
  %3855 = vmatmul.mubr.bf16.gmra.mrb[0].mxu0 %v3614
  %v3856 = vpop.f32.mrb[0].mxu0
  %v3857 = vadd.f32 0.0, %v3856
  %v3858 = vpop.f32.mrb[0].mxu0
  %v3859 = vpop.f32.mrb[0].mxu0
  %v3860 = vadd.f32 0.0, %v3859
  %v3861 = vpop.f32.mrb[0].mxu0
  %3862 = vmatprep.mubr.bf16.mxu0 0
  %3863 = vmatmul.mubr.bf16.gmra.mrb[0].mxu0 %v3617
  %v3864 = vpop.f32.mrb[0].mxu0
  %v3865 = vadd.f32 0.0, %v3864
  %v3866 = vpop.f32.mrb[0].mxu0
  %v3867 = vpop.f32.mrb[0].mxu0
  %v3868 = vadd.f32 0.0, %v3867
  %v3869 = vpop.f32.mrb[0].mxu0
  %3870 = vmatprep.mubr.bf16.mxu0 0
  %3871 = vmatmul.mubr.bf16.gmra.mrb[0].mxu0 %v3620
  %v3872 = vpop.f32.mrb[0].mxu0
  %v3873 = vadd.f32 0.0, %v3872
  %v3874 = vpop.f32.mrb[0].mxu0
  %v3875 = vpop.f32.mrb[0].mxu0
  %v3876 = vadd.f32 0.0, %v3875
  %v3877 = vpop.f32.mrb[0].mxu0
  %3878 = vmatprep.mubr.bf16.mxu0 0
  %3879 = vmatmul.mubr.bf16.gmra.mrb[0].mxu0 %v3623
  %v3880 = vpop.f32.mrb[0].mxu0
  %v3881 = vadd.f32 0.0, %v3880
  %v3882 = vpop.f32.mrb[0].mxu0
  %v3883 = vpop.f32.mrb[0].mxu0
  %v3884 = vadd.f32 0.0, %v3883
  %v3885 = vpop.f32.mrb[0].mxu0
  %3886 = vmatprep.mubr.bf16.mxu0 0
  %3887 = vmatmul.mubr.bf16.gmra.mrb[0].mxu0 %v3626
  %v3888 = vpop.f32.mrb[0].mxu0
  %v3889 = vadd.f32 0.0, %v3888
  %v3890 = vpop.f32.mrb[0].mxu0
  %v3891 = vpop.f32.mrb[0].mxu0
  %v3892 = vadd.f32 0.0, %v3891
  %v3893 = vpop.f32.mrb[0].mxu0
  %3894 = vmatprep.mubr.bf16.mxu0 0
  %3895 = vmatmul.mubr.bf16.gmra.mrb[0].mxu0 %v3629
  %v3896 = vpop.f32.mrb[0].mxu0
  %v3897 = vadd.f32 0.0, %v3896
  %v3898 = vpop.f32.mrb[0].mxu0
  %v3899 = vpop.f32.mrb[0].mxu0
  %v3900 = vadd.f32 0.0, %v3899
  %v3901 = vpop.f32.mrb[0].mxu0
  %3902 = vmatprep.mubr.bf16.mxu0 0
  %3903 = vmatmul.mubr.bf16.gmra.mrb[0].mxu0 %v3632
  %v3904 = vpop.f32.mrb[0].mxu0
  %v3905 = vadd.f32 0.0, %v3904
  %v3906 = vpop.f32.mrb[0].mxu0
  %v3907 = vpop.f32.mrb[0].mxu0
  %v3908 = vadd.f32 0.0, %v3907
  %v3909 = vpop.f32.mrb[0].mxu0
  %3910 = vmatprep.mubr.bf16.mxu0 0
  %3911 = vmatmul.mubr.bf16.gmra.mrb[0].mxu0 %v3635
  %v3912 = vpop.f32.mrb[0].mxu0
  %v3913 = vadd.f32 0.0, %v3912
  %v3914 = vpop.f32.mrb[0].mxu0
  %v3915 = vpop.f32.mrb[0].mxu0
  %v3916 = vadd.f32 0.0, %v3915
  %v3917 = vpop.f32.mrb[0].mxu0
  %3918 = vmatprep.mubr.bf16.mxu0 0
  %3919 = vmatmul.mubr.bf16.gmra.mrb[0].mxu0 %v3638
  %v3920 = vpop.f32.mrb[0].mxu0
  %v3921 = vadd.f32 0.0, %v3920
  %v3922 = vpop.f32.mrb[0].mxu0
  %v3923 = vpop.f32.mrb[0].mxu0
  %v3924 = vadd.f32 0.0, %v3923
  %v3925 = vpop.f32.mrb[0].mxu0
  %3926 = vmatprep.mubr.bf16.mxu0 0
  %3927 = vmatmul.mubr.bf16.gmra.mrb[0].mxu0 %v3641
  %v3928 = vpop.f32.mrb[0].mxu0
  %v3929 = vadd.f32 0.0, %v3928
  %v3930 = vpop.f32.mrb[0].mxu0
  %v3931 = vpop.f32.mrb[0].mxu0
  %v3932 = vadd.f32 0.0, %v3931
  %v3933 = vpop.f32.mrb[0].mxu0
  %3934 = vdwg.mxu0
  %v3935 = vadd.f32 %v3384, %v3681
  %v3936 = vadd.f32 %v3385, %v3684
  %v3937 = vadd.f32 %v3386, %v3689
  %v3938 = vadd.f32 %v3387, %v3692
  %v3939 = vadd.f32 %v3388, %v3697
  %v3940 = vadd.f32 %v3389, %v3700
  %v3941 = vadd.f32 %v3390, %v3705
  %v3942 = vadd.f32 %v3391, %v3708
  %v3943 = vadd.f32 %v3392, %v3713
  %v3944 = vadd.f32 %v3393, %v3716
  %v3945 = vadd.f32 %v3394, %v3721
  %v3946 = vadd.f32 %v3395, %v3724
  %v3947 = vadd.f32 %v3396, %v3729
  %v3948 = vadd.f32 %v3397, %v3732
  %v3949 = vadd.f32 %v3398, %v3737
  %v3950 = vadd.f32 %v3399, %v3740
  %v3951 = vadd.f32 %v3400, %v3745
  %v3952 = vadd.f32 %v3401, %v3748
  %v3953 = vadd.f32 %v3402, %v3753
  %v3954 = vadd.f32 %v3403, %v3756
  %v3955 = vadd.f32 %v3404, %v3761
  %v3956 = vadd.f32 %v3405, %v3764
  %v3957 = vadd.f32 %v3406, %v3769
  %v3958 = vadd.f32 %v3407, %v3772
  %v3959 = vadd.f32 %v3408, %v3777
  %v3960 = vadd.f32 %v3409, %v3780
  %v3961 = vadd.f32 %v3410, %v3785
  %v3962 = vadd.f32 %v3411, %v3788
  %v3963 = vadd.f32 %v3412, %v3793
  %v3964 = vadd.f32 %v3413, %v3796
  %v3965 = vadd.f32 %v3414, %v3801
  %v3966 = vadd.f32 %v3415, %v3804
  %v3967 = vadd.f32 %v3416, %v3809
  %v3968 = vadd.f32 %v3417, %v3812
  %v3969 = vadd.f32 %v3418, %v3817
  %v3970 = vadd.f32 %v3419, %v3820
  %v3971 = vadd.f32 %v3420, %v3825
  %v3972 = vadd.f32 %v3421, %v3828
  %v3973 = vadd.f32 %v3422, %v3833
  %v3974 = vadd.f32 %v3423, %v3836
  %v3975 = vadd.f32 %v3424, %v3841
  %v3976 = vadd.f32 %v3425, %v3844
  %v3977 = vadd.f32 %v3426, %v3849
  %v3978 = vadd.f32 %v3427, %v3852
  %v3979 = vadd.f32 %v3428, %v3857
  %v3980 = vadd.f32 %v3429, %v3860
  %v3981 = vadd.f32 %v3430, %v3865
  %v3982 = vadd.f32 %v3431, %v3868
  %v3983 = vadd.f32 %v3432, %v3873
  %v3984 = vadd.f32 %v3433, %v3876
  %v3985 = vadd.f32 %v3434, %v3881
  %v3986 = vadd.f32 %v3435, %v3884
  %v3987 = vadd.f32 %v3436, %v3889
  %v3988 = vadd.f32 %v3437, %v3892
  %v3989 = vadd.f32 %v3438, %v3897
  %v3990 = vadd.f32 %v3439, %v3900
  %v3991 = vadd.f32 %v3440, %v3905
  %v3992 = vadd.f32 %v3441, %v3908
  %v3993 = vadd.f32 %v3442, %v3913
  %v3994 = vadd.f32 %v3443, %v3916
  %v3995 = vadd.f32 %v3444, %v3921
  %v3996 = vadd.f32 %v3445, %v3924
  %v3997 = vadd.f32 %v3446, %v3929
  %v3998 = vadd.f32 %v3447, %v3932
  %v3999 = vld [vmem:[%s3448 + $0x1] sm:$0xff]
  %v4000 = vld [vmem:[%s3448 + $0x9] sm:$0xff]
  %v4001 = vld [vmem:[%s3448 + $0x19] sm:$0xff]
  %v4002 = vld [vmem:[%s3448 + $0x21] sm:$0xff]
  %v4003 = vld [vmem:[%s3448 + $0x31] sm:$0xff]
  %v4004 = vld [vmem:[%s3448 + $0x39] sm:$0xff]
  %v4005 = vld [vmem:[%s3448 + $0x49] sm:$0xff]
  %v4006 = vld [vmem:[%s3448 + $0x51] sm:$0xff]
  %v4007 = vld [vmem:[%s3448 + $0x61] sm:$0xff]
  %v4008 = vld [vmem:[%s3448 + $0x69] sm:$0xff]
  %v4009 = vld [vmem:[%s3448 + $0x79] sm:$0xff]
  %v4010 = vld [vmem:[%s3448 + $0x81] sm:$0xff]
  %v4011 = vld [vmem:[%s3448 + $0x91] sm:$0xff]
  %v4012 = vld [vmem:[%s3448 + $0x99] sm:$0xff]
  %v4013 = vld [vmem:[%s3448 + $0xa9] sm:$0xff]
  %v4014 = vld [vmem:[%s3448 + $0xb1] sm:$0xff]
  %v4015 = vld [vmem:[%s3448 + $0xc1] sm:$0xff]
  %v4016 = vld [vmem:[%s3448 + $0xc9] sm:$0xff]
  %v4017 = vld [vmem:[%s3448 + $0xd9] sm:$0xff]
  %v4018 = vld [vmem:[%s3448 + $0xe1] sm:$0xff]
  %v4019 = vld [vmem:[%s3448 + $0xf1] sm:$0xff]
  %v4020 = vld [vmem:[%s3448 + $0xf9] sm:$0xff]
  %v4021 = vld [vmem:[%s3448 + $0x109] sm:$0xff]
  %v4022 = vld [vmem:[%s3448 + $0x111] sm:$0xff]
  %v4023 = vld [vmem:[%s3448 + $0x121] sm:$0xff]
  %v4024 = vld [vmem:[%s3448 + $0x129] sm:$0xff]
  %v4025 = vld [vmem:[%s3448 + $0x139] sm:$0xff]
  %v4026 = vld [vmem:[%s3448 + $0x141] sm:$0xff]
  %v4027 = vld [vmem:[%s3448 + $0x151] sm:$0xff]
  %v4028 = vld [vmem:[%s3448 + $0x159] sm:$0xff]
  %v4029 = vld [vmem:[%s3448 + $0x169] sm:$0xff]
  %v4030 = vld [vmem:[%s3448 + $0x171] sm:$0xff]
  %v4031 = vld [vmem:[%s3448 + $0x1b1] sm:$0xff]
  %v4032 = vld [vmem:[%s3448 + $0x1b9] sm:$0xff]
  %v4033 = vld [vmem:[%s3448 + $0x1c9] sm:$0xff]
  %v4034 = vld [vmem:[%s3448 + $0x1d1] sm:$0xff]
  %v4035 = vld [vmem:[%s3448 + $0x1e1] sm:$0xff]
  %v4036 = vld [vmem:[%s3448 + $0x1e9] sm:$0xff]
  %v4037 = vld [vmem:[%s3448 + $0x1f9] sm:$0xff]
  %v4038 = vld [vmem:[%s3448 + $0x201] sm:$0xff]
  %v4039 = vld [vmem:[%s3448 + $0x211] sm:$0xff]
  %v4040 = vld [vmem:[%s3448 + $0x219] sm:$0xff]
  %v4041 = vld [vmem:[%s3448 + $0x229] sm:$0xff]
  %v4042 = vld [vmem:[%s3448 + $0x231] sm:$0xff]
  %v4043 = vld [vmem:[%s3448 + $0x241] sm:$0xff]
  %v4044 = vld [vmem:[%s3448 + $0x249] sm:$0xff]
  %v4045 = vld [vmem:[%s3448 + $0x259] sm:$0xff]
  %v4046 = vld [vmem:[%s3448 + $0x261] sm:$0xff]
  %v4047 = vld [vmem:[%s3448 + $0x271] sm:$0xff]
  %v4048 = vld [vmem:[%s3448 + $0x279] sm:$0xff]
  %v4049 = vld [vmem:[%s3448 + $0x289] sm:$0xff]
  %v4050 = vld [vmem:[%s3448 + $0x291] sm:$0xff]
  %v4051 = vld [vmem:[%s3448 + $0x2a1] sm:$0xff]
  %v4052 = vld [vmem:[%s3448 + $0x2a9] sm:$0xff]
  %v4053 = vld [vmem:[%s3448 + $0x2b9] sm:$0xff]
  %v4054 = vld [vmem:[%s3448 + $0x2c1] sm:$0xff]
  %v4055 = vld [vmem:[%s3448 + $0x2d1] sm:$0xff]
  %v4056 = vld [vmem:[%s3448 + $0x2d9] sm:$0xff]
  %v4057 = vld [vmem:[%s3448 + $0x2e9] sm:$0xff]
  %v4058 = vld [vmem:[%s3448 + $0x2f1] sm:$0xff]
  %v4059 = vld [vmem:[%s3448 + $0x301] sm:$0xff]
  %v4060 = vld [vmem:[%s3448 + $0x309] sm:$0xff]
  %v4061 = vld [vmem:[%s3448 + $0x319] sm:$0xff]
  %v4062 = vld [vmem:[%s3448 + $0x321] sm:$0xff]
  %v4063 = vpack.c.bf16 %v4000, %v3999
  %v4064 = vpack.c.bf16 %v4002, %v4001
  %v4065 = vpack.c.bf16 %v4004, %v4003
  %v4066 = vpack.c.bf16 %v4006, %v4005
  %v4067 = vpack.c.bf16 %v4008, %v4007
  %v4068 = vpack.c.bf16 %v4010, %v4009
  %v4069 = vpack.c.bf16 %v4012, %v4011
  %v4070 = vpack.c.bf16 %v4014, %v4013
  %v4071 = vpack.c.bf16 %v4016, %v4015
  %v4072 = vpack.c.bf16 %v4018, %v4017
  %v4073 = vpack.c.bf16 %v4020, %v4019
  %v4074 = vpack.c.bf16 %v4022, %v4021
  %v4075 = vpack.c.bf16 %v4024, %v4023
  %v4076 = vpack.c.bf16 %v4026, %v4025
  %v4077 = vpack.c.bf16 %v4028, %v4027
  %v4078 = vpack.c.bf16 %v4030, %v4029
  %v4079 = vpack.c.bf16 %v4032, %v4031
  %v4080 = vpack.c.bf16 %v4034, %v4033
  %v4081 = vpack.c.bf16 %v4036, %v4035
  %v4082 = vpack.c.bf16 %v4038, %v4037
  %v4083 = vpack.c.bf16 %v4040, %v4039
  %v4084 = vpack.c.bf16 %v4042, %v4041
  %v4085 = vpack.c.bf16 %v4044, %v4043
  %v4086 = vpack.c.bf16 %v4046, %v4045
  %v4087 = vpack.c.bf16 %v4048, %v4047
  %v4088 = vpack.c.bf16 %v4050, %v4049
  %v4089 = vpack.c.bf16 %v4052, %v4051
  %v4090 = vpack.c.bf16 %v4054, %v4053
  %v4091 = vpack.c.bf16 %v4056, %v4055
  %v4092 = vpack.c.bf16 %v4058, %v4057
  %v4093 = vpack.c.bf16 %v4060, %v4059
  %v4094 = vpack.c.bf16 %v4062, %v4061
  %s4095 = scalar_lea.vmem %s1, 14
  %v4096 = vld [vmem:[%s4095] sm:$0x3]
  %v4098 = vsel %vm101, %v4063, 0
  %v4101 = vsel %vm101, %v4064, 0
  %v4104 = vsel %vm101, %v4065, 0
  %v4107 = vsel %vm101, %v4066, 0
  %v4110 = vsel %vm101, %v4067, 0
  %v4113 = vsel %vm101, %v4068, 0
  %v4116 = vsel %vm101, %v4069, 0
  %v4119 = vsel %vm101, %v4070, 0
  %v4122 = vsel %vm101, %v4071, 0
  %v4125 = vsel %vm101, %v4072, 0
  %v4128 = vsel %vm101, %v4073, 0
  %v4131 = vsel %vm101, %v4074, 0
  %v4134 = vsel %vm101, %v4075, 0
  %v4137 = vsel %vm101, %v4076, 0
  %v4140 = vsel %vm101, %v4077, 0
  %v4143 = vsel %vm101, %v4078, 0
  %v4146 = vsel %vm101, %v4079, 0
  %v4149 = vsel %vm101, %v4080, 0
  %v4152 = vsel %vm101, %v4081, 0
  %v4155 = vsel %vm101, %v4082, 0
  %v4158 = vsel %vm101, %v4083, 0
  %v4161 = vsel %vm101, %v4084, 0
  %v4164 = vsel %vm101, %v4085, 0
  %v4167 = vsel %vm101, %v4086, 0
  %v4170 = vsel %vm101, %v4087, 0
  %v4173 = vsel %vm101, %v4088, 0
  %v4176 = vsel %vm101, %v4089, 0
  %v4179 = vsel %vm101, %v4090, 0
  %v4182 = vsel %vm101, %v4091, 0
  %v4185 = vsel %vm101, %v4092, 0
  %v4188 = vsel %vm101, %v4093, 0
  %v4191 = vsel %vm101, %v4094, 0
  %v4194 = vsel %vm567, %v4096, 0
  %4196 = vmatprep.subr.bf16.mxu0 0
  %4197 = vmatpush1.bf16.msra.mxu0 %v4194
  %4198 = vmatprep.subr.bf16.mxu0 0
  %4199 = vmatpush1.bf16.msra.mxu0 0
  %4200 = vmatprep.subr.bf16.mxu0 0
  %4201 = vmatpush1.bf16.msra.mxu0 0
  %4202 = vmatprep.subr.bf16.mxu0 0
  %4203 = vmatpush1.bf16.msra.mxu0 0
  %4204 = vmatprep.subr.bf16.mxu0 0
  %4205 = vmatpush1.bf16.msra.mxu0 0
  %4206 = vmatprep.subr.bf16.mxu0 0
  %4207 = vmatpush1.bf16.msra.mxu0 0
  %4208 = vmatprep.subr.bf16.mxu0 0
  %4209 = vmatpush1.bf16.msra.mxu0 0
  %4210 = vmatprep.subr.bf16.mxu0 0
  %4211 = vmatpush1.bf16.msra.mxu0 0
  %4212 = vmatprep.subr.bf16.mxu0 0
  %4213 = vmatpush1.bf16.msra.mxu0 0
  %4214 = vmatprep.subr.bf16.mxu0 0
  %4215 = vmatpush1.bf16.msra.mxu0 0
  %4216 = vmatprep.subr.bf16.mxu0 0
  %4217 = vmatpush1.bf16.msra.mxu0 0
  %4218 = vmatprep.subr.bf16.mxu0 0
  %4219 = vmatpush1.bf16.msra.mxu0 0
  %4220 = vmatprep.subr.bf16.mxu0 0
  %4221 = vmatpush1.bf16.msra.mxu0 0
  %4222 = vmatprep.subr.bf16.mxu0 0
  %4223 = vmatpush1.bf16.msra.mxu0 0
  %4224 = vmatprep.subr.bf16.mxu0 0
  %4225 = vmatpush1.bf16.msra.mxu0 0
  %4226 = vmatprep.subr.bf16.mxu0 0
  %4227 = vmatpush1.bf16.msra.mxu0 0
  %4228 = vmatprep.mubr.bf16.mxu0 0
  %4229 = vmatmul.mubr.bf16.gmra.mrb[0].mxu0 %v4098
  %v4230 = vpop.f32.mrb[0].mxu0
  %v4231 = vadd.f32 0.0, %v4230
  %v4232 = vpop.f32.mrb[0].mxu0
  %v4233 = vpop.f32.mrb[0].mxu0
  %v4234 = vadd.f32 0.0, %v4233
  %v4235 = vpop.f32.mrb[0].mxu0
  %4236 = vmatprep.mubr.bf16.mxu0 0
  %4237 = vmatmul.mubr.bf16.gmra.mrb[0].mxu0 %v4101
  %v4238 = vpop.f32.mrb[0].mxu0
  %v4239 = vadd.f32 0.0, %v4238
  %v4240 = vpop.f32.mrb[0].mxu0
  %v4241 = vpop.f32.mrb[0].mxu0
  %v4242 = vadd.f32 0.0, %v4241
  %v4243 = vpop.f32.mrb[0].mxu0
  %4244 = vmatprep.mubr.bf16.mxu0 0
  %4245 = vmatmul.mubr.bf16.gmra.mrb[0].mxu0 %v4104
  %v4246 = vpop.f32.mrb[0].mxu0
  %v4247 = vadd.f32 0.0, %v4246
  %v4248 = vpop.f32.mrb[0].mxu0
  %v4249 = vpop.f32.mrb[0].mxu0
  %v4250 = vadd.f32 0.0, %v4249
  %v4251 = vpop.f32.mrb[0].mxu0
  %4252 = vmatprep.mubr.bf16.mxu0 0
  %4253 = vmatmul.mubr.bf16.gmra.mrb[0].mxu0 %v4107
  %v4254 = vpop.f32.mrb[0].mxu0
  %v4255 = vadd.f32 0.0, %v4254
  %v4256 = vpop.f32.mrb[0].mxu0
  %v4257 = vpop.f32.mrb[0].mxu0
  %v4258 = vadd.f32 0.0, %v4257
  %v4259 = vpop.f32.mrb[0].mxu0
  %4260 = vmatprep.mubr.bf16.mxu0 0
  %4261 = vmatmul.mubr.bf16.gmra.mrb[0].mxu0 %v4110
  %v4262 = vpop.f32.mrb[0].mxu0
  %v4263 = vadd.f32 0.0, %v4262
  %v4264 = vpop.f32.mrb[0].mxu0
  %v4265 = vpop.f32.mrb[0].mxu0
  %v4266 = vadd.f32 0.0, %v4265
  %v4267 = vpop.f32.mrb[0].mxu0
  %4268 = vmatprep.mubr.bf16.mxu0 0
  %4269 = vmatmul.mubr.bf16.gmra.mrb[0].mxu0 %v4113
  %v4270 = vpop.f32.mrb[0].mxu0
  %v4271 = vadd.f32 0.0, %v4270
  %v4272 = vpop.f32.mrb[0].mxu0
  %v4273 = vpop.f32.mrb[0].mxu0
  %v4274 = vadd.f32 0.0, %v4273
  %v4275 = vpop.f32.mrb[0].mxu0
  %4276 = vmatprep.mubr.bf16.mxu0 0
  %4277 = vmatmul.mubr.bf16.gmra.mrb[0].mxu0 %v4116
  %v4278 = vpop.f32.mrb[0].mxu0
  %v4279 = vadd.f32 0.0, %v4278
  %v4280 = vpop.f32.mrb[0].mxu0
  %v4281 = vpop.f32.mrb[0].mxu0
  %v4282 = vadd.f32 0.0, %v4281
  %v4283 = vpop.f32.mrb[0].mxu0
  %4284 = vmatprep.mubr.bf16.mxu0 0
  %4285 = vmatmul.mubr.bf16.gmra.mrb[0].mxu0 %v4119
  %v4286 = vpop.f32.mrb[0].mxu0
  %v4287 = vadd.f32 0.0, %v4286
  %v4288 = vpop.f32.mrb[0].mxu0
  %v4289 = vpop.f32.mrb[0].mxu0
  %v4290 = vadd.f32 0.0, %v4289
  %v4291 = vpop.f32.mrb[0].mxu0
  %4292 = vmatprep.mubr.bf16.mxu0 0
  %4293 = vmatmul.mubr.bf16.gmra.mrb[0].mxu0 %v4122
  %v4294 = vpop.f32.mrb[0].mxu0
  %v4295 = vadd.f32 0.0, %v4294
  %v4296 = vpop.f32.mrb[0].mxu0
  %v4297 = vpop.f32.mrb[0].mxu0
  %v4298 = vadd.f32 0.0, %v4297
  %v4299 = vpop.f32.mrb[0].mxu0
  %4300 = vmatprep.mubr.bf16.mxu0 0
  %4301 = vmatmul.mubr.bf16.gmra.mrb[0].mxu0 %v4125
  %v4302 = vpop.f32.mrb[0].mxu0
  %v4303 = vadd.f32 0.0, %v4302
  %v4304 = vpop.f32.mrb[0].mxu0
  %v4305 = vpop.f32.mrb[0].mxu0
  %v4306 = vadd.f32 0.0, %v4305
  %v4307 = vpop.f32.mrb[0].mxu0
  %4308 = vmatprep.mubr.bf16.mxu0 0
  %4309 = vmatmul.mubr.bf16.gmra.mrb[0].mxu0 %v4128
  %v4310 = vpop.f32.mrb[0].mxu0
  %v4311 = vadd.f32 0.0, %v4310
  %v4312 = vpop.f32.mrb[0].mxu0
  %v4313 = vpop.f32.mrb[0].mxu0
  %v4314 = vadd.f32 0.0, %v4313
  %v4315 = vpop.f32.mrb[0].mxu0
  %4316 = vmatprep.mubr.bf16.mxu0 0
  %4317 = vmatmul.mubr.bf16.gmra.mrb[0].mxu0 %v4131
  %v4318 = vpop.f32.mrb[0].mxu0
  %v4319 = vadd.f32 0.0, %v4318
  %v4320 = vpop.f32.mrb[0].mxu0
  %v4321 = vpop.f32.mrb[0].mxu0
  %v4322 = vadd.f32 0.0, %v4321
  %v4323 = vpop.f32.mrb[0].mxu0
  %4324 = vmatprep.mubr.bf16.mxu0 0
  %4325 = vmatmul.mubr.bf16.gmra.mrb[0].mxu0 %v4134
  %v4326 = vpop.f32.mrb[0].mxu0
  %v4327 = vadd.f32 0.0, %v4326
  %v4328 = vpop.f32.mrb[0].mxu0
  %v4329 = vpop.f32.mrb[0].mxu0
  %v4330 = vadd.f32 0.0, %v4329
  %v4331 = vpop.f32.mrb[0].mxu0
  %4332 = vmatprep.mubr.bf16.mxu0 0
  %4333 = vmatmul.mubr.bf16.gmra.mrb[0].mxu0 %v4137
  %v4334 = vpop.f32.mrb[0].mxu0
  %v4335 = vadd.f32 0.0, %v4334
  %v4336 = vpop.f32.mrb[0].mxu0
  %v4337 = vpop.f32.mrb[0].mxu0
  %v4338 = vadd.f32 0.0, %v4337
  %v4339 = vpop.f32.mrb[0].mxu0
  %4340 = vmatprep.mubr.bf16.mxu0 0
  %4341 = vmatmul.mubr.bf16.gmra.mrb[0].mxu0 %v4140
  %v4342 = vpop.f32.mrb[0].mxu0
  %v4343 = vadd.f32 0.0, %v4342
  %v4344 = vpop.f32.mrb[0].mxu0
  %v4345 = vpop.f32.mrb[0].mxu0
  %v4346 = vadd.f32 0.0, %v4345
  %v4347 = vpop.f32.mrb[0].mxu0
  %4348 = vmatprep.mubr.bf16.mxu0 0
  %4349 = vmatmul.mubr.bf16.gmra.mrb[0].mxu0 %v4143
  %v4350 = vpop.f32.mrb[0].mxu0
  %v4351 = vadd.f32 0.0, %v4350
  %v4352 = vpop.f32.mrb[0].mxu0
  %v4353 = vpop.f32.mrb[0].mxu0
  %v4354 = vadd.f32 0.0, %v4353
  %v4355 = vpop.f32.mrb[0].mxu0
  %4356 = vmatprep.mubr.bf16.mxu0 0
  %4357 = vmatmul.mubr.bf16.gmra.mrb[0].mxu0 %v4146
  %v4358 = vpop.f32.mrb[0].mxu0
  %v4359 = vadd.f32 0.0, %v4358
  %v4360 = vpop.f32.mrb[0].mxu0
  %v4361 = vpop.f32.mrb[0].mxu0
  %v4362 = vadd.f32 0.0, %v4361
  %v4363 = vpop.f32.mrb[0].mxu0
  %4364 = vmatprep.mubr.bf16.mxu0 0
  %4365 = vmatmul.mubr.bf16.gmra.mrb[0].mxu0 %v4149
  %v4366 = vpop.f32.mrb[0].mxu0
  %v4367 = vadd.f32 0.0, %v4366
  %v4368 = vpop.f32.mrb[0].mxu0
  %v4369 = vpop.f32.mrb[0].mxu0
  %v4370 = vadd.f32 0.0, %v4369
  %v4371 = vpop.f32.mrb[0].mxu0
  %4372 = vmatprep.mubr.bf16.mxu0 0
  %4373 = vmatmul.mubr.bf16.gmra.mrb[0].mxu0 %v4152
  %v4374 = vpop.f32.mrb[0].mxu0
  %v4375 = vadd.f32 0.0, %v4374
  %v4376 = vpop.f32.mrb[0].mxu0
  %v4377 = vpop.f32.mrb[0].mxu0
  %v4378 = vadd.f32 0.0, %v4377
  %v4379 = vpop.f32.mrb[0].mxu0
  %4380 = vmatprep.mubr.bf16.mxu0 0
  %4381 = vmatmul.mubr.bf16.gmra.mrb[0].mxu0 %v4155
  %v4382 = vpop.f32.mrb[0].mxu0
  %v4383 = vadd.f32 0.0, %v4382
  %v4384 = vpop.f32.mrb[0].mxu0
  %v4385 = vpop.f32.mrb[0].mxu0
  %v4386 = vadd.f32 0.0, %v4385
  %v4387 = vpop.f32.mrb[0].mxu0
  %4388 = vmatprep.mubr.bf16.mxu0 0
  %4389 = vmatmul.mubr.bf16.gmra.mrb[0].mxu0 %v4158
  %v4390 = vpop.f32.mrb[0].mxu0
  %v4391 = vadd.f32 0.0, %v4390
  %v4392 = vpop.f32.mrb[0].mxu0
  %v4393 = vpop.f32.mrb[0].mxu0
  %v4394 = vadd.f32 0.0, %v4393
  %v4395 = vpop.f32.mrb[0].mxu0
  %4396 = vmatprep.mubr.bf16.mxu0 0
  %4397 = vmatmul.mubr.bf16.gmra.mrb[0].mxu0 %v4161
  %v4398 = vpop.f32.mrb[0].mxu0
  %v4399 = vadd.f32 0.0, %v4398
  %v4400 = vpop.f32.mrb[0].mxu0
  %v4401 = vpop.f32.mrb[0].mxu0
  %v4402 = vadd.f32 0.0, %v4401
  %v4403 = vpop.f32.mrb[0].mxu0
  %4404 = vmatprep.mubr.bf16.mxu0 0
  %4405 = vmatmul.mubr.bf16.gmra.mrb[0].mxu0 %v4164
  %v4406 = vpop.f32.mrb[0].mxu0
  %v4407 = vadd.f32 0.0, %v4406
  %v4408 = vpop.f32.mrb[0].mxu0
  %v4409 = vpop.f32.mrb[0].mxu0
  %v4410 = vadd.f32 0.0, %v4409
  %v4411 = vpop.f32.mrb[0].mxu0
  %4412 = vmatprep.mubr.bf16.mxu0 0
  %4413 = vmatmul.mubr.bf16.gmra.mrb[0].mxu0 %v4167
  %v4414 = vpop.f32.mrb[0].mxu0
  %v4415 = vadd.f32 0.0, %v4414
  %v4416 = vpop.f32.mrb[0].mxu0
  %v4417 = vpop.f32.mrb[0].mxu0
  %v4418 = vadd.f32 0.0, %v4417
  %v4419 = vpop.f32.mrb[0].mxu0
  %4420 = vmatprep.mubr.bf16.mxu0 0
  %4421 = vmatmul.mubr.bf16.gmra.mrb[0].mxu0 %v4170
  %v4422 = vpop.f32.mrb[0].mxu0
  %v4423 = vadd.f32 0.0, %v4422
  %v4424 = vpop.f32.mrb[0].mxu0
  %v4425 = vpop.f32.mrb[0].mxu0
  %v4426 = vadd.f32 0.0, %v4425
  %v4427 = vpop.f32.mrb[0].mxu0
  %4428 = vmatprep.mubr.bf16.mxu0 0
  %4429 = vmatmul.mubr.bf16.gmra.mrb[0].mxu0 %v4173
  %v4430 = vpop.f32.mrb[0].mxu0
  %v4431 = vadd.f32 0.0, %v4430
  %v4432 = vpop.f32.mrb[0].mxu0
  %v4433 = vpop.f32.mrb[0].mxu0
  %v4434 = vadd.f32 0.0, %v4433
  %v4435 = vpop.f32.mrb[0].mxu0
  %4436 = vmatprep.mubr.bf16.mxu0 0
  %4437 = vmatmul.mubr.bf16.gmra.mrb[0].mxu0 %v4176
  %v4438 = vpop.f32.mrb[0].mxu0
  %v4439 = vadd.f32 0.0, %v4438
  %v4440 = vpop.f32.mrb[0].mxu0
  %v4441 = vpop.f32.mrb[0].mxu0
  %v4442 = vadd.f32 0.0, %v4441
  %v4443 = vpop.f32.mrb[0].mxu0
  %4444 = vmatprep.mubr.bf16.mxu0 0
  %4445 = vmatmul.mubr.bf16.gmra.mrb[0].mxu0 %v4179
  %v4446 = vpop.f32.mrb[0].mxu0
  %v4447 = vadd.f32 0.0, %v4446
  %v4448 = vpop.f32.mrb[0].mxu0
  %v4449 = vpop.f32.mrb[0].mxu0
  %v4450 = vadd.f32 0.0, %v4449
  %v4451 = vpop.f32.mrb[0].mxu0
  %4452 = vmatprep.mubr.bf16.mxu0 0
  %4453 = vmatmul.mubr.bf16.gmra.mrb[0].mxu0 %v4182
  %v4454 = vpop.f32.mrb[0].mxu0
  %v4455 = vadd.f32 0.0, %v4454
  %v4456 = vpop.f32.mrb[0].mxu0
  %v4457 = vpop.f32.mrb[0].mxu0
  %v4458 = vadd.f32 0.0, %v4457
  %v4459 = vpop.f32.mrb[0].mxu0
  %4460 = vmatprep.mubr.bf16.mxu0 0
  %4461 = vmatmul.mubr.bf16.gmra.mrb[0].mxu0 %v4185
  %v4462 = vpop.f32.mrb[0].mxu0
  %v4463 = vadd.f32 0.0, %v4462
  %v4464 = vpop.f32.mrb[0].mxu0
  %v4465 = vpop.f32.mrb[0].mxu0
  %v4466 = vadd.f32 0.0, %v4465
  %v4467 = vpop.f32.mrb[0].mxu0
  %4468 = vmatprep.mubr.bf16.mxu0 0
  %4469 = vmatmul.mubr.bf16.gmra.mrb[0].mxu0 %v4188
  %v4470 = vpop.f32.mrb[0].mxu0
  %v4471 = vadd.f32 0.0, %v4470
  %v4472 = vpop.f32.mrb[0].mxu0
  %v4473 = vpop.f32.mrb[0].mxu0
  %v4474 = vadd.f32 0.0, %v4473
  %v4475 = vpop.f32.mrb[0].mxu0
  %4476 = vmatprep.mubr.bf16.mxu0 0
  %4477 = vmatmul.mubr.bf16.gmra.mrb[0].mxu0 %v4191
  %v4478 = vpop.f32.mrb[0].mxu0
  %v4479 = vadd.f32 0.0, %v4478
  %v4480 = vpop.f32.mrb[0].mxu0
  %v4481 = vpop.f32.mrb[0].mxu0
  %v4482 = vadd.f32 0.0, %v4481
  %v4483 = vpop.f32.mrb[0].mxu0
  %4484 = vdwg.mxu0
  %v4485 = vadd.f32 %v3935, %v4231
  %v4486 = vadd.f32 %v3936, %v4234
  %v4487 = vadd.f32 %v3937, %v4239
  %v4488 = vadd.f32 %v3938, %v4242
  %v4489 = vadd.f32 %v3939, %v4247
  %v4490 = vadd.f32 %v3940, %v4250
  %v4491 = vadd.f32 %v3941, %v4255
  %v4492 = vadd.f32 %v3942, %v4258
  %v4493 = vadd.f32 %v3943, %v4263
  %v4494 = vadd.f32 %v3944, %v4266
  %v4495 = vadd.f32 %v3945, %v4271
  %v4496 = vadd.f32 %v3946, %v4274
  %v4497 = vadd.f32 %v3947, %v4279
  %v4498 = vadd.f32 %v3948, %v4282
  %v4499 = vadd.f32 %v3949, %v4287
  %v4500 = vadd.f32 %v3950, %v4290
  %v4501 = vadd.f32 %v3951, %v4295
  %v4502 = vadd.f32 %v3952, %v4298
  %v4503 = vadd.f32 %v3953, %v4303
  %v4504 = vadd.f32 %v3954, %v4306
  %v4505 = vadd.f32 %v3955, %v4311
  %v4506 = vadd.f32 %v3956, %v4314
  %v4507 = vadd.f32 %v3957, %v4319
  %v4508 = vadd.f32 %v3958, %v4322
  %v4509 = vadd.f32 %v3959, %v4327
  %v4510 = vadd.f32 %v3960, %v4330
  %v4511 = vadd.f32 %v3961, %v4335
  %v4512 = vadd.f32 %v3962, %v4338
  %v4513 = vadd.f32 %v3963, %v4343
  %v4514 = vadd.f32 %v3964, %v4346
  %v4515 = vadd.f32 %v3965, %v4351
  %v4516 = vadd.f32 %v3966, %v4354
  %v4517 = vadd.f32 %v3967, %v4359
  %v4518 = vadd.f32 %v3968, %v4362
  %v4519 = vadd.f32 %v3969, %v4367
  %v4520 = vadd.f32 %v3970, %v4370
  %v4521 = vadd.f32 %v3971, %v4375
  %v4522 = vadd.f32 %v3972, %v4378
  %v4523 = vadd.f32 %v3973, %v4383
  %v4524 = vadd.f32 %v3974, %v4386
  %v4525 = vadd.f32 %v3975, %v4391
  %v4526 = vadd.f32 %v3976, %v4394
  %v4527 = vadd.f32 %v3977, %v4399
  %v4528 = vadd.f32 %v3978, %v4402
  %v4529 = vadd.f32 %v3979, %v4407
  %v4530 = vadd.f32 %v3980, %v4410
  %v4531 = vadd.f32 %v3981, %v4415
  %v4532 = vadd.f32 %v3982, %v4418
  %v4533 = vadd.f32 %v3983, %v4423
  %v4534 = vadd.f32 %v3984, %v4426
  %v4535 = vadd.f32 %v3985, %v4431
  %v4536 = vadd.f32 %v3986, %v4434
  %v4537 = vadd.f32 %v3987, %v4439
  %v4538 = vadd.f32 %v3988, %v4442
  %v4539 = vadd.f32 %v3989, %v4447
  %v4540 = vadd.f32 %v3990, %v4450
  %v4541 = vadd.f32 %v3991, %v4455
  %v4542 = vadd.f32 %v3992, %v4458
  %v4543 = vadd.f32 %v3993, %v4463
  %v4544 = vadd.f32 %v3994, %v4466
  %v4545 = vadd.f32 %v3995, %v4471
  %v4546 = vadd.f32 %v3996, %v4474
  %v4547 = vadd.f32 %v3997, %v4479
  %v4548 = vadd.f32 %v3998, %v4482
  %v4549 = vld [vmem:[%s3448 + $0x2] sm:$0xff]
  %v4550 = vld [vmem:[%s3448 + $0xa] sm:$0xff]
  %v4551 = vld [vmem:[%s3448 + $0x1a] sm:$0xff]
  %v4552 = vld [vmem:[%s3448 + $0x22] sm:$0xff]
  %v4553 = vld [vmem:[%s3448 + $0x32] sm:$0xff]
  %v4554 = vld [vmem:[%s3448 + $0x3a] sm:$0xff]
  %v4555 = vld [vmem:[%s3448 + $0x4a] sm:$0xff]
  %v4556 = vld [vmem:[%s3448 + $0x52] sm:$0xff]
  %v4557 = vld [vmem:[%s3448 + $0x62] sm:$0xff]
  %v4558 = vld [vmem:[%s3448 + $0x6a] sm:$0xff]
  %v4559 = vld [vmem:[%s3448 + $0x7a] sm:$0xff]
  %v4560 = vld [vmem:[%s3448 + $0x82] sm:$0xff]
  %v4561 = vld [vmem:[%s3448 + $0x92] sm:$0xff]
  %v4562 = vld [vmem:[%s3448 + $0x9a] sm:$0xff]
  %v4563 = vld [vmem:[%s3448 + $0xaa] sm:$0xff]
  %v4564 = vld [vmem:[%s3448 + $0xb2] sm:$0xff]
  %v4565 = vld [vmem:[%s3448 + $0xc2] sm:$0xff]
  %v4566 = vld [vmem:[%s3448 + $0xca] sm:$0xff]
  %v4567 = vld [vmem:[%s3448 + $0xda] sm:$0xff]
  %v4568 = vld [vmem:[%s3448 + $0xe2] sm:$0xff]
  %v4569 = vld [vmem:[%s3448 + $0xf2] sm:$0xff]
  %v4570 = vld [vmem:[%s3448 + $0xfa] sm:$0xff]
  %v4571 = vld [vmem:[%s3448 + $0x10a] sm:$0xff]
  %v4572 = vld [vmem:[%s3448 + $0x112] sm:$0xff]
  %v4573 = vld [vmem:[%s3448 + $0x122] sm:$0xff]
  %v4574 = vld [vmem:[%s3448 + $0x12a] sm:$0xff]
  %v4575 = vld [vmem:[%s3448 + $0x13a] sm:$0xff]
  %v4576 = vld [vmem:[%s3448 + $0x142] sm:$0xff]
  %v4577 = vld [vmem:[%s3448 + $0x152] sm:$0xff]
  %v4578 = vld [vmem:[%s3448 + $0x15a] sm:$0xff]
  %v4579 = vld [vmem:[%s3448 + $0x16a] sm:$0xff]
  %v4580 = vld [vmem:[%s3448 + $0x172] sm:$0xff]
  %v4581 = vld [vmem:[%s3448 + $0x1b2] sm:$0xff]
  %v4582 = vld [vmem:[%s3448 + $0x1ba] sm:$0xff]
  %v4583 = vld [vmem:[%s3448 + $0x1ca] sm:$0xff]
  %v4584 = vld [vmem:[%s3448 + $0x1d2] sm:$0xff]
  %v4585 = vld [vmem:[%s3448 + $0x1e2] sm:$0xff]
  %v4586 = vld [vmem:[%s3448 + $0x1ea] sm:$0xff]
  %v4587 = vld [vmem:[%s3448 + $0x1fa] sm:$0xff]
  %v4588 = vld [vmem:[%s3448 + $0x202] sm:$0xff]
  %v4589 = vld [vmem:[%s3448 + $0x212] sm:$0xff]
  %v4590 = vld [vmem:[%s3448 + $0x21a] sm:$0xff]
  %v4591 = vld [vmem:[%s3448 + $0x22a] sm:$0xff]
  %v4592 = vld [vmem:[%s3448 + $0x232] sm:$0xff]
  %v4593 = vld [vmem:[%s3448 + $0x242] sm:$0xff]
  %v4594 = vld [vmem:[%s3448 + $0x24a] sm:$0xff]
  %v4595 = vld [vmem:[%s3448 + $0x25a] sm:$0xff]
  %v4596 = vld [vmem:[%s3448 + $0x262] sm:$0xff]
  %v4597 = vld [vmem:[%s3448 + $0x272] sm:$0xff]
  %v4598 = vld [vmem:[%s3448 + $0x27a] sm:$0xff]
  %v4599 = vld [vmem:[%s3448 + $0x28a] sm:$0xff]
  %v4600 = vld [vmem:[%s3448 + $0x292] sm:$0xff]
  %v4601 = vld [vmem:[%s3448 + $0x2a2] sm:$0xff]
  %v4602 = vld [vmem:[%s3448 + $0x2aa] sm:$0xff]
  %v4603 = vld [vmem:[%s3448 + $0x2ba] sm:$0xff]
  %v4604 = vld [vmem:[%s3448 + $0x2c2] sm:$0xff]
  %v4605 = vld [vmem:[%s3448 + $0x2d2] sm:$0xff]
  %v4606 = vld [vmem:[%s3448 + $0x2da] sm:$0xff]
  %v4607 = vld [vmem:[%s3448 + $0x2ea] sm:$0xff]
  %v4608 = vld [vmem:[%s3448 + $0x2f2] sm:$0xff]
  %v4609 = vld [vmem:[%s3448 + $0x302] sm:$0xff]
  %v4610 = vld [vmem:[%s3448 + $0x30a] sm:$0xff]
  %v4611 = vld [vmem:[%s3448 + $0x31a] sm:$0xff]
  %v4612 = vld [vmem:[%s3448 + $0x322] sm:$0xff]
  %v4613 = vpack.c.bf16 %v4550, %v4549
  %v4614 = vpack.c.bf16 %v4552, %v4551
  %v4615 = vpack.c.bf16 %v4554, %v4553
  %v4616 = vpack.c.bf16 %v4556, %v4555
  %v4617 = vpack.c.bf16 %v4558, %v4557
  %v4618 = vpack.c.bf16 %v4560, %v4559
  %v4619 = vpack.c.bf16 %v4562, %v4561
  %v4620 = vpack.c.bf16 %v4564, %v4563
  %v4621 = vpack.c.bf16 %v4566, %v4565
  %v4622 = vpack.c.bf16 %v4568, %v4567
  %v4623 = vpack.c.bf16 %v4570, %v4569
  %v4624 = vpack.c.bf16 %v4572, %v4571
  %v4625 = vpack.c.bf16 %v4574, %v4573
  %v4626 = vpack.c.bf16 %v4576, %v4575
  %v4627 = vpack.c.bf16 %v4578, %v4577
  %v4628 = vpack.c.bf16 %v4580, %v4579
  %v4629 = vpack.c.bf16 %v4582, %v4581
  %v4630 = vpack.c.bf16 %v4584, %v4583
  %v4631 = vpack.c.bf16 %v4586, %v4585
  %v4632 = vpack.c.bf16 %v4588, %v4587
  %v4633 = vpack.c.bf16 %v4590, %v4589
  %v4634 = vpack.c.bf16 %v4592, %v4591
  %v4635 = vpack.c.bf16 %v4594, %v4593
  %v4636 = vpack.c.bf16 %v4596, %v4595
  %v4637 = vpack.c.bf16 %v4598, %v4597
  %v4638 = vpack.c.bf16 %v4600, %v4599
  %v4639 = vpack.c.bf16 %v4602, %v4601
  %v4640 = vpack.c.bf16 %v4604, %v4603
  %v4641 = vpack.c.bf16 %v4606, %v4605
  %v4642 = vpack.c.bf16 %v4608, %v4607
  %v4643 = vpack.c.bf16 %v4610, %v4609
  %v4644 = vpack.c.bf16 %v4612, %v4611
  %s4645 = scalar_lea.vmem %s1, 16
  %v4646 = vld [vmem:[%s4645] sm:$0x3]
  %v4648 = vsel %vm101, %v4613, 0
  %v4651 = vsel %vm101, %v4614, 0
  %v4654 = vsel %vm101, %v4615, 0
  %v4657 = vsel %vm101, %v4616, 0
  %v4660 = vsel %vm101, %v4617, 0
  %v4663 = vsel %vm101, %v4618, 0
  %v4666 = vsel %vm101, %v4619, 0
  %v4669 = vsel %vm101, %v4620, 0
  %v4672 = vsel %vm101, %v4621, 0
  %v4675 = vsel %vm101, %v4622, 0
  %v4678 = vsel %vm101, %v4623, 0
  %v4681 = vsel %vm101, %v4624, 0
  %v4684 = vsel %vm101, %v4625, 0
  %v4687 = vsel %vm101, %v4626, 0
  %v4690 = vsel %vm101, %v4627, 0
  %v4693 = vsel %vm101, %v4628, 0
  %v4696 = vsel %vm101, %v4629, 0
  %v4699 = vsel %vm101, %v4630, 0
  %v4702 = vsel %vm101, %v4631, 0
  %v4705 = vsel %vm101, %v4632, 0
  %v4708 = vsel %vm101, %v4633, 0
  %v4711 = vsel %vm101, %v4634, 0
  %v4714 = vsel %vm101, %v4635, 0
  %v4717 = vsel %vm101, %v4636, 0
  %v4720 = vsel %vm101, %v4637, 0
  %v4723 = vsel %vm101, %v4638, 0
  %v4726 = vsel %vm101, %v4639, 0
  %v4729 = vsel %vm101, %v4640, 0
  %v4732 = vsel %vm101, %v4641, 0
  %v4735 = vsel %vm101, %v4642, 0
  %v4738 = vsel %vm101, %v4643, 0
  %v4741 = vsel %vm101, %v4644, 0
  %v4744 = vsel %vm567, %v4646, 0
  %4746 = vmatprep.subr.bf16.mxu0 0
  %4747 = vmatpush1.bf16.msra.mxu0 %v4744
  %4748 = vmatprep.subr.bf16.mxu0 0
  %4749 = vmatpush1.bf16.msra.mxu0 0
  %4750 = vmatprep.subr.bf16.mxu0 0
  %4751 = vmatpush1.bf16.msra.mxu0 0
  %4752 = vmatprep.subr.bf16.mxu0 0
  %4753 = vmatpush1.bf16.msra.mxu0 0
  %4754 = vmatprep.subr.bf16.mxu0 0
  %4755 = vmatpush1.bf16.msra.mxu0 0
  %4756 = vmatprep.subr.bf16.mxu0 0
  %4757 = vmatpush1.bf16.msra.mxu0 0
  %4758 = vmatprep.subr.bf16.mxu0 0
  %4759 = vmatpush1.bf16.msra.mxu0 0
  %4760 = vmatprep.subr.bf16.mxu0 0
  %4761 = vmatpush1.bf16.msra.mxu0 0
  %4762 = vmatprep.subr.bf16.mxu0 0
  %4763 = vmatpush1.bf16.msra.mxu0 0
  %4764 = vmatprep.subr.bf16.mxu0 0
  %4765 = vmatpush1.bf16.msra.mxu0 0
  %4766 = vmatprep.subr.bf16.mxu0 0
  %4767 = vmatpush1.bf16.msra.mxu0 0
  %4768 = vmatprep.subr.bf16.mxu0 0
  %4769 = vmatpush1.bf16.msra.mxu0 0
  %4770 = vmatprep.subr.bf16.mxu0 0
  %4771 = vmatpush1.bf16.msra.mxu0 0
  %4772 = vmatprep.subr.bf16.mxu0 0
  %4773 = vmatpush1.bf16.msra.mxu0 0
  %4774 = vmatprep.subr.bf16.mxu0 0
  %4775 = vmatpush1.bf16.msra.mxu0 0
  %4776 = vmatprep.subr.bf16.mxu0 0
  %4777 = vmatpush1.bf16.msra.mxu0 0
  %4778 = vmatprep.mubr.bf16.mxu0 0
  %4779 = vmatmul.mubr.bf16.gmra.mrb[0].mxu0 %v4648
  %v4780 = vpop.f32.mrb[0].mxu0
  %v4781 = vadd.f32 0.0, %v4780
  %v4782 = vpop.f32.mrb[0].mxu0
  %v4783 = vpop.f32.mrb[0].mxu0
  %v4784 = vadd.f32 0.0, %v4783
  %v4785 = vpop.f32.mrb[0].mxu0
  %4786 = vmatprep.mubr.bf16.mxu0 0
  %4787 = vmatmul.mubr.bf16.gmra.mrb[0].mxu0 %v4651
  %v4788 = vpop.f32.mrb[0].mxu0
  %v4789 = vadd.f32 0.0, %v4788
  %v4790 = vpop.f32.mrb[0].mxu0
  %v4791 = vpop.f32.mrb[0].mxu0
  %v4792 = vadd.f32 0.0, %v4791
  %v4793 = vpop.f32.mrb[0].mxu0
  %4794 = vmatprep.mubr.bf16.mxu0 0
  %4795 = vmatmul.mubr.bf16.gmra.mrb[0].mxu0 %v4654
  %v4796 = vpop.f32.mrb[0].mxu0
  %v4797 = vadd.f32 0.0, %v4796
  %v4798 = vpop.f32.mrb[0].mxu0
  %v4799 = vpop.f32.mrb[0].mxu0
  %v4800 = vadd.f32 0.0, %v4799
  %v4801 = vpop.f32.mrb[0].mxu0
  %4802 = vmatprep.mubr.bf16.mxu0 0
  %4803 = vmatmul.mubr.bf16.gmra.mrb[0].mxu0 %v4657
  %v4804 = vpop.f32.mrb[0].mxu0
  %v4805 = vadd.f32 0.0, %v4804
  %v4806 = vpop.f32.mrb[0].mxu0
  %v4807 = vpop.f32.mrb[0].mxu0
  %v4808 = vadd.f32 0.0, %v4807
  %v4809 = vpop.f32.mrb[0].mxu0
  %4810 = vmatprep.mubr.bf16.mxu0 0
  %4811 = vmatmul.mubr.bf16.gmra.mrb[0].mxu0 %v4660
  %v4812 = vpop.f32.mrb[0].mxu0
  %v4813 = vadd.f32 0.0, %v4812
  %v4814 = vpop.f32.mrb[0].mxu0
  %v4815 = vpop.f32.mrb[0].mxu0
  %v4816 = vadd.f32 0.0, %v4815
  %v4817 = vpop.f32.mrb[0].mxu0
  %4818 = vmatprep.mubr.bf16.mxu0 0
  %4819 = vmatmul.mubr.bf16.gmra.mrb[0].mxu0 %v4663
  %v4820 = vpop.f32.mrb[0].mxu0
  %v4821 = vadd.f32 0.0, %v4820
  %v4822 = vpop.f32.mrb[0].mxu0
  %v4823 = vpop.f32.mrb[0].mxu0
  %v4824 = vadd.f32 0.0, %v4823
  %v4825 = vpop.f32.mrb[0].mxu0
  %4826 = vmatprep.mubr.bf16.mxu0 0
  %4827 = vmatmul.mubr.bf16.gmra.mrb[0].mxu0 %v4666
  %v4828 = vpop.f32.mrb[0].mxu0
  %v4829 = vadd.f32 0.0, %v4828
  %v4830 = vpop.f32.mrb[0].mxu0
  %v4831 = vpop.f32.mrb[0].mxu0
  %v4832 = vadd.f32 0.0, %v4831
  %v4833 = vpop.f32.mrb[0].mxu0
  %4834 = vmatprep.mubr.bf16.mxu0 0
  %4835 = vmatmul.mubr.bf16.gmra.mrb[0].mxu0 %v4669
  %v4836 = vpop.f32.mrb[0].mxu0
  %v4837 = vadd.f32 0.0, %v4836
  %v4838 = vpop.f32.mrb[0].mxu0
  %v4839 = vpop.f32.mrb[0].mxu0
  %v4840 = vadd.f32 0.0, %v4839
  %v4841 = vpop.f32.mrb[0].mxu0
  %4842 = vmatprep.mubr.bf16.mxu0 0
  %4843 = vmatmul.mubr.bf16.gmra.mrb[0].mxu0 %v4672
  %v4844 = vpop.f32.mrb[0].mxu0
  %v4845 = vadd.f32 0.0, %v4844
  %v4846 = vpop.f32.mrb[0].mxu0
  %v4847 = vpop.f32.mrb[0].mxu0
  %v4848 = vadd.f32 0.0, %v4847
  %v4849 = vpop.f32.mrb[0].mxu0
  %4850 = vmatprep.mubr.bf16.mxu0 0
  %4851 = vmatmul.mubr.bf16.gmra.mrb[0].mxu0 %v4675
  %v4852 = vpop.f32.mrb[0].mxu0
  %v4853 = vadd.f32 0.0, %v4852
  %v4854 = vpop.f32.mrb[0].mxu0
  %v4855 = vpop.f32.mrb[0].mxu0
  %v4856 = vadd.f32 0.0, %v4855
  %v4857 = vpop.f32.mrb[0].mxu0
  %4858 = vmatprep.mubr.bf16.mxu0 0
  %4859 = vmatmul.mubr.bf16.gmra.mrb[0].mxu0 %v4678
  %v4860 = vpop.f32.mrb[0].mxu0
  %v4861 = vadd.f32 0.0, %v4860
  %v4862 = vpop.f32.mrb[0].mxu0
  %v4863 = vpop.f32.mrb[0].mxu0
  %v4864 = vadd.f32 0.0, %v4863
  %v4865 = vpop.f32.mrb[0].mxu0
  %4866 = vmatprep.mubr.bf16.mxu0 0
  %4867 = vmatmul.mubr.bf16.gmra.mrb[0].mxu0 %v4681
  %v4868 = vpop.f32.mrb[0].mxu0
  %v4869 = vadd.f32 0.0, %v4868
  %v4870 = vpop.f32.mrb[0].mxu0
  %v4871 = vpop.f32.mrb[0].mxu0
  %v4872 = vadd.f32 0.0, %v4871
  %v4873 = vpop.f32.mrb[0].mxu0
  %4874 = vmatprep.mubr.bf16.mxu0 0
  %4875 = vmatmul.mubr.bf16.gmra.mrb[0].mxu0 %v4684
  %v4876 = vpop.f32.mrb[0].mxu0
  %v4877 = vadd.f32 0.0, %v4876
  %v4878 = vpop.f32.mrb[0].mxu0
  %v4879 = vpop.f32.mrb[0].mxu0
  %v4880 = vadd.f32 0.0, %v4879
  %v4881 = vpop.f32.mrb[0].mxu0
  %4882 = vmatprep.mubr.bf16.mxu0 0
  %4883 = vmatmul.mubr.bf16.gmra.mrb[0].mxu0 %v4687
  %v4884 = vpop.f32.mrb[0].mxu0
  %v4885 = vadd.f32 0.0, %v4884
  %v4886 = vpop.f32.mrb[0].mxu0
  %v4887 = vpop.f32.mrb[0].mxu0
  %v4888 = vadd.f32 0.0, %v4887
  %v4889 = vpop.f32.mrb[0].mxu0
  %4890 = vmatprep.mubr.bf16.mxu0 0
  %4891 = vmatmul.mubr.bf16.gmra.mrb[0].mxu0 %v4690
  %v4892 = vpop.f32.mrb[0].mxu0
  %v4893 = vadd.f32 0.0, %v4892
  %v4894 = vpop.f32.mrb[0].mxu0
  %v4895 = vpop.f32.mrb[0].mxu0
  %v4896 = vadd.f32 0.0, %v4895
  %v4897 = vpop.f32.mrb[0].mxu0
  %4898 = vmatprep.mubr.bf16.mxu0 0
  %4899 = vmatmul.mubr.bf16.gmra.mrb[0].mxu0 %v4693
  %v4900 = vpop.f32.mrb[0].mxu0
  %v4901 = vadd.f32 0.0, %v4900
  %v4902 = vpop.f32.mrb[0].mxu0
  %v4903 = vpop.f32.mrb[0].mxu0
  %v4904 = vadd.f32 0.0, %v4903
  %v4905 = vpop.f32.mrb[0].mxu0
  %4906 = vmatprep.mubr.bf16.mxu0 0
  %4907 = vmatmul.mubr.bf16.gmra.mrb[0].mxu0 %v4696
  %v4908 = vpop.f32.mrb[0].mxu0
  %v4909 = vadd.f32 0.0, %v4908
  %v4910 = vpop.f32.mrb[0].mxu0
  %v4911 = vpop.f32.mrb[0].mxu0
  %v4912 = vadd.f32 0.0, %v4911
  %v4913 = vpop.f32.mrb[0].mxu0
  %4914 = vmatprep.mubr.bf16.mxu0 0
  %4915 = vmatmul.mubr.bf16.gmra.mrb[0].mxu0 %v4699
  %v4916 = vpop.f32.mrb[0].mxu0
  %v4917 = vadd.f32 0.0, %v4916
  %v4918 = vpop.f32.mrb[0].mxu0
  %v4919 = vpop.f32.mrb[0].mxu0
  %v4920 = vadd.f32 0.0, %v4919
  %v4921 = vpop.f32.mrb[0].mxu0
  %4922 = vmatprep.mubr.bf16.mxu0 0
  %4923 = vmatmul.mubr.bf16.gmra.mrb[0].mxu0 %v4702
  %v4924 = vpop.f32.mrb[0].mxu0
  %v4925 = vadd.f32 0.0, %v4924
  %v4926 = vpop.f32.mrb[0].mxu0
  %v4927 = vpop.f32.mrb[0].mxu0
  %v4928 = vadd.f32 0.0, %v4927
  %v4929 = vpop.f32.mrb[0].mxu0
  %4930 = vmatprep.mubr.bf16.mxu0 0
  %4931 = vmatmul.mubr.bf16.gmra.mrb[0].mxu0 %v4705
  %v4932 = vpop.f32.mrb[0].mxu0
  %v4933 = vadd.f32 0.0, %v4932
  %v4934 = vpop.f32.mrb[0].mxu0
  %v4935 = vpop.f32.mrb[0].mxu0
  %v4936 = vadd.f32 0.0, %v4935
  %v4937 = vpop.f32.mrb[0].mxu0
  %4938 = vmatprep.mubr.bf16.mxu0 0
  %4939 = vmatmul.mubr.bf16.gmra.mrb[0].mxu0 %v4708
  %v4940 = vpop.f32.mrb[0].mxu0
  %v4941 = vadd.f32 0.0, %v4940
  %v4942 = vpop.f32.mrb[0].mxu0
  %v4943 = vpop.f32.mrb[0].mxu0
  %v4944 = vadd.f32 0.0, %v4943
  %v4945 = vpop.f32.mrb[0].mxu0
  %4946 = vmatprep.mubr.bf16.mxu0 0
  %4947 = vmatmul.mubr.bf16.gmra.mrb[0].mxu0 %v4711
  %v4948 = vpop.f32.mrb[0].mxu0
  %v4949 = vadd.f32 0.0, %v4948
  %v4950 = vpop.f32.mrb[0].mxu0
  %v4951 = vpop.f32.mrb[0].mxu0
  %v4952 = vadd.f32 0.0, %v4951
  %v4953 = vpop.f32.mrb[0].mxu0
  %4954 = vmatprep.mubr.bf16.mxu0 0
  %4955 = vmatmul.mubr.bf16.gmra.mrb[0].mxu0 %v4714
  %v4956 = vpop.f32.mrb[0].mxu0
  %v4957 = vadd.f32 0.0, %v4956
  %v4958 = vpop.f32.mrb[0].mxu0
  %v4959 = vpop.f32.mrb[0].mxu0
  %v4960 = vadd.f32 0.0, %v4959
  %v4961 = vpop.f32.mrb[0].mxu0
  %4962 = vmatprep.mubr.bf16.mxu0 0
  %4963 = vmatmul.mubr.bf16.gmra.mrb[0].mxu0 %v4717
  %v4964 = vpop.f32.mrb[0].mxu0
  %v4965 = vadd.f32 0.0, %v4964
  %v4966 = vpop.f32.mrb[0].mxu0
  %v4967 = vpop.f32.mrb[0].mxu0
  %v4968 = vadd.f32 0.0, %v4967
  %v4969 = vpop.f32.mrb[0].mxu0
  %4970 = vmatprep.mubr.bf16.mxu0 0
  %4971 = vmatmul.mubr.bf16.gmra.mrb[0].mxu0 %v4720
  %v4972 = vpop.f32.mrb[0].mxu0
  %v4973 = vadd.f32 0.0, %v4972
  %v4974 = vpop.f32.mrb[0].mxu0
  %v4975 = vpop.f32.mrb[0].mxu0
  %v4976 = vadd.f32 0.0, %v4975
  %v4977 = vpop.f32.mrb[0].mxu0
  %4978 = vmatprep.mubr.bf16.mxu0 0
  %4979 = vmatmul.mubr.bf16.gmra.mrb[0].mxu0 %v4723
  %v4980 = vpop.f32.mrb[0].mxu0
  %v4981 = vadd.f32 0.0, %v4980
  %v4982 = vpop.f32.mrb[0].mxu0
  %v4983 = vpop.f32.mrb[0].mxu0
  %v4984 = vadd.f32 0.0, %v4983
  %v4985 = vpop.f32.mrb[0].mxu0
  %4986 = vmatprep.mubr.bf16.mxu0 0
  %4987 = vmatmul.mubr.bf16.gmra.mrb[0].mxu0 %v4726
  %v4988 = vpop.f32.mrb[0].mxu0
  %v4989 = vadd.f32 0.0, %v4988
  %v4990 = vpop.f32.mrb[0].mxu0
  %v4991 = vpop.f32.mrb[0].mxu0
  %v4992 = vadd.f32 0.0, %v4991
  %v4993 = vpop.f32.mrb[0].mxu0
  %4994 = vmatprep.mubr.bf16.mxu0 0
  %4995 = vmatmul.mubr.bf16.gmra.mrb[0].mxu0 %v4729
  %v4996 = vpop.f32.mrb[0].mxu0
  %v4997 = vadd.f32 0.0, %v4996
  %v4998 = vpop.f32.mrb[0].mxu0
  %v4999 = vpop.f32.mrb[0].mxu0
  %v5000 = vadd.f32 0.0, %v4999
  %v5001 = vpop.f32.mrb[0].mxu0
  %5002 = vmatprep.mubr.bf16.mxu0 0
  %5003 = vmatmul.mubr.bf16.gmra.mrb[0].mxu0 %v4732
  %v5004 = vpop.f32.mrb[0].mxu0
  %v5005 = vadd.f32 0.0, %v5004
  %v5006 = vpop.f32.mrb[0].mxu0
  %v5007 = vpop.f32.mrb[0].mxu0
  %v5008 = vadd.f32 0.0, %v5007
  %v5009 = vpop.f32.mrb[0].mxu0
  %5010 = vmatprep.mubr.bf16.mxu0 0
  %5011 = vmatmul.mubr.bf16.gmra.mrb[0].mxu0 %v4735
  %v5012 = vpop.f32.mrb[0].mxu0
  %v5013 = vadd.f32 0.0, %v5012
  %v5014 = vpop.f32.mrb[0].mxu0
  %v5015 = vpop.f32.mrb[0].mxu0
  %v5016 = vadd.f32 0.0, %v5015
  %v5017 = vpop.f32.mrb[0].mxu0
  %5018 = vmatprep.mubr.bf16.mxu0 0
  %5019 = vmatmul.mubr.bf16.gmra.mrb[0].mxu0 %v4738
  %v5020 = vpop.f32.mrb[0].mxu0
  %v5021 = vadd.f32 0.0, %v5020
  %v5022 = vpop.f32.mrb[0].mxu0
  %v5023 = vpop.f32.mrb[0].mxu0
  %v5024 = vadd.f32 0.0, %v5023
  %v5025 = vpop.f32.mrb[0].mxu0
  %5026 = vmatprep.mubr.bf16.mxu0 0
  %5027 = vmatmul.mubr.bf16.gmra.mrb[0].mxu0 %v4741
  %v5028 = vpop.f32.mrb[0].mxu0
  %v5029 = vadd.f32 0.0, %v5028
  %v5030 = vpop.f32.mrb[0].mxu0
  %v5031 = vpop.f32.mrb[0].mxu0
  %v5032 = vadd.f32 0.0, %v5031
  %v5033 = vpop.f32.mrb[0].mxu0
  %5034 = vdwg.mxu0
  %v5035 = vadd.f32 %v4485, %v4781
  %v5036 = vadd.f32 %v4486, %v4784
  %v5037 = vadd.f32 %v4487, %v4789
  %v5038 = vadd.f32 %v4488, %v4792
  %v5039 = vadd.f32 %v4489, %v4797
  %v5040 = vadd.f32 %v4490, %v4800
  %v5041 = vadd.f32 %v4491, %v4805
  %v5042 = vadd.f32 %v4492, %v4808
  %v5043 = vadd.f32 %v4493, %v4813
  %v5044 = vadd.f32 %v4494, %v4816
  %v5045 = vadd.f32 %v4495, %v4821
  %v5046 = vadd.f32 %v4496, %v4824
  %v5047 = vadd.f32 %v4497, %v4829
  %v5048 = vadd.f32 %v4498, %v4832
  %v5049 = vadd.f32 %v4499, %v4837
  %v5050 = vadd.f32 %v4500, %v4840
  %v5051 = vadd.f32 %v4501, %v4845
  %v5052 = vadd.f32 %v4502, %v4848
  %v5053 = vadd.f32 %v4503, %v4853
  %v5054 = vadd.f32 %v4504, %v4856
  %v5055 = vadd.f32 %v4505, %v4861
  %v5056 = vadd.f32 %v4506, %v4864
  %v5057 = vadd.f32 %v4507, %v4869
  %v5058 = vadd.f32 %v4508, %v4872
  %v5059 = vadd.f32 %v4509, %v4877
  %v5060 = vadd.f32 %v4510, %v4880
  %v5061 = vadd.f32 %v4511, %v4885
  %v5062 = vadd.f32 %v4512, %v4888
  %v5063 = vadd.f32 %v4513, %v4893
  %v5064 = vadd.f32 %v4514, %v4896
  %v5065 = vadd.f32 %v4515, %v4901
  %v5066 = vadd.f32 %v4516, %v4904
  %v5067 = vadd.f32 %v4517, %v4909
  %v5068 = vadd.f32 %v4518, %v4912
  %v5069 = vadd.f32 %v4519, %v4917
  %v5070 = vadd.f32 %v4520, %v4920
  %v5071 = vadd.f32 %v4521, %v4925
  %v5072 = vadd.f32 %v4522, %v4928
  %v5073 = vadd.f32 %v4523, %v4933
  %v5074 = vadd.f32 %v4524, %v4936
  %v5075 = vadd.f32 %v4525, %v4941
  %v5076 = vadd.f32 %v4526, %v4944
  %v5077 = vadd.f32 %v4527, %v4949
  %v5078 = vadd.f32 %v4528, %v4952
  %v5079 = vadd.f32 %v4529, %v4957
  %v5080 = vadd.f32 %v4530, %v4960
  %v5081 = vadd.f32 %v4531, %v4965
  %v5082 = vadd.f32 %v4532, %v4968
  %v5083 = vadd.f32 %v4533, %v4973
  %v5084 = vadd.f32 %v4534, %v4976
  %v5085 = vadd.f32 %v4535, %v4981
  %v5086 = vadd.f32 %v4536, %v4984
  %v5087 = vadd.f32 %v4537, %v4989
  %v5088 = vadd.f32 %v4538, %v4992
  %v5089 = vadd.f32 %v4539, %v4997
  %v5090 = vadd.f32 %v4540, %v5000
  %v5091 = vadd.f32 %v4541, %v5005
  %v5092 = vadd.f32 %v4542, %v5008
  %v5093 = vadd.f32 %v4543, %v5013
  %v5094 = vadd.f32 %v4544, %v5016
  %v5095 = vadd.f32 %v4545, %v5021
  %v5096 = vadd.f32 %v4546, %v5024
  %v5097 = vadd.f32 %v4547, %v5029
  %v5098 = vadd.f32 %v4548, %v5032
  %v5099 = vld [vmem:[%s2] sm:$0x1]
  %v5101 = vlaneseq
  %v5102 = vshrl.u32 %v5101, 7
  %v5103 = vsub.s32 0, %v5102
  %v5104 = vrot.slane %v5099, %v5103
  %v5106 = vadd.f32 %v5035, %v5104
  %v5107 = vadd.f32 %v5036, %v5104
  %v5108 = vadd.f32 %v5037, %v5104
  %v5109 = vadd.f32 %v5038, %v5104
  %v5110 = vadd.f32 %v5039, %v5104
  %v5111 = vadd.f32 %v5040, %v5104
  %v5112 = vadd.f32 %v5041, %v5104
  %v5113 = vadd.f32 %v5042, %v5104
  %v5114 = vadd.f32 %v5043, %v5104
  %v5115 = vadd.f32 %v5044, %v5104
  %v5116 = vadd.f32 %v5045, %v5104
  %v5117 = vadd.f32 %v5046, %v5104
  %v5118 = vadd.f32 %v5047, %v5104
  %v5119 = vadd.f32 %v5048, %v5104
  %v5120 = vadd.f32 %v5049, %v5104
  %v5121 = vadd.f32 %v5050, %v5104
  %v5122 = vadd.f32 %v5051, %v5104
  %v5123 = vadd.f32 %v5052, %v5104
  %v5124 = vadd.f32 %v5053, %v5104
  %v5125 = vadd.f32 %v5054, %v5104
  %v5126 = vadd.f32 %v5055, %v5104
  %v5127 = vadd.f32 %v5056, %v5104
  %v5128 = vadd.f32 %v5057, %v5104
  %v5129 = vadd.f32 %v5058, %v5104
  %v5130 = vadd.f32 %v5059, %v5104
  %v5131 = vadd.f32 %v5060, %v5104
  %v5132 = vadd.f32 %v5061, %v5104
  %v5133 = vadd.f32 %v5062, %v5104
  %v5134 = vadd.f32 %v5063, %v5104
  %v5135 = vadd.f32 %v5064, %v5104
  %v5136 = vadd.f32 %v5065, %v5104
  %v5137 = vadd.f32 %v5066, %v5104
  %v5138 = vadd.f32 %v5067, %v5104
  %v5139 = vadd.f32 %v5068, %v5104
  %v5140 = vadd.f32 %v5069, %v5104
  %v5141 = vadd.f32 %v5070, %v5104
  %v5142 = vadd.f32 %v5071, %v5104
  %v5143 = vadd.f32 %v5072, %v5104
  %v5144 = vadd.f32 %v5073, %v5104
  %v5145 = vadd.f32 %v5074, %v5104
  %v5146 = vadd.f32 %v5075, %v5104
  %v5147 = vadd.f32 %v5076, %v5104
  %v5148 = vadd.f32 %v5077, %v5104
  %v5149 = vadd.f32 %v5078, %v5104
  %v5150 = vadd.f32 %v5079, %v5104
  %v5151 = vadd.f32 %v5080, %v5104
  %v5152 = vadd.f32 %v5081, %v5104
  %v5153 = vadd.f32 %v5082, %v5104
  %v5154 = vadd.f32 %v5083, %v5104
  %v5155 = vadd.f32 %v5084, %v5104
  %v5156 = vadd.f32 %v5085, %v5104
  %v5157 = vadd.f32 %v5086, %v5104
  %v5158 = vadd.f32 %v5087, %v5104
  %v5159 = vadd.f32 %v5088, %v5104
  %v5160 = vadd.f32 %v5089, %v5104
  %v5161 = vadd.f32 %v5090, %v5104
  %v5162 = vadd.f32 %v5091, %v5104
  %v5163 = vadd.f32 %v5092, %v5104
  %v5164 = vadd.f32 %v5093, %v5104
  %v5165 = vadd.f32 %v5094, %v5104
  %v5166 = vadd.f32 %v5095, %v5104
  %v5167 = vadd.f32 %v5096, %v5104
  %v5168 = vadd.f32 %v5097, %v5104
  %v5169 = vadd.f32 %v5098, %v5104
  %v5170 = vsel %vm101, %v5106, 0.0
  %v5171 = vsel %vm101, %v5107, 0.0
  %v5172 = vadd.f32 %v5170, %v5171
  %v5173 = vsel %vm101, %v5108, 0.0
  %v5174 = vadd.f32 %v5172, %v5173
  %v5175 = vsel %vm101, %v5109, 0.0
  %v5176 = vadd.f32 %v5174, %v5175
  %v5177 = vsel %vm101, %v5110, 0.0
  %v5178 = vadd.f32 %v5176, %v5177
  %v5179 = vsel %vm101, %v5111, 0.0
  %v5180 = vadd.f32 %v5178, %v5179
  %v5181 = vsel %vm101, %v5112, 0.0
  %v5182 = vadd.f32 %v5180, %v5181
  %v5183 = vsel %vm101, %v5113, 0.0
  %v5184 = vadd.f32 %v5182, %v5183
  %v5185 = vsel %vm101, %v5114, 0.0
  %v5186 = vadd.f32 %v5184, %v5185
  %v5187 = vsel %vm101, %v5115, 0.0
  %v5188 = vadd.f32 %v5186, %v5187
  %v5189 = vsel %vm101, %v5116, 0.0
  %v5190 = vadd.f32 %v5188, %v5189
  %v5191 = vsel %vm101, %v5117, 0.0
  %v5192 = vadd.f32 %v5190, %v5191
  %v5193 = vsel %vm101, %v5118, 0.0
  %v5194 = vadd.f32 %v5192, %v5193
  %v5195 = vsel %vm101, %v5119, 0.0
  %v5196 = vadd.f32 %v5194, %v5195
  %v5197 = vsel %vm101, %v5120, 0.0
  %v5198 = vadd.f32 %v5196, %v5197
  %v5199 = vsel %vm101, %v5121, 0.0
  %v5200 = vadd.f32 %v5198, %v5199
  %v5201 = vsel %vm101, %v5122, 0.0
  %v5202 = vadd.f32 %v5200, %v5201
  %v5203 = vsel %vm101, %v5123, 0.0
  %v5204 = vadd.f32 %v5202, %v5203
  %v5205 = vsel %vm101, %v5124, 0.0
  %v5206 = vadd.f32 %v5204, %v5205
  %v5207 = vsel %vm101, %v5125, 0.0
  %v5208 = vadd.f32 %v5206, %v5207
  %v5209 = vsel %vm101, %v5126, 0.0
  %v5210 = vadd.f32 %v5208, %v5209
  %v5211 = vsel %vm101, %v5127, 0.0
  %v5212 = vadd.f32 %v5210, %v5211
  %v5213 = vsel %vm101, %v5128, 0.0
  %v5214 = vadd.f32 %v5212, %v5213
  %v5215 = vsel %vm101, %v5129, 0.0
  %v5216 = vadd.f32 %v5214, %v5215
  %v5217 = vsel %vm101, %v5130, 0.0
  %v5218 = vadd.f32 %v5216, %v5217
  %v5219 = vsel %vm101, %v5131, 0.0
  %v5220 = vadd.f32 %v5218, %v5219
  %v5221 = vsel %vm101, %v5132, 0.0
  %v5222 = vadd.f32 %v5220, %v5221
  %v5223 = vsel %vm101, %v5133, 0.0
  %v5224 = vadd.f32 %v5222, %v5223
  %v5225 = vsel %vm101, %v5134, 0.0
  %v5226 = vadd.f32 %v5224, %v5225
  %v5227 = vsel %vm101, %v5135, 0.0
  %v5228 = vadd.f32 %v5226, %v5227
  %v5229 = vsel %vm101, %v5136, 0.0
  %v5230 = vadd.f32 %v5228, %v5229
  %v5231 = vsel %vm101, %v5137, 0.0
  %v5232 = vadd.f32 %v5230, %v5231
  %v5233 = vsel %vm101, %v5138, 0.0
  %v5234 = vadd.f32 %v5232, %v5233
  %v5235 = vsel %vm101, %v5139, 0.0
  %v5236 = vadd.f32 %v5234, %v5235
  %v5237 = vsel %vm101, %v5140, 0.0
  %v5238 = vadd.f32 %v5236, %v5237
  %v5239 = vsel %vm101, %v5141, 0.0
  %v5240 = vadd.f32 %v5238, %v5239
  %v5241 = vsel %vm101, %v5142, 0.0
  %v5242 = vadd.f32 %v5240, %v5241
  %v5243 = vsel %vm101, %v5143, 0.0
  %v5244 = vadd.f32 %v5242, %v5243
  %v5245 = vsel %vm101, %v5144, 0.0
  %v5246 = vadd.f32 %v5244, %v5245
  %v5247 = vsel %vm101, %v5145, 0.0
  %v5248 = vadd.f32 %v5246, %v5247
  %v5249 = vsel %vm101, %v5146, 0.0
  %v5250 = vadd.f32 %v5248, %v5249
  %v5251 = vsel %vm101, %v5147, 0.0
  %v5252 = vadd.f32 %v5250, %v5251
  %v5253 = vsel %vm101, %v5148, 0.0
  %v5254 = vadd.f32 %v5252, %v5253
  %v5255 = vsel %vm101, %v5149, 0.0
  %v5256 = vadd.f32 %v5254, %v5255
  %v5257 = vsel %vm101, %v5150, 0.0
  %v5258 = vadd.f32 %v5256, %v5257
  %v5259 = vsel %vm101, %v5151, 0.0
  %v5260 = vadd.f32 %v5258, %v5259
  %v5261 = vsel %vm101, %v5152, 0.0
  %v5262 = vadd.f32 %v5260, %v5261
  %v5263 = vsel %vm101, %v5153, 0.0
  %v5264 = vadd.f32 %v5262, %v5263
  %v5265 = vsel %vm101, %v5154, 0.0
  %v5266 = vadd.f32 %v5264, %v5265
  %v5267 = vsel %vm101, %v5155, 0.0
  %v5268 = vadd.f32 %v5266, %v5267
  %v5269 = vsel %vm101, %v5156, 0.0
  %v5270 = vadd.f32 %v5268, %v5269
  %v5271 = vsel %vm101, %v5157, 0.0
  %v5272 = vadd.f32 %v5270, %v5271
  %v5273 = vsel %vm101, %v5158, 0.0
  %v5274 = vadd.f32 %v5272, %v5273
  %v5275 = vsel %vm101, %v5159, 0.0
  %v5276 = vadd.f32 %v5274, %v5275
  %v5277 = vsel %vm101, %v5160, 0.0
  %v5278 = vadd.f32 %v5276, %v5277
  %v5279 = vsel %vm101, %v5161, 0.0
  %v5280 = vadd.f32 %v5278, %v5279
  %v5281 = vsel %vm101, %v5162, 0.0
  %v5282 = vadd.f32 %v5280, %v5281
  %v5283 = vsel %vm101, %v5163, 0.0
  %v5284 = vadd.f32 %v5282, %v5283
  %v5285 = vsel %vm101, %v5164, 0.0
  %v5286 = vadd.f32 %v5284, %v5285
  %v5287 = vsel %vm101, %v5165, 0.0
  %v5288 = vadd.f32 %v5286, %v5287
  %v5289 = vsel %vm101, %v5166, 0.0
  %v5290 = vadd.f32 %v5288, %v5289
  %v5291 = vsel %vm101, %v5167, 0.0
  %v5292 = vadd.f32 %v5290, %v5291
  %v5293 = vsel %vm101, %v5168, 0.0
  %v5294 = vadd.f32 %v5292, %v5293
  %v5295 = vsel %vm101, %v5169, 0.0
  %v5296 = vadd.f32 %v5294, %v5295
  %v5297 = vrot.slane %v5296, 4
  %v5298 = vadd.f32 %v5296, %v5297
  %v5299 = vrot.slane %v5298, 2
  %v5300 = vadd.f32 %v5298, %v5299
  %v5301 = vrot.slane %v5300, 1
  %v5302 = vadd.f32 %v5300, %v5301
  %v5303 = vmul.f32 %v5302, 0.001953125
  %v5304 = vmul.f32 %v5106, %v5106
  %v5305 = vmul.f32 %v5107, %v5107
  %v5306 = vmul.f32 %v5108, %v5108
  %v5307 = vmul.f32 %v5109, %v5109
  %v5308 = vmul.f32 %v5110, %v5110
  %v5309 = vmul.f32 %v5111, %v5111
  %v5310 = vmul.f32 %v5112, %v5112
  %v5311 = vmul.f32 %v5113, %v5113
  %v5312 = vmul.f32 %v5114, %v5114
  %v5313 = vmul.f32 %v5115, %v5115
  %v5314 = vmul.f32 %v5116, %v5116
  %v5315 = vmul.f32 %v5117, %v5117
  %v5316 = vmul.f32 %v5118, %v5118
  %v5317 = vmul.f32 %v5119, %v5119
  %v5318 = vmul.f32 %v5120, %v5120
  %v5319 = vmul.f32 %v5121, %v5121
  %v5320 = vmul.f32 %v5122, %v5122
  %v5321 = vmul.f32 %v5123, %v5123
  %v5322 = vmul.f32 %v5124, %v5124
  %v5323 = vmul.f32 %v5125, %v5125
  %v5324 = vmul.f32 %v5126, %v5126
  %v5325 = vmul.f32 %v5127, %v5127
  %v5326 = vmul.f32 %v5128, %v5128
  %v5327 = vmul.f32 %v5129, %v5129
  %v5328 = vmul.f32 %v5130, %v5130
  %v5329 = vmul.f32 %v5131, %v5131
  %v5330 = vmul.f32 %v5132, %v5132
  %v5331 = vmul.f32 %v5133, %v5133
  %v5332 = vmul.f32 %v5134, %v5134
  %v5333 = vmul.f32 %v5135, %v5135
  %v5334 = vmul.f32 %v5136, %v5136
  %v5335 = vmul.f32 %v5137, %v5137
  %v5336 = vmul.f32 %v5138, %v5138
  %v5337 = vmul.f32 %v5139, %v5139
  %v5338 = vmul.f32 %v5140, %v5140
  %v5339 = vmul.f32 %v5141, %v5141
  %v5340 = vmul.f32 %v5142, %v5142
  %v5341 = vmul.f32 %v5143, %v5143
  %v5342 = vmul.f32 %v5144, %v5144
  %v5343 = vmul.f32 %v5145, %v5145
  %v5344 = vmul.f32 %v5146, %v5146
  %v5345 = vmul.f32 %v5147, %v5147
  %v5346 = vmul.f32 %v5148, %v5148
  %v5347 = vmul.f32 %v5149, %v5149
  %v5348 = vmul.f32 %v5150, %v5150
  %v5349 = vmul.f32 %v5151, %v5151
  %v5350 = vmul.f32 %v5152, %v5152
  %v5351 = vmul.f32 %v5153, %v5153
  %v5352 = vmul.f32 %v5154, %v5154
  %v5353 = vmul.f32 %v5155, %v5155
  %v5354 = vmul.f32 %v5156, %v5156
  %v5355 = vmul.f32 %v5157, %v5157
  %v5356 = vmul.f32 %v5158, %v5158
  %v5357 = vmul.f32 %v5159, %v5159
  %v5358 = vmul.f32 %v5160, %v5160
  %v5359 = vmul.f32 %v5161, %v5161
  %v5360 = vmul.f32 %v5162, %v5162
  %v5361 = vmul.f32 %v5163, %v5163
  %v5362 = vmul.f32 %v5164, %v5164
  %v5363 = vmul.f32 %v5165, %v5165
  %v5364 = vmul.f32 %v5166, %v5166
  %v5365 = vmul.f32 %v5167, %v5167
  %v5366 = vmul.f32 %v5168, %v5168
  %v5367 = vmul.f32 %v5169, %v5169
  %v5368 = vsel %vm101, %v5304, 0.0
  %v5369 = vsel %vm101, %v5305, 0.0
  %v5370 = vadd.f32 %v5368, %v5369
  %v5371 = vsel %vm101, %v5306, 0.0
  %v5372 = vadd.f32 %v5370, %v5371
  %v5373 = vsel %vm101, %v5307, 0.0
  %v5374 = vadd.f32 %v5372, %v5373
  %v5375 = vsel %vm101, %v5308, 0.0
  %v5376 = vadd.f32 %v5374, %v5375
  %v5377 = vsel %vm101, %v5309, 0.0
  %v5378 = vadd.f32 %v5376, %v5377
  %v5379 = vsel %vm101, %v5310, 0.0
  %v5380 = vadd.f32 %v5378, %v5379
  %v5381 = vsel %vm101, %v5311, 0.0
  %v5382 = vadd.f32 %v5380, %v5381
  %v5383 = vsel %vm101, %v5312, 0.0
  %v5384 = vadd.f32 %v5382, %v5383
  %v5385 = vsel %vm101, %v5313, 0.0
  %v5386 = vadd.f32 %v5384, %v5385
  %v5387 = vsel %vm101, %v5314, 0.0
  %v5388 = vadd.f32 %v5386, %v5387
  %v5389 = vsel %vm101, %v5315, 0.0
  %v5390 = vadd.f32 %v5388, %v5389
  %v5391 = vsel %vm101, %v5316, 0.0
  %v5392 = vadd.f32 %v5390, %v5391
  %v5393 = vsel %vm101, %v5317, 0.0
  %v5394 = vadd.f32 %v5392, %v5393
  %v5395 = vsel %vm101, %v5318, 0.0
  %v5396 = vadd.f32 %v5394, %v5395
  %v5397 = vsel %vm101, %v5319, 0.0
  %v5398 = vadd.f32 %v5396, %v5397
  %v5399 = vsel %vm101, %v5320, 0.0
  %v5400 = vadd.f32 %v5398, %v5399
  %v5401 = vsel %vm101, %v5321, 0.0
  %v5402 = vadd.f32 %v5400, %v5401
  %v5403 = vsel %vm101, %v5322, 0.0
  %v5404 = vadd.f32 %v5402, %v5403
  %v5405 = vsel %vm101, %v5323, 0.0
  %v5406 = vadd.f32 %v5404, %v5405
  %v5407 = vsel %vm101, %v5324, 0.0
  %v5408 = vadd.f32 %v5406, %v5407
  %v5409 = vsel %vm101, %v5325, 0.0
  %v5410 = vadd.f32 %v5408, %v5409
  %v5411 = vsel %vm101, %v5326, 0.0
  %v5412 = vadd.f32 %v5410, %v5411
  %v5413 = vsel %vm101, %v5327, 0.0
  %v5414 = vadd.f32 %v5412, %v5413
  %v5415 = vsel %vm101, %v5328, 0.0
  %v5416 = vadd.f32 %v5414, %v5415
  %v5417 = vsel %vm101, %v5329, 0.0
  %v5418 = vadd.f32 %v5416, %v5417
  %v5419 = vsel %vm101, %v5330, 0.0
  %v5420 = vadd.f32 %v5418, %v5419
  %v5421 = vsel %vm101, %v5331, 0.0
  %v5422 = vadd.f32 %v5420, %v5421
  %v5423 = vsel %vm101, %v5332, 0.0
  %v5424 = vadd.f32 %v5422, %v5423
  %v5425 = vsel %vm101, %v5333, 0.0
  %v5426 = vadd.f32 %v5424, %v5425
  %v5427 = vsel %vm101, %v5334, 0.0
  %v5428 = vadd.f32 %v5426, %v5427
  %v5429 = vsel %vm101, %v5335, 0.0
  %v5430 = vadd.f32 %v5428, %v5429
  %v5431 = vsel %vm101, %v5336, 0.0
  %v5432 = vadd.f32 %v5430, %v5431
  %v5433 = vsel %vm101, %v5337, 0.0
  %v5434 = vadd.f32 %v5432, %v5433
  %v5435 = vsel %vm101, %v5338, 0.0
  %v5436 = vadd.f32 %v5434, %v5435
  %v5437 = vsel %vm101, %v5339, 0.0
  %v5438 = vadd.f32 %v5436, %v5437
  %v5439 = vsel %vm101, %v5340, 0.0
  %v5440 = vadd.f32 %v5438, %v5439
  %v5441 = vsel %vm101, %v5341, 0.0
  %v5442 = vadd.f32 %v5440, %v5441
  %v5443 = vsel %vm101, %v5342, 0.0
  %v5444 = vadd.f32 %v5442, %v5443
  %v5445 = vsel %vm101, %v5343, 0.0
  %v5446 = vadd.f32 %v5444, %v5445
  %v5447 = vsel %vm101, %v5344, 0.0
  %v5448 = vadd.f32 %v5446, %v5447
  %v5449 = vsel %vm101, %v5345, 0.0
  %v5450 = vadd.f32 %v5448, %v5449
  %v5451 = vsel %vm101, %v5346, 0.0
  %v5452 = vadd.f32 %v5450, %v5451
  %v5453 = vsel %vm101, %v5347, 0.0
  %v5454 = vadd.f32 %v5452, %v5453
  %v5455 = vsel %vm101, %v5348, 0.0
  %v5456 = vadd.f32 %v5454, %v5455
  %v5457 = vsel %vm101, %v5349, 0.0
  %v5458 = vadd.f32 %v5456, %v5457
  %v5459 = vsel %vm101, %v5350, 0.0
  %v5460 = vadd.f32 %v5458, %v5459
  %v5461 = vsel %vm101, %v5351, 0.0
  %v5462 = vadd.f32 %v5460, %v5461
  %v5463 = vsel %vm101, %v5352, 0.0
  %v5464 = vadd.f32 %v5462, %v5463
  %v5465 = vsel %vm101, %v5353, 0.0
  %v5466 = vadd.f32 %v5464, %v5465
  %v5467 = vsel %vm101, %v5354, 0.0
  %v5468 = vadd.f32 %v5466, %v5467
  %v5469 = vsel %vm101, %v5355, 0.0
  %v5470 = vadd.f32 %v5468, %v5469
  %v5471 = vsel %vm101, %v5356, 0.0
  %v5472 = vadd.f32 %v5470, %v5471
  %v5473 = vsel %vm101, %v5357, 0.0
  %v5474 = vadd.f32 %v5472, %v5473
  %v5475 = vsel %vm101, %v5358, 0.0
  %v5476 = vadd.f32 %v5474, %v5475
  %v5477 = vsel %vm101, %v5359, 0.0
  %v5478 = vadd.f32 %v5476, %v5477
  %v5479 = vsel %vm101, %v5360, 0.0
  %v5480 = vadd.f32 %v5478, %v5479
  %v5481 = vsel %vm101, %v5361, 0.0
  %v5482 = vadd.f32 %v5480, %v5481
  %v5483 = vsel %vm101, %v5362, 0.0
  %v5484 = vadd.f32 %v5482, %v5483
  %v5485 = vsel %vm101, %v5363, 0.0
  %v5486 = vadd.f32 %v5484, %v5485
  %v5487 = vsel %vm101, %v5364, 0.0
  %v5488 = vadd.f32 %v5486, %v5487
  %v5489 = vsel %vm101, %v5365, 0.0
  %v5490 = vadd.f32 %v5488, %v5489
  %v5491 = vsel %vm101, %v5366, 0.0
  %v5492 = vadd.f32 %v5490, %v5491
  %v5493 = vsel %vm101, %v5367, 0.0
  %v5494 = vadd.f32 %v5492, %v5493
  %v5495 = vrot.slane %v5494, 4
  %v5496 = vadd.f32 %v5494, %v5495
  %v5497 = vrot.slane %v5496, 2
  %v5498 = vadd.f32 %v5496, %v5497
  %v5499 = vrot.slane %v5498, 1
  %v5500 = vadd.f32 %v5498, %v5499
  %v5501 = vmul.f32 %v5500, 0.001953125
  %v5502 = vmul.f32 %v5303, %v5303
  %v5503 = vsub.f32 %v5501, %v5502
  %v5504 = vmax.f32 %v5503, 0.0
  %v5505 = vadd.f32 %v5504, 1e-05
  %v5506 = vrsqrt.pop %v5505
  %v5507 = vld [vmem:[%s3] sm:$0x1]
  %v5508 = vmul.f32 %v5506, %v5507
  %v5509 = vsub.f32 %v5106, %v5303
  %v5510 = vsub.f32 %v5107, %v5303
  %v5511 = vsub.f32 %v5108, %v5303
  %v5512 = vsub.f32 %v5109, %v5303
  %v5513 = vsub.f32 %v5110, %v5303
  %v5514 = vsub.f32 %v5111, %v5303
  %v5515 = vsub.f32 %v5112, %v5303
  %v5516 = vsub.f32 %v5113, %v5303
  %v5517 = vsub.f32 %v5114, %v5303
  %v5518 = vsub.f32 %v5115, %v5303
  %v5519 = vsub.f32 %v5116, %v5303
  %v5520 = vsub.f32 %v5117, %v5303
  %v5521 = vsub.f32 %v5118, %v5303
  %v5522 = vsub.f32 %v5119, %v5303
  %v5523 = vsub.f32 %v5120, %v5303
  %v5524 = vsub.f32 %v5121, %v5303
  %v5525 = vsub.f32 %v5122, %v5303
  %v5526 = vsub.f32 %v5123, %v5303
  %v5527 = vsub.f32 %v5124, %v5303
  %v5528 = vsub.f32 %v5125, %v5303
  %v5529 = vsub.f32 %v5126, %v5303
  %v5530 = vsub.f32 %v5127, %v5303
  %v5531 = vsub.f32 %v5128, %v5303
  %v5532 = vsub.f32 %v5129, %v5303
  %v5533 = vsub.f32 %v5130, %v5303
  %v5534 = vsub.f32 %v5131, %v5303
  %v5535 = vsub.f32 %v5132, %v5303
  %v5536 = vsub.f32 %v5133, %v5303
  %v5537 = vsub.f32 %v5134, %v5303
  %v5538 = vsub.f32 %v5135, %v5303
  %v5539 = vsub.f32 %v5136, %v5303
  %v5540 = vsub.f32 %v5137, %v5303
  %v5541 = vsub.f32 %v5138, %v5303
  %v5542 = vsub.f32 %v5139, %v5303
  %v5543 = vsub.f32 %v5140, %v5303
  %v5544 = vsub.f32 %v5141, %v5303
  %v5545 = vsub.f32 %v5142, %v5303
  %v5546 = vsub.f32 %v5143, %v5303
  %v5547 = vsub.f32 %v5144, %v5303
  %v5548 = vsub.f32 %v5145, %v5303
  %v5549 = vsub.f32 %v5146, %v5303
  %v5550 = vsub.f32 %v5147, %v5303
  %v5551 = vsub.f32 %v5148, %v5303
  %v5552 = vsub.f32 %v5149, %v5303
  %v5553 = vsub.f32 %v5150, %v5303
  %v5554 = vsub.f32 %v5151, %v5303
  %v5555 = vsub.f32 %v5152, %v5303
  %v5556 = vsub.f32 %v5153, %v5303
  %v5557 = vsub.f32 %v5154, %v5303
  %v5558 = vsub.f32 %v5155, %v5303
  %v5559 = vsub.f32 %v5156, %v5303
  %v5560 = vsub.f32 %v5157, %v5303
  %v5561 = vsub.f32 %v5158, %v5303
  %v5562 = vsub.f32 %v5159, %v5303
  %v5563 = vsub.f32 %v5160, %v5303
  %v5564 = vsub.f32 %v5161, %v5303
  %v5565 = vsub.f32 %v5162, %v5303
  %v5566 = vsub.f32 %v5163, %v5303
  %v5567 = vsub.f32 %v5164, %v5303
  %v5568 = vsub.f32 %v5165, %v5303
  %v5569 = vsub.f32 %v5166, %v5303
  %v5570 = vsub.f32 %v5167, %v5303
  %v5571 = vsub.f32 %v5168, %v5303
  %v5572 = vsub.f32 %v5169, %v5303
  %v5573 = vlaneseq
  %v5574 = vshrl.u32 %v5573, 7
  %v5575 = vsub.s32 0, %v5574
  %v5576 = vrot.slane %v5508, %v5575
  %v5577 = vmul.f32 %v5509, %v5576
  %v5578 = vmul.f32 %v5510, %v5576
  %v5579 = vmul.f32 %v5511, %v5576
  %v5580 = vmul.f32 %v5512, %v5576
  %v5581 = vmul.f32 %v5513, %v5576
  %v5582 = vmul.f32 %v5514, %v5576
  %v5583 = vmul.f32 %v5515, %v5576
  %v5584 = vmul.f32 %v5516, %v5576
  %v5585 = vmul.f32 %v5517, %v5576
  %v5586 = vmul.f32 %v5518, %v5576
  %v5587 = vmul.f32 %v5519, %v5576
  %v5588 = vmul.f32 %v5520, %v5576
  %v5589 = vmul.f32 %v5521, %v5576
  %v5590 = vmul.f32 %v5522, %v5576
  %v5591 = vmul.f32 %v5523, %v5576
  %v5592 = vmul.f32 %v5524, %v5576
  %v5593 = vmul.f32 %v5525, %v5576
  %v5594 = vmul.f32 %v5526, %v5576
  %v5595 = vmul.f32 %v5527, %v5576
  %v5596 = vmul.f32 %v5528, %v5576
  %v5597 = vmul.f32 %v5529, %v5576
  %v5598 = vmul.f32 %v5530, %v5576
  %v5599 = vmul.f32 %v5531, %v5576
  %v5600 = vmul.f32 %v5532, %v5576
  %v5601 = vmul.f32 %v5533, %v5576
  %v5602 = vmul.f32 %v5534, %v5576
  %v5603 = vmul.f32 %v5535, %v5576
  %v5604 = vmul.f32 %v5536, %v5576
  %v5605 = vmul.f32 %v5537, %v5576
  %v5606 = vmul.f32 %v5538, %v5576
  %v5607 = vmul.f32 %v5539, %v5576
  %v5608 = vmul.f32 %v5540, %v5576
  %v5609 = vmul.f32 %v5541, %v5576
  %v5610 = vmul.f32 %v5542, %v5576
  %v5611 = vmul.f32 %v5543, %v5576
  %v5612 = vmul.f32 %v5544, %v5576
  %v5613 = vmul.f32 %v5545, %v5576
  %v5614 = vmul.f32 %v5546, %v5576
  %v5615 = vmul.f32 %v5547, %v5576
  %v5616 = vmul.f32 %v5548, %v5576
  %v5617 = vmul.f32 %v5549, %v5576
  %v5618 = vmul.f32 %v5550, %v5576
  %v5619 = vmul.f32 %v5551, %v5576
  %v5620 = vmul.f32 %v5552, %v5576
  %v5621 = vmul.f32 %v5553, %v5576
  %v5622 = vmul.f32 %v5554, %v5576
  %v5623 = vmul.f32 %v5555, %v5576
  %v5624 = vmul.f32 %v5556, %v5576
  %v5625 = vmul.f32 %v5557, %v5576
  %v5626 = vmul.f32 %v5558, %v5576
  %v5627 = vmul.f32 %v5559, %v5576
  %v5628 = vmul.f32 %v5560, %v5576
  %v5629 = vmul.f32 %v5561, %v5576
  %v5630 = vmul.f32 %v5562, %v5576
  %v5631 = vmul.f32 %v5563, %v5576
  %v5632 = vmul.f32 %v5564, %v5576
  %v5633 = vmul.f32 %v5565, %v5576
  %v5634 = vmul.f32 %v5566, %v5576
  %v5635 = vmul.f32 %v5567, %v5576
  %v5636 = vmul.f32 %v5568, %v5576
  %v5637 = vmul.f32 %v5569, %v5576
  %v5638 = vmul.f32 %v5570, %v5576
  %v5639 = vmul.f32 %v5571, %v5576
  %v5640 = vmul.f32 %v5572, %v5576
  %v5641 = vld [vmem:[%s4] sm:$0x1]
  %v5643 = vlaneseq
  %v5644 = vshrl.u32 %v5643, 7
  %v5645 = vsub.s32 0, %v5644
  %v5646 = vrot.slane %v5641, %v5645
  %v5648 = vadd.f32 %v5577, %v5646
  %v5649 = vadd.f32 %v5578, %v5646
  %v5650 = vadd.f32 %v5579, %v5646
  %v5651 = vadd.f32 %v5580, %v5646
  %v5652 = vadd.f32 %v5581, %v5646
  %v5653 = vadd.f32 %v5582, %v5646
  %v5654 = vadd.f32 %v5583, %v5646
  %v5655 = vadd.f32 %v5584, %v5646
  %v5656 = vadd.f32 %v5585, %v5646
  %v5657 = vadd.f32 %v5586, %v5646
  %v5658 = vadd.f32 %v5587, %v5646
  %v5659 = vadd.f32 %v5588, %v5646
  %v5660 = vadd.f32 %v5589, %v5646
  %v5661 = vadd.f32 %v5590, %v5646
  %v5662 = vadd.f32 %v5591, %v5646
  %v5663 = vadd.f32 %v5592, %v5646
  %v5664 = vadd.f32 %v5593, %v5646
  %v5665 = vadd.f32 %v5594, %v5646
  %v5666 = vadd.f32 %v5595, %v5646
  %v5667 = vadd.f32 %v5596, %v5646
  %v5668 = vadd.f32 %v5597, %v5646
  %v5669 = vadd.f32 %v5598, %v5646
  %v5670 = vadd.f32 %v5599, %v5646
  %v5671 = vadd.f32 %v5600, %v5646
  %v5672 = vadd.f32 %v5601, %v5646
  %v5673 = vadd.f32 %v5602, %v5646
  %v5674 = vadd.f32 %v5603, %v5646
  %v5675 = vadd.f32 %v5604, %v5646
  %v5676 = vadd.f32 %v5605, %v5646
  %v5677 = vadd.f32 %v5606, %v5646
  %v5678 = vadd.f32 %v5607, %v5646
  %v5679 = vadd.f32 %v5608, %v5646
  %v5680 = vadd.f32 %v5609, %v5646
  %v5681 = vadd.f32 %v5610, %v5646
  %v5682 = vadd.f32 %v5611, %v5646
  %v5683 = vadd.f32 %v5612, %v5646
  %v5684 = vadd.f32 %v5613, %v5646
  %v5685 = vadd.f32 %v5614, %v5646
  %v5686 = vadd.f32 %v5615, %v5646
  %v5687 = vadd.f32 %v5616, %v5646
  %v5688 = vadd.f32 %v5617, %v5646
  %v5689 = vadd.f32 %v5618, %v5646
  %v5690 = vadd.f32 %v5619, %v5646
  %v5691 = vadd.f32 %v5620, %v5646
  %v5692 = vadd.f32 %v5621, %v5646
  %v5693 = vadd.f32 %v5622, %v5646
  %v5694 = vadd.f32 %v5623, %v5646
  %v5695 = vadd.f32 %v5624, %v5646
  %v5696 = vadd.f32 %v5625, %v5646
  %v5697 = vadd.f32 %v5626, %v5646
  %v5698 = vadd.f32 %v5627, %v5646
  %v5699 = vadd.f32 %v5628, %v5646
  %v5700 = vadd.f32 %v5629, %v5646
  %v5701 = vadd.f32 %v5630, %v5646
  %v5702 = vadd.f32 %v5631, %v5646
  %v5703 = vadd.f32 %v5632, %v5646
  %v5704 = vadd.f32 %v5633, %v5646
  %v5705 = vadd.f32 %v5634, %v5646
  %v5706 = vadd.f32 %v5635, %v5646
  %v5707 = vadd.f32 %v5636, %v5646
  %v5708 = vadd.f32 %v5637, %v5646
  %v5709 = vadd.f32 %v5638, %v5646
  %v5710 = vadd.f32 %v5639, %v5646
  %v5711 = vadd.f32 %v5640, %v5646
  %s5712 = sld [smem:[#allocation3]]
  %vm5713 = vcmp.gt.f32.partialorder %v5648, 0.0
  %vm5714 = vcmp.gt.f32.partialorder %v5649, 0.0
  %vm5715 = vcmp.gt.f32.partialorder %v5650, 0.0
  %vm5716 = vcmp.gt.f32.partialorder %v5651, 0.0
  %vm5717 = vcmp.gt.f32.partialorder %v5652, 0.0
  %vm5718 = vcmp.gt.f32.partialorder %v5653, 0.0
  %vm5719 = vcmp.gt.f32.partialorder %v5654, 0.0
  %vm5720 = vcmp.gt.f32.partialorder %v5655, 0.0
  %vm5721 = vcmp.gt.f32.partialorder %v5656, 0.0
  %vm5722 = vcmp.gt.f32.partialorder %v5657, 0.0
  %vm5723 = vcmp.gt.f32.partialorder %v5658, 0.0
  %vm5724 = vcmp.gt.f32.partialorder %v5659, 0.0
  %vm5725 = vcmp.gt.f32.partialorder %v5660, 0.0
  %vm5726 = vcmp.gt.f32.partialorder %v5661, 0.0
  %vm5727 = vcmp.gt.f32.partialorder %v5662, 0.0
  %vm5728 = vcmp.gt.f32.partialorder %v5663, 0.0
  %vm5729 = vcmp.gt.f32.partialorder %v5664, 0.0
  %vm5730 = vcmp.gt.f32.partialorder %v5665, 0.0
  %vm5731 = vcmp.gt.f32.partialorder %v5666, 0.0
  %vm5732 = vcmp.gt.f32.partialorder %v5667, 0.0
  %vm5733 = vcmp.gt.f32.partialorder %v5668, 0.0
  %vm5734 = vcmp.gt.f32.partialorder %v5669, 0.0
  %vm5735 = vcmp.gt.f32.partialorder %v5670, 0.0
  %vm5736 = vcmp.gt.f32.partialorder %v5671, 0.0
  %vm5737 = vcmp.gt.f32.partialorder %v5672, 0.0
  %vm5738 = vcmp.gt.f32.partialorder %v5673, 0.0
  %vm5739 = vcmp.gt.f32.partialorder %v5674, 0.0
  %vm5740 = vcmp.gt.f32.partialorder %v5675, 0.0
  %vm5741 = vcmp.gt.f32.partialorder %v5676, 0.0
  %vm5742 = vcmp.gt.f32.partialorder %v5677, 0.0
  %vm5743 = vcmp.gt.f32.partialorder %v5678, 0.0
  %vm5744 = vcmp.gt.f32.partialorder %v5679, 0.0
  %vm5745 = vcmp.gt.f32.partialorder %v5680, 0.0
  %vm5746 = vcmp.gt.f32.partialorder %v5681, 0.0
  %vm5747 = vcmp.gt.f32.partialorder %v5682, 0.0
  %vm5748 = vcmp.gt.f32.partialorder %v5683, 0.0
  %vm5749 = vcmp.gt.f32.partialorder %v5684, 0.0
  %vm5750 = vcmp.gt.f32.partialorder %v5685, 0.0
  %vm5751 = vcmp.gt.f32.partialorder %v5686, 0.0
  %vm5752 = vcmp.gt.f32.partialorder %v5687, 0.0
  %vm5753 = vcmp.gt.f32.partialorder %v5688, 0.0
  %vm5754 = vcmp.gt.f32.partialorder %v5689, 0.0
  %vm5755 = vcmp.gt.f32.partialorder %v5690, 0.0
  %vm5756 = vcmp.gt.f32.partialorder %v5691, 0.0
  %vm5757 = vcmp.gt.f32.partialorder %v5692, 0.0
  %vm5758 = vcmp.gt.f32.partialorder %v5693, 0.0
  %vm5759 = vcmp.gt.f32.partialorder %v5694, 0.0
  %vm5760 = vcmp.gt.f32.partialorder %v5695, 0.0
  %vm5761 = vcmp.gt.f32.partialorder %v5696, 0.0
  %vm5762 = vcmp.gt.f32.partialorder %v5697, 0.0
  %vm5763 = vcmp.gt.f32.partialorder %v5698, 0.0
  %vm5764 = vcmp.gt.f32.partialorder %v5699, 0.0
  %vm5765 = vcmp.gt.f32.partialorder %v5700, 0.0
  %vm5766 = vcmp.gt.f32.partialorder %v5701, 0.0
  %vm5767 = vcmp.gt.f32.partialorder %v5702, 0.0
  %vm5768 = vcmp.gt.f32.partialorder %v5703, 0.0
  %vm5769 = vcmp.gt.f32.partialorder %v5704, 0.0
  %vm5770 = vcmp.gt.f32.partialorder %v5705, 0.0
  %vm5771 = vcmp.gt.f32.partialorder %v5706, 0.0
  %vm5772 = vcmp.gt.f32.partialorder %v5707, 0.0
  %vm5773 = vcmp.gt.f32.partialorder %v5708, 0.0
  %vm5774 = vcmp.gt.f32.partialorder %v5709, 0.0
  %vm5775 = vcmp.gt.f32.partialorder %v5710, 0.0
  %vm5776 = vcmp.gt.f32.partialorder %v5711, 0.0
  %v5777 = vstv %s5712
  %v5778 = vmul.f32 %v5777, %v5648
  %v5779 = vmul.f32 %v5777, %v5649
  %v5780 = vmul.f32 %v5777, %v5650
  %v5781 = vmul.f32 %v5777, %v5651
  %v5782 = vmul.f32 %v5777, %v5652
  %v5783 = vmul.f32 %v5777, %v5653
  %v5784 = vmul.f32 %v5777, %v5654
  %v5785 = vmul.f32 %v5777, %v5655
  %v5786 = vmul.f32 %v5777, %v5656
  %v5787 = vmul.f32 %v5777, %v5657
  %v5788 = vmul.f32 %v5777, %v5658
  %v5789 = vmul.f32 %v5777, %v5659
  %v5790 = vmul.f32 %v5777, %v5660
  %v5791 = vmul.f32 %v5777, %v5661
  %v5792 = vmul.f32 %v5777, %v5662
  %v5793 = vmul.f32 %v5777, %v5663
  %v5794 = vmul.f32 %v5777, %v5664
  %v5795 = vmul.f32 %v5777, %v5665
  %v5796 = vmul.f32 %v5777, %v5666
  %v5797 = vmul.f32 %v5777, %v5667
  %v5798 = vmul.f32 %v5777, %v5668
  %v5799 = vmul.f32 %v5777, %v5669
  %v5800 = vmul.f32 %v5777, %v5670
  %v5801 = vmul.f32 %v5777, %v5671
  %v5802 = vmul.f32 %v5777, %v5672
  %v5803 = vmul.f32 %v5777, %v5673
  %v5804 = vmul.f32 %v5777, %v5674
  %v5805 = vmul.f32 %v5777, %v5675
  %v5806 = vmul.f32 %v5777, %v5676
  %v5807 = vmul.f32 %v5777, %v5677
  %v5808 = vmul.f32 %v5777, %v5678
  %v5809 = vmul.f32 %v5777, %v5679
  %v5810 = vmul.f32 %v5777, %v5680
  %v5811 = vmul.f32 %v5777, %v5681
  %v5812 = vmul.f32 %v5777, %v5682
  %v5813 = vmul.f32 %v5777, %v5683
  %v5814 = vmul.f32 %v5777, %v5684
  %v5815 = vmul.f32 %v5777, %v5685
  %v5816 = vmul.f32 %v5777, %v5686
  %v5817 = vmul.f32 %v5777, %v5687
  %v5818 = vmul.f32 %v5777, %v5688
  %v5819 = vmul.f32 %v5777, %v5689
  %v5820 = vmul.f32 %v5777, %v5690
  %v5821 = vmul.f32 %v5777, %v5691
  %v5822 = vmul.f32 %v5777, %v5692
  %v5823 = vmul.f32 %v5777, %v5693
  %v5824 = vmul.f32 %v5777, %v5694
  %v5825 = vmul.f32 %v5777, %v5695
  %v5826 = vmul.f32 %v5777, %v5696
  %v5827 = vmul.f32 %v5777, %v5697
  %v5828 = vmul.f32 %v5777, %v5698
  %v5829 = vmul.f32 %v5777, %v5699
  %v5830 = vmul.f32 %v5777, %v5700
  %v5831 = vmul.f32 %v5777, %v5701
  %v5832 = vmul.f32 %v5777, %v5702
  %v5833 = vmul.f32 %v5777, %v5703
  %v5834 = vmul.f32 %v5777, %v5704
  %v5835 = vmul.f32 %v5777, %v5705
  %v5836 = vmul.f32 %v5777, %v5706
  %v5837 = vmul.f32 %v5777, %v5707
  %v5838 = vmul.f32 %v5777, %v5708
  %v5839 = vmul.f32 %v5777, %v5709
  %v5840 = vmul.f32 %v5777, %v5710
  %v5841 = vmul.f32 %v5777, %v5711
  %v5842 = vsel %vm5713, %v5648, %v5778
  %v5843 = vsel %vm5714, %v5649, %v5779
  %v5844 = vsel %vm5715, %v5650, %v5780
  %v5845 = vsel %vm5716, %v5651, %v5781
  %v5846 = vsel %vm5717, %v5652, %v5782
  %v5847 = vsel %vm5718, %v5653, %v5783
  %v5848 = vsel %vm5719, %v5654, %v5784
  %v5849 = vsel %vm5720, %v5655, %v5785
  %v5850 = vsel %vm5721, %v5656, %v5786
  %v5851 = vsel %vm5722, %v5657, %v5787
  %v5852 = vsel %vm5723, %v5658, %v5788
  %v5853 = vsel %vm5724, %v5659, %v5789
  %v5854 = vsel %vm5725, %v5660, %v5790
  %v5855 = vsel %vm5726, %v5661, %v5791
  %v5856 = vsel %vm5727, %v5662, %v5792
  %v5857 = vsel %vm5728, %v5663, %v5793
  %v5858 = vsel %vm5729, %v5664, %v5794
  %v5859 = vsel %vm5730, %v5665, %v5795
  %v5860 = vsel %vm5731, %v5666, %v5796
  %v5861 = vsel %vm5732, %v5667, %v5797
  %v5862 = vsel %vm5733, %v5668, %v5798
  %v5863 = vsel %vm5734, %v5669, %v5799
  %v5864 = vsel %vm5735, %v5670, %v5800
  %v5865 = vsel %vm5736, %v5671, %v5801
  %v5866 = vsel %vm5737, %v5672, %v5802
  %v5867 = vsel %vm5738, %v5673, %v5803
  %v5868 = vsel %vm5739, %v5674, %v5804
  %v5869 = vsel %vm5740, %v5675, %v5805
  %v5870 = vsel %vm5741, %v5676, %v5806
  %v5871 = vsel %vm5742, %v5677, %v5807
  %v5872 = vsel %vm5743, %v5678, %v5808
  %v5873 = vsel %vm5744, %v5679, %v5809
  %v5874 = vsel %vm5745, %v5680, %v5810
  %v5875 = vsel %vm5746, %v5681, %v5811
  %v5876 = vsel %vm5747, %v5682, %v5812
  %v5877 = vsel %vm5748, %v5683, %v5813
  %v5878 = vsel %vm5749, %v5684, %v5814
  %v5879 = vsel %vm5750, %v5685, %v5815
  %v5880 = vsel %vm5751, %v5686, %v5816
  %v5881 = vsel %vm5752, %v5687, %v5817
  %v5882 = vsel %vm5753, %v5688, %v5818
  %v5883 = vsel %vm5754, %v5689, %v5819
  %v5884 = vsel %vm5755, %v5690, %v5820
  %v5885 = vsel %vm5756, %v5691, %v5821
  %v5886 = vsel %vm5757, %v5692, %v5822
  %v5887 = vsel %vm5758, %v5693, %v5823
  %v5888 = vsel %vm5759, %v5694, %v5824
  %v5889 = vsel %vm5760, %v5695, %v5825
  %v5890 = vsel %vm5761, %v5696, %v5826
  %v5891 = vsel %vm5762, %v5697, %v5827
  %v5892 = vsel %vm5763, %v5698, %v5828
  %v5893 = vsel %vm5764, %v5699, %v5829
  %v5894 = vsel %vm5765, %v5700, %v5830
  %v5895 = vsel %vm5766, %v5701, %v5831
  %v5896 = vsel %vm5767, %v5702, %v5832
  %v5897 = vsel %vm5768, %v5703, %v5833
  %v5898 = vsel %vm5769, %v5704, %v5834
  %v5899 = vsel %vm5770, %v5705, %v5835
  %v5900 = vsel %vm5771, %v5706, %v5836
  %v5901 = vsel %vm5772, %v5707, %v5837
  %v5902 = vsel %vm5773, %v5708, %v5838
  %v5903 = vsel %vm5774, %v5709, %v5839
  %v5904 = vsel %vm5775, %v5710, %v5840
  %v5905 = vsel %vm5776, %v5711, %v5841
  %5906 = vst.msk [vmem:[%s211 + $0x1] sm:$0xff] %vm101, %v5842
  %5907 = vst.msk [vmem:[%s211 + $0x9] sm:$0xff] %vm101, %v5843
  %5908 = vst.msk [vmem:[%s211 + $0x19] sm:$0xff] %vm101, %v5844
  %5909 = vst.msk [vmem:[%s211 + $0x21] sm:$0xff] %vm101, %v5845
  %5910 = vst.msk [vmem:[%s211 + $0x31] sm:$0xff] %vm101, %v5846
  %5911 = vst.msk [vmem:[%s211 + $0x39] sm:$0xff] %vm101, %v5847
  %5912 = vst.msk [vmem:[%s211 + $0x49] sm:$0xff] %vm101, %v5848
  %5913 = vst.msk [vmem:[%s211 + $0x51] sm:$0xff] %vm101, %v5849
  %5914 = vst.msk [vmem:[%s211 + $0x61] sm:$0xff] %vm101, %v5850
  %5915 = vst.msk [vmem:[%s211 + $0x69] sm:$0xff] %vm101, %v5851
  %5916 = vst.msk [vmem:[%s211 + $0x79] sm:$0xff] %vm101, %v5852
  %5917 = vst.msk [vmem:[%s211 + $0x81] sm:$0xff] %vm101, %v5853
  %5918 = vst.msk [vmem:[%s211 + $0x91] sm:$0xff] %vm101, %v5854
  %5919 = vst.msk [vmem:[%s211 + $0x99] sm:$0xff] %vm101, %v5855
  %5920 = vst.msk [vmem:[%s211 + $0xa9] sm:$0xff] %vm101, %v5856
  %5921 = vst.msk [vmem:[%s211 + $0xb1] sm:$0xff] %vm101, %v5857
  %5922 = vst.msk [vmem:[%s211 + $0xc1] sm:$0xff] %vm101, %v5858
  %5923 = vst.msk [vmem:[%s211 + $0xc9] sm:$0xff] %vm101, %v5859
  %5924 = vst.msk [vmem:[%s211 + $0xd9] sm:$0xff] %vm101, %v5860
  %5925 = vst.msk [vmem:[%s211 + $0xe1] sm:$0xff] %vm101, %v5861
  %5926 = vst.msk [vmem:[%s211 + $0xf1] sm:$0xff] %vm101, %v5862
  %5927 = vst.msk [vmem:[%s211 + $0xf9] sm:$0xff] %vm101, %v5863
  %5928 = vst.msk [vmem:[%s211 + $0x109] sm:$0xff] %vm101, %v5864
  %5929 = vst.msk [vmem:[%s211 + $0x111] sm:$0xff] %vm101, %v5865
  %5930 = vst.msk [vmem:[%s211 + $0x121] sm:$0xff] %vm101, %v5866
  %5931 = vst.msk [vmem:[%s211 + $0x129] sm:$0xff] %vm101, %v5867
  %5932 = vst.msk [vmem:[%s211 + $0x139] sm:$0xff] %vm101, %v5868
  %5933 = vst.msk [vmem:[%s211 + $0x141] sm:$0xff] %vm101, %v5869
  %5934 = vst.msk [vmem:[%s211 + $0x151] sm:$0xff] %vm101, %v5870
  %5935 = vst.msk [vmem:[%s211 + $0x159] sm:$0xff] %vm101, %v5871
  %5936 = vst.msk [vmem:[%s211 + $0x169] sm:$0xff] %vm101, %v5872
  %5937 = vst.msk [vmem:[%s211 + $0x171] sm:$0xff] %vm101, %v5873
  %5938 = vst.msk [vmem:[%s211 + $0x1b1] sm:$0xff] %vm101, %v5874
  %5939 = vst.msk [vmem:[%s211 + $0x1b9] sm:$0xff] %vm101, %v5875
  %5940 = vst.msk [vmem:[%s211 + $0x1c9] sm:$0xff] %vm101, %v5876
  %5941 = vst.msk [vmem:[%s211 + $0x1d1] sm:$0xff] %vm101, %v5877
  %5942 = vst.msk [vmem:[%s211 + $0x1e1] sm:$0xff] %vm101, %v5878
  %5943 = vst.msk [vmem:[%s211 + $0x1e9] sm:$0xff] %vm101, %v5879
  %5944 = vst.msk [vmem:[%s211 + $0x1f9] sm:$0xff] %vm101, %v5880
  %5945 = vst.msk [vmem:[%s211 + $0x201] sm:$0xff] %vm101, %v5881
  %5946 = vst.msk [vmem:[%s211 + $0x211] sm:$0xff] %vm101, %v5882
  %5947 = vst.msk [vmem:[%s211 + $0x219] sm:$0xff] %vm101, %v5883
  %5948 = vst.msk [vmem:[%s211 + $0x229] sm:$0xff] %vm101, %v5884
  %5949 = vst.msk [vmem:[%s211 + $0x231] sm:$0xff] %vm101, %v5885
  %5950 = vst.msk [vmem:[%s211 + $0x241] sm:$0xff] %vm101, %v5886
  %5951 = vst.msk [vmem:[%s211 + $0x249] sm:$0xff] %vm101, %v5887
  %5952 = vst.msk [vmem:[%s211 + $0x259] sm:$0xff] %vm101, %v5888
  %5953 = vst.msk [vmem:[%s211 + $0x261] sm:$0xff] %vm101, %v5889
  %5954 = vst.msk [vmem:[%s211 + $0x271] sm:$0xff] %vm101, %v5890
  %5955 = vst.msk [vmem:[%s211 + $0x279] sm:$0xff] %vm101, %v5891
  %5956 = vst.msk [vmem:[%s211 + $0x289] sm:$0xff] %vm101, %v5892
  %5957 = vst.msk [vmem:[%s211 + $0x291] sm:$0xff] %vm101, %v5893
  %5958 = vst.msk [vmem:[%s211 + $0x2a1] sm:$0xff] %vm101, %v5894
  %5959 = vst.msk [vmem:[%s211 + $0x2a9] sm:$0xff] %vm101, %v5895
  %5960 = vst.msk [vmem:[%s211 + $0x2b9] sm:$0xff] %vm101, %v5896
  %5961 = vst.msk [vmem:[%s211 + $0x2c1] sm:$0xff] %vm101, %v5897
  %5962 = vst.msk [vmem:[%s211 + $0x2d1] sm:$0xff] %vm101, %v5898
  %5963 = vst.msk [vmem:[%s211 + $0x2d9] sm:$0xff] %vm101, %v5899
  %5964 = vst.msk [vmem:[%s211 + $0x2e9] sm:$0xff] %vm101, %v5900
  %5965 = vst.msk [vmem:[%s211 + $0x2f1] sm:$0xff] %vm101, %v5901
  %5966 = vst.msk [vmem:[%s211 + $0x301] sm:$0xff] %vm101, %v5902
  %5967 = vst.msk [vmem:[%s211 + $0x309] sm:$0xff] %vm101, %v5903
  %5968 = vst.msk [vmem:[%s211 + $0x319] sm:$0xff] %vm101, %v5904
  %5969 = vst.msk [vmem:[%s211 + $0x321] sm:$0xff] %vm101, %v5905
  %v5970 = vld [vmem:[#allocation2] sm:$0xff]
  %v5971 = vld [vmem:[#allocation2 + $0x8] sm:$0xff]
  %v5972 = vld [vmem:[#allocation2 + $0x18] sm:$0xff]
  %v5973 = vld [vmem:[#allocation2 + $0x20] sm:$0xff]
  %v5974 = vld [vmem:[#allocation2 + $0x30] sm:$0xff]
  %v5975 = vld [vmem:[#allocation2 + $0x38] sm:$0xff]
  %v5976 = vld [vmem:[#allocation2 + $0x48] sm:$0xff]
  %v5977 = vld [vmem:[#allocation2 + $0x50] sm:$0xff]
  %v5978 = vld [vmem:[#allocation2 + $0x60] sm:$0xff]
  %v5979 = vld [vmem:[#allocation2 + $0x68] sm:$0xff]
  %v5980 = vld [vmem:[#allocation2 + $0x78] sm:$0xff]
  %v5981 = vld [vmem:[#allocation2 + $0x80] sm:$0xff]
  %v5982 = vld [vmem:[#allocation2 + $0x90] sm:$0xff]
  %v5983 = vld [vmem:[#allocation2 + $0x98] sm:$0xff]
  %v5984 = vld [vmem:[#allocation2 + $0xa8] sm:$0xff]
  %v5985 = vld [vmem:[#allocation2 + $0xb0] sm:$0xff]
  %v5986 = vld [vmem:[#allocation2 + $0xc0] sm:$0xff]
  %v5987 = vld [vmem:[#allocation2 + $0xc8] sm:$0xff]
  %v5988 = vld [vmem:[#allocation2 + $0xd8] sm:$0xff]
  %v5989 = vld [vmem:[#allocation2 + $0xe0] sm:$0xff]
  %v5990 = vld [vmem:[#allocation2 + $0xf0] sm:$0xff]
  %v5991 = vld [vmem:[#allocation2 + $0xf8] sm:$0xff]
  %v5992 = vld [vmem:[#allocation2 + $0x108] sm:$0xff]
  %v5993 = vld [vmem:[#allocation2 + $0x110] sm:$0xff]
  %v5994 = vld [vmem:[#allocation2 + $0x120] sm:$0xff]
  %v5995 = vld [vmem:[#allocation2 + $0x128] sm:$0xff]
  %v5996 = vld [vmem:[#allocation2 + $0x138] sm:$0xff]
  %v5997 = vld [vmem:[#allocation2 + $0x140] sm:$0xff]
  %v5998 = vld [vmem:[#allocation2 + $0x150] sm:$0xff]
  %v5999 = vld [vmem:[#allocation2 + $0x158] sm:$0xff]
  %v6000 = vld [vmem:[#allocation2 + $0x168] sm:$0xff]
  %v6001 = vld [vmem:[#allocation2 + $0x170] sm:$0xff]
  %v6002 = vld [vmem:[#allocation2 + $0x1b0] sm:$0xff]
  %v6003 = vld [vmem:[#allocation2 + $0x1b8] sm:$0xff]
  %v6004 = vld [vmem:[#allocation2 + $0x1c8] sm:$0xff]
  %v6005 = vld [vmem:[#allocation2 + $0x1d0] sm:$0xff]
  %v6006 = vld [vmem:[#allocation2 + $0x1e0] sm:$0xff]
  %v6007 = vld [vmem:[#allocation2 + $0x1e8] sm:$0xff]
  %v6008 = vld [vmem:[#allocation2 + $0x1f8] sm:$0xff]
  %v6009 = vld [vmem:[#allocation2 + $0x200] sm:$0xff]
  %v6010 = vld [vmem:[#allocation2 + $0x210] sm:$0xff]
  %v6011 = vld [vmem:[#allocation2 + $0x218] sm:$0xff]
  %v6012 = vld [vmem:[#allocation2 + $0x228] sm:$0xff]
  %v6013 = vld [vmem:[#allocation2 + $0x230] sm:$0xff]
  %v6014 = vld [vmem:[#allocation2 + $0x240] sm:$0xff]
  %v6015 = vld [vmem:[#allocation2 + $0x248] sm:$0xff]
  %v6016 = vld [vmem:[#allocation2 + $0x258] sm:$0xff]
  %v6017 = vld [vmem:[#allocation2 + $0x260] sm:$0xff]
  %v6018 = vld [vmem:[#allocation2 + $0x270] sm:$0xff]
  %v6019 = vld [vmem:[#allocation2 + $0x278] sm:$0xff]
  %v6020 = vld [vmem:[#allocation2 + $0x288] sm:$0xff]
  %v6021 = vld [vmem:[#allocation2 + $0x290] sm:$0xff]
  %v6022 = vld [vmem:[#allocation2 + $0x2a0] sm:$0xff]
  %v6023 = vld [vmem:[#allocation2 + $0x2a8] sm:$0xff]
  %v6024 = vld [vmem:[#allocation2 + $0x2b8] sm:$0xff]
  %v6025 = vld [vmem:[#allocation2 + $0x2c0] sm:$0xff]
  %v6026 = vld [vmem:[#allocation2 + $0x2d0] sm:$0xff]
  %v6027 = vld [vmem:[#allocation2 + $0x2d8] sm:$0xff]
  %v6028 = vld [vmem:[#allocation2 + $0x2e8] sm:$0xff]
  %v6029 = vld [vmem:[#allocation2 + $0x2f0] sm:$0xff]
  %v6030 = vld [vmem:[#allocation2 + $0x300] sm:$0xff]
  %v6031 = vld [vmem:[#allocation2 + $0x308] sm:$0xff]
  %v6032 = vld [vmem:[#allocation2 + $0x318] sm:$0xff]
  %v6033 = vld [vmem:[#allocation2 + $0x320] sm:$0xff]
  %v6034 = vpack.c.bf16 %v5971, %v5970
  %v6035 = vpack.c.bf16 %v5973, %v5972
  %v6036 = vpack.c.bf16 %v5975, %v5974
  %v6037 = vpack.c.bf16 %v5977, %v5976
  %v6038 = vpack.c.bf16 %v5979, %v5978
  %v6039 = vpack.c.bf16 %v5981, %v5980
  %v6040 = vpack.c.bf16 %v5983, %v5982
  %v6041 = vpack.c.bf16 %v5985, %v5984
  %v6042 = vpack.c.bf16 %v5987, %v5986
  %v6043 = vpack.c.bf16 %v5989, %v5988
  %v6044 = vpack.c.bf16 %v5991, %v5990
  %v6045 = vpack.c.bf16 %v5993, %v5992
  %v6046 = vpack.c.bf16 %v5995, %v5994
  %v6047 = vpack.c.bf16 %v5997, %v5996
  %v6048 = vpack.c.bf16 %v5999, %v5998
  %v6049 = vpack.c.bf16 %v6001, %v6000
  %v6050 = vpack.c.bf16 %v6003, %v6002
  %v6051 = vpack.c.bf16 %v6005, %v6004
  %v6052 = vpack.c.bf16 %v6007, %v6006
  %v6053 = vpack.c.bf16 %v6009, %v6008
  %v6054 = vpack.c.bf16 %v6011, %v6010
  %v6055 = vpack.c.bf16 %v6013, %v6012
  %v6056 = vpack.c.bf16 %v6015, %v6014
  %v6057 = vpack.c.bf16 %v6017, %v6016
  %v6058 = vpack.c.bf16 %v6019, %v6018
  %v6059 = vpack.c.bf16 %v6021, %v6020
  %v6060 = vpack.c.bf16 %v6023, %v6022
  %v6061 = vpack.c.bf16 %v6025, %v6024
  %v6062 = vpack.c.bf16 %v6027, %v6026
  %v6063 = vpack.c.bf16 %v6029, %v6028
  %v6064 = vpack.c.bf16 %v6031, %v6030
  %v6065 = vpack.c.bf16 %v6033, %v6032
  %v6066 = vld [vmem:[%s5] sm:$0x3]
  %v6067 = vld [vmem:[#allocation2 + $0x1] sm:$0xff]
  %v6068 = vld [vmem:[#allocation2 + $0x9] sm:$0xff]
  %v6069 = vld [vmem:[#allocation2 + $0x19] sm:$0xff]
  %v6070 = vld [vmem:[#allocation2 + $0x21] sm:$0xff]
  %v6071 = vld [vmem:[#allocation2 + $0x31] sm:$0xff]
  %v6072 = vld [vmem:[#allocation2 + $0x39] sm:$0xff]
  %v6073 = vld [vmem:[#allocation2 + $0x49] sm:$0xff]
  %v6074 = vld [vmem:[#allocation2 + $0x51] sm:$0xff]
  %v6075 = vld [vmem:[#allocation2 + $0x61] sm:$0xff]
  %v6076 = vld [vmem:[#allocation2 + $0x69] sm:$0xff]
  %v6077 = vld [vmem:[#allocation2 + $0x79] sm:$0xff]
  %v6078 = vld [vmem:[#allocation2 + $0x81] sm:$0xff]
  %v6079 = vld [vmem:[#allocation2 + $0x91] sm:$0xff]
  %v6080 = vld [vmem:[#allocation2 + $0x99] sm:$0xff]
  %v6081 = vld [vmem:[#allocation2 + $0xa9] sm:$0xff]
  %v6082 = vld [vmem:[#allocation2 + $0xb1] sm:$0xff]
  %v6083 = vld [vmem:[#allocation2 + $0xc1] sm:$0xff]
  %v6084 = vld [vmem:[#allocation2 + $0xc9] sm:$0xff]
  %v6085 = vld [vmem:[#allocation2 + $0xd9] sm:$0xff]
  %v6086 = vld [vmem:[#allocation2 + $0xe1] sm:$0xff]
  %v6087 = vld [vmem:[#allocation2 + $0xf1] sm:$0xff]
  %v6088 = vld [vmem:[#allocation2 + $0xf9] sm:$0xff]
  %v6089 = vld [vmem:[#allocation2 + $0x109] sm:$0xff]
  %v6090 = vld [vmem:[#allocation2 + $0x111] sm:$0xff]
  %v6091 = vld [vmem:[#allocation2 + $0x121] sm:$0xff]
  %v6092 = vld [vmem:[#allocation2 + $0x129] sm:$0xff]
  %v6093 = vld [vmem:[#allocation2 + $0x139] sm:$0xff]
  %v6094 = vld [vmem:[#allocation2 + $0x141] sm:$0xff]
  %v6095 = vld [vmem:[#allocation2 + $0x151] sm:$0xff]
  %v6096 = vld [vmem:[#allocation2 + $0x159] sm:$0xff]
  %v6097 = vld [vmem:[#allocation2 + $0x169] sm:$0xff]
  %v6098 = vld [vmem:[#allocation2 + $0x171] sm:$0xff]
  %v6099 = vld [vmem:[#allocation2 + $0x1b1] sm:$0xff]
  %v6100 = vld [vmem:[#allocation2 + $0x1b9] sm:$0xff]
  %v6101 = vld [vmem:[#allocation2 + $0x1c9] sm:$0xff]
  %v6102 = vld [vmem:[#allocation2 + $0x1d1] sm:$0xff]
  %v6103 = vld [vmem:[#allocation2 + $0x1e1] sm:$0xff]
  %v6104 = vld [vmem:[#allocation2 + $0x1e9] sm:$0xff]
  %v6105 = vld [vmem:[#allocation2 + $0x1f9] sm:$0xff]
  %v6106 = vld [vmem:[#allocation2 + $0x201] sm:$0xff]
  %v6107 = vld [vmem:[#allocation2 + $0x211] sm:$0xff]
  %v6108 = vld [vmem:[#allocation2 + $0x219] sm:$0xff]
  %v6109 = vld [vmem:[#allocation2 + $0x229] sm:$0xff]
  %v6110 = vld [vmem:[#allocation2 + $0x231] sm:$0xff]
  %v6111 = vld [vmem:[#allocation2 + $0x241] sm:$0xff]
  %v6112 = vld [vmem:[#allocation2 + $0x249] sm:$0xff]
  %v6113 = vld [vmem:[#allocation2 + $0x259] sm:$0xff]
  %v6114 = vld [vmem:[#allocation2 + $0x261] sm:$0xff]
  %v6115 = vld [vmem:[#allocation2 + $0x271] sm:$0xff]
  %v6116 = vld [vmem:[#allocation2 + $0x279] sm:$0xff]
  %v6117 = vld [vmem:[#allocation2 + $0x289] sm:$0xff]
  %v6118 = vld [vmem:[#allocation2 + $0x291] sm:$0xff]
  %v6119 = vld [vmem:[#allocation2 + $0x2a1] sm:$0xff]
  %v6120 = vld [vmem:[#allocation2 + $0x2a9] sm:$0xff]
  %v6121 = vld [vmem:[#allocation2 + $0x2b9] sm:$0xff]
  %v6122 = vld [vmem:[#allocation2 + $0x2c1] sm:$0xff]
  %v6123 = vld [vmem:[#allocation2 + $0x2d1] sm:$0xff]
  %v6124 = vld [vmem:[#allocation2 + $0x2d9] sm:$0xff]
  %v6125 = vld [vmem:[#allocation2 + $0x2e9] sm:$0xff]
  %v6126 = vld [vmem:[#allocation2 + $0x2f1] sm:$0xff]
  %v6127 = vld [vmem:[#allocation2 + $0x301] sm:$0xff]
  %v6128 = vld [vmem:[#allocation2 + $0x309] sm:$0xff]
  %v6129 = vld [vmem:[#allocation2 + $0x319] sm:$0xff]
  %v6130 = vld [vmem:[#allocation2 + $0x321] sm:$0xff]
  %v6131 = vpack.c.bf16 %v6068, %v6067
  %v6132 = vpack.c.bf16 %v6070, %v6069
  %v6133 = vpack.c.bf16 %v6072, %v6071
  %v6134 = vpack.c.bf16 %v6074, %v6073
  %v6135 = vpack.c.bf16 %v6076, %v6075
  %v6136 = vpack.c.bf16 %v6078, %v6077
  %v6137 = vpack.c.bf16 %v6080, %v6079
  %v6138 = vpack.c.bf16 %v6082, %v6081
  %v6139 = vpack.c.bf16 %v6084, %v6083
  %v6140 = vpack.c.bf16 %v6086, %v6085
  %v6141 = vpack.c.bf16 %v6088, %v6087
  %v6142 = vpack.c.bf16 %v6090, %v6089
  %v6143 = vpack.c.bf16 %v6092, %v6091
  %v6144 = vpack.c.bf16 %v6094, %v6093
  %v6145 = vpack.c.bf16 %v6096, %v6095
  %v6146 = vpack.c.bf16 %v6098, %v6097
  %v6147 = vpack.c.bf16 %v6100, %v6099
  %v6148 = vpack.c.bf16 %v6102, %v6101
  %v6149 = vpack.c.bf16 %v6104, %v6103
  %v6150 = vpack.c.bf16 %v6106, %v6105
  %v6151 = vpack.c.bf16 %v6108, %v6107
  %v6152 = vpack.c.bf16 %v6110, %v6109
  %v6153 = vpack.c.bf16 %v6112, %v6111
  %v6154 = vpack.c.bf16 %v6114, %v6113
  %v6155 = vpack.c.bf16 %v6116, %v6115
  %v6156 = vpack.c.bf16 %v6118, %v6117
  %v6157 = vpack.c.bf16 %v6120, %v6119
  %v6158 = vpack.c.bf16 %v6122, %v6121
  %v6159 = vpack.c.bf16 %v6124, %v6123
  %v6160 = vpack.c.bf16 %v6126, %v6125
  %v6161 = vpack.c.bf16 %v6128, %v6127
  %v6162 = vpack.c.bf16 %v6130, %v6129
  %s6163 = scalar_lea.vmem %s5, 2
  %v6164 = vld [vmem:[%s6163] sm:$0x3]
  %v6166 = vsel %vm101, %v6131, 0
  %v6169 = vsel %vm101, %v6132, 0
  %v6172 = vsel %vm101, %v6133, 0
  %v6175 = vsel %vm101, %v6134, 0
  %v6178 = vsel %vm101, %v6135, 0
  %v6181 = vsel %vm101, %v6136, 0
  %v6184 = vsel %vm101, %v6137, 0
  %v6187 = vsel %vm101, %v6138, 0
  %v6190 = vsel %vm101, %v6139, 0
  %v6193 = vsel %vm101, %v6140, 0
  %v6196 = vsel %vm101, %v6141, 0
  %v6199 = vsel %vm101, %v6142, 0
  %v6202 = vsel %vm101, %v6143, 0
  %v6205 = vsel %vm101, %v6144, 0
  %v6208 = vsel %vm101, %v6145, 0
  %v6211 = vsel %vm101, %v6146, 0
  %v6214 = vsel %vm101, %v6147, 0
  %v6217 = vsel %vm101, %v6148, 0
  %v6220 = vsel %vm101, %v6149, 0
  %v6223 = vsel %vm101, %v6150, 0
  %v6226 = vsel %vm101, %v6151, 0
  %v6229 = vsel %vm101, %v6152, 0
  %v6232 = vsel %vm101, %v6153, 0
  %v6235 = vsel %vm101, %v6154, 0
  %v6238 = vsel %vm101, %v6155, 0
  %v6241 = vsel %vm101, %v6156, 0
  %v6244 = vsel %vm101, %v6157, 0
  %v6247 = vsel %vm101, %v6158, 0
  %v6250 = vsel %vm101, %v6159, 0
  %v6253 = vsel %vm101, %v6160, 0
  %v6256 = vsel %vm101, %v6161, 0
  %v6259 = vsel %vm101, %v6162, 0
  %v6262 = vsel %vm567, %v6164, 0
  %6264 = vmatprep.subr.bf16.mxu0 0
  %6265 = vmatpush1.bf16.msra.mxu0 %v6262
  %6266 = vmatprep.subr.bf16.mxu0 0
  %6267 = vmatpush1.bf16.msra.mxu0 0
  %6268 = vmatprep.subr.bf16.mxu0 0
  %6269 = vmatpush1.bf16.msra.mxu0 0
  %6270 = vmatprep.subr.bf16.mxu0 0
  %6271 = vmatpush1.bf16.msra.mxu0 0
  %6272 = vmatprep.subr.bf16.mxu0 0
  %6273 = vmatpush1.bf16.msra.mxu0 0
  %6274 = vmatprep.subr.bf16.mxu0 0
  %6275 = vmatpush1.bf16.msra.mxu0 0
  %6276 = vmatprep.subr.bf16.mxu0 0
  %6277 = vmatpush1.bf16.msra.mxu0 0
  %6278 = vmatprep.subr.bf16.mxu0 0
  %6279 = vmatpush1.bf16.msra.mxu0 0
  %6280 = vmatprep.subr.bf16.mxu0 0
  %6281 = vmatpush1.bf16.msra.mxu0 0
  %6282 = vmatprep.subr.bf16.mxu0 0
  %6283 = vmatpush1.bf16.msra.mxu0 0
  %6284 = vmatprep.subr.bf16.mxu0 0
  %6285 = vmatpush1.bf16.msra.mxu0 0
  %6286 = vmatprep.subr.bf16.mxu0 0
  %6287 = vmatpush1.bf16.msra.mxu0 0
  %6288 = vmatprep.subr.bf16.mxu0 0
  %6289 = vmatpush1.bf16.msra.mxu0 0
  %6290 = vmatprep.subr.bf16.mxu0 0
  %6291 = vmatpush1.bf16.msra.mxu0 0
  %6292 = vmatprep.subr.bf16.mxu0 0
  %6293 = vmatpush1.bf16.msra.mxu0 0
  %6294 = vmatprep.subr.bf16.mxu0 0
  %6295 = vmatpush1.bf16.msra.mxu0 0
  %6296 = vmatprep.mubr.bf16.mxu0 0
  %6297 = vmatmul.mubr.bf16.gmra.mrb[0].mxu0 %v6166
  %v6298 = vpop.f32.mrb[0].mxu0
  %v6299 = vadd.f32 0.0, %v6298
  %v6300 = vpop.f32.mrb[0].mxu0
  %v6301 = vpop.f32.mrb[0].mxu0
  %v6302 = vadd.f32 0.0, %v6301
  %v6303 = vpop.f32.mrb[0].mxu0
  %6304 = vmatprep.mubr.bf16.mxu0 0
  %6305 = vmatmul.mubr.bf16.gmra.mrb[0].mxu0 %v6169
  %v6306 = vpop.f32.mrb[0].mxu0
  %v6307 = vadd.f32 0.0, %v6306
  %v6308 = vpop.f32.mrb[0].mxu0
  %v6309 = vpop.f32.mrb[0].mxu0
  %v6310 = vadd.f32 0.0, %v6309
  %v6311 = vpop.f32.mrb[0].mxu0
  %6312 = vmatprep.mubr.bf16.mxu0 0
  %6313 = vmatmul.mubr.bf16.gmra.mrb[0].mxu0 %v6172
  %v6314 = vpop.f32.mrb[0].mxu0
  %v6315 = vadd.f32 0.0, %v6314
  %v6316 = vpop.f32.mrb[0].mxu0
  %v6317 = vpop.f32.mrb[0].mxu0
  %v6318 = vadd.f32 0.0, %v6317
  %v6319 = vpop.f32.mrb[0].mxu0
  %6320 = vmatprep.mubr.bf16.mxu0 0
  %6321 = vmatmul.mubr.bf16.gmra.mrb[0].mxu0 %v6175
  %v6322 = vpop.f32.mrb[0].mxu0
  %v6323 = vadd.f32 0.0, %v6322
  %v6324 = vpop.f32.mrb[0].mxu0
  %v6325 = vpop.f32.mrb[0].mxu0
  %v6326 = vadd.f32 0.0, %v6325
  %v6327 = vpop.f32.mrb[0].mxu0
  %6328 = vmatprep.mubr.bf16.mxu0 0
  %6329 = vmatmul.mubr.bf16.gmra.mrb[0].mxu0 %v6178
  %v6330 = vpop.f32.mrb[0].mxu0
  %v6331 = vadd.f32 0.0, %v6330
  %v6332 = vpop.f32.mrb[0].mxu0
  %v6333 = vpop.f32.mrb[0].mxu0
  %v6334 = vadd.f32 0.0, %v6333
  %v6335 = vpop.f32.mrb[0].mxu0
  %6336 = vmatprep.mubr.bf16.mxu0 0
  %6337 = vmatmul.mubr.bf16.gmra.mrb[0].mxu0 %v6181
  %v6338 = vpop.f32.mrb[0].mxu0
  %v6339 = vadd.f32 0.0, %v6338
  %v6340 = vpop.f32.mrb[0].mxu0
  %v6341 = vpop.f32.mrb[0].mxu0
  %v6342 = vadd.f32 0.0, %v6341
  %v6343 = vpop.f32.mrb[0].mxu0
  %6344 = vmatprep.mubr.bf16.mxu0 0
  %6345 = vmatmul.mubr.bf16.gmra.mrb[0].mxu0 %v6184
  %v6346 = vpop.f32.mrb[0].mxu0
  %v6347 = vadd.f32 0.0, %v6346
  %v6348 = vpop.f32.mrb[0].mxu0
  %v6349 = vpop.f32.mrb[0].mxu0
  %v6350 = vadd.f32 0.0, %v6349
  %v6351 = vpop.f32.mrb[0].mxu0
  %6352 = vmatprep.mubr.bf16.mxu0 0
  %6353 = vmatmul.mubr.bf16.gmra.mrb[0].mxu0 %v6187
  %v6354 = vpop.f32.mrb[0].mxu0
  %v6355 = vadd.f32 0.0, %v6354
  %v6356 = vpop.f32.mrb[0].mxu0
  %v6357 = vpop.f32.mrb[0].mxu0
  %v6358 = vadd.f32 0.0, %v6357
  %v6359 = vpop.f32.mrb[0].mxu0
  %6360 = vmatprep.mubr.bf16.mxu0 0
  %6361 = vmatmul.mubr.bf16.gmra.mrb[0].mxu0 %v6190
  %v6362 = vpop.f32.mrb[0].mxu0
  %v6363 = vadd.f32 0.0, %v6362
  %v6364 = vpop.f32.mrb[0].mxu0
  %v6365 = vpop.f32.mrb[0].mxu0
  %v6366 = vadd.f32 0.0, %v6365
  %v6367 = vpop.f32.mrb[0].mxu0
  %6368 = vmatprep.mubr.bf16.mxu0 0
  %6369 = vmatmul.mubr.bf16.gmra.mrb[0].mxu0 %v6193
  %v6370 = vpop.f32.mrb[0].mxu0
  %v6371 = vadd.f32 0.0, %v6370
  %v6372 = vpop.f32.mrb[0].mxu0
  %v6373 = vpop.f32.mrb[0].mxu0
  %v6374 = vadd.f32 0.0, %v6373
  %v6375 = vpop.f32.mrb[0].mxu0
  %6376 = vmatprep.mubr.bf16.mxu0 0
  %6377 = vmatmul.mubr.bf16.gmra.mrb[0].mxu0 %v6196
  %v6378 = vpop.f32.mrb[0].mxu0
  %v6379 = vadd.f32 0.0, %v6378
  %v6380 = vpop.f32.mrb[0].mxu0
  %v6381 = vpop.f32.mrb[0].mxu0
  %v6382 = vadd.f32 0.0, %v6381
  %v6383 = vpop.f32.mrb[0].mxu0
  %6384 = vmatprep.mubr.bf16.mxu0 0
  %6385 = vmatmul.mubr.bf16.gmra.mrb[0].mxu0 %v6199
  %v6386 = vpop.f32.mrb[0].mxu0
  %v6387 = vadd.f32 0.0, %v6386
  %v6388 = vpop.f32.mrb[0].mxu0
  %v6389 = vpop.f32.mrb[0].mxu0
  %v6390 = vadd.f32 0.0, %v6389
  %v6391 = vpop.f32.mrb[0].mxu0
  %6392 = vmatprep.mubr.bf16.mxu0 0
  %6393 = vmatmul.mubr.bf16.gmra.mrb[0].mxu0 %v6202
  %v6394 = vpop.f32.mrb[0].mxu0
  %v6395 = vadd.f32 0.0, %v6394
  %v6396 = vpop.f32.mrb[0].mxu0
  %v6397 = vpop.f32.mrb[0].mxu0
  %v6398 = vadd.f32 0.0, %v6397
  %v6399 = vpop.f32.mrb[0].mxu0
  %6400 = vmatprep.mubr.bf16.mxu0 0
  %6401 = vmatmul.mubr.bf16.gmra.mrb[0].mxu0 %v6205
  %v6402 = vpop.f32.mrb[0].mxu0
  %v6403 = vadd.f32 0.0, %v6402
  %v6404 = vpop.f32.mrb[0].mxu0
  %v6405 = vpop.f32.mrb[0].mxu0
  %v6406 = vadd.f32 0.0, %v6405
  %v6407 = vpop.f32.mrb[0].mxu0
  %6408 = vmatprep.mubr.bf16.mxu0 0
  %6409 = vmatmul.mubr.bf16.gmra.mrb[0].mxu0 %v6208
  %v6410 = vpop.f32.mrb[0].mxu0
  %v6411 = vadd.f32 0.0, %v6410
  %v6412 = vpop.f32.mrb[0].mxu0
  %v6413 = vpop.f32.mrb[0].mxu0
  %v6414 = vadd.f32 0.0, %v6413
  %v6415 = vpop.f32.mrb[0].mxu0
  %6416 = vmatprep.mubr.bf16.mxu0 0
  %6417 = vmatmul.mubr.bf16.gmra.mrb[0].mxu0 %v6211
  %v6418 = vpop.f32.mrb[0].mxu0
  %v6419 = vadd.f32 0.0, %v6418
  %v6420 = vpop.f32.mrb[0].mxu0
  %v6421 = vpop.f32.mrb[0].mxu0
  %v6422 = vadd.f32 0.0, %v6421
  %v6423 = vpop.f32.mrb[0].mxu0
  %6424 = vmatprep.mubr.bf16.mxu0 0
  %6425 = vmatmul.mubr.bf16.gmra.mrb[0].mxu0 %v6214
  %v6426 = vpop.f32.mrb[0].mxu0
  %v6427 = vadd.f32 0.0, %v6426
  %v6428 = vpop.f32.mrb[0].mxu0
  %v6429 = vpop.f32.mrb[0].mxu0
  %v6430 = vadd.f32 0.0, %v6429
  %v6431 = vpop.f32.mrb[0].mxu0
  %6432 = vmatprep.mubr.bf16.mxu0 0
  %6433 = vmatmul.mubr.bf16.gmra.mrb[0].mxu0 %v6217
  %v6434 = vpop.f32.mrb[0].mxu0
  %v6435 = vadd.f32 0.0, %v6434
  %v6436 = vpop.f32.mrb[0].mxu0
  %v6437 = vpop.f32.mrb[0].mxu0
  %v6438 = vadd.f32 0.0, %v6437
  %v6439 = vpop.f32.mrb[0].mxu0
  %6440 = vmatprep.mubr.bf16.mxu0 0
  %6441 = vmatmul.mubr.bf16.gmra.mrb[0].mxu0 %v6220
  %v6442 = vpop.f32.mrb[0].mxu0
  %v6443 = vadd.f32 0.0, %v6442
  %v6444 = vpop.f32.mrb[0].mxu0
  %v6445 = vpop.f32.mrb[0].mxu0
  %v6446 = vadd.f32 0.0, %v6445
  %v6447 = vpop.f32.mrb[0].mxu0
  %6448 = vmatprep.mubr.bf16.mxu0 0
  %6449 = vmatmul.mubr.bf16.gmra.mrb[0].mxu0 %v6223
  %v6450 = vpop.f32.mrb[0].mxu0
  %v6451 = vadd.f32 0.0, %v6450
  %v6452 = vpop.f32.mrb[0].mxu0
  %v6453 = vpop.f32.mrb[0].mxu0
  %v6454 = vadd.f32 0.0, %v6453
  %v6455 = vpop.f32.mrb[0].mxu0
  %6456 = vmatprep.mubr.bf16.mxu0 0
  %6457 = vmatmul.mubr.bf16.gmra.mrb[0].mxu0 %v6226
  %v6458 = vpop.f32.mrb[0].mxu0
  %v6459 = vadd.f32 0.0, %v6458
  %v6460 = vpop.f32.mrb[0].mxu0
  %v6461 = vpop.f32.mrb[0].mxu0
  %v6462 = vadd.f32 0.0, %v6461
  %v6463 = vpop.f32.mrb[0].mxu0
  %6464 = vmatprep.mubr.bf16.mxu0 0
  %6465 = vmatmul.mubr.bf16.gmra.mrb[0].mxu0 %v6229
  %v6466 = vpop.f32.mrb[0].mxu0
  %v6467 = vadd.f32 0.0, %v6466
  %v6468 = vpop.f32.mrb[0].mxu0
  %v6469 = vpop.f32.mrb[0].mxu0
  %v6470 = vadd.f32 0.0, %v6469
  %v6471 = vpop.f32.mrb[0].mxu0
  %6472 = vmatprep.mubr.bf16.mxu0 0
  %6473 = vmatmul.mubr.bf16.gmra.mrb[0].mxu0 %v6232
  %v6474 = vpop.f32.mrb[0].mxu0
  %v6475 = vadd.f32 0.0, %v6474
  %v6476 = vpop.f32.mrb[0].mxu0
  %v6477 = vpop.f32.mrb[0].mxu0
  %v6478 = vadd.f32 0.0, %v6477
  %v6479 = vpop.f32.mrb[0].mxu0
  %6480 = vmatprep.mubr.bf16.mxu0 0
  %6481 = vmatmul.mubr.bf16.gmra.mrb[0].mxu0 %v6235
  %v6482 = vpop.f32.mrb[0].mxu0
  %v6483 = vadd.f32 0.0, %v6482
  %v6484 = vpop.f32.mrb[0].mxu0
  %v6485 = vpop.f32.mrb[0].mxu0
  %v6486 = vadd.f32 0.0, %v6485
  %v6487 = vpop.f32.mrb[0].mxu0
  %6488 = vmatprep.mubr.bf16.mxu0 0
  %6489 = vmatmul.mubr.bf16.gmra.mrb[0].mxu0 %v6238
  %v6490 = vpop.f32.mrb[0].mxu0
  %v6491 = vadd.f32 0.0, %v6490
  %v6492 = vpop.f32.mrb[0].mxu0
  %v6493 = vpop.f32.mrb[0].mxu0
  %v6494 = vadd.f32 0.0, %v6493
  %v6495 = vpop.f32.mrb[0].mxu0
  %6496 = vmatprep.mubr.bf16.mxu0 0
  %6497 = vmatmul.mubr.bf16.gmra.mrb[0].mxu0 %v6241
  %v6498 = vpop.f32.mrb[0].mxu0
  %v6499 = vadd.f32 0.0, %v6498
  %v6500 = vpop.f32.mrb[0].mxu0
  %v6501 = vpop.f32.mrb[0].mxu0
  %v6502 = vadd.f32 0.0, %v6501
  %v6503 = vpop.f32.mrb[0].mxu0
  %6504 = vmatprep.mubr.bf16.mxu0 0
  %6505 = vmatmul.mubr.bf16.gmra.mrb[0].mxu0 %v6244
  %v6506 = vpop.f32.mrb[0].mxu0
  %v6507 = vadd.f32 0.0, %v6506
  %v6508 = vpop.f32.mrb[0].mxu0
  %v6509 = vpop.f32.mrb[0].mxu0
  %v6510 = vadd.f32 0.0, %v6509
  %v6511 = vpop.f32.mrb[0].mxu0
  %6512 = vmatprep.mubr.bf16.mxu0 0
  %6513 = vmatmul.mubr.bf16.gmra.mrb[0].mxu0 %v6247
  %v6514 = vpop.f32.mrb[0].mxu0
  %v6515 = vadd.f32 0.0, %v6514
  %v6516 = vpop.f32.mrb[0].mxu0
  %v6517 = vpop.f32.mrb[0].mxu0
  %v6518 = vadd.f32 0.0, %v6517
  %v6519 = vpop.f32.mrb[0].mxu0
  %6520 = vmatprep.mubr.bf16.mxu0 0
  %6521 = vmatmul.mubr.bf16.gmra.mrb[0].mxu0 %v6250
  %v6522 = vpop.f32.mrb[0].mxu0
  %v6523 = vadd.f32 0.0, %v6522
  %v6524 = vpop.f32.mrb[0].mxu0
  %v6525 = vpop.f32.mrb[0].mxu0
  %v6526 = vadd.f32 0.0, %v6525
  %v6527 = vpop.f32.mrb[0].mxu0
  %6528 = vmatprep.mubr.bf16.mxu0 0
  %6529 = vmatmul.mubr.bf16.gmra.mrb[0].mxu0 %v6253
  %v6530 = vpop.f32.mrb[0].mxu0
  %v6531 = vadd.f32 0.0, %v6530
  %v6532 = vpop.f32.mrb[0].mxu0
  %v6533 = vpop.f32.mrb[0].mxu0
  %v6534 = vadd.f32 0.0, %v6533
  %v6535 = vpop.f32.mrb[0].mxu0
  %6536 = vmatprep.mubr.bf16.mxu0 0
  %6537 = vmatmul.mubr.bf16.gmra.mrb[0].mxu0 %v6256
  %v6538 = vpop.f32.mrb[0].mxu0
  %v6539 = vadd.f32 0.0, %v6538
  %v6540 = vpop.f32.mrb[0].mxu0
  %v6541 = vpop.f32.mrb[0].mxu0
  %v6542 = vadd.f32 0.0, %v6541
  %v6543 = vpop.f32.mrb[0].mxu0
  %6544 = vmatprep.mubr.bf16.mxu0 0
  %6545 = vmatmul.mubr.bf16.gmra.mrb[0].mxu0 %v6259
  %v6546 = vpop.f32.mrb[0].mxu0
  %v6547 = vadd.f32 0.0, %v6546
  %v6548 = vpop.f32.mrb[0].mxu0
  %v6549 = vpop.f32.mrb[0].mxu0
  %v6550 = vadd.f32 0.0, %v6549
  %v6551 = vpop.f32.mrb[0].mxu0
  %6552 = vdwg.mxu0
  %v6554 = vsel %vm101, %v6034, 0
  %v6557 = vsel %vm101, %v6035, 0
  %v6560 = vsel %vm101, %v6036, 0
  %v6563 = vsel %vm101, %v6037, 0
  %v6566 = vsel %vm101, %v6038, 0
  %v6569 = vsel %vm101, %v6039, 0
  %v6572 = vsel %vm101, %v6040, 0
  %v6575 = vsel %vm101, %v6041, 0
  %v6578 = vsel %vm101, %v6042, 0
  %v6581 = vsel %vm101, %v6043, 0
  %v6584 = vsel %vm101, %v6044, 0
  %v6587 = vsel %vm101, %v6045, 0
  %v6590 = vsel %vm101, %v6046, 0
  %v6593 = vsel %vm101, %v6047, 0
  %v6596 = vsel %vm101, %v6048, 0
  %v6599 = vsel %vm101, %v6049, 0
  %v6602 = vsel %vm101, %v6050, 0
  %v6605 = vsel %vm101, %v6051, 0
  %v6608 = vsel %vm101, %v6052, 0
  %v6611 = vsel %vm101, %v6053, 0
  %v6614 = vsel %vm101, %v6054, 0
  %v6617 = vsel %vm101, %v6055, 0
  %v6620 = vsel %vm101, %v6056, 0
  %v6623 = vsel %vm101, %v6057, 0
  %v6626 = vsel %vm101, %v6058, 0
  %v6629 = vsel %vm101, %v6059, 0
  %v6632 = vsel %vm101, %v6060, 0
  %v6635 = vsel %vm101, %v6061, 0
  %v6638 = vsel %vm101, %v6062, 0
  %v6641 = vsel %vm101, %v6063, 0
  %v6644 = vsel %vm101, %v6064, 0
  %v6647 = vsel %vm101, %v6065, 0
  %v6650 = vsel %vm567, %v6066, 0
  %6652 = vmatprep.subr.bf16.mxu0 0
  %6653 = vmatpush1.bf16.msra.mxu0 %v6650
  %6654 = vmatprep.subr.bf16.mxu0 0
  %6655 = vmatpush1.bf16.msra.mxu0 0
  %6656 = vmatprep.subr.bf16.mxu0 0
  %6657 = vmatpush1.bf16.msra.mxu0 0
  %6658 = vmatprep.subr.bf16.mxu0 0
  %6659 = vmatpush1.bf16.msra.mxu0 0
  %6660 = vmatprep.subr.bf16.mxu0 0
  %6661 = vmatpush1.bf16.msra.mxu0 0
  %6662 = vmatprep.subr.bf16.mxu0 0
  %6663 = vmatpush1.bf16.msra.mxu0 0
  %6664 = vmatprep.subr.bf16.mxu0 0
  %6665 = vmatpush1.bf16.msra.mxu0 0
  %6666 = vmatprep.subr.bf16.mxu0 0
  %6667 = vmatpush1.bf16.msra.mxu0 0
  %6668 = vmatprep.subr.bf16.mxu0 0
  %6669 = vmatpush1.bf16.msra.mxu0 0
  %6670 = vmatprep.subr.bf16.mxu0 0
  %6671 = vmatpush1.bf16.msra.mxu0 0
  %6672 = vmatprep.subr.bf16.mxu0 0
  %6673 = vmatpush1.bf16.msra.mxu0 0
  %6674 = vmatprep.subr.bf16.mxu0 0
  %6675 = vmatpush1.bf16.msra.mxu0 0
  %6676 = vmatprep.subr.bf16.mxu0 0
  %6677 = vmatpush1.bf16.msra.mxu0 0
  %6678 = vmatprep.subr.bf16.mxu0 0
  %6679 = vmatpush1.bf16.msra.mxu0 0
  %6680 = vmatprep.subr.bf16.mxu0 0
  %6681 = vmatpush1.bf16.msra.mxu0 0
  %6682 = vmatprep.subr.bf16.mxu0 0
  %6683 = vmatpush1.bf16.msra.mxu0 0
  %6684 = vmatprep.mubr.bf16.mxu0 0
  %6685 = vmatmul.mubr.bf16.gmra.mrb[0].mxu0 %v6554
  %v6686 = vpop.f32.mrb[0].mxu0
  %v6687 = vadd.f32 %v6299, %v6686
  %v6688 = vpop.f32.mrb[0].mxu0
  %v6689 = vpop.f32.mrb[0].mxu0
  %v6690 = vadd.f32 %v6302, %v6689
  %v6691 = vpop.f32.mrb[0].mxu0
  %6692 = vmatprep.mubr.bf16.mxu0 0
  %6693 = vmatmul.mubr.bf16.gmra.mrb[0].mxu0 %v6557
  %v6694 = vpop.f32.mrb[0].mxu0
  %v6695 = vadd.f32 %v6307, %v6694
  %v6696 = vpop.f32.mrb[0].mxu0
  %v6697 = vpop.f32.mrb[0].mxu0
  %v6698 = vadd.f32 %v6310, %v6697
  %v6699 = vpop.f32.mrb[0].mxu0
  %6700 = vmatprep.mubr.bf16.mxu0 0
  %6701 = vmatmul.mubr.bf16.gmra.mrb[0].mxu0 %v6560
  %v6702 = vpop.f32.mrb[0].mxu0
  %v6703 = vadd.f32 %v6315, %v6702
  %v6704 = vpop.f32.mrb[0].mxu0
  %v6705 = vpop.f32.mrb[0].mxu0
  %v6706 = vadd.f32 %v6318, %v6705
  %v6707 = vpop.f32.mrb[0].mxu0
  %6708 = vmatprep.mubr.bf16.mxu0 0
  %6709 = vmatmul.mubr.bf16.gmra.mrb[0].mxu0 %v6563
  %v6710 = vpop.f32.mrb[0].mxu0
  %v6711 = vadd.f32 %v6323, %v6710
  %v6712 = vpop.f32.mrb[0].mxu0
  %v6713 = vpop.f32.mrb[0].mxu0
  %v6714 = vadd.f32 %v6326, %v6713
  %v6715 = vpop.f32.mrb[0].mxu0
  %6716 = vmatprep.mubr.bf16.mxu0 0
  %6717 = vmatmul.mubr.bf16.gmra.mrb[0].mxu0 %v6566
  %v6718 = vpop.f32.mrb[0].mxu0
  %v6719 = vadd.f32 %v6331, %v6718
  %v6720 = vpop.f32.mrb[0].mxu0
  %v6721 = vpop.f32.mrb[0].mxu0
  %v6722 = vadd.f32 %v6334, %v6721
  %v6723 = vpop.f32.mrb[0].mxu0
  %6724 = vmatprep.mubr.bf16.mxu0 0
  %6725 = vmatmul.mubr.bf16.gmra.mrb[0].mxu0 %v6569
  %v6726 = vpop.f32.mrb[0].mxu0
  %v6727 = vadd.f32 %v6339, %v6726
  %v6728 = vpop.f32.mrb[0].mxu0
  %v6729 = vpop.f32.mrb[0].mxu0
  %v6730 = vadd.f32 %v6342, %v6729
  %v6731 = vpop.f32.mrb[0].mxu0
  %6732 = vmatprep.mubr.bf16.mxu0 0
  %6733 = vmatmul.mubr.bf16.gmra.mrb[0].mxu0 %v6572
  %v6734 = vpop.f32.mrb[0].mxu0
  %v6735 = vadd.f32 %v6347, %v6734
  %v6736 = vpop.f32.mrb[0].mxu0
  %v6737 = vpop.f32.mrb[0].mxu0
  %v6738 = vadd.f32 %v6350, %v6737
  %v6739 = vpop.f32.mrb[0].mxu0
  %6740 = vmatprep.mubr.bf16.mxu0 0
  %6741 = vmatmul.mubr.bf16.gmra.mrb[0].mxu0 %v6575
  %v6742 = vpop.f32.mrb[0].mxu0
  %v6743 = vadd.f32 %v6355, %v6742
  %v6744 = vpop.f32.mrb[0].mxu0
  %v6745 = vpop.f32.mrb[0].mxu0
  %v6746 = vadd.f32 %v6358, %v6745
  %v6747 = vpop.f32.mrb[0].mxu0
  %6748 = vmatprep.mubr.bf16.mxu0 0
  %6749 = vmatmul.mubr.bf16.gmra.mrb[0].mxu0 %v6578
  %v6750 = vpop.f32.mrb[0].mxu0
  %v6751 = vadd.f32 %v6363, %v6750
  %v6752 = vpop.f32.mrb[0].mxu0
  %v6753 = vpop.f32.mrb[0].mxu0
  %v6754 = vadd.f32 %v6366, %v6753
  %v6755 = vpop.f32.mrb[0].mxu0
  %6756 = vmatprep.mubr.bf16.mxu0 0
  %6757 = vmatmul.mubr.bf16.gmra.mrb[0].mxu0 %v6581
  %v6758 = vpop.f32.mrb[0].mxu0
  %v6759 = vadd.f32 %v6371, %v6758
  %v6760 = vpop.f32.mrb[0].mxu0
  %v6761 = vpop.f32.mrb[0].mxu0
  %v6762 = vadd.f32 %v6374, %v6761
  %v6763 = vpop.f32.mrb[0].mxu0
  %6764 = vmatprep.mubr.bf16.mxu0 0
  %6765 = vmatmul.mubr.bf16.gmra.mrb[0].mxu0 %v6584
  %v6766 = vpop.f32.mrb[0].mxu0
  %v6767 = vadd.f32 %v6379, %v6766
  %v6768 = vpop.f32.mrb[0].mxu0
  %v6769 = vpop.f32.mrb[0].mxu0
  %v6770 = vadd.f32 %v6382, %v6769
  %v6771 = vpop.f32.mrb[0].mxu0
  %6772 = vmatprep.mubr.bf16.mxu0 0
  %6773 = vmatmul.mubr.bf16.gmra.mrb[0].mxu0 %v6587
  %v6774 = vpop.f32.mrb[0].mxu0
  %v6775 = vadd.f32 %v6387, %v6774
  %v6776 = vpop.f32.mrb[0].mxu0
  %v6777 = vpop.f32.mrb[0].mxu0
  %v6778 = vadd.f32 %v6390, %v6777
  %v6779 = vpop.f32.mrb[0].mxu0
  %6780 = vmatprep.mubr.bf16.mxu0 0
  %6781 = vmatmul.mubr.bf16.gmra.mrb[0].mxu0 %v6590
  %v6782 = vpop.f32.mrb[0].mxu0
  %v6783 = vadd.f32 %v6395, %v6782
  %v6784 = vpop.f32.mrb[0].mxu0
  %v6785 = vpop.f32.mrb[0].mxu0
  %v6786 = vadd.f32 %v6398, %v6785
  %v6787 = vpop.f32.mrb[0].mxu0
  %6788 = vmatprep.mubr.bf16.mxu0 0
  %6789 = vmatmul.mubr.bf16.gmra.mrb[0].mxu0 %v6593
  %v6790 = vpop.f32.mrb[0].mxu0
  %v6791 = vadd.f32 %v6403, %v6790
  %v6792 = vpop.f32.mrb[0].mxu0
  %v6793 = vpop.f32.mrb[0].mxu0
  %v6794 = vadd.f32 %v6406, %v6793
  %v6795 = vpop.f32.mrb[0].mxu0
  %6796 = vmatprep.mubr.bf16.mxu0 0
  %6797 = vmatmul.mubr.bf16.gmra.mrb[0].mxu0 %v6596
  %v6798 = vpop.f32.mrb[0].mxu0
  %v6799 = vadd.f32 %v6411, %v6798
  %v6800 = vpop.f32.mrb[0].mxu0
  %v6801 = vpop.f32.mrb[0].mxu0
  %v6802 = vadd.f32 %v6414, %v6801
  %v6803 = vpop.f32.mrb[0].mxu0
  %6804 = vmatprep.mubr.bf16.mxu0 0
  %6805 = vmatmul.mubr.bf16.gmra.mrb[0].mxu0 %v6599
  %v6806 = vpop.f32.mrb[0].mxu0
  %v6807 = vadd.f32 %v6419, %v6806
  %v6808 = vpop.f32.mrb[0].mxu0
  %v6809 = vpop.f32.mrb[0].mxu0
  %v6810 = vadd.f32 %v6422, %v6809
  %v6811 = vpop.f32.mrb[0].mxu0
  %6812 = vmatprep.mubr.bf16.mxu0 0
  %6813 = vmatmul.mubr.bf16.gmra.mrb[0].mxu0 %v6602
  %v6814 = vpop.f32.mrb[0].mxu0
  %v6815 = vadd.f32 %v6427, %v6814
  %v6816 = vpop.f32.mrb[0].mxu0
  %v6817 = vpop.f32.mrb[0].mxu0
  %v6818 = vadd.f32 %v6430, %v6817
  %v6819 = vpop.f32.mrb[0].mxu0
  %6820 = vmatprep.mubr.bf16.mxu0 0
  %6821 = vmatmul.mubr.bf16.gmra.mrb[0].mxu0 %v6605
  %v6822 = vpop.f32.mrb[0].mxu0
  %v6823 = vadd.f32 %v6435, %v6822
  %v6824 = vpop.f32.mrb[0].mxu0
  %v6825 = vpop.f32.mrb[0].mxu0
  %v6826 = vadd.f32 %v6438, %v6825
  %v6827 = vpop.f32.mrb[0].mxu0
  %6828 = vmatprep.mubr.bf16.mxu0 0
  %6829 = vmatmul.mubr.bf16.gmra.mrb[0].mxu0 %v6608
  %v6830 = vpop.f32.mrb[0].mxu0
  %v6831 = vadd.f32 %v6443, %v6830
  %v6832 = vpop.f32.mrb[0].mxu0
  %v6833 = vpop.f32.mrb[0].mxu0
  %v6834 = vadd.f32 %v6446, %v6833
  %v6835 = vpop.f32.mrb[0].mxu0
  %6836 = vmatprep.mubr.bf16.mxu0 0
  %6837 = vmatmul.mubr.bf16.gmra.mrb[0].mxu0 %v6611
  %v6838 = vpop.f32.mrb[0].mxu0
  %v6839 = vadd.f32 %v6451, %v6838
  %v6840 = vpop.f32.mrb[0].mxu0
  %v6841 = vpop.f32.mrb[0].mxu0
  %v6842 = vadd.f32 %v6454, %v6841
  %v6843 = vpop.f32.mrb[0].mxu0
  %6844 = vmatprep.mubr.bf16.mxu0 0
  %6845 = vmatmul.mubr.bf16.gmra.mrb[0].mxu0 %v6614
  %v6846 = vpop.f32.mrb[0].mxu0
  %v6847 = vadd.f32 %v6459, %v6846
  %v6848 = vpop.f32.mrb[0].mxu0
  %v6849 = vpop.f32.mrb[0].mxu0
  %v6850 = vadd.f32 %v6462, %v6849
  %v6851 = vpop.f32.mrb[0].mxu0
  %6852 = vmatprep.mubr.bf16.mxu0 0
  %6853 = vmatmul.mubr.bf16.gmra.mrb[0].mxu0 %v6617
  %v6854 = vpop.f32.mrb[0].mxu0
  %v6855 = vadd.f32 %v6467, %v6854
  %v6856 = vpop.f32.mrb[0].mxu0
  %v6857 = vpop.f32.mrb[0].mxu0
  %v6858 = vadd.f32 %v6470, %v6857
  %v6859 = vpop.f32.mrb[0].mxu0
  %6860 = vmatprep.mubr.bf16.mxu0 0
  %6861 = vmatmul.mubr.bf16.gmra.mrb[0].mxu0 %v6620
  %v6862 = vpop.f32.mrb[0].mxu0
  %v6863 = vadd.f32 %v6475, %v6862
  %v6864 = vpop.f32.mrb[0].mxu0
  %v6865 = vpop.f32.mrb[0].mxu0
  %v6866 = vadd.f32 %v6478, %v6865
  %v6867 = vpop.f32.mrb[0].mxu0
  %6868 = vmatprep.mubr.bf16.mxu0 0
  %6869 = vmatmul.mubr.bf16.gmra.mrb[0].mxu0 %v6623
  %v6870 = vpop.f32.mrb[0].mxu0
  %v6871 = vadd.f32 %v6483, %v6870
  %v6872 = vpop.f32.mrb[0].mxu0
  %v6873 = vpop.f32.mrb[0].mxu0
  %v6874 = vadd.f32 %v6486, %v6873
  %v6875 = vpop.f32.mrb[0].mxu0
  %6876 = vmatprep.mubr.bf16.mxu0 0
  %6877 = vmatmul.mubr.bf16.gmra.mrb[0].mxu0 %v6626
  %v6878 = vpop.f32.mrb[0].mxu0
  %v6879 = vadd.f32 %v6491, %v6878
  %v6880 = vpop.f32.mrb[0].mxu0
  %v6881 = vpop.f32.mrb[0].mxu0
  %v6882 = vadd.f32 %v6494, %v6881
  %v6883 = vpop.f32.mrb[0].mxu0
  %6884 = vmatprep.mubr.bf16.mxu0 0
  %6885 = vmatmul.mubr.bf16.gmra.mrb[0].mxu0 %v6629
  %v6886 = vpop.f32.mrb[0].mxu0
  %v6887 = vadd.f32 %v6499, %v6886
  %v6888 = vpop.f32.mrb[0].mxu0
  %v6889 = vpop.f32.mrb[0].mxu0
  %v6890 = vadd.f32 %v6502, %v6889
  %v6891 = vpop.f32.mrb[0].mxu0
  %6892 = vmatprep.mubr.bf16.mxu0 0
  %6893 = vmatmul.mubr.bf16.gmra.mrb[0].mxu0 %v6632
  %v6894 = vpop.f32.mrb[0].mxu0
  %v6895 = vadd.f32 %v6507, %v6894
  %v6896 = vpop.f32.mrb[0].mxu0
  %v6897 = vpop.f32.mrb[0].mxu0
  %v6898 = vadd.f32 %v6510, %v6897
  %v6899 = vpop.f32.mrb[0].mxu0
  %6900 = vmatprep.mubr.bf16.mxu0 0
  %6901 = vmatmul.mubr.bf16.gmra.mrb[0].mxu0 %v6635
  %v6902 = vpop.f32.mrb[0].mxu0
  %v6903 = vadd.f32 %v6515, %v6902
  %v6904 = vpop.f32.mrb[0].mxu0
  %v6905 = vpop.f32.mrb[0].mxu0
  %v6906 = vadd.f32 %v6518, %v6905
  %v6907 = vpop.f32.mrb[0].mxu0
  %6908 = vmatprep.mubr.bf16.mxu0 0
  %6909 = vmatmul.mubr.bf16.gmra.mrb[0].mxu0 %v6638
  %v6910 = vpop.f32.mrb[0].mxu0
  %v6911 = vadd.f32 %v6523, %v6910
  %v6912 = vpop.f32.mrb[0].mxu0
  %v6913 = vpop.f32.mrb[0].mxu0
  %v6914 = vadd.f32 %v6526, %v6913
  %v6915 = vpop.f32.mrb[0].mxu0
  %6916 = vmatprep.mubr.bf16.mxu0 0
  %6917 = vmatmul.mubr.bf16.gmra.mrb[0].mxu0 %v6641
  %v6918 = vpop.f32.mrb[0].mxu0
  %v6919 = vadd.f32 %v6531, %v6918
  %v6920 = vpop.f32.mrb[0].mxu0
  %v6921 = vpop.f32.mrb[0].mxu0
  %v6922 = vadd.f32 %v6534, %v6921
  %v6923 = vpop.f32.mrb[0].mxu0
  %6924 = vmatprep.mubr.bf16.mxu0 0
  %6925 = vmatmul.mubr.bf16.gmra.mrb[0].mxu0 %v6644
  %v6926 = vpop.f32.mrb[0].mxu0
  %v6927 = vadd.f32 %v6539, %v6926
  %v6928 = vpop.f32.mrb[0].mxu0
  %v6929 = vpop.f32.mrb[0].mxu0
  %v6930 = vadd.f32 %v6542, %v6929
  %v6931 = vpop.f32.mrb[0].mxu0
  %6932 = vmatprep.mubr.bf16.mxu0 0
  %6933 = vmatmul.mubr.bf16.gmra.mrb[0].mxu0 %v6647
  %v6934 = vpop.f32.mrb[0].mxu0
  %v6935 = vadd.f32 %v6547, %v6934
  %v6936 = vpop.f32.mrb[0].mxu0
  %v6937 = vpop.f32.mrb[0].mxu0
  %v6938 = vadd.f32 %v6550, %v6937
  %v6939 = vpop.f32.mrb[0].mxu0
  %6940 = vdwg.mxu0
  %v6941 = vld [vmem:[#allocation2 + $0x2] sm:$0xff]
  %v6942 = vld [vmem:[#allocation2 + $0xa] sm:$0xff]
  %v6943 = vld [vmem:[#allocation2 + $0x1a] sm:$0xff]
  %v6944 = vld [vmem:[#allocation2 + $0x22] sm:$0xff]
  %v6945 = vld [vmem:[#allocation2 + $0x32] sm:$0xff]
  %v6946 = vld [vmem:[#allocation2 + $0x3a] sm:$0xff]
  %v6947 = vld [vmem:[#allocation2 + $0x4a] sm:$0xff]
  %v6948 = vld [vmem:[#allocation2 + $0x52] sm:$0xff]
  %v6949 = vld [vmem:[#allocation2 + $0x62] sm:$0xff]
  %v6950 = vld [vmem:[#allocation2 + $0x6a] sm:$0xff]
  %v6951 = vld [vmem:[#allocation2 + $0x7a] sm:$0xff]
  %v6952 = vld [vmem:[#allocation2 + $0x82] sm:$0xff]
  %v6953 = vld [vmem:[#allocation2 + $0x92] sm:$0xff]
  %v6954 = vld [vmem:[#allocation2 + $0x9a] sm:$0xff]
  %v6955 = vld [vmem:[#allocation2 + $0xaa] sm:$0xff]
  %v6956 = vld [vmem:[#allocation2 + $0xb2] sm:$0xff]
  %v6957 = vld [vmem:[#allocation2 + $0xc2] sm:$0xff]
  %v6958 = vld [vmem:[#allocation2 + $0xca] sm:$0xff]
  %v6959 = vld [vmem:[#allocation2 + $0xda] sm:$0xff]
  %v6960 = vld [vmem:[#allocation2 + $0xe2] sm:$0xff]
  %v6961 = vld [vmem:[#allocation2 + $0xf2] sm:$0xff]
  %v6962 = vld [vmem:[#allocation2 + $0xfa] sm:$0xff]
  %v6963 = vld [vmem:[#allocation2 + $0x10a] sm:$0xff]
  %v6964 = vld [vmem:[#allocation2 + $0x112] sm:$0xff]
  %v6965 = vld [vmem:[#allocation2 + $0x122] sm:$0xff]
  %v6966 = vld [vmem:[#allocation2 + $0x12a] sm:$0xff]
  %v6967 = vld [vmem:[#allocation2 + $0x13a] sm:$0xff]
  %v6968 = vld [vmem:[#allocation2 + $0x142] sm:$0xff]
  %v6969 = vld [vmem:[#allocation2 + $0x152] sm:$0xff]
  %v6970 = vld [vmem:[#allocation2 + $0x15a] sm:$0xff]
  %v6971 = vld [vmem:[#allocation2 + $0x16a] sm:$0xff]
  %v6972 = vld [vmem:[#allocation2 + $0x172] sm:$0xff]
  %v6973 = vld [vmem:[#allocation2 + $0x1b2] sm:$0xff]
  %v6974 = vld [vmem:[#allocation2 + $0x1ba] sm:$0xff]
  %v6975 = vld [vmem:[#allocation2 + $0x1ca] sm:$0xff]
  %v6976 = vld [vmem:[#allocation2 + $0x1d2] sm:$0xff]
  %v6977 = vld [vmem:[#allocation2 + $0x1e2] sm:$0xff]
  %v6978 = vld [vmem:[#allocation2 + $0x1ea] sm:$0xff]
  %v6979 = vld [vmem:[#allocation2 + $0x1fa] sm:$0xff]
  %v6980 = vld [vmem:[#allocation2 + $0x202] sm:$0xff]
  %v6981 = vld [vmem:[#allocation2 + $0x212] sm:$0xff]
  %v6982 = vld [vmem:[#allocation2 + $0x21a] sm:$0xff]
  %v6983 = vld [vmem:[#allocation2 + $0x22a] sm:$0xff]
  %v6984 = vld [vmem:[#allocation2 + $0x232] sm:$0xff]
  %v6985 = vld [vmem:[#allocation2 + $0x242] sm:$0xff]
  %v6986 = vld [vmem:[#allocation2 + $0x24a] sm:$0xff]
  %v6987 = vld [vmem:[#allocation2 + $0x25a] sm:$0xff]
  %v6988 = vld [vmem:[#allocation2 + $0x262] sm:$0xff]
  %v6989 = vld [vmem:[#allocation2 + $0x272] sm:$0xff]
  %v6990 = vld [vmem:[#allocation2 + $0x27a] sm:$0xff]
  %v6991 = vld [vmem:[#allocation2 + $0x28a] sm:$0xff]
  %v6992 = vld [vmem:[#allocation2 + $0x292] sm:$0xff]
  %v6993 = vld [vmem:[#allocation2 + $0x2a2] sm:$0xff]
  %v6994 = vld [vmem:[#allocation2 + $0x2aa] sm:$0xff]
  %v6995 = vld [vmem:[#allocation2 + $0x2ba] sm:$0xff]
  %v6996 = vld [vmem:[#allocation2 + $0x2c2] sm:$0xff]
  %v6997 = vld [vmem:[#allocation2 + $0x2d2] sm:$0xff]
  %v6998 = vld [vmem:[#allocation2 + $0x2da] sm:$0xff]
  %v6999 = vld [vmem:[#allocation2 + $0x2ea] sm:$0xff]
  %v7000 = vld [vmem:[#allocation2 + $0x2f2] sm:$0xff]
  %v7001 = vld [vmem:[#allocation2 + $0x302] sm:$0xff]
  %v7002 = vld [vmem:[#allocation2 + $0x30a] sm:$0xff]
  %v7003 = vld [vmem:[#allocation2 + $0x31a] sm:$0xff]
  %v7004 = vld [vmem:[#allocation2 + $0x322] sm:$0xff]
  %v7005 = vpack.c.bf16 %v6942, %v6941
  %v7006 = vpack.c.bf16 %v6944, %v6943
  %v7007 = vpack.c.bf16 %v6946, %v6945
  %v7008 = vpack.c.bf16 %v6948, %v6947
  %v7009 = vpack.c.bf16 %v6950, %v6949
  %v7010 = vpack.c.bf16 %v6952, %v6951
  %v7011 = vpack.c.bf16 %v6954, %v6953
  %v7012 = vpack.c.bf16 %v6956, %v6955
  %v7013 = vpack.c.bf16 %v6958, %v6957
  %v7014 = vpack.c.bf16 %v6960, %v6959
  %v7015 = vpack.c.bf16 %v6962, %v6961
  %v7016 = vpack.c.bf16 %v6964, %v6963
  %v7017 = vpack.c.bf16 %v6966, %v6965
  %v7018 = vpack.c.bf16 %v6968, %v6967
  %v7019 = vpack.c.bf16 %v6970, %v6969
  %v7020 = vpack.c.bf16 %v6972, %v6971
  %v7021 = vpack.c.bf16 %v6974, %v6973
  %v7022 = vpack.c.bf16 %v6976, %v6975
  %v7023 = vpack.c.bf16 %v6978, %v6977
  %v7024 = vpack.c.bf16 %v6980, %v6979
  %v7025 = vpack.c.bf16 %v6982, %v6981
  %v7026 = vpack.c.bf16 %v6984, %v6983
  %v7027 = vpack.c.bf16 %v6986, %v6985
  %v7028 = vpack.c.bf16 %v6988, %v6987
  %v7029 = vpack.c.bf16 %v6990, %v6989
  %v7030 = vpack.c.bf16 %v6992, %v6991
  %v7031 = vpack.c.bf16 %v6994, %v6993
  %v7032 = vpack.c.bf16 %v6996, %v6995
  %v7033 = vpack.c.bf16 %v6998, %v6997
  %v7034 = vpack.c.bf16 %v7000, %v6999
  %v7035 = vpack.c.bf16 %v7002, %v7001
  %v7036 = vpack.c.bf16 %v7004, %v7003
  %s7037 = scalar_lea.vmem %s5, 4
  %v7038 = vld [vmem:[%s7037] sm:$0x3]
  %v7040 = vsel %vm101, %v7005, 0
  %v7043 = vsel %vm101, %v7006, 0
  %v7046 = vsel %vm101, %v7007, 0
  %v7049 = vsel %vm101, %v7008, 0
  %v7052 = vsel %vm101, %v7009, 0
  %v7055 = vsel %vm101, %v7010, 0
  %v7058 = vsel %vm101, %v7011, 0
  %v7061 = vsel %vm101, %v7012, 0
  %v7064 = vsel %vm101, %v7013, 0
  %v7067 = vsel %vm101, %v7014, 0
  %v7070 = vsel %vm101, %v7015, 0
  %v7073 = vsel %vm101, %v7016, 0
  %v7076 = vsel %vm101, %v7017, 0
  %v7079 = vsel %vm101, %v7018, 0
  %v7082 = vsel %vm101, %v7019, 0
  %v7085 = vsel %vm101, %v7020, 0
  %v7088 = vsel %vm101, %v7021, 0
  %v7091 = vsel %vm101, %v7022, 0
  %v7094 = vsel %vm101, %v7023, 0
  %v7097 = vsel %vm101, %v7024, 0
  %v7100 = vsel %vm101, %v7025, 0
  %v7103 = vsel %vm101, %v7026, 0
  %v7106 = vsel %vm101, %v7027, 0
  %v7109 = vsel %vm101, %v7028, 0
  %v7112 = vsel %vm101, %v7029, 0
  %v7115 = vsel %vm101, %v7030, 0
  %v7118 = vsel %vm101, %v7031, 0
  %v7121 = vsel %vm101, %v7032, 0
  %v7124 = vsel %vm101, %v7033, 0
  %v7127 = vsel %vm101, %v7034, 0
  %v7130 = vsel %vm101, %v7035, 0
  %v7133 = vsel %vm101, %v7036, 0
  %v7136 = vsel %vm567, %v7038, 0
  %7138 = vmatprep.subr.bf16.mxu0 0
  %7139 = vmatpush1.bf16.msra.mxu0 %v7136
  %7140 = vmatprep.subr.bf16.mxu0 0
  %7141 = vmatpush1.bf16.msra.mxu0 0
  %7142 = vmatprep.subr.bf16.mxu0 0
  %7143 = vmatpush1.bf16.msra.mxu0 0
  %7144 = vmatprep.subr.bf16.mxu0 0
  %7145 = vmatpush1.bf16.msra.mxu0 0
  %7146 = vmatprep.subr.bf16.mxu0 0
  %7147 = vmatpush1.bf16.msra.mxu0 0
  %7148 = vmatprep.subr.bf16.mxu0 0
  %7149 = vmatpush1.bf16.msra.mxu0 0
  %7150 = vmatprep.subr.bf16.mxu0 0
  %7151 = vmatpush1.bf16.msra.mxu0 0
  %7152 = vmatprep.subr.bf16.mxu0 0
  %7153 = vmatpush1.bf16.msra.mxu0 0
  %7154 = vmatprep.subr.bf16.mxu0 0
  %7155 = vmatpush1.bf16.msra.mxu0 0
  %7156 = vmatprep.subr.bf16.mxu0 0
  %7157 = vmatpush1.bf16.msra.mxu0 0
  %7158 = vmatprep.subr.bf16.mxu0 0
  %7159 = vmatpush1.bf16.msra.mxu0 0
  %7160 = vmatprep.subr.bf16.mxu0 0
  %7161 = vmatpush1.bf16.msra.mxu0 0
  %7162 = vmatprep.subr.bf16.mxu0 0
  %7163 = vmatpush1.bf16.msra.mxu0 0
  %7164 = vmatprep.subr.bf16.mxu0 0
  %7165 = vmatpush1.bf16.msra.mxu0 0
  %7166 = vmatprep.subr.bf16.mxu0 0
  %7167 = vmatpush1.bf16.msra.mxu0 0
  %7168 = vmatprep.subr.bf16.mxu0 0
  %7169 = vmatpush1.bf16.msra.mxu0 0
  %7170 = vmatprep.mubr.bf16.mxu0 0
  %7171 = vmatmul.mubr.bf16.gmra.mrb[0].mxu0 %v7040
  %v7172 = vpop.f32.mrb[0].mxu0
  %v7173 = vadd.f32 0.0, %v7172
  %v7174 = vpop.f32.mrb[0].mxu0
  %v7175 = vpop.f32.mrb[0].mxu0
  %v7176 = vadd.f32 0.0, %v7175
  %v7177 = vpop.f32.mrb[0].mxu0
  %7178 = vmatprep.mubr.bf16.mxu0 0
  %7179 = vmatmul.mubr.bf16.gmra.mrb[0].mxu0 %v7043
  %v7180 = vpop.f32.mrb[0].mxu0
  %v7181 = vadd.f32 0.0, %v7180
  %v7182 = vpop.f32.mrb[0].mxu0
  %v7183 = vpop.f32.mrb[0].mxu0
  %v7184 = vadd.f32 0.0, %v7183
  %v7185 = vpop.f32.mrb[0].mxu0
  %7186 = vmatprep.mubr.bf16.mxu0 0
  %7187 = vmatmul.mubr.bf16.gmra.mrb[0].mxu0 %v7046
  %v7188 = vpop.f32.mrb[0].mxu0
  %v7189 = vadd.f32 0.0, %v7188
  %v7190 = vpop.f32.mrb[0].mxu0
  %v7191 = vpop.f32.mrb[0].mxu0
  %v7192 = vadd.f32 0.0, %v7191
  %v7193 = vpop.f32.mrb[0].mxu0
  %7194 = vmatprep.mubr.bf16.mxu0 0
  %7195 = vmatmul.mubr.bf16.gmra.mrb[0].mxu0 %v7049
  %v7196 = vpop.f32.mrb[0].mxu0
  %v7197 = vadd.f32 0.0, %v7196
  %v7198 = vpop.f32.mrb[0].mxu0
  %v7199 = vpop.f32.mrb[0].mxu0
  %v7200 = vadd.f32 0.0, %v7199
  %v7201 = vpop.f32.mrb[0].mxu0
  %7202 = vmatprep.mubr.bf16.mxu0 0
  %7203 = vmatmul.mubr.bf16.gmra.mrb[0].mxu0 %v7052
  %v7204 = vpop.f32.mrb[0].mxu0
  %v7205 = vadd.f32 0.0, %v7204
  %v7206 = vpop.f32.mrb[0].mxu0
  %v7207 = vpop.f32.mrb[0].mxu0
  %v7208 = vadd.f32 0.0, %v7207
  %v7209 = vpop.f32.mrb[0].mxu0
  %7210 = vmatprep.mubr.bf16.mxu0 0
  %7211 = vmatmul.mubr.bf16.gmra.mrb[0].mxu0 %v7055
  %v7212 = vpop.f32.mrb[0].mxu0
  %v7213 = vadd.f32 0.0, %v7212
  %v7214 = vpop.f32.mrb[0].mxu0
  %v7215 = vpop.f32.mrb[0].mxu0
  %v7216 = vadd.f32 0.0, %v7215
  %v7217 = vpop.f32.mrb[0].mxu0
  %7218 = vmatprep.mubr.bf16.mxu0 0
  %7219 = vmatmul.mubr.bf16.gmra.mrb[0].mxu0 %v7058
  %v7220 = vpop.f32.mrb[0].mxu0
  %v7221 = vadd.f32 0.0, %v7220
  %v7222 = vpop.f32.mrb[0].mxu0
  %v7223 = vpop.f32.mrb[0].mxu0
  %v7224 = vadd.f32 0.0, %v7223
  %v7225 = vpop.f32.mrb[0].mxu0
  %7226 = vmatprep.mubr.bf16.mxu0 0
  %7227 = vmatmul.mubr.bf16.gmra.mrb[0].mxu0 %v7061
  %v7228 = vpop.f32.mrb[0].mxu0
  %v7229 = vadd.f32 0.0, %v7228
  %v7230 = vpop.f32.mrb[0].mxu0
  %v7231 = vpop.f32.mrb[0].mxu0
  %v7232 = vadd.f32 0.0, %v7231
  %v7233 = vpop.f32.mrb[0].mxu0
  %7234 = vmatprep.mubr.bf16.mxu0 0
  %7235 = vmatmul.mubr.bf16.gmra.mrb[0].mxu0 %v7064
  %v7236 = vpop.f32.mrb[0].mxu0
  %v7237 = vadd.f32 0.0, %v7236
  %v7238 = vpop.f32.mrb[0].mxu0
  %v7239 = vpop.f32.mrb[0].mxu0
  %v7240 = vadd.f32 0.0, %v7239
  %v7241 = vpop.f32.mrb[0].mxu0
  %7242 = vmatprep.mubr.bf16.mxu0 0
  %7243 = vmatmul.mubr.bf16.gmra.mrb[0].mxu0 %v7067
  %v7244 = vpop.f32.mrb[0].mxu0
  %v7245 = vadd.f32 0.0, %v7244
  %v7246 = vpop.f32.mrb[0].mxu0
  %v7247 = vpop.f32.mrb[0].mxu0
  %v7248 = vadd.f32 0.0, %v7247
  %v7249 = vpop.f32.mrb[0].mxu0
  %7250 = vmatprep.mubr.bf16.mxu0 0
  %7251 = vmatmul.mubr.bf16.gmra.mrb[0].mxu0 %v7070
  %v7252 = vpop.f32.mrb[0].mxu0
  %v7253 = vadd.f32 0.0, %v7252
  %v7254 = vpop.f32.mrb[0].mxu0
  %v7255 = vpop.f32.mrb[0].mxu0
  %v7256 = vadd.f32 0.0, %v7255
  %v7257 = vpop.f32.mrb[0].mxu0
  %7258 = vmatprep.mubr.bf16.mxu0 0
  %7259 = vmatmul.mubr.bf16.gmra.mrb[0].mxu0 %v7073
  %v7260 = vpop.f32.mrb[0].mxu0
  %v7261 = vadd.f32 0.0, %v7260
  %v7262 = vpop.f32.mrb[0].mxu0
  %v7263 = vpop.f32.mrb[0].mxu0
  %v7264 = vadd.f32 0.0, %v7263
  %v7265 = vpop.f32.mrb[0].mxu0
  %7266 = vmatprep.mubr.bf16.mxu0 0
  %7267 = vmatmul.mubr.bf16.gmra.mrb[0].mxu0 %v7076
  %v7268 = vpop.f32.mrb[0].mxu0
  %v7269 = vadd.f32 0.0, %v7268
  %v7270 = vpop.f32.mrb[0].mxu0
  %v7271 = vpop.f32.mrb[0].mxu0
  %v7272 = vadd.f32 0.0, %v7271
  %v7273 = vpop.f32.mrb[0].mxu0
  %7274 = vmatprep.mubr.bf16.mxu0 0
  %7275 = vmatmul.mubr.bf16.gmra.mrb[0].mxu0 %v7079
  %v7276 = vpop.f32.mrb[0].mxu0
  %v7277 = vadd.f32 0.0, %v7276
  %v7278 = vpop.f32.mrb[0].mxu0
  %v7279 = vpop.f32.mrb[0].mxu0
  %v7280 = vadd.f32 0.0, %v7279
  %v7281 = vpop.f32.mrb[0].mxu0
  %7282 = vmatprep.mubr.bf16.mxu0 0
  %7283 = vmatmul.mubr.bf16.gmra.mrb[0].mxu0 %v7082
  %v7284 = vpop.f32.mrb[0].mxu0
  %v7285 = vadd.f32 0.0, %v7284
  %v7286 = vpop.f32.mrb[0].mxu0
  %v7287 = vpop.f32.mrb[0].mxu0
  %v7288 = vadd.f32 0.0, %v7287
  %v7289 = vpop.f32.mrb[0].mxu0
  %7290 = vmatprep.mubr.bf16.mxu0 0
  %7291 = vmatmul.mubr.bf16.gmra.mrb[0].mxu0 %v7085
  %v7292 = vpop.f32.mrb[0].mxu0
  %v7293 = vadd.f32 0.0, %v7292
  %v7294 = vpop.f32.mrb[0].mxu0
  %v7295 = vpop.f32.mrb[0].mxu0
  %v7296 = vadd.f32 0.0, %v7295
  %v7297 = vpop.f32.mrb[0].mxu0
  %7298 = vmatprep.mubr.bf16.mxu0 0
  %7299 = vmatmul.mubr.bf16.gmra.mrb[0].mxu0 %v7088
  %v7300 = vpop.f32.mrb[0].mxu0
  %v7301 = vadd.f32 0.0, %v7300
  %v7302 = vpop.f32.mrb[0].mxu0
  %v7303 = vpop.f32.mrb[0].mxu0
  %v7304 = vadd.f32 0.0, %v7303
  %v7305 = vpop.f32.mrb[0].mxu0
  %7306 = vmatprep.mubr.bf16.mxu0 0
  %7307 = vmatmul.mubr.bf16.gmra.mrb[0].mxu0 %v7091
  %v7308 = vpop.f32.mrb[0].mxu0
  %v7309 = vadd.f32 0.0, %v7308
  %v7310 = vpop.f32.mrb[0].mxu0
  %v7311 = vpop.f32.mrb[0].mxu0
  %v7312 = vadd.f32 0.0, %v7311
  %v7313 = vpop.f32.mrb[0].mxu0
  %7314 = vmatprep.mubr.bf16.mxu0 0
  %7315 = vmatmul.mubr.bf16.gmra.mrb[0].mxu0 %v7094
  %v7316 = vpop.f32.mrb[0].mxu0
  %v7317 = vadd.f32 0.0, %v7316
  %v7318 = vpop.f32.mrb[0].mxu0
  %v7319 = vpop.f32.mrb[0].mxu0
  %v7320 = vadd.f32 0.0, %v7319
  %v7321 = vpop.f32.mrb[0].mxu0
  %7322 = vmatprep.mubr.bf16.mxu0 0
  %7323 = vmatmul.mubr.bf16.gmra.mrb[0].mxu0 %v7097
  %v7324 = vpop.f32.mrb[0].mxu0
  %v7325 = vadd.f32 0.0, %v7324
  %v7326 = vpop.f32.mrb[0].mxu0
  %v7327 = vpop.f32.mrb[0].mxu0
  %v7328 = vadd.f32 0.0, %v7327
  %v7329 = vpop.f32.mrb[0].mxu0
  %7330 = vmatprep.mubr.bf16.mxu0 0
  %7331 = vmatmul.mubr.bf16.gmra.mrb[0].mxu0 %v7100
  %v7332 = vpop.f32.mrb[0].mxu0
  %v7333 = vadd.f32 0.0, %v7332
  %v7334 = vpop.f32.mrb[0].mxu0
  %v7335 = vpop.f32.mrb[0].mxu0
  %v7336 = vadd.f32 0.0, %v7335
  %v7337 = vpop.f32.mrb[0].mxu0
  %7338 = vmatprep.mubr.bf16.mxu0 0
  %7339 = vmatmul.mubr.bf16.gmra.mrb[0].mxu0 %v7103
  %v7340 = vpop.f32.mrb[0].mxu0
  %v7341 = vadd.f32 0.0, %v7340
  %v7342 = vpop.f32.mrb[0].mxu0
  %v7343 = vpop.f32.mrb[0].mxu0
  %v7344 = vadd.f32 0.0, %v7343
  %v7345 = vpop.f32.mrb[0].mxu0
  %7346 = vmatprep.mubr.bf16.mxu0 0
  %7347 = vmatmul.mubr.bf16.gmra.mrb[0].mxu0 %v7106
  %v7348 = vpop.f32.mrb[0].mxu0
  %v7349 = vadd.f32 0.0, %v7348
  %v7350 = vpop.f32.mrb[0].mxu0
  %v7351 = vpop.f32.mrb[0].mxu0
  %v7352 = vadd.f32 0.0, %v7351
  %v7353 = vpop.f32.mrb[0].mxu0
  %7354 = vmatprep.mubr.bf16.mxu0 0
  %7355 = vmatmul.mubr.bf16.gmra.mrb[0].mxu0 %v7109
  %v7356 = vpop.f32.mrb[0].mxu0
  %v7357 = vadd.f32 0.0, %v7356
  %v7358 = vpop.f32.mrb[0].mxu0
  %v7359 = vpop.f32.mrb[0].mxu0
  %v7360 = vadd.f32 0.0, %v7359
  %v7361 = vpop.f32.mrb[0].mxu0
  %7362 = vmatprep.mubr.bf16.mxu0 0
  %7363 = vmatmul.mubr.bf16.gmra.mrb[0].mxu0 %v7112
  %v7364 = vpop.f32.mrb[0].mxu0
  %v7365 = vadd.f32 0.0, %v7364
  %v7366 = vpop.f32.mrb[0].mxu0
  %v7367 = vpop.f32.mrb[0].mxu0
  %v7368 = vadd.f32 0.0, %v7367
  %v7369 = vpop.f32.mrb[0].mxu0
  %7370 = vmatprep.mubr.bf16.mxu0 0
  %7371 = vmatmul.mubr.bf16.gmra.mrb[0].mxu0 %v7115
  %v7372 = vpop.f32.mrb[0].mxu0
  %v7373 = vadd.f32 0.0, %v7372
  %v7374 = vpop.f32.mrb[0].mxu0
  %v7375 = vpop.f32.mrb[0].mxu0
  %v7376 = vadd.f32 0.0, %v7375
  %v7377 = vpop.f32.mrb[0].mxu0
  %7378 = vmatprep.mubr.bf16.mxu0 0
  %7379 = vmatmul.mubr.bf16.gmra.mrb[0].mxu0 %v7118
  %v7380 = vpop.f32.mrb[0].mxu0
  %v7381 = vadd.f32 0.0, %v7380
  %v7382 = vpop.f32.mrb[0].mxu0
  %v7383 = vpop.f32.mrb[0].mxu0
  %v7384 = vadd.f32 0.0, %v7383
  %v7385 = vpop.f32.mrb[0].mxu0
  %7386 = vmatprep.mubr.bf16.mxu0 0
  %7387 = vmatmul.mubr.bf16.gmra.mrb[0].mxu0 %v7121
  %v7388 = vpop.f32.mrb[0].mxu0
  %v7389 = vadd.f32 0.0, %v7388
  %v7390 = vpop.f32.mrb[0].mxu0
  %v7391 = vpop.f32.mrb[0].mxu0
  %v7392 = vadd.f32 0.0, %v7391
  %v7393 = vpop.f32.mrb[0].mxu0
  %7394 = vmatprep.mubr.bf16.mxu0 0
  %7395 = vmatmul.mubr.bf16.gmra.mrb[0].mxu0 %v7124
  %v7396 = vpop.f32.mrb[0].mxu0
  %v7397 = vadd.f32 0.0, %v7396
  %v7398 = vpop.f32.mrb[0].mxu0
  %v7399 = vpop.f32.mrb[0].mxu0
  %v7400 = vadd.f32 0.0, %v7399
  %v7401 = vpop.f32.mrb[0].mxu0
  %7402 = vmatprep.mubr.bf16.mxu0 0
  %7403 = vmatmul.mubr.bf16.gmra.mrb[0].mxu0 %v7127
  %v7404 = vpop.f32.mrb[0].mxu0
  %v7405 = vadd.f32 0.0, %v7404
  %v7406 = vpop.f32.mrb[0].mxu0
  %v7407 = vpop.f32.mrb[0].mxu0
  %v7408 = vadd.f32 0.0, %v7407
  %v7409 = vpop.f32.mrb[0].mxu0
  %7410 = vmatprep.mubr.bf16.mxu0 0
  %7411 = vmatmul.mubr.bf16.gmra.mrb[0].mxu0 %v7130
  %v7412 = vpop.f32.mrb[0].mxu0
  %v7413 = vadd.f32 0.0, %v7412
  %v7414 = vpop.f32.mrb[0].mxu0
  %v7415 = vpop.f32.mrb[0].mxu0
  %v7416 = vadd.f32 0.0, %v7415
  %v7417 = vpop.f32.mrb[0].mxu0
  %7418 = vmatprep.mubr.bf16.mxu0 0
  %7419 = vmatmul.mubr.bf16.gmra.mrb[0].mxu0 %v7133
  %v7420 = vpop.f32.mrb[0].mxu0
  %v7421 = vadd.f32 0.0, %v7420
  %v7422 = vpop.f32.mrb[0].mxu0
  %v7423 = vpop.f32.mrb[0].mxu0
  %v7424 = vadd.f32 0.0, %v7423
  %v7425 = vpop.f32.mrb[0].mxu0
  %7426 = vdwg.mxu0
  %v7427 = vadd.f32 %v6687, %v7173
  %v7428 = vadd.f32 %v6690, %v7176
  %v7429 = vadd.f32 %v6695, %v7181
  %v7430 = vadd.f32 %v6698, %v7184
  %v7431 = vadd.f32 %v6703, %v7189
  %v7432 = vadd.f32 %v6706, %v7192
  %v7433 = vadd.f32 %v6711, %v7197
  %v7434 = vadd.f32 %v6714, %v7200
  %v7435 = vadd.f32 %v6719, %v7205
  %v7436 = vadd.f32 %v6722, %v7208
  %v7437 = vadd.f32 %v6727, %v7213
  %v7438 = vadd.f32 %v6730, %v7216
  %v7439 = vadd.f32 %v6735, %v7221
  %v7440 = vadd.f32 %v6738, %v7224
  %v7441 = vadd.f32 %v6743, %v7229
  %v7442 = vadd.f32 %v6746, %v7232
  %v7443 = vadd.f32 %v6751, %v7237
  %v7444 = vadd.f32 %v6754, %v7240
  %v7445 = vadd.f32 %v6759, %v7245
  %v7446 = vadd.f32 %v6762, %v7248
  %v7447 = vadd.f32 %v6767, %v7253
  %v7448 = vadd.f32 %v6770, %v7256
  %v7449 = vadd.f32 %v6775, %v7261
  %v7450 = vadd.f32 %v6778, %v7264
  %v7451 = vadd.f32 %v6783, %v7269
  %v7452 = vadd.f32 %v6786, %v7272
  %v7453 = vadd.f32 %v6791, %v7277
  %v7454 = vadd.f32 %v6794, %v7280
  %v7455 = vadd.f32 %v6799, %v7285
  %v7456 = vadd.f32 %v6802, %v7288
  %v7457 = vadd.f32 %v6807, %v7293
  %v7458 = vadd.f32 %v6810, %v7296
  %v7459 = vadd.f32 %v6815, %v7301
  %v7460 = vadd.f32 %v6818, %v7304
  %v7461 = vadd.f32 %v6823, %v7309
  %v7462 = vadd.f32 %v6826, %v7312
  %v7463 = vadd.f32 %v6831, %v7317
  %v7464 = vadd.f32 %v6834, %v7320
  %v7465 = vadd.f32 %v6839, %v7325
  %v7466 = vadd.f32 %v6842, %v7328
  %v7467 = vadd.f32 %v6847, %v7333
  %v7468 = vadd.f32 %v6850, %v7336
  %v7469 = vadd.f32 %v6855, %v7341
  %v7470 = vadd.f32 %v6858, %v7344
  %v7471 = vadd.f32 %v6863, %v7349
  %v7472 = vadd.f32 %v6866, %v7352
  %v7473 = vadd.f32 %v6871, %v7357
  %v7474 = vadd.f32 %v6874, %v7360
  %v7475 = vadd.f32 %v6879, %v7365
  %v7476 = vadd.f32 %v6882, %v7368
  %v7477 = vadd.f32 %v6887, %v7373
  %v7478 = vadd.f32 %v6890, %v7376
  %v7479 = vadd.f32 %v6895, %v7381
  %v7480 = vadd.f32 %v6898, %v7384
  %v7481 = vadd.f32 %v6903, %v7389
  %v7482 = vadd.f32 %v6906, %v7392
  %v7483 = vadd.f32 %v6911, %v7397
  %v7484 = vadd.f32 %v6914, %v7400
  %v7485 = vadd.f32 %v6919, %v7405
  %v7486 = vadd.f32 %v6922, %v7408
  %v7487 = vadd.f32 %v6927, %v7413
  %v7488 = vadd.f32 %v6930, %v7416
  %v7489 = vadd.f32 %v6935, %v7421
  %v7490 = vadd.f32 %v6938, %v7424
  %v7491 = vld [vmem:[%s211] sm:$0xff]
  %v7492 = vld [vmem:[%s211 + $0x8] sm:$0xff]
  %v7493 = vld [vmem:[%s211 + $0x18] sm:$0xff]
  %v7494 = vld [vmem:[%s211 + $0x20] sm:$0xff]
  %v7495 = vld [vmem:[%s211 + $0x30] sm:$0xff]
  %v7496 = vld [vmem:[%s211 + $0x38] sm:$0xff]
  %v7497 = vld [vmem:[%s211 + $0x48] sm:$0xff]
  %v7498 = vld [vmem:[%s211 + $0x50] sm:$0xff]
  %v7499 = vld [vmem:[%s211 + $0x60] sm:$0xff]
  %v7500 = vld [vmem:[%s211 + $0x68] sm:$0xff]
  %v7501 = vld [vmem:[%s211 + $0x78] sm:$0xff]
  %v7502 = vld [vmem:[%s211 + $0x80] sm:$0xff]
  %v7503 = vld [vmem:[%s211 + $0x90] sm:$0xff]
  %v7504 = vld [vmem:[%s211 + $0x98] sm:$0xff]
  %v7505 = vld [vmem:[%s211 + $0xa8] sm:$0xff]
  %v7506 = vld [vmem:[%s211 + $0xb0] sm:$0xff]
  %v7507 = vld [vmem:[%s211 + $0xc0] sm:$0xff]
  %v7508 = vld [vmem:[%s211 + $0xc8] sm:$0xff]
  %v7509 = vld [vmem:[%s211 + $0xd8] sm:$0xff]
  %v7510 = vld [vmem:[%s211 + $0xe0] sm:$0xff]
  %v7511 = vld [vmem:[%s211 + $0xf0] sm:$0xff]
  %v7512 = vld [vmem:[%s211 + $0xf8] sm:$0xff]
  %v7513 = vld [vmem:[%s211 + $0x108] sm:$0xff]
  %v7514 = vld [vmem:[%s211 + $0x110] sm:$0xff]
  %v7515 = vld [vmem:[%s211 + $0x120] sm:$0xff]
  %v7516 = vld [vmem:[%s211 + $0x128] sm:$0xff]
  %v7517 = vld [vmem:[%s211 + $0x138] sm:$0xff]
  %v7518 = vld [vmem:[%s211 + $0x140] sm:$0xff]
  %v7519 = vld [vmem:[%s211 + $0x150] sm:$0xff]
  %v7520 = vld [vmem:[%s211 + $0x158] sm:$0xff]
  %v7521 = vld [vmem:[%s211 + $0x168] sm:$0xff]
  %v7522 = vld [vmem:[%s211 + $0x170] sm:$0xff]
  %v7523 = vld [vmem:[%s211 + $0x1b0] sm:$0xff]
  %v7524 = vld [vmem:[%s211 + $0x1b8] sm:$0xff]
  %v7525 = vld [vmem:[%s211 + $0x1c8] sm:$0xff]
  %v7526 = vld [vmem:[%s211 + $0x1d0] sm:$0xff]
  %v7527 = vld [vmem:[%s211 + $0x1e0] sm:$0xff]
  %v7528 = vld [vmem:[%s211 + $0x1e8] sm:$0xff]
  %v7529 = vld [vmem:[%s211 + $0x1f8] sm:$0xff]
  %v7530 = vld [vmem:[%s211 + $0x200] sm:$0xff]
  %v7531 = vld [vmem:[%s211 + $0x210] sm:$0xff]
  %v7532 = vld [vmem:[%s211 + $0x218] sm:$0xff]
  %v7533 = vld [vmem:[%s211 + $0x228] sm:$0xff]
  %v7534 = vld [vmem:[%s211 + $0x230] sm:$0xff]
  %v7535 = vld [vmem:[%s211 + $0x240] sm:$0xff]
  %v7536 = vld [vmem:[%s211 + $0x248] sm:$0xff]
  %v7537 = vld [vmem:[%s211 + $0x258] sm:$0xff]
  %v7538 = vld [vmem:[%s211 + $0x260] sm:$0xff]
  %v7539 = vld [vmem:[%s211 + $0x270] sm:$0xff]
  %v7540 = vld [vmem:[%s211 + $0x278] sm:$0xff]
  %v7541 = vld [vmem:[%s211 + $0x288] sm:$0xff]
  %v7542 = vld [vmem:[%s211 + $0x290] sm:$0xff]
  %v7543 = vld [vmem:[%s211 + $0x2a0] sm:$0xff]
  %v7544 = vld [vmem:[%s211 + $0x2a8] sm:$0xff]
  %v7545 = vld [vmem:[%s211 + $0x2b8] sm:$0xff]
  %v7546 = vld [vmem:[%s211 + $0x2c0] sm:$0xff]
  %v7547 = vld [vmem:[%s211 + $0x2d0] sm:$0xff]
  %v7548 = vld [vmem:[%s211 + $0x2d8] sm:$0xff]
  %v7549 = vld [vmem:[%s211 + $0x2e8] sm:$0xff]
  %v7550 = vld [vmem:[%s211 + $0x2f0] sm:$0xff]
  %v7551 = vld [vmem:[%s211 + $0x300] sm:$0xff]
  %v7552 = vld [vmem:[%s211 + $0x308] sm:$0xff]
  %v7553 = vld [vmem:[%s211 + $0x318] sm:$0xff]
  %v7554 = vld [vmem:[%s211 + $0x320] sm:$0xff]
  %v7555 = vpack.c.bf16 %v7492, %v7491
  %v7556 = vpack.c.bf16 %v7494, %v7493
  %v7557 = vpack.c.bf16 %v7496, %v7495
  %v7558 = vpack.c.bf16 %v7498, %v7497
  %v7559 = vpack.c.bf16 %v7500, %v7499
  %v7560 = vpack.c.bf16 %v7502, %v7501
  %v7561 = vpack.c.bf16 %v7504, %v7503
  %v7562 = vpack.c.bf16 %v7506, %v7505
  %v7563 = vpack.c.bf16 %v7508, %v7507
  %v7564 = vpack.c.bf16 %v7510, %v7509
  %v7565 = vpack.c.bf16 %v7512, %v7511
  %v7566 = vpack.c.bf16 %v7514, %v7513
  %v7567 = vpack.c.bf16 %v7516, %v7515
  %v7568 = vpack.c.bf16 %v7518, %v7517
  %v7569 = vpack.c.bf16 %v7520, %v7519
  %v7570 = vpack.c.bf16 %v7522, %v7521
  %v7571 = vpack.c.bf16 %v7524, %v7523
  %v7572 = vpack.c.bf16 %v7526, %v7525
  %v7573 = vpack.c.bf16 %v7528, %v7527
  %v7574 = vpack.c.bf16 %v7530, %v7529
  %v7575 = vpack.c.bf16 %v7532, %v7531
  %v7576 = vpack.c.bf16 %v7534, %v7533
  %v7577 = vpack.c.bf16 %v7536, %v7535
  %v7578 = vpack.c.bf16 %v7538, %v7537
  %v7579 = vpack.c.bf16 %v7540, %v7539
  %v7580 = vpack.c.bf16 %v7542, %v7541
  %v7581 = vpack.c.bf16 %v7544, %v7543
  %v7582 = vpack.c.bf16 %v7546, %v7545
  %v7583 = vpack.c.bf16 %v7548, %v7547
  %v7584 = vpack.c.bf16 %v7550, %v7549
  %v7585 = vpack.c.bf16 %v7552, %v7551
  %v7586 = vpack.c.bf16 %v7554, %v7553
  %s7587 = scalar_lea.vmem %s5, 6
  %v7588 = vld [vmem:[%s7587] sm:$0x3]
  %v7590 = vsel %vm101, %v7555, 0
  %v7593 = vsel %vm101, %v7556, 0
  %v7596 = vsel %vm101, %v7557, 0
  %v7599 = vsel %vm101, %v7558, 0
  %v7602 = vsel %vm101, %v7559, 0
  %v7605 = vsel %vm101, %v7560, 0
  %v7608 = vsel %vm101, %v7561, 0
  %v7611 = vsel %vm101, %v7562, 0
  %v7614 = vsel %vm101, %v7563, 0
  %v7617 = vsel %vm101, %v7564, 0
  %v7620 = vsel %vm101, %v7565, 0
  %v7623 = vsel %vm101, %v7566, 0
  %v7626 = vsel %vm101, %v7567, 0
  %v7629 = vsel %vm101, %v7568, 0
  %v7632 = vsel %vm101, %v7569, 0
  %v7635 = vsel %vm101, %v7570, 0
  %v7638 = vsel %vm101, %v7571, 0
  %v7641 = vsel %vm101, %v7572, 0
  %v7644 = vsel %vm101, %v7573, 0
  %v7647 = vsel %vm101, %v7574, 0
  %v7650 = vsel %vm101, %v7575, 0
  %v7653 = vsel %vm101, %v7576, 0
  %v7656 = vsel %vm101, %v7577, 0
  %v7659 = vsel %vm101, %v7578, 0
  %v7662 = vsel %vm101, %v7579, 0
  %v7665 = vsel %vm101, %v7580, 0
  %v7668 = vsel %vm101, %v7581, 0
  %v7671 = vsel %vm101, %v7582, 0
  %v7674 = vsel %vm101, %v7583, 0
  %v7677 = vsel %vm101, %v7584, 0
  %v7680 = vsel %vm101, %v7585, 0
  %v7683 = vsel %vm101, %v7586, 0
  %v7686 = vsel %vm567, %v7588, 0
  %7688 = vmatprep.subr.bf16.mxu0 0
  %7689 = vmatpush1.bf16.msra.mxu0 %v7686
  %7690 = vmatprep.subr.bf16.mxu0 0
  %7691 = vmatpush1.bf16.msra.mxu0 0
  %7692 = vmatprep.subr.bf16.mxu0 0
  %7693 = vmatpush1.bf16.msra.mxu0 0
  %7694 = vmatprep.subr.bf16.mxu0 0
  %7695 = vmatpush1.bf16.msra.mxu0 0
  %7696 = vmatprep.subr.bf16.mxu0 0
  %7697 = vmatpush1.bf16.msra.mxu0 0
  %7698 = vmatprep.subr.bf16.mxu0 0
  %7699 = vmatpush1.bf16.msra.mxu0 0
  %7700 = vmatprep.subr.bf16.mxu0 0
  %7701 = vmatpush1.bf16.msra.mxu0 0
  %7702 = vmatprep.subr.bf16.mxu0 0
  %7703 = vmatpush1.bf16.msra.mxu0 0
  %7704 = vmatprep.subr.bf16.mxu0 0
  %7705 = vmatpush1.bf16.msra.mxu0 0
  %7706 = vmatprep.subr.bf16.mxu0 0
  %7707 = vmatpush1.bf16.msra.mxu0 0
  %7708 = vmatprep.subr.bf16.mxu0 0
  %7709 = vmatpush1.bf16.msra.mxu0 0
  %7710 = vmatprep.subr.bf16.mxu0 0
  %7711 = vmatpush1.bf16.msra.mxu0 0
  %7712 = vmatprep.subr.bf16.mxu0 0
  %7713 = vmatpush1.bf16.msra.mxu0 0
  %7714 = vmatprep.subr.bf16.mxu0 0
  %7715 = vmatpush1.bf16.msra.mxu0 0
  %7716 = vmatprep.subr.bf16.mxu0 0
  %7717 = vmatpush1.bf16.msra.mxu0 0
  %7718 = vmatprep.subr.bf16.mxu0 0
  %7719 = vmatpush1.bf16.msra.mxu0 0
  %7720 = vmatprep.mubr.bf16.mxu0 0
  %7721 = vmatmul.mubr.bf16.gmra.mrb[0].mxu0 %v7590
  %v7722 = vpop.f32.mrb[0].mxu0
  %v7723 = vadd.f32 0.0, %v7722
  %v7724 = vpop.f32.mrb[0].mxu0
  %v7725 = vpop.f32.mrb[0].mxu0
  %v7726 = vadd.f32 0.0, %v7725
  %v7727 = vpop.f32.mrb[0].mxu0
  %7728 = vmatprep.mubr.bf16.mxu0 0
  %7729 = vmatmul.mubr.bf16.gmra.mrb[0].mxu0 %v7593
  %v7730 = vpop.f32.mrb[0].mxu0
  %v7731 = vadd.f32 0.0, %v7730
  %v7732 = vpop.f32.mrb[0].mxu0
  %v7733 = vpop.f32.mrb[0].mxu0
  %v7734 = vadd.f32 0.0, %v7733
  %v7735 = vpop.f32.mrb[0].mxu0
  %7736 = vmatprep.mubr.bf16.mxu0 0
  %7737 = vmatmul.mubr.bf16.gmra.mrb[0].mxu0 %v7596
  %v7738 = vpop.f32.mrb[0].mxu0
  %v7739 = vadd.f32 0.0, %v7738
  %v7740 = vpop.f32.mrb[0].mxu0
  %v7741 = vpop.f32.mrb[0].mxu0
  %v7742 = vadd.f32 0.0, %v7741
  %v7743 = vpop.f32.mrb[0].mxu0
  %7744 = vmatprep.mubr.bf16.mxu0 0
  %7745 = vmatmul.mubr.bf16.gmra.mrb[0].mxu0 %v7599
  %v7746 = vpop.f32.mrb[0].mxu0
  %v7747 = vadd.f32 0.0, %v7746
  %v7748 = vpop.f32.mrb[0].mxu0
  %v7749 = vpop.f32.mrb[0].mxu0
  %v7750 = vadd.f32 0.0, %v7749
  %v7751 = vpop.f32.mrb[0].mxu0
  %7752 = vmatprep.mubr.bf16.mxu0 0
  %7753 = vmatmul.mubr.bf16.gmra.mrb[0].mxu0 %v7602
  %v7754 = vpop.f32.mrb[0].mxu0
  %v7755 = vadd.f32 0.0, %v7754
  %v7756 = vpop.f32.mrb[0].mxu0
  %v7757 = vpop.f32.mrb[0].mxu0
  %v7758 = vadd.f32 0.0, %v7757
  %v7759 = vpop.f32.mrb[0].mxu0
  %7760 = vmatprep.mubr.bf16.mxu0 0
  %7761 = vmatmul.mubr.bf16.gmra.mrb[0].mxu0 %v7605
  %v7762 = vpop.f32.mrb[0].mxu0
  %v7763 = vadd.f32 0.0, %v7762
  %v7764 = vpop.f32.mrb[0].mxu0
  %v7765 = vpop.f32.mrb[0].mxu0
  %v7766 = vadd.f32 0.0, %v7765
  %v7767 = vpop.f32.mrb[0].mxu0
  %7768 = vmatprep.mubr.bf16.mxu0 0
  %7769 = vmatmul.mubr.bf16.gmra.mrb[0].mxu0 %v7608
  %v7770 = vpop.f32.mrb[0].mxu0
  %v7771 = vadd.f32 0.0, %v7770
  %v7772 = vpop.f32.mrb[0].mxu0
  %v7773 = vpop.f32.mrb[0].mxu0
  %v7774 = vadd.f32 0.0, %v7773
  %v7775 = vpop.f32.mrb[0].mxu0
  %7776 = vmatprep.mubr.bf16.mxu0 0
  %7777 = vmatmul.mubr.bf16.gmra.mrb[0].mxu0 %v7611
  %v7778 = vpop.f32.mrb[0].mxu0
  %v7779 = vadd.f32 0.0, %v7778
  %v7780 = vpop.f32.mrb[0].mxu0
  %v7781 = vpop.f32.mrb[0].mxu0
  %v7782 = vadd.f32 0.0, %v7781
  %v7783 = vpop.f32.mrb[0].mxu0
  %7784 = vmatprep.mubr.bf16.mxu0 0
  %7785 = vmatmul.mubr.bf16.gmra.mrb[0].mxu0 %v7614
  %v7786 = vpop.f32.mrb[0].mxu0
  %v7787 = vadd.f32 0.0, %v7786
  %v7788 = vpop.f32.mrb[0].mxu0
  %v7789 = vpop.f32.mrb[0].mxu0
  %v7790 = vadd.f32 0.0, %v7789
  %v7791 = vpop.f32.mrb[0].mxu0
  %7792 = vmatprep.mubr.bf16.mxu0 0
  %7793 = vmatmul.mubr.bf16.gmra.mrb[0].mxu0 %v7617
  %v7794 = vpop.f32.mrb[0].mxu0
  %v7795 = vadd.f32 0.0, %v7794
  %v7796 = vpop.f32.mrb[0].mxu0
  %v7797 = vpop.f32.mrb[0].mxu0
  %v7798 = vadd.f32 0.0, %v7797
  %v7799 = vpop.f32.mrb[0].mxu0
  %7800 = vmatprep.mubr.bf16.mxu0 0
  %7801 = vmatmul.mubr.bf16.gmra.mrb[0].mxu0 %v7620
  %v7802 = vpop.f32.mrb[0].mxu0
  %v7803 = vadd.f32 0.0, %v7802
  %v7804 = vpop.f32.mrb[0].mxu0
  %v7805 = vpop.f32.mrb[0].mxu0
  %v7806 = vadd.f32 0.0, %v7805
  %v7807 = vpop.f32.mrb[0].mxu0
  %7808 = vmatprep.mubr.bf16.mxu0 0
  %7809 = vmatmul.mubr.bf16.gmra.mrb[0].mxu0 %v7623
  %v7810 = vpop.f32.mrb[0].mxu0
  %v7811 = vadd.f32 0.0, %v7810
  %v7812 = vpop.f32.mrb[0].mxu0
  %v7813 = vpop.f32.mrb[0].mxu0
  %v7814 = vadd.f32 0.0, %v7813
  %v7815 = vpop.f32.mrb[0].mxu0
  %7816 = vmatprep.mubr.bf16.mxu0 0
  %7817 = vmatmul.mubr.bf16.gmra.mrb[0].mxu0 %v7626
  %v7818 = vpop.f32.mrb[0].mxu0
  %v7819 = vadd.f32 0.0, %v7818
  %v7820 = vpop.f32.mrb[0].mxu0
  %v7821 = vpop.f32.mrb[0].mxu0
  %v7822 = vadd.f32 0.0, %v7821
  %v7823 = vpop.f32.mrb[0].mxu0
  %7824 = vmatprep.mubr.bf16.mxu0 0
  %7825 = vmatmul.mubr.bf16.gmra.mrb[0].mxu0 %v7629
  %v7826 = vpop.f32.mrb[0].mxu0
  %v7827 = vadd.f32 0.0, %v7826
  %v7828 = vpop.f32.mrb[0].mxu0
  %v7829 = vpop.f32.mrb[0].mxu0
  %v7830 = vadd.f32 0.0, %v7829
  %v7831 = vpop.f32.mrb[0].mxu0
  %7832 = vmatprep.mubr.bf16.mxu0 0
  %7833 = vmatmul.mubr.bf16.gmra.mrb[0].mxu0 %v7632
  %v7834 = vpop.f32.mrb[0].mxu0
  %v7835 = vadd.f32 0.0, %v7834
  %v7836 = vpop.f32.mrb[0].mxu0
  %v7837 = vpop.f32.mrb[0].mxu0
  %v7838 = vadd.f32 0.0, %v7837
  %v7839 = vpop.f32.mrb[0].mxu0
  %7840 = vmatprep.mubr.bf16.mxu0 0
  %7841 = vmatmul.mubr.bf16.gmra.mrb[0].mxu0 %v7635
  %v7842 = vpop.f32.mrb[0].mxu0
  %v7843 = vadd.f32 0.0, %v7842
  %v7844 = vpop.f32.mrb[0].mxu0
  %v7845 = vpop.f32.mrb[0].mxu0
  %v7846 = vadd.f32 0.0, %v7845
  %v7847 = vpop.f32.mrb[0].mxu0
  %7848 = vmatprep.mubr.bf16.mxu0 0
  %7849 = vmatmul.mubr.bf16.gmra.mrb[0].mxu0 %v7638
  %v7850 = vpop.f32.mrb[0].mxu0
  %v7851 = vadd.f32 0.0, %v7850
  %v7852 = vpop.f32.mrb[0].mxu0
  %v7853 = vpop.f32.mrb[0].mxu0
  %v7854 = vadd.f32 0.0, %v7853
  %v7855 = vpop.f32.mrb[0].mxu0
  %7856 = vmatprep.mubr.bf16.mxu0 0
  %7857 = vmatmul.mubr.bf16.gmra.mrb[0].mxu0 %v7641
  %v7858 = vpop.f32.mrb[0].mxu0
  %v7859 = vadd.f32 0.0, %v7858
  %v7860 = vpop.f32.mrb[0].mxu0
  %v7861 = vpop.f32.mrb[0].mxu0
  %v7862 = vadd.f32 0.0, %v7861
  %v7863 = vpop.f32.mrb[0].mxu0
  %7864 = vmatprep.mubr.bf16.mxu0 0
  %7865 = vmatmul.mubr.bf16.gmra.mrb[0].mxu0 %v7644
  %v7866 = vpop.f32.mrb[0].mxu0
  %v7867 = vadd.f32 0.0, %v7866
  %v7868 = vpop.f32.mrb[0].mxu0
  %v7869 = vpop.f32.mrb[0].mxu0
  %v7870 = vadd.f32 0.0, %v7869
  %v7871 = vpop.f32.mrb[0].mxu0
  %7872 = vmatprep.mubr.bf16.mxu0 0
  %7873 = vmatmul.mubr.bf16.gmra.mrb[0].mxu0 %v7647
  %v7874 = vpop.f32.mrb[0].mxu0
  %v7875 = vadd.f32 0.0, %v7874
  %v7876 = vpop.f32.mrb[0].mxu0
  %v7877 = vpop.f32.mrb[0].mxu0
  %v7878 = vadd.f32 0.0, %v7877
  %v7879 = vpop.f32.mrb[0].mxu0
  %7880 = vmatprep.mubr.bf16.mxu0 0
  %7881 = vmatmul.mubr.bf16.gmra.mrb[0].mxu0 %v7650
  %v7882 = vpop.f32.mrb[0].mxu0
  %v7883 = vadd.f32 0.0, %v7882
  %v7884 = vpop.f32.mrb[0].mxu0
  %v7885 = vpop.f32.mrb[0].mxu0
  %v7886 = vadd.f32 0.0, %v7885
  %v7887 = vpop.f32.mrb[0].mxu0
  %7888 = vmatprep.mubr.bf16.mxu0 0
  %7889 = vmatmul.mubr.bf16.gmra.mrb[0].mxu0 %v7653
  %v7890 = vpop.f32.mrb[0].mxu0
  %v7891 = vadd.f32 0.0, %v7890
  %v7892 = vpop.f32.mrb[0].mxu0
  %v7893 = vpop.f32.mrb[0].mxu0
  %v7894 = vadd.f32 0.0, %v7893
  %v7895 = vpop.f32.mrb[0].mxu0
  %7896 = vmatprep.mubr.bf16.mxu0 0
  %7897 = vmatmul.mubr.bf16.gmra.mrb[0].mxu0 %v7656
  %v7898 = vpop.f32.mrb[0].mxu0
  %v7899 = vadd.f32 0.0, %v7898
  %v7900 = vpop.f32.mrb[0].mxu0
  %v7901 = vpop.f32.mrb[0].mxu0
  %v7902 = vadd.f32 0.0, %v7901
  %v7903 = vpop.f32.mrb[0].mxu0
  %7904 = vmatprep.mubr.bf16.mxu0 0
  %7905 = vmatmul.mubr.bf16.gmra.mrb[0].mxu0 %v7659
  %v7906 = vpop.f32.mrb[0].mxu0
  %v7907 = vadd.f32 0.0, %v7906
  %v7908 = vpop.f32.mrb[0].mxu0
  %v7909 = vpop.f32.mrb[0].mxu0
  %v7910 = vadd.f32 0.0, %v7909
  %v7911 = vpop.f32.mrb[0].mxu0
  %7912 = vmatprep.mubr.bf16.mxu0 0
  %7913 = vmatmul.mubr.bf16.gmra.mrb[0].mxu0 %v7662
  %v7914 = vpop.f32.mrb[0].mxu0
  %v7915 = vadd.f32 0.0, %v7914
  %v7916 = vpop.f32.mrb[0].mxu0
  %v7917 = vpop.f32.mrb[0].mxu0
  %v7918 = vadd.f32 0.0, %v7917
  %v7919 = vpop.f32.mrb[0].mxu0
  %7920 = vmatprep.mubr.bf16.mxu0 0
  %7921 = vmatmul.mubr.bf16.gmra.mrb[0].mxu0 %v7665
  %v7922 = vpop.f32.mrb[0].mxu0
  %v7923 = vadd.f32 0.0, %v7922
  %v7924 = vpop.f32.mrb[0].mxu0
  %v7925 = vpop.f32.mrb[0].mxu0
  %v7926 = vadd.f32 0.0, %v7925
  %v7927 = vpop.f32.mrb[0].mxu0
  %7928 = vmatprep.mubr.bf16.mxu0 0
  %7929 = vmatmul.mubr.bf16.gmra.mrb[0].mxu0 %v7668
  %v7930 = vpop.f32.mrb[0].mxu0
  %v7931 = vadd.f32 0.0, %v7930
  %v7932 = vpop.f32.mrb[0].mxu0
  %v7933 = vpop.f32.mrb[0].mxu0
  %v7934 = vadd.f32 0.0, %v7933
  %v7935 = vpop.f32.mrb[0].mxu0
  %7936 = vmatprep.mubr.bf16.mxu0 0
  %7937 = vmatmul.mubr.bf16.gmra.mrb[0].mxu0 %v7671
  %v7938 = vpop.f32.mrb[0].mxu0
  %v7939 = vadd.f32 0.0, %v7938
  %v7940 = vpop.f32.mrb[0].mxu0
  %v7941 = vpop.f32.mrb[0].mxu0
  %v7942 = vadd.f32 0.0, %v7941
  %v7943 = vpop.f32.mrb[0].mxu0
  %7944 = vmatprep.mubr.bf16.mxu0 0
  %7945 = vmatmul.mubr.bf16.gmra.mrb[0].mxu0 %v7674
  %v7946 = vpop.f32.mrb[0].mxu0
  %v7947 = vadd.f32 0.0, %v7946
  %v7948 = vpop.f32.mrb[0].mxu0
  %v7949 = vpop.f32.mrb[0].mxu0
  %v7950 = vadd.f32 0.0, %v7949
  %v7951 = vpop.f32.mrb[0].mxu0
  %7952 = vmatprep.mubr.bf16.mxu0 0
  %7953 = vmatmul.mubr.bf16.gmra.mrb[0].mxu0 %v7677
  %v7954 = vpop.f32.mrb[0].mxu0
  %v7955 = vadd.f32 0.0, %v7954
  %v7956 = vpop.f32.mrb[0].mxu0
  %v7957 = vpop.f32.mrb[0].mxu0
  %v7958 = vadd.f32 0.0, %v7957
  %v7959 = vpop.f32.mrb[0].mxu0
  %7960 = vmatprep.mubr.bf16.mxu0 0
  %7961 = vmatmul.mubr.bf16.gmra.mrb[0].mxu0 %v7680
  %v7962 = vpop.f32.mrb[0].mxu0
  %v7963 = vadd.f32 0.0, %v7962
  %v7964 = vpop.f32.mrb[0].mxu0
  %v7965 = vpop.f32.mrb[0].mxu0
  %v7966 = vadd.f32 0.0, %v7965
  %v7967 = vpop.f32.mrb[0].mxu0
  %7968 = vmatprep.mubr.bf16.mxu0 0
  %7969 = vmatmul.mubr.bf16.gmra.mrb[0].mxu0 %v7683
  %v7970 = vpop.f32.mrb[0].mxu0
  %v7971 = vadd.f32 0.0, %v7970
  %v7972 = vpop.f32.mrb[0].mxu0
  %v7973 = vpop.f32.mrb[0].mxu0
  %v7974 = vadd.f32 0.0, %v7973
  %v7975 = vpop.f32.mrb[0].mxu0
  %7976 = vdwg.mxu0
  %v7977 = vadd.f32 %v7427, %v7723
  %v7978 = vadd.f32 %v7428, %v7726
  %v7979 = vadd.f32 %v7429, %v7731
  %v7980 = vadd.f32 %v7430, %v7734
  %v7981 = vadd.f32 %v7431, %v7739
  %v7982 = vadd.f32 %v7432, %v7742
  %v7983 = vadd.f32 %v7433, %v7747
  %v7984 = vadd.f32 %v7434, %v7750
  %v7985 = vadd.f32 %v7435, %v7755
  %v7986 = vadd.f32 %v7436, %v7758
  %v7987 = vadd.f32 %v7437, %v7763
  %v7988 = vadd.f32 %v7438, %v7766
  %v7989 = vadd.f32 %v7439, %v7771
  %v7990 = vadd.f32 %v7440, %v7774
  %v7991 = vadd.f32 %v7441, %v7779
  %v7992 = vadd.f32 %v7442, %v7782
  %v7993 = vadd.f32 %v7443, %v7787
  %v7994 = vadd.f32 %v7444, %v7790
  %v7995 = vadd.f32 %v7445, %v7795
  %v7996 = vadd.f32 %v7446, %v7798
  %v7997 = vadd.f32 %v7447, %v7803
  %v7998 = vadd.f32 %v7448, %v7806
  %v7999 = vadd.f32 %v7449, %v7811
  %v8000 = vadd.f32 %v7450, %v7814
  %v8001 = vadd.f32 %v7451, %v7819
  %v8002 = vadd.f32 %v7452, %v7822
  %v8003 = vadd.f32 %v7453, %v7827
  %v8004 = vadd.f32 %v7454, %v7830
  %v8005 = vadd.f32 %v7455, %v7835
  %v8006 = vadd.f32 %v7456, %v7838
  %v8007 = vadd.f32 %v7457, %v7843
  %v8008 = vadd.f32 %v7458, %v7846
  %v8009 = vadd.f32 %v7459, %v7851
  %v8010 = vadd.f32 %v7460, %v7854
  %v8011 = vadd.f32 %v7461, %v7859
  %v8012 = vadd.f32 %v7462, %v7862
  %v8013 = vadd.f32 %v7463, %v7867
  %v8014 = vadd.f32 %v7464, %v7870
  %v8015 = vadd.f32 %v7465, %v7875
  %v8016 = vadd.f32 %v7466, %v7878
  %v8017 = vadd.f32 %v7467, %v7883
  %v8018 = vadd.f32 %v7468, %v7886
  %v8019 = vadd.f32 %v7469, %v7891
  %v8020 = vadd.f32 %v7470, %v7894
  %v8021 = vadd.f32 %v7471, %v7899
  %v8022 = vadd.f32 %v7472, %v7902
  %v8023 = vadd.f32 %v7473, %v7907
  %v8024 = vadd.f32 %v7474, %v7910
  %v8025 = vadd.f32 %v7475, %v7915
  %v8026 = vadd.f32 %v7476, %v7918
  %v8027 = vadd.f32 %v7477, %v7923
  %v8028 = vadd.f32 %v7478, %v7926
  %v8029 = vadd.f32 %v7479, %v7931
  %v8030 = vadd.f32 %v7480, %v7934
  %v8031 = vadd.f32 %v7481, %v7939
  %v8032 = vadd.f32 %v7482, %v7942
  %v8033 = vadd.f32 %v7483, %v7947
  %v8034 = vadd.f32 %v7484, %v7950
  %v8035 = vadd.f32 %v7485, %v7955
  %v8036 = vadd.f32 %v7486, %v7958
  %v8037 = vadd.f32 %v7487, %v7963
  %v8038 = vadd.f32 %v7488, %v7966
  %v8039 = vadd.f32 %v7489, %v7971
  %v8040 = vadd.f32 %v7490, %v7974
  %v8041 = vld [vmem:[%s211 + $0x1] sm:$0xff]
  %v8042 = vld [vmem:[%s211 + $0x9] sm:$0xff]
  %v8043 = vld [vmem:[%s211 + $0x19] sm:$0xff]
  %v8044 = vld [vmem:[%s211 + $0x21] sm:$0xff]
  %v8045 = vld [vmem:[%s211 + $0x31] sm:$0xff]
  %v8046 = vld [vmem:[%s211 + $0x39] sm:$0xff]
  %v8047 = vld [vmem:[%s211 + $0x49] sm:$0xff]
  %v8048 = vld [vmem:[%s211 + $0x51] sm:$0xff]
  %v8049 = vld [vmem:[%s211 + $0x61] sm:$0xff]
  %v8050 = vld [vmem:[%s211 + $0x69] sm:$0xff]
  %v8051 = vld [vmem:[%s211 + $0x79] sm:$0xff]
  %v8052 = vld [vmem:[%s211 + $0x81] sm:$0xff]
  %v8053 = vld [vmem:[%s211 + $0x91] sm:$0xff]
  %v8054 = vld [vmem:[%s211 + $0x99] sm:$0xff]
  %v8055 = vld [vmem:[%s211 + $0xa9] sm:$0xff]
  %v8056 = vld [vmem:[%s211 + $0xb1] sm:$0xff]
  %v8057 = vld [vmem:[%s211 + $0xc1] sm:$0xff]
  %v8058 = vld [vmem:[%s211 + $0xc9] sm:$0xff]
  %v8059 = vld [vmem:[%s211 + $0xd9] sm:$0xff]
  %v8060 = vld [vmem:[%s211 + $0xe1] sm:$0xff]
  %v8061 = vld [vmem:[%s211 + $0xf1] sm:$0xff]
  %v8062 = vld [vmem:[%s211 + $0xf9] sm:$0xff]
  %v8063 = vld [vmem:[%s211 + $0x109] sm:$0xff]
  %v8064 = vld [vmem:[%s211 + $0x111] sm:$0xff]
  %v8065 = vld [vmem:[%s211 + $0x121] sm:$0xff]
  %v8066 = vld [vmem:[%s211 + $0x129] sm:$0xff]
  %v8067 = vld [vmem:[%s211 + $0x139] sm:$0xff]
  %v8068 = vld [vmem:[%s211 + $0x141] sm:$0xff]
  %v8069 = vld [vmem:[%s211 + $0x151] sm:$0xff]
  %v8070 = vld [vmem:[%s211 + $0x159] sm:$0xff]
  %v8071 = vld [vmem:[%s211 + $0x169] sm:$0xff]
  %v8072 = vld [vmem:[%s211 + $0x171] sm:$0xff]
  %v8073 = vld [vmem:[%s211 + $0x1b1] sm:$0xff]
  %v8074 = vld [vmem:[%s211 + $0x1b9] sm:$0xff]
  %v8075 = vld [vmem:[%s211 + $0x1c9] sm:$0xff]
  %v8076 = vld [vmem:[%s211 + $0x1d1] sm:$0xff]
  %v8077 = vld [vmem:[%s211 + $0x1e1] sm:$0xff]
  %v8078 = vld [vmem:[%s211 + $0x1e9] sm:$0xff]
  %v8079 = vld [vmem:[%s211 + $0x1f9] sm:$0xff]
  %v8080 = vld [vmem:[%s211 + $0x201] sm:$0xff]
  %v8081 = vld [vmem:[%s211 + $0x211] sm:$0xff]
  %v8082 = vld [vmem:[%s211 + $0x219] sm:$0xff]
  %v8083 = vld [vmem:[%s211 + $0x229] sm:$0xff]
  %v8084 = vld [vmem:[%s211 + $0x231] sm:$0xff]
  %v8085 = vld [vmem:[%s211 + $0x241] sm:$0xff]
  %v8086 = vld [vmem:[%s211 + $0x249] sm:$0xff]
  %v8087 = vld [vmem:[%s211 + $0x259] sm:$0xff]
  %v8088 = vld [vmem:[%s211 + $0x261] sm:$0xff]
  %v8089 = vld [vmem:[%s211 + $0x271] sm:$0xff]
  %v8090 = vld [vmem:[%s211 + $0x279] sm:$0xff]
  %v8091 = vld [vmem:[%s211 + $0x289] sm:$0xff]
  %v8092 = vld [vmem:[%s211 + $0x291] sm:$0xff]
  %v8093 = vld [vmem:[%s211 + $0x2a1] sm:$0xff]
  %v8094 = vld [vmem:[%s211 + $0x2a9] sm:$0xff]
  %v8095 = vld [vmem:[%s211 + $0x2b9] sm:$0xff]
  %v8096 = vld [vmem:[%s211 + $0x2c1] sm:$0xff]
  %v8097 = vld [vmem:[%s211 + $0x2d1] sm:$0xff]
  %v8098 = vld [vmem:[%s211 + $0x2d9] sm:$0xff]
  %v8099 = vld [vmem:[%s211 + $0x2e9] sm:$0xff]
  %v8100 = vld [vmem:[%s211 + $0x2f1] sm:$0xff]
  %v8101 = vld [vmem:[%s211 + $0x301] sm:$0xff]
  %v8102 = vld [vmem:[%s211 + $0x309] sm:$0xff]
  %v8103 = vld [vmem:[%s211 + $0x319] sm:$0xff]
  %v8104 = vld [vmem:[%s211 + $0x321] sm:$0xff]
  %v8105 = vpack.c.bf16 %v8042, %v8041
  %v8106 = vpack.c.bf16 %v8044, %v8043
  %v8107 = vpack.c.bf16 %v8046, %v8045
  %v8108 = vpack.c.bf16 %v8048, %v8047
  %v8109 = vpack.c.bf16 %v8050, %v8049
  %v8110 = vpack.c.bf16 %v8052, %v8051
  %v8111 = vpack.c.bf16 %v8054, %v8053
  %v8112 = vpack.c.bf16 %v8056, %v8055
  %v8113 = vpack.c.bf16 %v8058, %v8057
  %v8114 = vpack.c.bf16 %v8060, %v8059
  %v8115 = vpack.c.bf16 %v8062, %v8061
  %v8116 = vpack.c.bf16 %v8064, %v8063
  %v8117 = vpack.c.bf16 %v8066, %v8065
  %v8118 = vpack.c.bf16 %v8068, %v8067
  %v8119 = vpack.c.bf16 %v8070, %v8069
  %v8120 = vpack.c.bf16 %v8072, %v8071
  %v8121 = vpack.c.bf16 %v8074, %v8073
  %v8122 = vpack.c.bf16 %v8076, %v8075
  %v8123 = vpack.c.bf16 %v8078, %v8077
  %v8124 = vpack.c.bf16 %v8080, %v8079
  %v8125 = vpack.c.bf16 %v8082, %v8081
  %v8126 = vpack.c.bf16 %v8084, %v8083
  %v8127 = vpack.c.bf16 %v8086, %v8085
  %v8128 = vpack.c.bf16 %v8088, %v8087
  %v8129 = vpack.c.bf16 %v8090, %v8089
  %v8130 = vpack.c.bf16 %v8092, %v8091
  %v8131 = vpack.c.bf16 %v8094, %v8093
  %v8132 = vpack.c.bf16 %v8096, %v8095
  %v8133 = vpack.c.bf16 %v8098, %v8097
  %v8134 = vpack.c.bf16 %v8100, %v8099
  %v8135 = vpack.c.bf16 %v8102, %v8101
  %v8136 = vpack.c.bf16 %v8104, %v8103
  %s8137 = scalar_lea.vmem %s5, 8
  %v8138 = vld [vmem:[%s8137] sm:$0x3]
  %v8140 = vsel %vm101, %v8105, 0
  %v8143 = vsel %vm101, %v8106, 0
  %v8146 = vsel %vm101, %v8107, 0
  %v8149 = vsel %vm101, %v8108, 0
  %v8152 = vsel %vm101, %v8109, 0
  %v8155 = vsel %vm101, %v8110, 0
  %v8158 = vsel %vm101, %v8111, 0
  %v8161 = vsel %vm101, %v8112, 0
  %v8164 = vsel %vm101, %v8113, 0
  %v8167 = vsel %vm101, %v8114, 0
  %v8170 = vsel %vm101, %v8115, 0
  %v8173 = vsel %vm101, %v8116, 0
  %v8176 = vsel %vm101, %v8117, 0
  %v8179 = vsel %vm101, %v8118, 0
  %v8182 = vsel %vm101, %v8119, 0
  %v8185 = vsel %vm101, %v8120, 0
  %v8188 = vsel %vm101, %v8121, 0
  %v8191 = vsel %vm101, %v8122, 0
  %v8194 = vsel %vm101, %v8123, 0
  %v8197 = vsel %vm101, %v8124, 0
  %v8200 = vsel %vm101, %v8125, 0
  %v8203 = vsel %vm101, %v8126, 0
  %v8206 = vsel %vm101, %v8127, 0
  %v8209 = vsel %vm101, %v8128, 0
  %v8212 = vsel %vm101, %v8129, 0
  %v8215 = vsel %vm101, %v8130, 0
  %v8218 = vsel %vm101, %v8131, 0
  %v8221 = vsel %vm101, %v8132, 0
  %v8224 = vsel %vm101, %v8133, 0
  %v8227 = vsel %vm101, %v8134, 0
  %v8230 = vsel %vm101, %v8135, 0
  %v8233 = vsel %vm101, %v8136, 0
  %v8236 = vsel %vm567, %v8138, 0
  %8238 = vmatprep.subr.bf16.mxu0 0
  %8239 = vmatpush1.bf16.msra.mxu0 %v8236
  %8240 = vmatprep.subr.bf16.mxu0 0
  %8241 = vmatpush1.bf16.msra.mxu0 0
  %8242 = vmatprep.subr.bf16.mxu0 0
  %8243 = vmatpush1.bf16.msra.mxu0 0
  %8244 = vmatprep.subr.bf16.mxu0 0
  %8245 = vmatpush1.bf16.msra.mxu0 0
  %8246 = vmatprep.subr.bf16.mxu0 0
  %8247 = vmatpush1.bf16.msra.mxu0 0
  %8248 = vmatprep.subr.bf16.mxu0 0
  %8249 = vmatpush1.bf16.msra.mxu0 0
  %8250 = vmatprep.subr.bf16.mxu0 0
  %8251 = vmatpush1.bf16.msra.mxu0 0
  %8252 = vmatprep.subr.bf16.mxu0 0
  %8253 = vmatpush1.bf16.msra.mxu0 0
  %8254 = vmatprep.subr.bf16.mxu0 0
  %8255 = vmatpush1.bf16.msra.mxu0 0
  %8256 = vmatprep.subr.bf16.mxu0 0
  %8257 = vmatpush1.bf16.msra.mxu0 0
  %8258 = vmatprep.subr.bf16.mxu0 0
  %8259 = vmatpush1.bf16.msra.mxu0 0
  %8260 = vmatprep.subr.bf16.mxu0 0
  %8261 = vmatpush1.bf16.msra.mxu0 0
  %8262 = vmatprep.subr.bf16.mxu0 0
  %8263 = vmatpush1.bf16.msra.mxu0 0
  %8264 = vmatprep.subr.bf16.mxu0 0
  %8265 = vmatpush1.bf16.msra.mxu0 0
  %8266 = vmatprep.subr.bf16.mxu0 0
  %8267 = vmatpush1.bf16.msra.mxu0 0
  %8268 = vmatprep.subr.bf16.mxu0 0
  %8269 = vmatpush1.bf16.msra.mxu0 0
  %8270 = vmatprep.mubr.bf16.mxu0 0
  %8271 = vmatmul.mubr.bf16.gmra.mrb[0].mxu0 %v8140
  %v8272 = vpop.f32.mrb[0].mxu0
  %v8273 = vadd.f32 0.0, %v8272
  %v8274 = vpop.f32.mrb[0].mxu0
  %v8275 = vpop.f32.mrb[0].mxu0
  %v8276 = vadd.f32 0.0, %v8275
  %v8277 = vpop.f32.mrb[0].mxu0
  %8278 = vmatprep.mubr.bf16.mxu0 0
  %8279 = vmatmul.mubr.bf16.gmra.mrb[0].mxu0 %v8143
  %v8280 = vpop.f32.mrb[0].mxu0
  %v8281 = vadd.f32 0.0, %v8280
  %v8282 = vpop.f32.mrb[0].mxu0
  %v8283 = vpop.f32.mrb[0].mxu0
  %v8284 = vadd.f32 0.0, %v8283
  %v8285 = vpop.f32.mrb[0].mxu0
  %8286 = vmatprep.mubr.bf16.mxu0 0
  %8287 = vmatmul.mubr.bf16.gmra.mrb[0].mxu0 %v8146
  %v8288 = vpop.f32.mrb[0].mxu0
  %v8289 = vadd.f32 0.0, %v8288
  %v8290 = vpop.f32.mrb[0].mxu0
  %v8291 = vpop.f32.mrb[0].mxu0
  %v8292 = vadd.f32 0.0, %v8291
  %v8293 = vpop.f32.mrb[0].mxu0
  %8294 = vmatprep.mubr.bf16.mxu0 0
  %8295 = vmatmul.mubr.bf16.gmra.mrb[0].mxu0 %v8149
  %v8296 = vpop.f32.mrb[0].mxu0
  %v8297 = vadd.f32 0.0, %v8296
  %v8298 = vpop.f32.mrb[0].mxu0
  %v8299 = vpop.f32.mrb[0].mxu0
  %v8300 = vadd.f32 0.0, %v8299
  %v8301 = vpop.f32.mrb[0].mxu0
  %8302 = vmatprep.mubr.bf16.mxu0 0
  %8303 = vmatmul.mubr.bf16.gmra.mrb[0].mxu0 %v8152
  %v8304 = vpop.f32.mrb[0].mxu0
  %v8305 = vadd.f32 0.0, %v8304
  %v8306 = vpop.f32.mrb[0].mxu0
  %v8307 = vpop.f32.mrb[0].mxu0
  %v8308 = vadd.f32 0.0, %v8307
  %v8309 = vpop.f32.mrb[0].mxu0
  %8310 = vmatprep.mubr.bf16.mxu0 0
  %8311 = vmatmul.mubr.bf16.gmra.mrb[0].mxu0 %v8155
  %v8312 = vpop.f32.mrb[0].mxu0
  %v8313 = vadd.f32 0.0, %v8312
  %v8314 = vpop.f32.mrb[0].mxu0
  %v8315 = vpop.f32.mrb[0].mxu0
  %v8316 = vadd.f32 0.0, %v8315
  %v8317 = vpop.f32.mrb[0].mxu0
  %8318 = vmatprep.mubr.bf16.mxu0 0
  %8319 = vmatmul.mubr.bf16.gmra.mrb[0].mxu0 %v8158
  %v8320 = vpop.f32.mrb[0].mxu0
  %v8321 = vadd.f32 0.0, %v8320
  %v8322 = vpop.f32.mrb[0].mxu0
  %v8323 = vpop.f32.mrb[0].mxu0
  %v8324 = vadd.f32 0.0, %v8323
  %v8325 = vpop.f32.mrb[0].mxu0
  %8326 = vmatprep.mubr.bf16.mxu0 0
  %8327 = vmatmul.mubr.bf16.gmra.mrb[0].mxu0 %v8161
  %v8328 = vpop.f32.mrb[0].mxu0
  %v8329 = vadd.f32 0.0, %v8328
  %v8330 = vpop.f32.mrb[0].mxu0
  %v8331 = vpop.f32.mrb[0].mxu0
  %v8332 = vadd.f32 0.0, %v8331
  %v8333 = vpop.f32.mrb[0].mxu0
  %8334 = vmatprep.mubr.bf16.mxu0 0
  %8335 = vmatmul.mubr.bf16.gmra.mrb[0].mxu0 %v8164
  %v8336 = vpop.f32.mrb[0].mxu0
  %v8337 = vadd.f32 0.0, %v8336
  %v8338 = vpop.f32.mrb[0].mxu0
  %v8339 = vpop.f32.mrb[0].mxu0
  %v8340 = vadd.f32 0.0, %v8339
  %v8341 = vpop.f32.mrb[0].mxu0
  %8342 = vmatprep.mubr.bf16.mxu0 0
  %8343 = vmatmul.mubr.bf16.gmra.mrb[0].mxu0 %v8167
  %v8344 = vpop.f32.mrb[0].mxu0
  %v8345 = vadd.f32 0.0, %v8344
  %v8346 = vpop.f32.mrb[0].mxu0
  %v8347 = vpop.f32.mrb[0].mxu0
  %v8348 = vadd.f32 0.0, %v8347
  %v8349 = vpop.f32.mrb[0].mxu0
  %8350 = vmatprep.mubr.bf16.mxu0 0
  %8351 = vmatmul.mubr.bf16.gmra.mrb[0].mxu0 %v8170
  %v8352 = vpop.f32.mrb[0].mxu0
  %v8353 = vadd.f32 0.0, %v8352
  %v8354 = vpop.f32.mrb[0].mxu0
  %v8355 = vpop.f32.mrb[0].mxu0
  %v8356 = vadd.f32 0.0, %v8355
  %v8357 = vpop.f32.mrb[0].mxu0
  %8358 = vmatprep.mubr.bf16.mxu0 0
  %8359 = vmatmul.mubr.bf16.gmra.mrb[0].mxu0 %v8173
  %v8360 = vpop.f32.mrb[0].mxu0
  %v8361 = vadd.f32 0.0, %v8360
  %v8362 = vpop.f32.mrb[0].mxu0
  %v8363 = vpop.f32.mrb[0].mxu0
  %v8364 = vadd.f32 0.0, %v8363
  %v8365 = vpop.f32.mrb[0].mxu0
  %8366 = vmatprep.mubr.bf16.mxu0 0
  %8367 = vmatmul.mubr.bf16.gmra.mrb[0].mxu0 %v8176
  %v8368 = vpop.f32.mrb[0].mxu0
  %v8369 = vadd.f32 0.0, %v8368
  %v8370 = vpop.f32.mrb[0].mxu0
  %v8371 = vpop.f32.mrb[0].mxu0
  %v8372 = vadd.f32 0.0, %v8371
  %v8373 = vpop.f32.mrb[0].mxu0
  %8374 = vmatprep.mubr.bf16.mxu0 0
  %8375 = vmatmul.mubr.bf16.gmra.mrb[0].mxu0 %v8179
  %v8376 = vpop.f32.mrb[0].mxu0
  %v8377 = vadd.f32 0.0, %v8376
  %v8378 = vpop.f32.mrb[0].mxu0
  %v8379 = vpop.f32.mrb[0].mxu0
  %v8380 = vadd.f32 0.0, %v8379
  %v8381 = vpop.f32.mrb[0].mxu0
  %8382 = vmatprep.mubr.bf16.mxu0 0
  %8383 = vmatmul.mubr.bf16.gmra.mrb[0].mxu0 %v8182
  %v8384 = vpop.f32.mrb[0].mxu0
  %v8385 = vadd.f32 0.0, %v8384
  %v8386 = vpop.f32.mrb[0].mxu0
  %v8387 = vpop.f32.mrb[0].mxu0
  %v8388 = vadd.f32 0.0, %v8387
  %v8389 = vpop.f32.mrb[0].mxu0
  %8390 = vmatprep.mubr.bf16.mxu0 0
  %8391 = vmatmul.mubr.bf16.gmra.mrb[0].mxu0 %v8185
  %v8392 = vpop.f32.mrb[0].mxu0
  %v8393 = vadd.f32 0.0, %v8392
  %v8394 = vpop.f32.mrb[0].mxu0
  %v8395 = vpop.f32.mrb[0].mxu0
  %v8396 = vadd.f32 0.0, %v8395
  %v8397 = vpop.f32.mrb[0].mxu0
  %8398 = vmatprep.mubr.bf16.mxu0 0
  %8399 = vmatmul.mubr.bf16.gmra.mrb[0].mxu0 %v8188
  %v8400 = vpop.f32.mrb[0].mxu0
  %v8401 = vadd.f32 0.0, %v8400
  %v8402 = vpop.f32.mrb[0].mxu0
  %v8403 = vpop.f32.mrb[0].mxu0
  %v8404 = vadd.f32 0.0, %v8403
  %v8405 = vpop.f32.mrb[0].mxu0
  %8406 = vmatprep.mubr.bf16.mxu0 0
  %8407 = vmatmul.mubr.bf16.gmra.mrb[0].mxu0 %v8191
  %v8408 = vpop.f32.mrb[0].mxu0
  %v8409 = vadd.f32 0.0, %v8408
  %v8410 = vpop.f32.mrb[0].mxu0
  %v8411 = vpop.f32.mrb[0].mxu0
  %v8412 = vadd.f32 0.0, %v8411
  %v8413 = vpop.f32.mrb[0].mxu0
  %8414 = vmatprep.mubr.bf16.mxu0 0
  %8415 = vmatmul.mubr.bf16.gmra.mrb[0].mxu0 %v8194
  %v8416 = vpop.f32.mrb[0].mxu0
  %v8417 = vadd.f32 0.0, %v8416
  %v8418 = vpop.f32.mrb[0].mxu0
  %v8419 = vpop.f32.mrb[0].mxu0
  %v8420 = vadd.f32 0.0, %v8419
  %v8421 = vpop.f32.mrb[0].mxu0
  %8422 = vmatprep.mubr.bf16.mxu0 0
  %8423 = vmatmul.mubr.bf16.gmra.mrb[0].mxu0 %v8197
  %v8424 = vpop.f32.mrb[0].mxu0
  %v8425 = vadd.f32 0.0, %v8424
  %v8426 = vpop.f32.mrb[0].mxu0
  %v8427 = vpop.f32.mrb[0].mxu0
  %v8428 = vadd.f32 0.0, %v8427
  %v8429 = vpop.f32.mrb[0].mxu0
  %8430 = vmatprep.mubr.bf16.mxu0 0
  %8431 = vmatmul.mubr.bf16.gmra.mrb[0].mxu0 %v8200
  %v8432 = vpop.f32.mrb[0].mxu0
  %v8433 = vadd.f32 0.0, %v8432
  %v8434 = vpop.f32.mrb[0].mxu0
  %v8435 = vpop.f32.mrb[0].mxu0
  %v8436 = vadd.f32 0.0, %v8435
  %v8437 = vpop.f32.mrb[0].mxu0
  %8438 = vmatprep.mubr.bf16.mxu0 0
  %8439 = vmatmul.mubr.bf16.gmra.mrb[0].mxu0 %v8203
  %v8440 = vpop.f32.mrb[0].mxu0
  %v8441 = vadd.f32 0.0, %v8440
  %v8442 = vpop.f32.mrb[0].mxu0
  %v8443 = vpop.f32.mrb[0].mxu0
  %v8444 = vadd.f32 0.0, %v8443
  %v8445 = vpop.f32.mrb[0].mxu0
  %8446 = vmatprep.mubr.bf16.mxu0 0
  %8447 = vmatmul.mubr.bf16.gmra.mrb[0].mxu0 %v8206
  %v8448 = vpop.f32.mrb[0].mxu0
  %v8449 = vadd.f32 0.0, %v8448
  %v8450 = vpop.f32.mrb[0].mxu0
  %v8451 = vpop.f32.mrb[0].mxu0
  %v8452 = vadd.f32 0.0, %v8451
  %v8453 = vpop.f32.mrb[0].mxu0
  %8454 = vmatprep.mubr.bf16.mxu0 0
  %8455 = vmatmul.mubr.bf16.gmra.mrb[0].mxu0 %v8209
  %v8456 = vpop.f32.mrb[0].mxu0
  %v8457 = vadd.f32 0.0, %v8456
  %v8458 = vpop.f32.mrb[0].mxu0
  %v8459 = vpop.f32.mrb[0].mxu0
  %v8460 = vadd.f32 0.0, %v8459
  %v8461 = vpop.f32.mrb[0].mxu0
  %8462 = vmatprep.mubr.bf16.mxu0 0
  %8463 = vmatmul.mubr.bf16.gmra.mrb[0].mxu0 %v8212
  %v8464 = vpop.f32.mrb[0].mxu0
  %v8465 = vadd.f32 0.0, %v8464
  %v8466 = vpop.f32.mrb[0].mxu0
  %v8467 = vpop.f32.mrb[0].mxu0
  %v8468 = vadd.f32 0.0, %v8467
  %v8469 = vpop.f32.mrb[0].mxu0
  %8470 = vmatprep.mubr.bf16.mxu0 0
  %8471 = vmatmul.mubr.bf16.gmra.mrb[0].mxu0 %v8215
  %v8472 = vpop.f32.mrb[0].mxu0
  %v8473 = vadd.f32 0.0, %v8472
  %v8474 = vpop.f32.mrb[0].mxu0
  %v8475 = vpop.f32.mrb[0].mxu0
  %v8476 = vadd.f32 0.0, %v8475
  %v8477 = vpop.f32.mrb[0].mxu0
  %8478 = vmatprep.mubr.bf16.mxu0 0
  %8479 = vmatmul.mubr.bf16.gmra.mrb[0].mxu0 %v8218
  %v8480 = vpop.f32.mrb[0].mxu0
  %v8481 = vadd.f32 0.0, %v8480
  %v8482 = vpop.f32.mrb[0].mxu0
  %v8483 = vpop.f32.mrb[0].mxu0
  %v8484 = vadd.f32 0.0, %v8483
  %v8485 = vpop.f32.mrb[0].mxu0
  %8486 = vmatprep.mubr.bf16.mxu0 0
  %8487 = vmatmul.mubr.bf16.gmra.mrb[0].mxu0 %v8221
  %v8488 = vpop.f32.mrb[0].mxu0
  %v8489 = vadd.f32 0.0, %v8488
  %v8490 = vpop.f32.mrb[0].mxu0
  %v8491 = vpop.f32.mrb[0].mxu0
  %v8492 = vadd.f32 0.0, %v8491
  %v8493 = vpop.f32.mrb[0].mxu0
  %8494 = vmatprep.mubr.bf16.mxu0 0
  %8495 = vmatmul.mubr.bf16.gmra.mrb[0].mxu0 %v8224
  %v8496 = vpop.f32.mrb[0].mxu0
  %v8497 = vadd.f32 0.0, %v8496
  %v8498 = vpop.f32.mrb[0].mxu0
  %v8499 = vpop.f32.mrb[0].mxu0
  %v8500 = vadd.f32 0.0, %v8499
  %v8501 = vpop.f32.mrb[0].mxu0
  %8502 = vmatprep.mubr.bf16.mxu0 0
  %8503 = vmatmul.mubr.bf16.gmra.mrb[0].mxu0 %v8227
  %v8504 = vpop.f32.mrb[0].mxu0
  %v8505 = vadd.f32 0.0, %v8504
  %v8506 = vpop.f32.mrb[0].mxu0
  %v8507 = vpop.f32.mrb[0].mxu0
  %v8508 = vadd.f32 0.0, %v8507
  %v8509 = vpop.f32.mrb[0].mxu0
  %8510 = vmatprep.mubr.bf16.mxu0 0
  %8511 = vmatmul.mubr.bf16.gmra.mrb[0].mxu0 %v8230
  %v8512 = vpop.f32.mrb[0].mxu0
  %v8513 = vadd.f32 0.0, %v8512
  %v8514 = vpop.f32.mrb[0].mxu0
  %v8515 = vpop.f32.mrb[0].mxu0
  %v8516 = vadd.f32 0.0, %v8515
  %v8517 = vpop.f32.mrb[0].mxu0
  %8518 = vmatprep.mubr.bf16.mxu0 0
  %8519 = vmatmul.mubr.bf16.gmra.mrb[0].mxu0 %v8233
  %v8520 = vpop.f32.mrb[0].mxu0
  %v8521 = vadd.f32 0.0, %v8520
  %v8522 = vpop.f32.mrb[0].mxu0
  %v8523 = vpop.f32.mrb[0].mxu0
  %v8524 = vadd.f32 0.0, %v8523
  %v8525 = vpop.f32.mrb[0].mxu0
  %8526 = vdwg.mxu0
  %v8527 = vadd.f32 %v7977, %v8273
  %v8528 = vadd.f32 %v7978, %v8276
  %v8529 = vadd.f32 %v7979, %v8281
  %v8530 = vadd.f32 %v7980, %v8284
  %v8531 = vadd.f32 %v7981, %v8289
  %v8532 = vadd.f32 %v7982, %v8292
  %v8533 = vadd.f32 %v7983, %v8297
  %v8534 = vadd.f32 %v7984, %v8300
  %v8535 = vadd.f32 %v7985, %v8305
  %v8536 = vadd.f32 %v7986, %v8308
  %v8537 = vadd.f32 %v7987, %v8313
  %v8538 = vadd.f32 %v7988, %v8316
  %v8539 = vadd.f32 %v7989, %v8321
  %v8540 = vadd.f32 %v7990, %v8324
  %v8541 = vadd.f32 %v7991, %v8329
  %v8542 = vadd.f32 %v7992, %v8332
  %v8543 = vadd.f32 %v7993, %v8337
  %v8544 = vadd.f32 %v7994, %v8340
  %v8545 = vadd.f32 %v7995, %v8345
  %v8546 = vadd.f32 %v7996, %v8348
  %v8547 = vadd.f32 %v7997, %v8353
  %v8548 = vadd.f32 %v7998, %v8356
  %v8549 = vadd.f32 %v7999, %v8361
  %v8550 = vadd.f32 %v8000, %v8364
  %v8551 = vadd.f32 %v8001, %v8369
  %v8552 = vadd.f32 %v8002, %v8372
  %v8553 = vadd.f32 %v8003, %v8377
  %v8554 = vadd.f32 %v8004, %v8380
  %v8555 = vadd.f32 %v8005, %v8385
  %v8556 = vadd.f32 %v8006, %v8388
  %v8557 = vadd.f32 %v8007, %v8393
  %v8558 = vadd.f32 %v8008, %v8396
  %v8559 = vadd.f32 %v8009, %v8401
  %v8560 = vadd.f32 %v8010, %v8404
  %v8561 = vadd.f32 %v8011, %v8409
  %v8562 = vadd.f32 %v8012, %v8412
  %v8563 = vadd.f32 %v8013, %v8417
  %v8564 = vadd.f32 %v8014, %v8420
  %v8565 = vadd.f32 %v8015, %v8425
  %v8566 = vadd.f32 %v8016, %v8428
  %v8567 = vadd.f32 %v8017, %v8433
  %v8568 = vadd.f32 %v8018, %v8436
  %v8569 = vadd.f32 %v8019, %v8441
  %v8570 = vadd.f32 %v8020, %v8444
  %v8571 = vadd.f32 %v8021, %v8449
  %v8572 = vadd.f32 %v8022, %v8452
  %v8573 = vadd.f32 %v8023, %v8457
  %v8574 = vadd.f32 %v8024, %v8460
  %v8575 = vadd.f32 %v8025, %v8465
  %v8576 = vadd.f32 %v8026, %v8468
  %v8577 = vadd.f32 %v8027, %v8473
  %v8578 = vadd.f32 %v8028, %v8476
  %v8579 = vadd.f32 %v8029, %v8481
  %v8580 = vadd.f32 %v8030, %v8484
  %v8581 = vadd.f32 %v8031, %v8489
  %v8582 = vadd.f32 %v8032, %v8492
  %v8583 = vadd.f32 %v8033, %v8497
  %v8584 = vadd.f32 %v8034, %v8500
  %v8585 = vadd.f32 %v8035, %v8505
  %v8586 = vadd.f32 %v8036, %v8508
  %v8587 = vadd.f32 %v8037, %v8513
  %v8588 = vadd.f32 %v8038, %v8516
  %v8589 = vadd.f32 %v8039, %v8521
  %v8590 = vadd.f32 %v8040, %v8524
  %v8591 = vld [vmem:[%s211 + $0x2] sm:$0xff]
  %v8592 = vld [vmem:[%s211 + $0xa] sm:$0xff]
  %v8593 = vld [vmem:[%s211 + $0x1a] sm:$0xff]
  %v8594 = vld [vmem:[%s211 + $0x22] sm:$0xff]
  %v8595 = vld [vmem:[%s211 + $0x32] sm:$0xff]
  %v8596 = vld [vmem:[%s211 + $0x3a] sm:$0xff]
  %v8597 = vld [vmem:[%s211 + $0x4a] sm:$0xff]
  %v8598 = vld [vmem:[%s211 + $0x52] sm:$0xff]
  %v8599 = vld [vmem:[%s211 + $0x62] sm:$0xff]
  %v8600 = vld [vmem:[%s211 + $0x6a] sm:$0xff]
  %v8601 = vld [vmem:[%s211 + $0x7a] sm:$0xff]
  %v8602 = vld [vmem:[%s211 + $0x82] sm:$0xff]
  %v8603 = vld [vmem:[%s211 + $0x92] sm:$0xff]
  %v8604 = vld [vmem:[%s211 + $0x9a] sm:$0xff]
  %v8605 = vld [vmem:[%s211 + $0xaa] sm:$0xff]
  %v8606 = vld [vmem:[%s211 + $0xb2] sm:$0xff]
  %v8607 = vld [vmem:[%s211 + $0xc2] sm:$0xff]
  %v8608 = vld [vmem:[%s211 + $0xca] sm:$0xff]
  %v8609 = vld [vmem:[%s211 + $0xda] sm:$0xff]
  %v8610 = vld [vmem:[%s211 + $0xe2] sm:$0xff]
  %v8611 = vld [vmem:[%s211 + $0xf2] sm:$0xff]
  %v8612 = vld [vmem:[%s211 + $0xfa] sm:$0xff]
  %v8613 = vld [vmem:[%s211 + $0x10a] sm:$0xff]
  %v8614 = vld [vmem:[%s211 + $0x112] sm:$0xff]
  %v8615 = vld [vmem:[%s211 + $0x122] sm:$0xff]
  %v8616 = vld [vmem:[%s211 + $0x12a] sm:$0xff]
  %v8617 = vld [vmem:[%s211 + $0x13a] sm:$0xff]
  %v8618 = vld [vmem:[%s211 + $0x142] sm:$0xff]
  %v8619 = vld [vmem:[%s211 + $0x152] sm:$0xff]
  %v8620 = vld [vmem:[%s211 + $0x15a] sm:$0xff]
  %v8621 = vld [vmem:[%s211 + $0x16a] sm:$0xff]
  %v8622 = vld [vmem:[%s211 + $0x172] sm:$0xff]
  %v8623 = vld [vmem:[%s211 + $0x1b2] sm:$0xff]
  %v8624 = vld [vmem:[%s211 + $0x1ba] sm:$0xff]
  %v8625 = vld [vmem:[%s211 + $0x1ca] sm:$0xff]
  %v8626 = vld [vmem:[%s211 + $0x1d2] sm:$0xff]
  %v8627 = vld [vmem:[%s211 + $0x1e2] sm:$0xff]
  %v8628 = vld [vmem:[%s211 + $0x1ea] sm:$0xff]
  %v8629 = vld [vmem:[%s211 + $0x1fa] sm:$0xff]
  %v8630 = vld [vmem:[%s211 + $0x202] sm:$0xff]
  %v8631 = vld [vmem:[%s211 + $0x212] sm:$0xff]
  %v8632 = vld [vmem:[%s211 + $0x21a] sm:$0xff]
  %v8633 = vld [vmem:[%s211 + $0x22a] sm:$0xff]
  %v8634 = vld [vmem:[%s211 + $0x232] sm:$0xff]
  %v8635 = vld [vmem:[%s211 + $0x242] sm:$0xff]
  %v8636 = vld [vmem:[%s211 + $0x24a] sm:$0xff]
  %v8637 = vld [vmem:[%s211 + $0x25a] sm:$0xff]
  %v8638 = vld [vmem:[%s211 + $0x262] sm:$0xff]
  %v8639 = vld [vmem:[%s211 + $0x272] sm:$0xff]
  %v8640 = vld [vmem:[%s211 + $0x27a] sm:$0xff]
  %v8641 = vld [vmem:[%s211 + $0x28a] sm:$0xff]
  %v8642 = vld [vmem:[%s211 + $0x292] sm:$0xff]
  %v8643 = vld [vmem:[%s211 + $0x2a2] sm:$0xff]
  %v8644 = vld [vmem:[%s211 + $0x2aa] sm:$0xff]
  %v8645 = vld [vmem:[%s211 + $0x2ba] sm:$0xff]
  %v8646 = vld [vmem:[%s211 + $0x2c2] sm:$0xff]
  %v8647 = vld [vmem:[%s211 + $0x2d2] sm:$0xff]
  %v8648 = vld [vmem:[%s211 + $0x2da] sm:$0xff]
  %v8649 = vld [vmem:[%s211 + $0x2ea] sm:$0xff]
  %v8650 = vld [vmem:[%s211 + $0x2f2] sm:$0xff]
  %v8651 = vld [vmem:[%s211 + $0x302] sm:$0xff]
  %v8652 = vld [vmem:[%s211 + $0x30a] sm:$0xff]
  %v8653 = vld [vmem:[%s211 + $0x31a] sm:$0xff]
  %v8654 = vld [vmem:[%s211 + $0x322] sm:$0xff]
  %v8655 = vpack.c.bf16 %v8592, %v8591
  %v8656 = vpack.c.bf16 %v8594, %v8593
  %v8657 = vpack.c.bf16 %v8596, %v8595
  %v8658 = vpack.c.bf16 %v8598, %v8597
  %v8659 = vpack.c.bf16 %v8600, %v8599
  %v8660 = vpack.c.bf16 %v8602, %v8601
  %v8661 = vpack.c.bf16 %v8604, %v8603
  %v8662 = vpack.c.bf16 %v8606, %v8605
  %v8663 = vpack.c.bf16 %v8608, %v8607
  %v8664 = vpack.c.bf16 %v8610, %v8609
  %v8665 = vpack.c.bf16 %v8612, %v8611
  %v8666 = vpack.c.bf16 %v8614, %v8613
  %v8667 = vpack.c.bf16 %v8616, %v8615
  %v8668 = vpack.c.bf16 %v8618, %v8617
  %v8669 = vpack.c.bf16 %v8620, %v8619
  %v8670 = vpack.c.bf16 %v8622, %v8621
  %v8671 = vpack.c.bf16 %v8624, %v8623
  %v8672 = vpack.c.bf16 %v8626, %v8625
  %v8673 = vpack.c.bf16 %v8628, %v8627
  %v8674 = vpack.c.bf16 %v8630, %v8629
  %v8675 = vpack.c.bf16 %v8632, %v8631
  %v8676 = vpack.c.bf16 %v8634, %v8633
  %v8677 = vpack.c.bf16 %v8636, %v8635
  %v8678 = vpack.c.bf16 %v8638, %v8637
  %v8679 = vpack.c.bf16 %v8640, %v8639
  %v8680 = vpack.c.bf16 %v8642, %v8641
  %v8681 = vpack.c.bf16 %v8644, %v8643
  %v8682 = vpack.c.bf16 %v8646, %v8645
  %v8683 = vpack.c.bf16 %v8648, %v8647
  %v8684 = vpack.c.bf16 %v8650, %v8649
  %v8685 = vpack.c.bf16 %v8652, %v8651
  %v8686 = vpack.c.bf16 %v8654, %v8653
  %s8687 = scalar_lea.vmem %s5, 10
  %v8688 = vld [vmem:[%s8687] sm:$0x3]
  %v8690 = vsel %vm101, %v8655, 0
  %v8693 = vsel %vm101, %v8656, 0
  %v8696 = vsel %vm101, %v8657, 0
  %v8699 = vsel %vm101, %v8658, 0
  %v8702 = vsel %vm101, %v8659, 0
  %v8705 = vsel %vm101, %v8660, 0
  %v8708 = vsel %vm101, %v8661, 0
  %v8711 = vsel %vm101, %v8662, 0
  %v8714 = vsel %vm101, %v8663, 0
  %v8717 = vsel %vm101, %v8664, 0
  %v8720 = vsel %vm101, %v8665, 0
  %v8723 = vsel %vm101, %v8666, 0
  %v8726 = vsel %vm101, %v8667, 0
  %v8729 = vsel %vm101, %v8668, 0
  %v8732 = vsel %vm101, %v8669, 0
  %v8735 = vsel %vm101, %v8670, 0
  %v8738 = vsel %vm101, %v8671, 0
  %v8741 = vsel %vm101, %v8672, 0
  %v8744 = vsel %vm101, %v8673, 0
  %v8747 = vsel %vm101, %v8674, 0
  %v8750 = vsel %vm101, %v8675, 0
  %v8753 = vsel %vm101, %v8676, 0
  %v8756 = vsel %vm101, %v8677, 0
  %v8759 = vsel %vm101, %v8678, 0
  %v8762 = vsel %vm101, %v8679, 0
  %v8765 = vsel %vm101, %v8680, 0
  %v8768 = vsel %vm101, %v8681, 0
  %v8771 = vsel %vm101, %v8682, 0
  %v8774 = vsel %vm101, %v8683, 0
  %v8777 = vsel %vm101, %v8684, 0
  %v8780 = vsel %vm101, %v8685, 0
  %v8783 = vsel %vm101, %v8686, 0
  %v8786 = vsel %vm567, %v8688, 0
  %8788 = vmatprep.subr.bf16.mxu0 0
  %8789 = vmatpush1.bf16.msra.mxu0 %v8786
  %8790 = vmatprep.subr.bf16.mxu0 0
  %8791 = vmatpush1.bf16.msra.mxu0 0
  %8792 = vmatprep.subr.bf16.mxu0 0
  %8793 = vmatpush1.bf16.msra.mxu0 0
  %8794 = vmatprep.subr.bf16.mxu0 0
  %8795 = vmatpush1.bf16.msra.mxu0 0
  %8796 = vmatprep.subr.bf16.mxu0 0
  %8797 = vmatpush1.bf16.msra.mxu0 0
  %8798 = vmatprep.subr.bf16.mxu0 0
  %8799 = vmatpush1.bf16.msra.mxu0 0
  %8800 = vmatprep.subr.bf16.mxu0 0
  %8801 = vmatpush1.bf16.msra.mxu0 0
  %8802 = vmatprep.subr.bf16.mxu0 0
  %8803 = vmatpush1.bf16.msra.mxu0 0
  %8804 = vmatprep.subr.bf16.mxu0 0
  %8805 = vmatpush1.bf16.msra.mxu0 0
  %8806 = vmatprep.subr.bf16.mxu0 0
  %8807 = vmatpush1.bf16.msra.mxu0 0
  %8808 = vmatprep.subr.bf16.mxu0 0
  %8809 = vmatpush1.bf16.msra.mxu0 0
  %8810 = vmatprep.subr.bf16.mxu0 0
  %8811 = vmatpush1.bf16.msra.mxu0 0
  %8812 = vmatprep.subr.bf16.mxu0 0
  %8813 = vmatpush1.bf16.msra.mxu0 0
  %8814 = vmatprep.subr.bf16.mxu0 0
  %8815 = vmatpush1.bf16.msra.mxu0 0
  %8816 = vmatprep.subr.bf16.mxu0 0
  %8817 = vmatpush1.bf16.msra.mxu0 0
  %8818 = vmatprep.subr.bf16.mxu0 0
  %8819 = vmatpush1.bf16.msra.mxu0 0
  %8820 = vmatprep.mubr.bf16.mxu0 0
  %8821 = vmatmul.mubr.bf16.gmra.mrb[0].mxu0 %v8690
  %v8822 = vpop.f32.mrb[0].mxu0
  %v8823 = vadd.f32 0.0, %v8822
  %v8824 = vpop.f32.mrb[0].mxu0
  %v8825 = vpop.f32.mrb[0].mxu0
  %v8826 = vadd.f32 0.0, %v8825
  %v8827 = vpop.f32.mrb[0].mxu0
  %8828 = vmatprep.mubr.bf16.mxu0 0
  %8829 = vmatmul.mubr.bf16.gmra.mrb[0].mxu0 %v8693
  %v8830 = vpop.f32.mrb[0].mxu0
  %v8831 = vadd.f32 0.0, %v8830
  %v8832 = vpop.f32.mrb[0].mxu0
  %v8833 = vpop.f32.mrb[0].mxu0
  %v8834 = vadd.f32 0.0, %v8833
  %v8835 = vpop.f32.mrb[0].mxu0
  %8836 = vmatprep.mubr.bf16.mxu0 0
  %8837 = vmatmul.mubr.bf16.gmra.mrb[0].mxu0 %v8696
  %v8838 = vpop.f32.mrb[0].mxu0
  %v8839 = vadd.f32 0.0, %v8838
  %v8840 = vpop.f32.mrb[0].mxu0
  %v8841 = vpop.f32.mrb[0].mxu0
  %v8842 = vadd.f32 0.0, %v8841
  %v8843 = vpop.f32.mrb[0].mxu0
  %8844 = vmatprep.mubr.bf16.mxu0 0
  %8845 = vmatmul.mubr.bf16.gmra.mrb[0].mxu0 %v8699
  %v8846 = vpop.f32.mrb[0].mxu0
  %v8847 = vadd.f32 0.0, %v8846
  %v8848 = vpop.f32.mrb[0].mxu0
  %v8849 = vpop.f32.mrb[0].mxu0
  %v8850 = vadd.f32 0.0, %v8849
  %v8851 = vpop.f32.mrb[0].mxu0
  %8852 = vmatprep.mubr.bf16.mxu0 0
  %8853 = vmatmul.mubr.bf16.gmra.mrb[0].mxu0 %v8702
  %v8854 = vpop.f32.mrb[0].mxu0
  %v8855 = vadd.f32 0.0, %v8854
  %v8856 = vpop.f32.mrb[0].mxu0
  %v8857 = vpop.f32.mrb[0].mxu0
  %v8858 = vadd.f32 0.0, %v8857
  %v8859 = vpop.f32.mrb[0].mxu0
  %8860 = vmatprep.mubr.bf16.mxu0 0
  %8861 = vmatmul.mubr.bf16.gmra.mrb[0].mxu0 %v8705
  %v8862 = vpop.f32.mrb[0].mxu0
  %v8863 = vadd.f32 0.0, %v8862
  %v8864 = vpop.f32.mrb[0].mxu0
  %v8865 = vpop.f32.mrb[0].mxu0
  %v8866 = vadd.f32 0.0, %v8865
  %v8867 = vpop.f32.mrb[0].mxu0
  %8868 = vmatprep.mubr.bf16.mxu0 0
  %8869 = vmatmul.mubr.bf16.gmra.mrb[0].mxu0 %v8708
  %v8870 = vpop.f32.mrb[0].mxu0
  %v8871 = vadd.f32 0.0, %v8870
  %v8872 = vpop.f32.mrb[0].mxu0
  %v8873 = vpop.f32.mrb[0].mxu0
  %v8874 = vadd.f32 0.0, %v8873
  %v8875 = vpop.f32.mrb[0].mxu0
  %8876 = vmatprep.mubr.bf16.mxu0 0
  %8877 = vmatmul.mubr.bf16.gmra.mrb[0].mxu0 %v8711
  %v8878 = vpop.f32.mrb[0].mxu0
  %v8879 = vadd.f32 0.0, %v8878
  %v8880 = vpop.f32.mrb[0].mxu0
  %v8881 = vpop.f32.mrb[0].mxu0
  %v8882 = vadd.f32 0.0, %v8881
  %v8883 = vpop.f32.mrb[0].mxu0
  %8884 = vmatprep.mubr.bf16.mxu0 0
  %8885 = vmatmul.mubr.bf16.gmra.mrb[0].mxu0 %v8714
  %v8886 = vpop.f32.mrb[0].mxu0
  %v8887 = vadd.f32 0.0, %v8886
  %v8888 = vpop.f32.mrb[0].mxu0
  %v8889 = vpop.f32.mrb[0].mxu0
  %v8890 = vadd.f32 0.0, %v8889
  %v8891 = vpop.f32.mrb[0].mxu0
  %8892 = vmatprep.mubr.bf16.mxu0 0
  %8893 = vmatmul.mubr.bf16.gmra.mrb[0].mxu0 %v8717
  %v8894 = vpop.f32.mrb[0].mxu0
  %v8895 = vadd.f32 0.0, %v8894
  %v8896 = vpop.f32.mrb[0].mxu0
  %v8897 = vpop.f32.mrb[0].mxu0
  %v8898 = vadd.f32 0.0, %v8897
  %v8899 = vpop.f32.mrb[0].mxu0
  %8900 = vmatprep.mubr.bf16.mxu0 0
  %8901 = vmatmul.mubr.bf16.gmra.mrb[0].mxu0 %v8720
  %v8902 = vpop.f32.mrb[0].mxu0
  %v8903 = vadd.f32 0.0, %v8902
  %v8904 = vpop.f32.mrb[0].mxu0
  %v8905 = vpop.f32.mrb[0].mxu0
  %v8906 = vadd.f32 0.0, %v8905
  %v8907 = vpop.f32.mrb[0].mxu0
  %8908 = vmatprep.mubr.bf16.mxu0 0
  %8909 = vmatmul.mubr.bf16.gmra.mrb[0].mxu0 %v8723
  %v8910 = vpop.f32.mrb[0].mxu0
  %v8911 = vadd.f32 0.0, %v8910
  %v8912 = vpop.f32.mrb[0].mxu0
  %v8913 = vpop.f32.mrb[0].mxu0
  %v8914 = vadd.f32 0.0, %v8913
  %v8915 = vpop.f32.mrb[0].mxu0
  %8916 = vmatprep.mubr.bf16.mxu0 0
  %8917 = vmatmul.mubr.bf16.gmra.mrb[0].mxu0 %v8726
  %v8918 = vpop.f32.mrb[0].mxu0
  %v8919 = vadd.f32 0.0, %v8918
  %v8920 = vpop.f32.mrb[0].mxu0
  %v8921 = vpop.f32.mrb[0].mxu0
  %v8922 = vadd.f32 0.0, %v8921
  %v8923 = vpop.f32.mrb[0].mxu0
  %8924 = vmatprep.mubr.bf16.mxu0 0
  %8925 = vmatmul.mubr.bf16.gmra.mrb[0].mxu0 %v8729
  %v8926 = vpop.f32.mrb[0].mxu0
  %v8927 = vadd.f32 0.0, %v8926
  %v8928 = vpop.f32.mrb[0].mxu0
  %v8929 = vpop.f32.mrb[0].mxu0
  %v8930 = vadd.f32 0.0, %v8929
  %v8931 = vpop.f32.mrb[0].mxu0
  %8932 = vmatprep.mubr.bf16.mxu0 0
  %8933 = vmatmul.mubr.bf16.gmra.mrb[0].mxu0 %v8732
  %v8934 = vpop.f32.mrb[0].mxu0
  %v8935 = vadd.f32 0.0, %v8934
  %v8936 = vpop.f32.mrb[0].mxu0
  %v8937 = vpop.f32.mrb[0].mxu0
  %v8938 = vadd.f32 0.0, %v8937
  %v8939 = vpop.f32.mrb[0].mxu0
  %8940 = vmatprep.mubr.bf16.mxu0 0
  %8941 = vmatmul.mubr.bf16.gmra.mrb[0].mxu0 %v8735
  %v8942 = vpop.f32.mrb[0].mxu0
  %v8943 = vadd.f32 0.0, %v8942
  %v8944 = vpop.f32.mrb[0].mxu0
  %v8945 = vpop.f32.mrb[0].mxu0
  %v8946 = vadd.f32 0.0, %v8945
  %v8947 = vpop.f32.mrb[0].mxu0
  %8948 = vmatprep.mubr.bf16.mxu0 0
  %8949 = vmatmul.mubr.bf16.gmra.mrb[0].mxu0 %v8738
  %v8950 = vpop.f32.mrb[0].mxu0
  %v8951 = vadd.f32 0.0, %v8950
  %v8952 = vpop.f32.mrb[0].mxu0
  %v8953 = vpop.f32.mrb[0].mxu0
  %v8954 = vadd.f32 0.0, %v8953
  %v8955 = vpop.f32.mrb[0].mxu0
  %8956 = vmatprep.mubr.bf16.mxu0 0
  %8957 = vmatmul.mubr.bf16.gmra.mrb[0].mxu0 %v8741
  %v8958 = vpop.f32.mrb[0].mxu0
  %v8959 = vadd.f32 0.0, %v8958
  %v8960 = vpop.f32.mrb[0].mxu0
  %v8961 = vpop.f32.mrb[0].mxu0
  %v8962 = vadd.f32 0.0, %v8961
  %v8963 = vpop.f32.mrb[0].mxu0
  %8964 = vmatprep.mubr.bf16.mxu0 0
  %8965 = vmatmul.mubr.bf16.gmra.mrb[0].mxu0 %v8744
  %v8966 = vpop.f32.mrb[0].mxu0
  %v8967 = vadd.f32 0.0, %v8966
  %v8968 = vpop.f32.mrb[0].mxu0
  %v8969 = vpop.f32.mrb[0].mxu0
  %v8970 = vadd.f32 0.0, %v8969
  %v8971 = vpop.f32.mrb[0].mxu0
  %8972 = vmatprep.mubr.bf16.mxu0 0
  %8973 = vmatmul.mubr.bf16.gmra.mrb[0].mxu0 %v8747
  %v8974 = vpop.f32.mrb[0].mxu0
  %v8975 = vadd.f32 0.0, %v8974
  %v8976 = vpop.f32.mrb[0].mxu0
  %v8977 = vpop.f32.mrb[0].mxu0
  %v8978 = vadd.f32 0.0, %v8977
  %v8979 = vpop.f32.mrb[0].mxu0
  %8980 = vmatprep.mubr.bf16.mxu0 0
  %8981 = vmatmul.mubr.bf16.gmra.mrb[0].mxu0 %v8750
  %v8982 = vpop.f32.mrb[0].mxu0
  %v8983 = vadd.f32 0.0, %v8982
  %v8984 = vpop.f32.mrb[0].mxu0
  %v8985 = vpop.f32.mrb[0].mxu0
  %v8986 = vadd.f32 0.0, %v8985
  %v8987 = vpop.f32.mrb[0].mxu0
  %8988 = vmatprep.mubr.bf16.mxu0 0
  %8989 = vmatmul.mubr.bf16.gmra.mrb[0].mxu0 %v8753
  %v8990 = vpop.f32.mrb[0].mxu0
  %v8991 = vadd.f32 0.0, %v8990
  %v8992 = vpop.f32.mrb[0].mxu0
  %v8993 = vpop.f32.mrb[0].mxu0
  %v8994 = vadd.f32 0.0, %v8993
  %v8995 = vpop.f32.mrb[0].mxu0
  %8996 = vmatprep.mubr.bf16.mxu0 0
  %8997 = vmatmul.mubr.bf16.gmra.mrb[0].mxu0 %v8756
  %v8998 = vpop.f32.mrb[0].mxu0
  %v8999 = vadd.f32 0.0, %v8998
  %v9000 = vpop.f32.mrb[0].mxu0
  %v9001 = vpop.f32.mrb[0].mxu0
  %v9002 = vadd.f32 0.0, %v9001
  %v9003 = vpop.f32.mrb[0].mxu0
  %9004 = vmatprep.mubr.bf16.mxu0 0
  %9005 = vmatmul.mubr.bf16.gmra.mrb[0].mxu0 %v8759
  %v9006 = vpop.f32.mrb[0].mxu0
  %v9007 = vadd.f32 0.0, %v9006
  %v9008 = vpop.f32.mrb[0].mxu0
  %v9009 = vpop.f32.mrb[0].mxu0
  %v9010 = vadd.f32 0.0, %v9009
  %v9011 = vpop.f32.mrb[0].mxu0
  %9012 = vmatprep.mubr.bf16.mxu0 0
  %9013 = vmatmul.mubr.bf16.gmra.mrb[0].mxu0 %v8762
  %v9014 = vpop.f32.mrb[0].mxu0
  %v9015 = vadd.f32 0.0, %v9014
  %v9016 = vpop.f32.mrb[0].mxu0
  %v9017 = vpop.f32.mrb[0].mxu0
  %v9018 = vadd.f32 0.0, %v9017
  %v9019 = vpop.f32.mrb[0].mxu0
  %9020 = vmatprep.mubr.bf16.mxu0 0
  %9021 = vmatmul.mubr.bf16.gmra.mrb[0].mxu0 %v8765
  %v9022 = vpop.f32.mrb[0].mxu0
  %v9023 = vadd.f32 0.0, %v9022
  %v9024 = vpop.f32.mrb[0].mxu0
  %v9025 = vpop.f32.mrb[0].mxu0
  %v9026 = vadd.f32 0.0, %v9025
  %v9027 = vpop.f32.mrb[0].mxu0
  %9028 = vmatprep.mubr.bf16.mxu0 0
  %9029 = vmatmul.mubr.bf16.gmra.mrb[0].mxu0 %v8768
  %v9030 = vpop.f32.mrb[0].mxu0
  %v9031 = vadd.f32 0.0, %v9030
  %v9032 = vpop.f32.mrb[0].mxu0
  %v9033 = vpop.f32.mrb[0].mxu0
  %v9034 = vadd.f32 0.0, %v9033
  %v9035 = vpop.f32.mrb[0].mxu0
  %9036 = vmatprep.mubr.bf16.mxu0 0
  %9037 = vmatmul.mubr.bf16.gmra.mrb[0].mxu0 %v8771
  %v9038 = vpop.f32.mrb[0].mxu0
  %v9039 = vadd.f32 0.0, %v9038
  %v9040 = vpop.f32.mrb[0].mxu0
  %v9041 = vpop.f32.mrb[0].mxu0
  %v9042 = vadd.f32 0.0, %v9041
  %v9043 = vpop.f32.mrb[0].mxu0
  %9044 = vmatprep.mubr.bf16.mxu0 0
  %9045 = vmatmul.mubr.bf16.gmra.mrb[0].mxu0 %v8774
  %v9046 = vpop.f32.mrb[0].mxu0
  %v9047 = vadd.f32 0.0, %v9046
  %v9048 = vpop.f32.mrb[0].mxu0
  %v9049 = vpop.f32.mrb[0].mxu0
  %v9050 = vadd.f32 0.0, %v9049
  %v9051 = vpop.f32.mrb[0].mxu0
  %9052 = vmatprep.mubr.bf16.mxu0 0
  %9053 = vmatmul.mubr.bf16.gmra.mrb[0].mxu0 %v8777
  %v9054 = vpop.f32.mrb[0].mxu0
  %v9055 = vadd.f32 0.0, %v9054
  %v9056 = vpop.f32.mrb[0].mxu0
  %v9057 = vpop.f32.mrb[0].mxu0
  %v9058 = vadd.f32 0.0, %v9057
  %v9059 = vpop.f32.mrb[0].mxu0
  %9060 = vmatprep.mubr.bf16.mxu0 0
  %9061 = vmatmul.mubr.bf16.gmra.mrb[0].mxu0 %v8780
  %v9062 = vpop.f32.mrb[0].mxu0
  %v9063 = vadd.f32 0.0, %v9062
  %v9064 = vpop.f32.mrb[0].mxu0
  %v9065 = vpop.f32.mrb[0].mxu0
  %v9066 = vadd.f32 0.0, %v9065
  %v9067 = vpop.f32.mrb[0].mxu0
  %9068 = vmatprep.mubr.bf16.mxu0 0
  %9069 = vmatmul.mubr.bf16.gmra.mrb[0].mxu0 %v8783
  %v9070 = vpop.f32.mrb[0].mxu0
  %v9071 = vadd.f32 0.0, %v9070
  %v9072 = vpop.f32.mrb[0].mxu0
  %v9073 = vpop.f32.mrb[0].mxu0
  %v9074 = vadd.f32 0.0, %v9073
  %v9075 = vpop.f32.mrb[0].mxu0
  %9076 = vdwg.mxu0
  %v9077 = vadd.f32 %v8527, %v8823
  %v9078 = vadd.f32 %v8528, %v8826
  %v9079 = vadd.f32 %v8529, %v8831
  %v9080 = vadd.f32 %v8530, %v8834
  %v9081 = vadd.f32 %v8531, %v8839
  %v9082 = vadd.f32 %v8532, %v8842
  %v9083 = vadd.f32 %v8533, %v8847
  %v9084 = vadd.f32 %v8534, %v8850
  %v9085 = vadd.f32 %v8535, %v8855
  %v9086 = vadd.f32 %v8536, %v8858
  %v9087 = vadd.f32 %v8537, %v8863
  %v9088 = vadd.f32 %v8538, %v8866
  %v9089 = vadd.f32 %v8539, %v8871
  %v9090 = vadd.f32 %v8540, %v8874
  %v9091 = vadd.f32 %v8541, %v8879
  %v9092 = vadd.f32 %v8542, %v8882
  %v9093 = vadd.f32 %v8543, %v8887
  %v9094 = vadd.f32 %v8544, %v8890
  %v9095 = vadd.f32 %v8545, %v8895
  %v9096 = vadd.f32 %v8546, %v8898
  %v9097 = vadd.f32 %v8547, %v8903
  %v9098 = vadd.f32 %v8548, %v8906
  %v9099 = vadd.f32 %v8549, %v8911
  %v9100 = vadd.f32 %v8550, %v8914
  %v9101 = vadd.f32 %v8551, %v8919
  %v9102 = vadd.f32 %v8552, %v8922
  %v9103 = vadd.f32 %v8553, %v8927
  %v9104 = vadd.f32 %v8554, %v8930
  %v9105 = vadd.f32 %v8555, %v8935
  %v9106 = vadd.f32 %v8556, %v8938
  %v9107 = vadd.f32 %v8557, %v8943
  %v9108 = vadd.f32 %v8558, %v8946
  %v9109 = vadd.f32 %v8559, %v8951
  %v9110 = vadd.f32 %v8560, %v8954
  %v9111 = vadd.f32 %v8561, %v8959
  %v9112 = vadd.f32 %v8562, %v8962
  %v9113 = vadd.f32 %v8563, %v8967
  %v9114 = vadd.f32 %v8564, %v8970
  %v9115 = vadd.f32 %v8565, %v8975
  %v9116 = vadd.f32 %v8566, %v8978
  %v9117 = vadd.f32 %v8567, %v8983
  %v9118 = vadd.f32 %v8568, %v8986
  %v9119 = vadd.f32 %v8569, %v8991
  %v9120 = vadd.f32 %v8570, %v8994
  %v9121 = vadd.f32 %v8571, %v8999
  %v9122 = vadd.f32 %v8572, %v9002
  %v9123 = vadd.f32 %v8573, %v9007
  %v9124 = vadd.f32 %v8574, %v9010
  %v9125 = vadd.f32 %v8575, %v9015
  %v9126 = vadd.f32 %v8576, %v9018
  %v9127 = vadd.f32 %v8577, %v9023
  %v9128 = vadd.f32 %v8578, %v9026
  %v9129 = vadd.f32 %v8579, %v9031
  %v9130 = vadd.f32 %v8580, %v9034
  %v9131 = vadd.f32 %v8581, %v9039
  %v9132 = vadd.f32 %v8582, %v9042
  %v9133 = vadd.f32 %v8583, %v9047
  %v9134 = vadd.f32 %v8584, %v9050
  %v9135 = vadd.f32 %v8585, %v9055
  %v9136 = vadd.f32 %v8586, %v9058
  %v9137 = vadd.f32 %v8587, %v9063
  %v9138 = vadd.f32 %v8588, %v9066
  %v9139 = vadd.f32 %v8589, %v9071
  %v9140 = vadd.f32 %v8590, %v9074
  %v9141 = vld [vmem:[%s3448] sm:$0xff]
  %v9142 = vld [vmem:[%s3448 + $0x8] sm:$0xff]
  %v9143 = vld [vmem:[%s3448 + $0x18] sm:$0xff]
  %v9144 = vld [vmem:[%s3448 + $0x20] sm:$0xff]
  %v9145 = vld [vmem:[%s3448 + $0x30] sm:$0xff]
  %v9146 = vld [vmem:[%s3448 + $0x38] sm:$0xff]
  %v9147 = vld [vmem:[%s3448 + $0x48] sm:$0xff]
  %v9148 = vld [vmem:[%s3448 + $0x50] sm:$0xff]
  %v9149 = vld [vmem:[%s3448 + $0x60] sm:$0xff]
  %v9150 = vld [vmem:[%s3448 + $0x68] sm:$0xff]
  %v9151 = vld [vmem:[%s3448 + $0x78] sm:$0xff]
  %v9152 = vld [vmem:[%s3448 + $0x80] sm:$0xff]
  %v9153 = vld [vmem:[%s3448 + $0x90] sm:$0xff]
  %v9154 = vld [vmem:[%s3448 + $0x98] sm:$0xff]
  %v9155 = vld [vmem:[%s3448 + $0xa8] sm:$0xff]
  %v9156 = vld [vmem:[%s3448 + $0xb0] sm:$0xff]
  %v9157 = vld [vmem:[%s3448 + $0xc0] sm:$0xff]
  %v9158 = vld [vmem:[%s3448 + $0xc8] sm:$0xff]
  %v9159 = vld [vmem:[%s3448 + $0xd8] sm:$0xff]
  %v9160 = vld [vmem:[%s3448 + $0xe0] sm:$0xff]
  %v9161 = vld [vmem:[%s3448 + $0xf0] sm:$0xff]
  %v9162 = vld [vmem:[%s3448 + $0xf8] sm:$0xff]
  %v9163 = vld [vmem:[%s3448 + $0x108] sm:$0xff]
  %v9164 = vld [vmem:[%s3448 + $0x110] sm:$0xff]
  %v9165 = vld [vmem:[%s3448 + $0x120] sm:$0xff]
  %v9166 = vld [vmem:[%s3448 + $0x128] sm:$0xff]
  %v9167 = vld [vmem:[%s3448 + $0x138] sm:$0xff]
  %v9168 = vld [vmem:[%s3448 + $0x140] sm:$0xff]
  %v9169 = vld [vmem:[%s3448 + $0x150] sm:$0xff]
  %v9170 = vld [vmem:[%s3448 + $0x158] sm:$0xff]
  %v9171 = vld [vmem:[%s3448 + $0x168] sm:$0xff]
  %v9172 = vld [vmem:[%s3448 + $0x170] sm:$0xff]
  %v9173 = vld [vmem:[%s3448 + $0x1b0] sm:$0xff]
  %v9174 = vld [vmem:[%s3448 + $0x1b8] sm:$0xff]
  %v9175 = vld [vmem:[%s3448 + $0x1c8] sm:$0xff]
  %v9176 = vld [vmem:[%s3448 + $0x1d0] sm:$0xff]
  %v9177 = vld [vmem:[%s3448 + $0x1e0] sm:$0xff]
  %v9178 = vld [vmem:[%s3448 + $0x1e8] sm:$0xff]
  %v9179 = vld [vmem:[%s3448 + $0x1f8] sm:$0xff]
  %v9180 = vld [vmem:[%s3448 + $0x200] sm:$0xff]
  %v9181 = vld [vmem:[%s3448 + $0x210] sm:$0xff]
  %v9182 = vld [vmem:[%s3448 + $0x218] sm:$0xff]
  %v9183 = vld [vmem:[%s3448 + $0x228] sm:$0xff]
  %v9184 = vld [vmem:[%s3448 + $0x230] sm:$0xff]
  %v9185 = vld [vmem:[%s3448 + $0x240] sm:$0xff]
  %v9186 = vld [vmem:[%s3448 + $0x248] sm:$0xff]
  %v9187 = vld [vmem:[%s3448 + $0x258] sm:$0xff]
  %v9188 = vld [vmem:[%s3448 + $0x260] sm:$0xff]
  %v9189 = vld [vmem:[%s3448 + $0x270] sm:$0xff]
  %v9190 = vld [vmem:[%s3448 + $0x278] sm:$0xff]
  %v9191 = vld [vmem:[%s3448 + $0x288] sm:$0xff]
  %v9192 = vld [vmem:[%s3448 + $0x290] sm:$0xff]
  %v9193 = vld [vmem:[%s3448 + $0x2a0] sm:$0xff]
  %v9194 = vld [vmem:[%s3448 + $0x2a8] sm:$0xff]
  %v9195 = vld [vmem:[%s3448 + $0x2b8] sm:$0xff]
  %v9196 = vld [vmem:[%s3448 + $0x2c0] sm:$0xff]
  %v9197 = vld [vmem:[%s3448 + $0x2d0] sm:$0xff]
  %v9198 = vld [vmem:[%s3448 + $0x2d8] sm:$0xff]
  %v9199 = vld [vmem:[%s3448 + $0x2e8] sm:$0xff]
  %v9200 = vld [vmem:[%s3448 + $0x2f0] sm:$0xff]
  %v9201 = vld [vmem:[%s3448 + $0x300] sm:$0xff]
  %v9202 = vld [vmem:[%s3448 + $0x308] sm:$0xff]
  %v9203 = vld [vmem:[%s3448 + $0x318] sm:$0xff]
  %v9204 = vld [vmem:[%s3448 + $0x320] sm:$0xff]
  %v9205 = vpack.c.bf16 %v9142, %v9141
  %v9206 = vpack.c.bf16 %v9144, %v9143
  %v9207 = vpack.c.bf16 %v9146, %v9145
  %v9208 = vpack.c.bf16 %v9148, %v9147
  %v9209 = vpack.c.bf16 %v9150, %v9149
  %v9210 = vpack.c.bf16 %v9152, %v9151
  %v9211 = vpack.c.bf16 %v9154, %v9153
  %v9212 = vpack.c.bf16 %v9156, %v9155
  %v9213 = vpack.c.bf16 %v9158, %v9157
  %v9214 = vpack.c.bf16 %v9160, %v9159
  %v9215 = vpack.c.bf16 %v9162, %v9161
  %v9216 = vpack.c.bf16 %v9164, %v9163
  %v9217 = vpack.c.bf16 %v9166, %v9165
  %v9218 = vpack.c.bf16 %v9168, %v9167
  %v9219 = vpack.c.bf16 %v9170, %v9169
  %v9220 = vpack.c.bf16 %v9172, %v9171
  %v9221 = vpack.c.bf16 %v9174, %v9173
  %v9222 = vpack.c.bf16 %v9176, %v9175
  %v9223 = vpack.c.bf16 %v9178, %v9177
  %v9224 = vpack.c.bf16 %v9180, %v9179
  %v9225 = vpack.c.bf16 %v9182, %v9181
  %v9226 = vpack.c.bf16 %v9184, %v9183
  %v9227 = vpack.c.bf16 %v9186, %v9185
  %v9228 = vpack.c.bf16 %v9188, %v9187
  %v9229 = vpack.c.bf16 %v9190, %v9189
  %v9230 = vpack.c.bf16 %v9192, %v9191
  %v9231 = vpack.c.bf16 %v9194, %v9193
  %v9232 = vpack.c.bf16 %v9196, %v9195
  %v9233 = vpack.c.bf16 %v9198, %v9197
  %v9234 = vpack.c.bf16 %v9200, %v9199
  %v9235 = vpack.c.bf16 %v9202, %v9201
  %v9236 = vpack.c.bf16 %v9204, %v9203
  %s9237 = scalar_lea.vmem %s5, 12
  %v9238 = vld [vmem:[%s9237] sm:$0x3]
  %v9240 = vsel %vm101, %v9205, 0
  %v9243 = vsel %vm101, %v9206, 0
  %v9246 = vsel %vm101, %v9207, 0
  %v9249 = vsel %vm101, %v9208, 0
  %v9252 = vsel %vm101, %v9209, 0
  %v9255 = vsel %vm101, %v9210, 0
  %v9258 = vsel %vm101, %v9211, 0
  %v9261 = vsel %vm101, %v9212, 0
  %v9264 = vsel %vm101, %v9213, 0
  %v9267 = vsel %vm101, %v9214, 0
  %v9270 = vsel %vm101, %v9215, 0
  %v9273 = vsel %vm101, %v9216, 0
  %v9276 = vsel %vm101, %v9217, 0
  %v9279 = vsel %vm101, %v9218, 0
  %v9282 = vsel %vm101, %v9219, 0
  %v9285 = vsel %vm101, %v9220, 0
  %v9288 = vsel %vm101, %v9221, 0
  %v9291 = vsel %vm101, %v9222, 0
  %v9294 = vsel %vm101, %v9223, 0
  %v9297 = vsel %vm101, %v9224, 0
  %v9300 = vsel %vm101, %v9225, 0
  %v9303 = vsel %vm101, %v9226, 0
  %v9306 = vsel %vm101, %v9227, 0
  %v9309 = vsel %vm101, %v9228, 0
  %v9312 = vsel %vm101, %v9229, 0
  %v9315 = vsel %vm101, %v9230, 0
  %v9318 = vsel %vm101, %v9231, 0
  %v9321 = vsel %vm101, %v9232, 0
  %v9324 = vsel %vm101, %v9233, 0
  %v9327 = vsel %vm101, %v9234, 0
  %v9330 = vsel %vm101, %v9235, 0
  %v9333 = vsel %vm101, %v9236, 0
  %v9336 = vsel %vm567, %v9238, 0
  %9338 = vmatprep.subr.bf16.mxu0 0
  %9339 = vmatpush1.bf16.msra.mxu0 %v9336
  %9340 = vmatprep.subr.bf16.mxu0 0
  %9341 = vmatpush1.bf16.msra.mxu0 0
  %9342 = vmatprep.subr.bf16.mxu0 0
  %9343 = vmatpush1.bf16.msra.mxu0 0
  %9344 = vmatprep.subr.bf16.mxu0 0
  %9345 = vmatpush1.bf16.msra.mxu0 0
  %9346 = vmatprep.subr.bf16.mxu0 0
  %9347 = vmatpush1.bf16.msra.mxu0 0
  %9348 = vmatprep.subr.bf16.mxu0 0
  %9349 = vmatpush1.bf16.msra.mxu0 0
  %9350 = vmatprep.subr.bf16.mxu0 0
  %9351 = vmatpush1.bf16.msra.mxu0 0
  %9352 = vmatprep.subr.bf16.mxu0 0
  %9353 = vmatpush1.bf16.msra.mxu0 0
  %9354 = vmatprep.subr.bf16.mxu0 0
  %9355 = vmatpush1.bf16.msra.mxu0 0
  %9356 = vmatprep.subr.bf16.mxu0 0
  %9357 = vmatpush1.bf16.msra.mxu0 0
  %9358 = vmatprep.subr.bf16.mxu0 0
  %9359 = vmatpush1.bf16.msra.mxu0 0
  %9360 = vmatprep.subr.bf16.mxu0 0
  %9361 = vmatpush1.bf16.msra.mxu0 0
  %9362 = vmatprep.subr.bf16.mxu0 0
  %9363 = vmatpush1.bf16.msra.mxu0 0
  %9364 = vmatprep.subr.bf16.mxu0 0
  %9365 = vmatpush1.bf16.msra.mxu0 0
  %9366 = vmatprep.subr.bf16.mxu0 0
  %9367 = vmatpush1.bf16.msra.mxu0 0
  %9368 = vmatprep.subr.bf16.mxu0 0
  %9369 = vmatpush1.bf16.msra.mxu0 0
  %9370 = vmatprep.mubr.bf16.mxu0 0
  %9371 = vmatmul.mubr.bf16.gmra.mrb[0].mxu0 %v9240
  %v9372 = vpop.f32.mrb[0].mxu0
  %v9373 = vadd.f32 0.0, %v9372
  %v9374 = vpop.f32.mrb[0].mxu0
  %v9375 = vpop.f32.mrb[0].mxu0
  %v9376 = vadd.f32 0.0, %v9375
  %v9377 = vpop.f32.mrb[0].mxu0
  %9378 = vmatprep.mubr.bf16.mxu0 0
  %9379 = vmatmul.mubr.bf16.gmra.mrb[0].mxu0 %v9243
  %v9380 = vpop.f32.mrb[0].mxu0
  %v9381 = vadd.f32 0.0, %v9380
  %v9382 = vpop.f32.mrb[0].mxu0
  %v9383 = vpop.f32.mrb[0].mxu0
  %v9384 = vadd.f32 0.0, %v9383
  %v9385 = vpop.f32.mrb[0].mxu0
  %9386 = vmatprep.mubr.bf16.mxu0 0
  %9387 = vmatmul.mubr.bf16.gmra.mrb[0].mxu0 %v9246
  %v9388 = vpop.f32.mrb[0].mxu0
  %v9389 = vadd.f32 0.0, %v9388
  %v9390 = vpop.f32.mrb[0].mxu0
  %v9391 = vpop.f32.mrb[0].mxu0
  %v9392 = vadd.f32 0.0, %v9391
  %v9393 = vpop.f32.mrb[0].mxu0
  %9394 = vmatprep.mubr.bf16.mxu0 0
  %9395 = vmatmul.mubr.bf16.gmra.mrb[0].mxu0 %v9249
  %v9396 = vpop.f32.mrb[0].mxu0
  %v9397 = vadd.f32 0.0, %v9396
  %v9398 = vpop.f32.mrb[0].mxu0
  %v9399 = vpop.f32.mrb[0].mxu0
  %v9400 = vadd.f32 0.0, %v9399
  %v9401 = vpop.f32.mrb[0].mxu0
  %9402 = vmatprep.mubr.bf16.mxu0 0
  %9403 = vmatmul.mubr.bf16.gmra.mrb[0].mxu0 %v9252
  %v9404 = vpop.f32.mrb[0].mxu0
  %v9405 = vadd.f32 0.0, %v9404
  %v9406 = vpop.f32.mrb[0].mxu0
  %v9407 = vpop.f32.mrb[0].mxu0
  %v9408 = vadd.f32 0.0, %v9407
  %v9409 = vpop.f32.mrb[0].mxu0
  %9410 = vmatprep.mubr.bf16.mxu0 0
  %9411 = vmatmul.mubr.bf16.gmra.mrb[0].mxu0 %v9255
  %v9412 = vpop.f32.mrb[0].mxu0
  %v9413 = vadd.f32 0.0, %v9412
  %v9414 = vpop.f32.mrb[0].mxu0
  %v9415 = vpop.f32.mrb[0].mxu0
  %v9416 = vadd.f32 0.0, %v9415
  %v9417 = vpop.f32.mrb[0].mxu0
  %9418 = vmatprep.mubr.bf16.mxu0 0
  %9419 = vmatmul.mubr.bf16.gmra.mrb[0].mxu0 %v9258
  %v9420 = vpop.f32.mrb[0].mxu0
  %v9421 = vadd.f32 0.0, %v9420
  %v9422 = vpop.f32.mrb[0].mxu0
  %v9423 = vpop.f32.mrb[0].mxu0
  %v9424 = vadd.f32 0.0, %v9423
  %v9425 = vpop.f32.mrb[0].mxu0
  %9426 = vmatprep.mubr.bf16.mxu0 0
  %9427 = vmatmul.mubr.bf16.gmra.mrb[0].mxu0 %v9261
  %v9428 = vpop.f32.mrb[0].mxu0
  %v9429 = vadd.f32 0.0, %v9428
  %v9430 = vpop.f32.mrb[0].mxu0
  %v9431 = vpop.f32.mrb[0].mxu0
  %v9432 = vadd.f32 0.0, %v9431
  %v9433 = vpop.f32.mrb[0].mxu0
  %9434 = vmatprep.mubr.bf16.mxu0 0
  %9435 = vmatmul.mubr.bf16.gmra.mrb[0].mxu0 %v9264
  %v9436 = vpop.f32.mrb[0].mxu0
  %v9437 = vadd.f32 0.0, %v9436
  %v9438 = vpop.f32.mrb[0].mxu0
  %v9439 = vpop.f32.mrb[0].mxu0
  %v9440 = vadd.f32 0.0, %v9439
  %v9441 = vpop.f32.mrb[0].mxu0
  %9442 = vmatprep.mubr.bf16.mxu0 0
  %9443 = vmatmul.mubr.bf16.gmra.mrb[0].mxu0 %v9267
  %v9444 = vpop.f32.mrb[0].mxu0
  %v9445 = vadd.f32 0.0, %v9444
  %v9446 = vpop.f32.mrb[0].mxu0
  %v9447 = vpop.f32.mrb[0].mxu0
  %v9448 = vadd.f32 0.0, %v9447
  %v9449 = vpop.f32.mrb[0].mxu0
  %9450 = vmatprep.mubr.bf16.mxu0 0
  %9451 = vmatmul.mubr.bf16.gmra.mrb[0].mxu0 %v9270
  %v9452 = vpop.f32.mrb[0].mxu0
  %v9453 = vadd.f32 0.0, %v9452
  %v9454 = vpop.f32.mrb[0].mxu0
  %v9455 = vpop.f32.mrb[0].mxu0
  %v9456 = vadd.f32 0.0, %v9455
  %v9457 = vpop.f32.mrb[0].mxu0
  %9458 = vmatprep.mubr.bf16.mxu0 0
  %9459 = vmatmul.mubr.bf16.gmra.mrb[0].mxu0 %v9273
  %v9460 = vpop.f32.mrb[0].mxu0
  %v9461 = vadd.f32 0.0, %v9460
  %v9462 = vpop.f32.mrb[0].mxu0
  %v9463 = vpop.f32.mrb[0].mxu0
  %v9464 = vadd.f32 0.0, %v9463
  %v9465 = vpop.f32.mrb[0].mxu0
  %9466 = vmatprep.mubr.bf16.mxu0 0
  %9467 = vmatmul.mubr.bf16.gmra.mrb[0].mxu0 %v9276
  %v9468 = vpop.f32.mrb[0].mxu0
  %v9469 = vadd.f32 0.0, %v9468
  %v9470 = vpop.f32.mrb[0].mxu0
  %v9471 = vpop.f32.mrb[0].mxu0
  %v9472 = vadd.f32 0.0, %v9471
  %v9473 = vpop.f32.mrb[0].mxu0
  %9474 = vmatprep.mubr.bf16.mxu0 0
  %9475 = vmatmul.mubr.bf16.gmra.mrb[0].mxu0 %v9279
  %v9476 = vpop.f32.mrb[0].mxu0
  %v9477 = vadd.f32 0.0, %v9476
  %v9478 = vpop.f32.mrb[0].mxu0
  %v9479 = vpop.f32.mrb[0].mxu0
  %v9480 = vadd.f32 0.0, %v9479
  %v9481 = vpop.f32.mrb[0].mxu0
  %9482 = vmatprep.mubr.bf16.mxu0 0
  %9483 = vmatmul.mubr.bf16.gmra.mrb[0].mxu0 %v9282
  %v9484 = vpop.f32.mrb[0].mxu0
  %v9485 = vadd.f32 0.0, %v9484
  %v9486 = vpop.f32.mrb[0].mxu0
  %v9487 = vpop.f32.mrb[0].mxu0
  %v9488 = vadd.f32 0.0, %v9487
  %v9489 = vpop.f32.mrb[0].mxu0
  %9490 = vmatprep.mubr.bf16.mxu0 0
  %9491 = vmatmul.mubr.bf16.gmra.mrb[0].mxu0 %v9285
  %v9492 = vpop.f32.mrb[0].mxu0
  %v9493 = vadd.f32 0.0, %v9492
  %v9494 = vpop.f32.mrb[0].mxu0
  %v9495 = vpop.f32.mrb[0].mxu0
  %v9496 = vadd.f32 0.0, %v9495
  %v9497 = vpop.f32.mrb[0].mxu0
  %9498 = vmatprep.mubr.bf16.mxu0 0
  %9499 = vmatmul.mubr.bf16.gmra.mrb[0].mxu0 %v9288
  %v9500 = vpop.f32.mrb[0].mxu0
  %v9501 = vadd.f32 0.0, %v9500
  %v9502 = vpop.f32.mrb[0].mxu0
  %v9503 = vpop.f32.mrb[0].mxu0
  %v9504 = vadd.f32 0.0, %v9503
  %v9505 = vpop.f32.mrb[0].mxu0
  %9506 = vmatprep.mubr.bf16.mxu0 0
  %9507 = vmatmul.mubr.bf16.gmra.mrb[0].mxu0 %v9291
  %v9508 = vpop.f32.mrb[0].mxu0
  %v9509 = vadd.f32 0.0, %v9508
  %v9510 = vpop.f32.mrb[0].mxu0
  %v9511 = vpop.f32.mrb[0].mxu0
  %v9512 = vadd.f32 0.0, %v9511
  %v9513 = vpop.f32.mrb[0].mxu0
  %9514 = vmatprep.mubr.bf16.mxu0 0
  %9515 = vmatmul.mubr.bf16.gmra.mrb[0].mxu0 %v9294
  %v9516 = vpop.f32.mrb[0].mxu0
  %v9517 = vadd.f32 0.0, %v9516
  %v9518 = vpop.f32.mrb[0].mxu0
  %v9519 = vpop.f32.mrb[0].mxu0
  %v9520 = vadd.f32 0.0, %v9519
  %v9521 = vpop.f32.mrb[0].mxu0
  %9522 = vmatprep.mubr.bf16.mxu0 0
  %9523 = vmatmul.mubr.bf16.gmra.mrb[0].mxu0 %v9297
  %v9524 = vpop.f32.mrb[0].mxu0
  %v9525 = vadd.f32 0.0, %v9524
  %v9526 = vpop.f32.mrb[0].mxu0
  %v9527 = vpop.f32.mrb[0].mxu0
  %v9528 = vadd.f32 0.0, %v9527
  %v9529 = vpop.f32.mrb[0].mxu0
  %9530 = vmatprep.mubr.bf16.mxu0 0
  %9531 = vmatmul.mubr.bf16.gmra.mrb[0].mxu0 %v9300
  %v9532 = vpop.f32.mrb[0].mxu0
  %v9533 = vadd.f32 0.0, %v9532
  %v9534 = vpop.f32.mrb[0].mxu0
  %v9535 = vpop.f32.mrb[0].mxu0
  %v9536 = vadd.f32 0.0, %v9535
  %v9537 = vpop.f32.mrb[0].mxu0
  %9538 = vmatprep.mubr.bf16.mxu0 0
  %9539 = vmatmul.mubr.bf16.gmra.mrb[0].mxu0 %v9303
  %v9540 = vpop.f32.mrb[0].mxu0
  %v9541 = vadd.f32 0.0, %v9540
  %v9542 = vpop.f32.mrb[0].mxu0
  %v9543 = vpop.f32.mrb[0].mxu0
  %v9544 = vadd.f32 0.0, %v9543
  %v9545 = vpop.f32.mrb[0].mxu0
  %9546 = vmatprep.mubr.bf16.mxu0 0
  %9547 = vmatmul.mubr.bf16.gmra.mrb[0].mxu0 %v9306
  %v9548 = vpop.f32.mrb[0].mxu0
  %v9549 = vadd.f32 0.0, %v9548
  %v9550 = vpop.f32.mrb[0].mxu0
  %v9551 = vpop.f32.mrb[0].mxu0
  %v9552 = vadd.f32 0.0, %v9551
  %v9553 = vpop.f32.mrb[0].mxu0
  %9554 = vmatprep.mubr.bf16.mxu0 0
  %9555 = vmatmul.mubr.bf16.gmra.mrb[0].mxu0 %v9309
  %v9556 = vpop.f32.mrb[0].mxu0
  %v9557 = vadd.f32 0.0, %v9556
  %v9558 = vpop.f32.mrb[0].mxu0
  %v9559 = vpop.f32.mrb[0].mxu0
  %v9560 = vadd.f32 0.0, %v9559
  %v9561 = vpop.f32.mrb[0].mxu0
  %9562 = vmatprep.mubr.bf16.mxu0 0
  %9563 = vmatmul.mubr.bf16.gmra.mrb[0].mxu0 %v9312
  %v9564 = vpop.f32.mrb[0].mxu0
  %v9565 = vadd.f32 0.0, %v9564
  %v9566 = vpop.f32.mrb[0].mxu0
  %v9567 = vpop.f32.mrb[0].mxu0
  %v9568 = vadd.f32 0.0, %v9567
  %v9569 = vpop.f32.mrb[0].mxu0
  %9570 = vmatprep.mubr.bf16.mxu0 0
  %9571 = vmatmul.mubr.bf16.gmra.mrb[0].mxu0 %v9315
  %v9572 = vpop.f32.mrb[0].mxu0
  %v9573 = vadd.f32 0.0, %v9572
  %v9574 = vpop.f32.mrb[0].mxu0
  %v9575 = vpop.f32.mrb[0].mxu0
  %v9576 = vadd.f32 0.0, %v9575
  %v9577 = vpop.f32.mrb[0].mxu0
  %9578 = vmatprep.mubr.bf16.mxu0 0
  %9579 = vmatmul.mubr.bf16.gmra.mrb[0].mxu0 %v9318
  %v9580 = vpop.f32.mrb[0].mxu0
  %v9581 = vadd.f32 0.0, %v9580
  %v9582 = vpop.f32.mrb[0].mxu0
  %v9583 = vpop.f32.mrb[0].mxu0
  %v9584 = vadd.f32 0.0, %v9583
  %v9585 = vpop.f32.mrb[0].mxu0
  %9586 = vmatprep.mubr.bf16.mxu0 0
  %9587 = vmatmul.mubr.bf16.gmra.mrb[0].mxu0 %v9321
  %v9588 = vpop.f32.mrb[0].mxu0
  %v9589 = vadd.f32 0.0, %v9588
  %v9590 = vpop.f32.mrb[0].mxu0
  %v9591 = vpop.f32.mrb[0].mxu0
  %v9592 = vadd.f32 0.0, %v9591
  %v9593 = vpop.f32.mrb[0].mxu0
  %9594 = vmatprep.mubr.bf16.mxu0 0
  %9595 = vmatmul.mubr.bf16.gmra.mrb[0].mxu0 %v9324
  %v9596 = vpop.f32.mrb[0].mxu0
  %v9597 = vadd.f32 0.0, %v9596
  %v9598 = vpop.f32.mrb[0].mxu0
  %v9599 = vpop.f32.mrb[0].mxu0
  %v9600 = vadd.f32 0.0, %v9599
  %v9601 = vpop.f32.mrb[0].mxu0
  %9602 = vmatprep.mubr.bf16.mxu0 0
  %9603 = vmatmul.mubr.bf16.gmra.mrb[0].mxu0 %v9327
  %v9604 = vpop.f32.mrb[0].mxu0
  %v9605 = vadd.f32 0.0, %v9604
  %v9606 = vpop.f32.mrb[0].mxu0
  %v9607 = vpop.f32.mrb[0].mxu0
  %v9608 = vadd.f32 0.0, %v9607
  %v9609 = vpop.f32.mrb[0].mxu0
  %9610 = vmatprep.mubr.bf16.mxu0 0
  %9611 = vmatmul.mubr.bf16.gmra.mrb[0].mxu0 %v9330
  %v9612 = vpop.f32.mrb[0].mxu0
  %v9613 = vadd.f32 0.0, %v9612
  %v9614 = vpop.f32.mrb[0].mxu0
  %v9615 = vpop.f32.mrb[0].mxu0
  %v9616 = vadd.f32 0.0, %v9615
  %v9617 = vpop.f32.mrb[0].mxu0
  %9618 = vmatprep.mubr.bf16.mxu0 0
  %9619 = vmatmul.mubr.bf16.gmra.mrb[0].mxu0 %v9333
  %v9620 = vpop.f32.mrb[0].mxu0
  %v9621 = vadd.f32 0.0, %v9620
  %v9622 = vpop.f32.mrb[0].mxu0
  %v9623 = vpop.f32.mrb[0].mxu0
  %v9624 = vadd.f32 0.0, %v9623
  %v9625 = vpop.f32.mrb[0].mxu0
  %9626 = vdwg.mxu0
  %v9627 = vadd.f32 %v9077, %v9373
  %v9628 = vadd.f32 %v9078, %v9376
  %v9629 = vadd.f32 %v9079, %v9381
  %v9630 = vadd.f32 %v9080, %v9384
  %v9631 = vadd.f32 %v9081, %v9389
  %v9632 = vadd.f32 %v9082, %v9392
  %v9633 = vadd.f32 %v9083, %v9397
  %v9634 = vadd.f32 %v9084, %v9400
  %v9635 = vadd.f32 %v9085, %v9405
  %v9636 = vadd.f32 %v9086, %v9408
  %v9637 = vadd.f32 %v9087, %v9413
  %v9638 = vadd.f32 %v9088, %v9416
  %v9639 = vadd.f32 %v9089, %v9421
  %v9640 = vadd.f32 %v9090, %v9424
  %v9641 = vadd.f32 %v9091, %v9429
  %v9642 = vadd.f32 %v9092, %v9432
  %v9643 = vadd.f32 %v9093, %v9437
  %v9644 = vadd.f32 %v9094, %v9440
  %v9645 = vadd.f32 %v9095, %v9445
  %v9646 = vadd.f32 %v9096, %v9448
  %v9647 = vadd.f32 %v9097, %v9453
  %v9648 = vadd.f32 %v9098, %v9456
  %v9649 = vadd.f32 %v9099, %v9461
  %v9650 = vadd.f32 %v9100, %v9464
  %v9651 = vadd.f32 %v9101, %v9469
  %v9652 = vadd.f32 %v9102, %v9472
  %v9653 = vadd.f32 %v9103, %v9477
  %v9654 = vadd.f32 %v9104, %v9480
  %v9655 = vadd.f32 %v9105, %v9485
  %v9656 = vadd.f32 %v9106, %v9488
  %v9657 = vadd.f32 %v9107, %v9493
  %v9658 = vadd.f32 %v9108, %v9496
  %v9659 = vadd.f32 %v9109, %v9501
  %v9660 = vadd.f32 %v9110, %v9504
  %v9661 = vadd.f32 %v9111, %v9509
  %v9662 = vadd.f32 %v9112, %v9512
  %v9663 = vadd.f32 %v9113, %v9517
  %v9664 = vadd.f32 %v9114, %v9520
  %v9665 = vadd.f32 %v9115, %v9525
  %v9666 = vadd.f32 %v9116, %v9528
  %v9667 = vadd.f32 %v9117, %v9533
  %v9668 = vadd.f32 %v9118, %v9536
  %v9669 = vadd.f32 %v9119, %v9541
  %v9670 = vadd.f32 %v9120, %v9544
  %v9671 = vadd.f32 %v9121, %v9549
  %v9672 = vadd.f32 %v9122, %v9552
  %v9673 = vadd.f32 %v9123, %v9557
  %v9674 = vadd.f32 %v9124, %v9560
  %v9675 = vadd.f32 %v9125, %v9565
  %v9676 = vadd.f32 %v9126, %v9568
  %v9677 = vadd.f32 %v9127, %v9573
  %v9678 = vadd.f32 %v9128, %v9576
  %v9679 = vadd.f32 %v9129, %v9581
  %v9680 = vadd.f32 %v9130, %v9584
  %v9681 = vadd.f32 %v9131, %v9589
  %v9682 = vadd.f32 %v9132, %v9592
  %v9683 = vadd.f32 %v9133, %v9597
  %v9684 = vadd.f32 %v9134, %v9600
  %v9685 = vadd.f32 %v9135, %v9605
  %v9686 = vadd.f32 %v9136, %v9608
  %v9687 = vadd.f32 %v9137, %v9613
  %v9688 = vadd.f32 %v9138, %v9616
  %v9689 = vadd.f32 %v9139, %v9621
  %v9690 = vadd.f32 %v9140, %v9624
  %v9691 = vld [vmem:[%s3448 + $0x1] sm:$0xff]
  %v9692 = vld [vmem:[%s3448 + $0x9] sm:$0xff]
  %v9693 = vld [vmem:[%s3448 + $0x19] sm:$0xff]
  %v9694 = vld [vmem:[%s3448 + $0x21] sm:$0xff]
  %v9695 = vld [vmem:[%s3448 + $0x31] sm:$0xff]
  %v9696 = vld [vmem:[%s3448 + $0x39] sm:$0xff]
  %v9697 = vld [vmem:[%s3448 + $0x49] sm:$0xff]
  %v9698 = vld [vmem:[%s3448 + $0x51] sm:$0xff]
  %v9699 = vld [vmem:[%s3448 + $0x61] sm:$0xff]
  %v9700 = vld [vmem:[%s3448 + $0x69] sm:$0xff]
  %v9701 = vld [vmem:[%s3448 + $0x79] sm:$0xff]
  %v9702 = vld [vmem:[%s3448 + $0x81] sm:$0xff]
  %v9703 = vld [vmem:[%s3448 + $0x91] sm:$0xff]
  %v9704 = vld [vmem:[%s3448 + $0x99] sm:$0xff]
  %v9705 = vld [vmem:[%s3448 + $0xa9] sm:$0xff]
  %v9706 = vld [vmem:[%s3448 + $0xb1] sm:$0xff]
  %v9707 = vld [vmem:[%s3448 + $0xc1] sm:$0xff]
  %v9708 = vld [vmem:[%s3448 + $0xc9] sm:$0xff]
  %v9709 = vld [vmem:[%s3448 + $0xd9] sm:$0xff]
  %v9710 = vld [vmem:[%s3448 + $0xe1] sm:$0xff]
  %v9711 = vld [vmem:[%s3448 + $0xf1] sm:$0xff]
  %v9712 = vld [vmem:[%s3448 + $0xf9] sm:$0xff]
  %v9713 = vld [vmem:[%s3448 + $0x109] sm:$0xff]
  %v9714 = vld [vmem:[%s3448 + $0x111] sm:$0xff]
  %v9715 = vld [vmem:[%s3448 + $0x121] sm:$0xff]
  %v9716 = vld [vmem:[%s3448 + $0x129] sm:$0xff]
  %v9717 = vld [vmem:[%s3448 + $0x139] sm:$0xff]
  %v9718 = vld [vmem:[%s3448 + $0x141] sm:$0xff]
  %v9719 = vld [vmem:[%s3448 + $0x151] sm:$0xff]
  %v9720 = vld [vmem:[%s3448 + $0x159] sm:$0xff]
  %v9721 = vld [vmem:[%s3448 + $0x169] sm:$0xff]
  %v9722 = vld [vmem:[%s3448 + $0x171] sm:$0xff]
  %v9723 = vld [vmem:[%s3448 + $0x1b1] sm:$0xff]
  %v9724 = vld [vmem:[%s3448 + $0x1b9] sm:$0xff]
  %v9725 = vld [vmem:[%s3448 + $0x1c9] sm:$0xff]
  %v9726 = vld [vmem:[%s3448 + $0x1d1] sm:$0xff]
  %v9727 = vld [vmem:[%s3448 + $0x1e1] sm:$0xff]
  %v9728 = vld [vmem:[%s3448 + $0x1e9] sm:$0xff]
  %v9729 = vld [vmem:[%s3448 + $0x1f9] sm:$0xff]
  %v9730 = vld [vmem:[%s3448 + $0x201] sm:$0xff]
  %v9731 = vld [vmem:[%s3448 + $0x211] sm:$0xff]
  %v9732 = vld [vmem:[%s3448 + $0x219] sm:$0xff]
  %v9733 = vld [vmem:[%s3448 + $0x229] sm:$0xff]
  %v9734 = vld [vmem:[%s3448 + $0x231] sm:$0xff]
  %v9735 = vld [vmem:[%s3448 + $0x241] sm:$0xff]
  %v9736 = vld [vmem:[%s3448 + $0x249] sm:$0xff]
  %v9737 = vld [vmem:[%s3448 + $0x259] sm:$0xff]
  %v9738 = vld [vmem:[%s3448 + $0x261] sm:$0xff]
  %v9739 = vld [vmem:[%s3448 + $0x271] sm:$0xff]
  %v9740 = vld [vmem:[%s3448 + $0x279] sm:$0xff]
  %v9741 = vld [vmem:[%s3448 + $0x289] sm:$0xff]
  %v9742 = vld [vmem:[%s3448 + $0x291] sm:$0xff]
  %v9743 = vld [vmem:[%s3448 + $0x2a1] sm:$0xff]
  %v9744 = vld [vmem:[%s3448 + $0x2a9] sm:$0xff]
  %v9745 = vld [vmem:[%s3448 + $0x2b9] sm:$0xff]
  %v9746 = vld [vmem:[%s3448 + $0x2c1] sm:$0xff]
  %v9747 = vld [vmem:[%s3448 + $0x2d1] sm:$0xff]
  %v9748 = vld [vmem:[%s3448 + $0x2d9] sm:$0xff]
  %v9749 = vld [vmem:[%s3448 + $0x2e9] sm:$0xff]
  %v9750 = vld [vmem:[%s3448 + $0x2f1] sm:$0xff]
  %v9751 = vld [vmem:[%s3448 + $0x301] sm:$0xff]
  %v9752 = vld [vmem:[%s3448 + $0x309] sm:$0xff]
  %v9753 = vld [vmem:[%s3448 + $0x319] sm:$0xff]
  %v9754 = vld [vmem:[%s3448 + $0x321] sm:$0xff]
  %v9755 = vpack.c.bf16 %v9692, %v9691
  %v9756 = vpack.c.bf16 %v9694, %v9693
  %v9757 = vpack.c.bf16 %v9696, %v9695
  %v9758 = vpack.c.bf16 %v9698, %v9697
  %v9759 = vpack.c.bf16 %v9700, %v9699
  %v9760 = vpack.c.bf16 %v9702, %v9701
  %v9761 = vpack.c.bf16 %v9704, %v9703
  %v9762 = vpack.c.bf16 %v9706, %v9705
  %v9763 = vpack.c.bf16 %v9708, %v9707
  %v9764 = vpack.c.bf16 %v9710, %v9709
  %v9765 = vpack.c.bf16 %v9712, %v9711
  %v9766 = vpack.c.bf16 %v9714, %v9713
  %v9767 = vpack.c.bf16 %v9716, %v9715
  %v9768 = vpack.c.bf16 %v9718, %v9717
  %v9769 = vpack.c.bf16 %v9720, %v9719
  %v9770 = vpack.c.bf16 %v9722, %v9721
  %v9771 = vpack.c.bf16 %v9724, %v9723
  %v9772 = vpack.c.bf16 %v9726, %v9725
  %v9773 = vpack.c.bf16 %v9728, %v9727
  %v9774 = vpack.c.bf16 %v9730, %v9729
  %v9775 = vpack.c.bf16 %v9732, %v9731
  %v9776 = vpack.c.bf16 %v9734, %v9733
  %v9777 = vpack.c.bf16 %v9736, %v9735
  %v9778 = vpack.c.bf16 %v9738, %v9737
  %v9779 = vpack.c.bf16 %v9740, %v9739
  %v9780 = vpack.c.bf16 %v9742, %v9741
  %v9781 = vpack.c.bf16 %v9744, %v9743
  %v9782 = vpack.c.bf16 %v9746, %v9745
  %v9783 = vpack.c.bf16 %v9748, %v9747
  %v9784 = vpack.c.bf16 %v9750, %v9749
  %v9785 = vpack.c.bf16 %v9752, %v9751
  %v9786 = vpack.c.bf16 %v9754, %v9753
  %s9787 = scalar_lea.vmem %s5, 14
  %v9788 = vld [vmem:[%s9787] sm:$0x3]
  %v9790 = vsel %vm101, %v9755, 0
  %v9793 = vsel %vm101, %v9756, 0
  %v9796 = vsel %vm101, %v9757, 0
  %v9799 = vsel %vm101, %v9758, 0
  %v9802 = vsel %vm101, %v9759, 0
  %v9805 = vsel %vm101, %v9760, 0
  %v9808 = vsel %vm101, %v9761, 0
  %v9811 = vsel %vm101, %v9762, 0
  %v9814 = vsel %vm101, %v9763, 0
  %v9817 = vsel %vm101, %v9764, 0
  %v9820 = vsel %vm101, %v9765, 0
  %v9823 = vsel %vm101, %v9766, 0
  %v9826 = vsel %vm101, %v9767, 0
  %v9829 = vsel %vm101, %v9768, 0
  %v9832 = vsel %vm101, %v9769, 0
  %v9835 = vsel %vm101, %v9770, 0
  %v9838 = vsel %vm101, %v9771, 0
  %v9841 = vsel %vm101, %v9772, 0
  %v9844 = vsel %vm101, %v9773, 0
  %v9847 = vsel %vm101, %v9774, 0
  %v9850 = vsel %vm101, %v9775, 0
  %v9853 = vsel %vm101, %v9776, 0
  %v9856 = vsel %vm101, %v9777, 0
  %v9859 = vsel %vm101, %v9778, 0
  %v9862 = vsel %vm101, %v9779, 0
  %v9865 = vsel %vm101, %v9780, 0
  %v9868 = vsel %vm101, %v9781, 0
  %v9871 = vsel %vm101, %v9782, 0
  %v9874 = vsel %vm101, %v9783, 0
  %v9877 = vsel %vm101, %v9784, 0
  %v9880 = vsel %vm101, %v9785, 0
  %v9883 = vsel %vm101, %v9786, 0
  %v9886 = vsel %vm567, %v9788, 0
  %9888 = vmatprep.subr.bf16.mxu0 0
  %9889 = vmatpush1.bf16.msra.mxu0 %v9886
  %9890 = vmatprep.subr.bf16.mxu0 0
  %9891 = vmatpush1.bf16.msra.mxu0 0
  %9892 = vmatprep.subr.bf16.mxu0 0
  %9893 = vmatpush1.bf16.msra.mxu0 0
  %9894 = vmatprep.subr.bf16.mxu0 0
  %9895 = vmatpush1.bf16.msra.mxu0 0
  %9896 = vmatprep.subr.bf16.mxu0 0
  %9897 = vmatpush1.bf16.msra.mxu0 0
  %9898 = vmatprep.subr.bf16.mxu0 0
  %9899 = vmatpush1.bf16.msra.mxu0 0
  %9900 = vmatprep.subr.bf16.mxu0 0
  %9901 = vmatpush1.bf16.msra.mxu0 0
  %9902 = vmatprep.subr.bf16.mxu0 0
  %9903 = vmatpush1.bf16.msra.mxu0 0
  %9904 = vmatprep.subr.bf16.mxu0 0
  %9905 = vmatpush1.bf16.msra.mxu0 0
  %9906 = vmatprep.subr.bf16.mxu0 0
  %9907 = vmatpush1.bf16.msra.mxu0 0
  %9908 = vmatprep.subr.bf16.mxu0 0
  %9909 = vmatpush1.bf16.msra.mxu0 0
  %9910 = vmatprep.subr.bf16.mxu0 0
  %9911 = vmatpush1.bf16.msra.mxu0 0
  %9912 = vmatprep.subr.bf16.mxu0 0
  %9913 = vmatpush1.bf16.msra.mxu0 0
  %9914 = vmatprep.subr.bf16.mxu0 0
  %9915 = vmatpush1.bf16.msra.mxu0 0
  %9916 = vmatprep.subr.bf16.mxu0 0
  %9917 = vmatpush1.bf16.msra.mxu0 0
  %9918 = vmatprep.subr.bf16.mxu0 0
  %9919 = vmatpush1.bf16.msra.mxu0 0
  %9920 = vmatprep.mubr.bf16.mxu0 0
  %9921 = vmatmul.mubr.bf16.gmra.mrb[0].mxu0 %v9790
  %v9922 = vpop.f32.mrb[0].mxu0
  %v9923 = vadd.f32 0.0, %v9922
  %v9924 = vpop.f32.mrb[0].mxu0
  %v9925 = vpop.f32.mrb[0].mxu0
  %v9926 = vadd.f32 0.0, %v9925
  %v9927 = vpop.f32.mrb[0].mxu0
  %9928 = vmatprep.mubr.bf16.mxu0 0
  %9929 = vmatmul.mubr.bf16.gmra.mrb[0].mxu0 %v9793
  %v9930 = vpop.f32.mrb[0].mxu0
  %v9931 = vadd.f32 0.0, %v9930
  %v9932 = vpop.f32.mrb[0].mxu0
  %v9933 = vpop.f32.mrb[0].mxu0
  %v9934 = vadd.f32 0.0, %v9933
  %v9935 = vpop.f32.mrb[0].mxu0
  %9936 = vmatprep.mubr.bf16.mxu0 0
  %9937 = vmatmul.mubr.bf16.gmra.mrb[0].mxu0 %v9796
  %v9938 = vpop.f32.mrb[0].mxu0
  %v9939 = vadd.f32 0.0, %v9938
  %v9940 = vpop.f32.mrb[0].mxu0
  %v9941 = vpop.f32.mrb[0].mxu0
  %v9942 = vadd.f32 0.0, %v9941
  %v9943 = vpop.f32.mrb[0].mxu0
  %9944 = vmatprep.mubr.bf16.mxu0 0
  %9945 = vmatmul.mubr.bf16.gmra.mrb[0].mxu0 %v9799
  %v9946 = vpop.f32.mrb[0].mxu0
  %v9947 = vadd.f32 0.0, %v9946
  %v9948 = vpop.f32.mrb[0].mxu0
  %v9949 = vpop.f32.mrb[0].mxu0
  %v9950 = vadd.f32 0.0, %v9949
  %v9951 = vpop.f32.mrb[0].mxu0
  %9952 = vmatprep.mubr.bf16.mxu0 0
  %9953 = vmatmul.mubr.bf16.gmra.mrb[0].mxu0 %v9802
  %v9954 = vpop.f32.mrb[0].mxu0
  %v9955 = vadd.f32 0.0, %v9954
  %v9956 = vpop.f32.mrb[0].mxu0
  %v9957 = vpop.f32.mrb[0].mxu0
  %v9958 = vadd.f32 0.0, %v9957
  %v9959 = vpop.f32.mrb[0].mxu0
  %9960 = vmatprep.mubr.bf16.mxu0 0
  %9961 = vmatmul.mubr.bf16.gmra.mrb[0].mxu0 %v9805
  %v9962 = vpop.f32.mrb[0].mxu0
  %v9963 = vadd.f32 0.0, %v9962
  %v9964 = vpop.f32.mrb[0].mxu0
  %v9965 = vpop.f32.mrb[0].mxu0
  %v9966 = vadd.f32 0.0, %v9965
  %v9967 = vpop.f32.mrb[0].mxu0
  %9968 = vmatprep.mubr.bf16.mxu0 0
  %9969 = vmatmul.mubr.bf16.gmra.mrb[0].mxu0 %v9808
  %v9970 = vpop.f32.mrb[0].mxu0
  %v9971 = vadd.f32 0.0, %v9970
  %v9972 = vpop.f32.mrb[0].mxu0
  %v9973 = vpop.f32.mrb[0].mxu0
  %v9974 = vadd.f32 0.0, %v9973
  %v9975 = vpop.f32.mrb[0].mxu0
  %9976 = vmatprep.mubr.bf16.mxu0 0
  %9977 = vmatmul.mubr.bf16.gmra.mrb[0].mxu0 %v9811
  %v9978 = vpop.f32.mrb[0].mxu0
  %v9979 = vadd.f32 0.0, %v9978
  %v9980 = vpop.f32.mrb[0].mxu0
  %v9981 = vpop.f32.mrb[0].mxu0
  %v9982 = vadd.f32 0.0, %v9981
  %v9983 = vpop.f32.mrb[0].mxu0
  %9984 = vmatprep.mubr.bf16.mxu0 0
  %9985 = vmatmul.mubr.bf16.gmra.mrb[0].mxu0 %v9814
  %v9986 = vpop.f32.mrb[0].mxu0
  %v9987 = vadd.f32 0.0, %v9986
  %v9988 = vpop.f32.mrb[0].mxu0
  %v9989 = vpop.f32.mrb[0].mxu0
  %v9990 = vadd.f32 0.0, %v9989
  %v9991 = vpop.f32.mrb[0].mxu0
  %9992 = vmatprep.mubr.bf16.mxu0 0
  %9993 = vmatmul.mubr.bf16.gmra.mrb[0].mxu0 %v9817
  %v9994 = vpop.f32.mrb[0].mxu0
  %v9995 = vadd.f32 0.0, %v9994
  %v9996 = vpop.f32.mrb[0].mxu0
  %v9997 = vpop.f32.mrb[0].mxu0
  %v9998 = vadd.f32 0.0, %v9997
  %v9999 = vpop.f32.mrb[0].mxu0
  %10000 = vmatprep.mubr.bf16.mxu0 0
  %10001 = vmatmul.mubr.bf16.gmra.mrb[0].mxu0 %v9820
  %v10002 = vpop.f32.mrb[0].mxu0
  %v10003 = vadd.f32 0.0, %v10002
  %v10004 = vpop.f32.mrb[0].mxu0
  %v10005 = vpop.f32.mrb[0].mxu0
  %v10006 = vadd.f32 0.0, %v10005
  %v10007 = vpop.f32.mrb[0].mxu0
  %10008 = vmatprep.mubr.bf16.mxu0 0
  %10009 = vmatmul.mubr.bf16.gmra.mrb[0].mxu0 %v9823
  %v10010 = vpop.f32.mrb[0].mxu0
  %v10011 = vadd.f32 0.0, %v10010
  %v10012 = vpop.f32.mrb[0].mxu0
  %v10013 = vpop.f32.mrb[0].mxu0
  %v10014 = vadd.f32 0.0, %v10013
  %v10015 = vpop.f32.mrb[0].mxu0
  %10016 = vmatprep.mubr.bf16.mxu0 0
  %10017 = vmatmul.mubr.bf16.gmra.mrb[0].mxu0 %v9826
  %v10018 = vpop.f32.mrb[0].mxu0
  %v10019 = vadd.f32 0.0, %v10018
  %v10020 = vpop.f32.mrb[0].mxu0
  %v10021 = vpop.f32.mrb[0].mxu0
  %v10022 = vadd.f32 0.0, %v10021
  %v10023 = vpop.f32.mrb[0].mxu0
  %10024 = vmatprep.mubr.bf16.mxu0 0
  %10025 = vmatmul.mubr.bf16.gmra.mrb[0].mxu0 %v9829
  %v10026 = vpop.f32.mrb[0].mxu0
  %v10027 = vadd.f32 0.0, %v10026
  %v10028 = vpop.f32.mrb[0].mxu0
  %v10029 = vpop.f32.mrb[0].mxu0
  %v10030 = vadd.f32 0.0, %v10029
  %v10031 = vpop.f32.mrb[0].mxu0
  %10032 = vmatprep.mubr.bf16.mxu0 0
  %10033 = vmatmul.mubr.bf16.gmra.mrb[0].mxu0 %v9832
  %v10034 = vpop.f32.mrb[0].mxu0
  %v10035 = vadd.f32 0.0, %v10034
  %v10036 = vpop.f32.mrb[0].mxu0
  %v10037 = vpop.f32.mrb[0].mxu0
  %v10038 = vadd.f32 0.0, %v10037
  %v10039 = vpop.f32.mrb[0].mxu0
  %10040 = vmatprep.mubr.bf16.mxu0 0
  %10041 = vmatmul.mubr.bf16.gmra.mrb[0].mxu0 %v9835
  %v10042 = vpop.f32.mrb[0].mxu0
  %v10043 = vadd.f32 0.0, %v10042
  %v10044 = vpop.f32.mrb[0].mxu0
  %v10045 = vpop.f32.mrb[0].mxu0
  %v10046 = vadd.f32 0.0, %v10045
  %v10047 = vpop.f32.mrb[0].mxu0
  %10048 = vmatprep.mubr.bf16.mxu0 0
  %10049 = vmatmul.mubr.bf16.gmra.mrb[0].mxu0 %v9838
  %v10050 = vpop.f32.mrb[0].mxu0
  %v10051 = vadd.f32 0.0, %v10050
  %v10052 = vpop.f32.mrb[0].mxu0
  %v10053 = vpop.f32.mrb[0].mxu0
  %v10054 = vadd.f32 0.0, %v10053
  %v10055 = vpop.f32.mrb[0].mxu0
  %10056 = vmatprep.mubr.bf16.mxu0 0
  %10057 = vmatmul.mubr.bf16.gmra.mrb[0].mxu0 %v9841
  %v10058 = vpop.f32.mrb[0].mxu0
  %v10059 = vadd.f32 0.0, %v10058
  %v10060 = vpop.f32.mrb[0].mxu0
  %v10061 = vpop.f32.mrb[0].mxu0
  %v10062 = vadd.f32 0.0, %v10061
  %v10063 = vpop.f32.mrb[0].mxu0
  %10064 = vmatprep.mubr.bf16.mxu0 0
  %10065 = vmatmul.mubr.bf16.gmra.mrb[0].mxu0 %v9844
  %v10066 = vpop.f32.mrb[0].mxu0
  %v10067 = vadd.f32 0.0, %v10066
  %v10068 = vpop.f32.mrb[0].mxu0
  %v10069 = vpop.f32.mrb[0].mxu0
  %v10070 = vadd.f32 0.0, %v10069
  %v10071 = vpop.f32.mrb[0].mxu0
  %10072 = vmatprep.mubr.bf16.mxu0 0
  %10073 = vmatmul.mubr.bf16.gmra.mrb[0].mxu0 %v9847
  %v10074 = vpop.f32.mrb[0].mxu0
  %v10075 = vadd.f32 0.0, %v10074
  %v10076 = vpop.f32.mrb[0].mxu0
  %v10077 = vpop.f32.mrb[0].mxu0
  %v10078 = vadd.f32 0.0, %v10077
  %v10079 = vpop.f32.mrb[0].mxu0
  %10080 = vmatprep.mubr.bf16.mxu0 0
  %10081 = vmatmul.mubr.bf16.gmra.mrb[0].mxu0 %v9850
  %v10082 = vpop.f32.mrb[0].mxu0
  %v10083 = vadd.f32 0.0, %v10082
  %v10084 = vpop.f32.mrb[0].mxu0
  %v10085 = vpop.f32.mrb[0].mxu0
  %v10086 = vadd.f32 0.0, %v10085
  %v10087 = vpop.f32.mrb[0].mxu0
  %10088 = vmatprep.mubr.bf16.mxu0 0
  %10089 = vmatmul.mubr.bf16.gmra.mrb[0].mxu0 %v9853
  %v10090 = vpop.f32.mrb[0].mxu0
  %v10091 = vadd.f32 0.0, %v10090
  %v10092 = vpop.f32.mrb[0].mxu0
  %v10093 = vpop.f32.mrb[0].mxu0
  %v10094 = vadd.f32 0.0, %v10093
  %v10095 = vpop.f32.mrb[0].mxu0
  %10096 = vmatprep.mubr.bf16.mxu0 0
  %10097 = vmatmul.mubr.bf16.gmra.mrb[0].mxu0 %v9856
  %v10098 = vpop.f32.mrb[0].mxu0
  %v10099 = vadd.f32 0.0, %v10098
  %v10100 = vpop.f32.mrb[0].mxu0
  %v10101 = vpop.f32.mrb[0].mxu0
  %v10102 = vadd.f32 0.0, %v10101
  %v10103 = vpop.f32.mrb[0].mxu0
  %10104 = vmatprep.mubr.bf16.mxu0 0
  %10105 = vmatmul.mubr.bf16.gmra.mrb[0].mxu0 %v9859
  %v10106 = vpop.f32.mrb[0].mxu0
  %v10107 = vadd.f32 0.0, %v10106
  %v10108 = vpop.f32.mrb[0].mxu0
  %v10109 = vpop.f32.mrb[0].mxu0
  %v10110 = vadd.f32 0.0, %v10109
  %v10111 = vpop.f32.mrb[0].mxu0
  %10112 = vmatprep.mubr.bf16.mxu0 0
  %10113 = vmatmul.mubr.bf16.gmra.mrb[0].mxu0 %v9862
  %v10114 = vpop.f32.mrb[0].mxu0
  %v10115 = vadd.f32 0.0, %v10114
  %v10116 = vpop.f32.mrb[0].mxu0
  %v10117 = vpop.f32.mrb[0].mxu0
  %v10118 = vadd.f32 0.0, %v10117
  %v10119 = vpop.f32.mrb[0].mxu0
  %10120 = vmatprep.mubr.bf16.mxu0 0
  %10121 = vmatmul.mubr.bf16.gmra.mrb[0].mxu0 %v9865
  %v10122 = vpop.f32.mrb[0].mxu0
  %v10123 = vadd.f32 0.0, %v10122
  %v10124 = vpop.f32.mrb[0].mxu0
  %v10125 = vpop.f32.mrb[0].mxu0
  %v10126 = vadd.f32 0.0, %v10125
  %v10127 = vpop.f32.mrb[0].mxu0
  %10128 = vmatprep.mubr.bf16.mxu0 0
  %10129 = vmatmul.mubr.bf16.gmra.mrb[0].mxu0 %v9868
  %v10130 = vpop.f32.mrb[0].mxu0
  %v10131 = vadd.f32 0.0, %v10130
  %v10132 = vpop.f32.mrb[0].mxu0
  %v10133 = vpop.f32.mrb[0].mxu0
  %v10134 = vadd.f32 0.0, %v10133
  %v10135 = vpop.f32.mrb[0].mxu0
  %10136 = vmatprep.mubr.bf16.mxu0 0
  %10137 = vmatmul.mubr.bf16.gmra.mrb[0].mxu0 %v9871
  %v10138 = vpop.f32.mrb[0].mxu0
  %v10139 = vadd.f32 0.0, %v10138
  %v10140 = vpop.f32.mrb[0].mxu0
  %v10141 = vpop.f32.mrb[0].mxu0
  %v10142 = vadd.f32 0.0, %v10141
  %v10143 = vpop.f32.mrb[0].mxu0
  %10144 = vmatprep.mubr.bf16.mxu0 0
  %10145 = vmatmul.mubr.bf16.gmra.mrb[0].mxu0 %v9874
  %v10146 = vpop.f32.mrb[0].mxu0
  %v10147 = vadd.f32 0.0, %v10146
  %v10148 = vpop.f32.mrb[0].mxu0
  %v10149 = vpop.f32.mrb[0].mxu0
  %v10150 = vadd.f32 0.0, %v10149
  %v10151 = vpop.f32.mrb[0].mxu0
  %10152 = vmatprep.mubr.bf16.mxu0 0
  %10153 = vmatmul.mubr.bf16.gmra.mrb[0].mxu0 %v9877
  %v10154 = vpop.f32.mrb[0].mxu0
  %v10155 = vadd.f32 0.0, %v10154
  %v10156 = vpop.f32.mrb[0].mxu0
  %v10157 = vpop.f32.mrb[0].mxu0
  %v10158 = vadd.f32 0.0, %v10157
  %v10159 = vpop.f32.mrb[0].mxu0
  %10160 = vmatprep.mubr.bf16.mxu0 0
  %10161 = vmatmul.mubr.bf16.gmra.mrb[0].mxu0 %v9880
  %v10162 = vpop.f32.mrb[0].mxu0
  %v10163 = vadd.f32 0.0, %v10162
  %v10164 = vpop.f32.mrb[0].mxu0
  %v10165 = vpop.f32.mrb[0].mxu0
  %v10166 = vadd.f32 0.0, %v10165
  %v10167 = vpop.f32.mrb[0].mxu0
  %10168 = vmatprep.mubr.bf16.mxu0 0
  %10169 = vmatmul.mubr.bf16.gmra.mrb[0].mxu0 %v9883
  %v10170 = vpop.f32.mrb[0].mxu0
  %v10171 = vadd.f32 0.0, %v10170
  %v10172 = vpop.f32.mrb[0].mxu0
  %v10173 = vpop.f32.mrb[0].mxu0
  %v10174 = vadd.f32 0.0, %v10173
  %v10175 = vpop.f32.mrb[0].mxu0
  %10176 = vdwg.mxu0
  %v10177 = vadd.f32 %v9627, %v9923
  %v10178 = vadd.f32 %v9628, %v9926
  %v10179 = vadd.f32 %v9629, %v9931
  %v10180 = vadd.f32 %v9630, %v9934
  %v10181 = vadd.f32 %v9631, %v9939
  %v10182 = vadd.f32 %v9632, %v9942
  %v10183 = vadd.f32 %v9633, %v9947
  %v10184 = vadd.f32 %v9634, %v9950
  %v10185 = vadd.f32 %v9635, %v9955
  %v10186 = vadd.f32 %v9636, %v9958
  %v10187 = vadd.f32 %v9637, %v9963
  %v10188 = vadd.f32 %v9638, %v9966
  %v10189 = vadd.f32 %v9639, %v9971
  %v10190 = vadd.f32 %v9640, %v9974
  %v10191 = vadd.f32 %v9641, %v9979
  %v10192 = vadd.f32 %v9642, %v9982
  %v10193 = vadd.f32 %v9643, %v9987
  %v10194 = vadd.f32 %v9644, %v9990
  %v10195 = vadd.f32 %v9645, %v9995
  %v10196 = vadd.f32 %v9646, %v9998
  %v10197 = vadd.f32 %v9647, %v10003
  %v10198 = vadd.f32 %v9648, %v10006
  %v10199 = vadd.f32 %v9649, %v10011
  %v10200 = vadd.f32 %v9650, %v10014
  %v10201 = vadd.f32 %v9651, %v10019
  %v10202 = vadd.f32 %v9652, %v10022
  %v10203 = vadd.f32 %v9653, %v10027
  %v10204 = vadd.f32 %v9654, %v10030
  %v10205 = vadd.f32 %v9655, %v10035
  %v10206 = vadd.f32 %v9656, %v10038
  %v10207 = vadd.f32 %v9657, %v10043
  %v10208 = vadd.f32 %v9658, %v10046
  %v10209 = vadd.f32 %v9659, %v10051
  %v10210 = vadd.f32 %v9660, %v10054
  %v10211 = vadd.f32 %v9661, %v10059
  %v10212 = vadd.f32 %v9662, %v10062
  %v10213 = vadd.f32 %v9663, %v10067
  %v10214 = vadd.f32 %v9664, %v10070
  %v10215 = vadd.f32 %v9665, %v10075
  %v10216 = vadd.f32 %v9666, %v10078
  %v10217 = vadd.f32 %v9667, %v10083
  %v10218 = vadd.f32 %v9668, %v10086
  %v10219 = vadd.f32 %v9669, %v10091
  %v10220 = vadd.f32 %v9670, %v10094
  %v10221 = vadd.f32 %v9671, %v10099
  %v10222 = vadd.f32 %v9672, %v10102
  %v10223 = vadd.f32 %v9673, %v10107
  %v10224 = vadd.f32 %v9674, %v10110
  %v10225 = vadd.f32 %v9675, %v10115
  %v10226 = vadd.f32 %v9676, %v10118
  %v10227 = vadd.f32 %v9677, %v10123
  %v10228 = vadd.f32 %v9678, %v10126
  %v10229 = vadd.f32 %v9679, %v10131
  %v10230 = vadd.f32 %v9680, %v10134
  %v10231 = vadd.f32 %v9681, %v10139
  %v10232 = vadd.f32 %v9682, %v10142
  %v10233 = vadd.f32 %v9683, %v10147
  %v10234 = vadd.f32 %v9684, %v10150
  %v10235 = vadd.f32 %v9685, %v10155
  %v10236 = vadd.f32 %v9686, %v10158
  %v10237 = vadd.f32 %v9687, %v10163
  %v10238 = vadd.f32 %v9688, %v10166
  %v10239 = vadd.f32 %v9689, %v10171
  %v10240 = vadd.f32 %v9690, %v10174
  %v10241 = vld [vmem:[%s3448 + $0x2] sm:$0xff]
  %v10242 = vld [vmem:[%s3448 + $0xa] sm:$0xff]
  %v10243 = vld [vmem:[%s3448 + $0x1a] sm:$0xff]
  %v10244 = vld [vmem:[%s3448 + $0x22] sm:$0xff]
  %v10245 = vld [vmem:[%s3448 + $0x32] sm:$0xff]
  %v10246 = vld [vmem:[%s3448 + $0x3a] sm:$0xff]
  %v10247 = vld [vmem:[%s3448 + $0x4a] sm:$0xff]
  %v10248 = vld [vmem:[%s3448 + $0x52] sm:$0xff]
  %v10249 = vld [vmem:[%s3448 + $0x62] sm:$0xff]
  %v10250 = vld [vmem:[%s3448 + $0x6a] sm:$0xff]
  %v10251 = vld [vmem:[%s3448 + $0x7a] sm:$0xff]
  %v10252 = vld [vmem:[%s3448 + $0x82] sm:$0xff]
  %v10253 = vld [vmem:[%s3448 + $0x92] sm:$0xff]
  %v10254 = vld [vmem:[%s3448 + $0x9a] sm:$0xff]
  %v10255 = vld [vmem:[%s3448 + $0xaa] sm:$0xff]
  %v10256 = vld [vmem:[%s3448 + $0xb2] sm:$0xff]
  %v10257 = vld [vmem:[%s3448 + $0xc2] sm:$0xff]
  %v10258 = vld [vmem:[%s3448 + $0xca] sm:$0xff]
  %v10259 = vld [vmem:[%s3448 + $0xda] sm:$0xff]
  %v10260 = vld [vmem:[%s3448 + $0xe2] sm:$0xff]
  %v10261 = vld [vmem:[%s3448 + $0xf2] sm:$0xff]
  %v10262 = vld [vmem:[%s3448 + $0xfa] sm:$0xff]
  %v10263 = vld [vmem:[%s3448 + $0x10a] sm:$0xff]
  %v10264 = vld [vmem:[%s3448 + $0x112] sm:$0xff]
  %v10265 = vld [vmem:[%s3448 + $0x122] sm:$0xff]
  %v10266 = vld [vmem:[%s3448 + $0x12a] sm:$0xff]
  %v10267 = vld [vmem:[%s3448 + $0x13a] sm:$0xff]
  %v10268 = vld [vmem:[%s3448 + $0x142] sm:$0xff]
  %v10269 = vld [vmem:[%s3448 + $0x152] sm:$0xff]
  %v10270 = vld [vmem:[%s3448 + $0x15a] sm:$0xff]
  %v10271 = vld [vmem:[%s3448 + $0x16a] sm:$0xff]
  %v10272 = vld [vmem:[%s3448 + $0x172] sm:$0xff]
  %v10273 = vld [vmem:[%s3448 + $0x1b2] sm:$0xff]
  %v10274 = vld [vmem:[%s3448 + $0x1ba] sm:$0xff]
  %v10275 = vld [vmem:[%s3448 + $0x1ca] sm:$0xff]
  %v10276 = vld [vmem:[%s3448 + $0x1d2] sm:$0xff]
  %v10277 = vld [vmem:[%s3448 + $0x1e2] sm:$0xff]
  %v10278 = vld [vmem:[%s3448 + $0x1ea] sm:$0xff]
  %v10279 = vld [vmem:[%s3448 + $0x1fa] sm:$0xff]
  %v10280 = vld [vmem:[%s3448 + $0x202] sm:$0xff]
  %v10281 = vld [vmem:[%s3448 + $0x212] sm:$0xff]
  %v10282 = vld [vmem:[%s3448 + $0x21a] sm:$0xff]
  %v10283 = vld [vmem:[%s3448 + $0x22a] sm:$0xff]
  %v10284 = vld [vmem:[%s3448 + $0x232] sm:$0xff]
  %v10285 = vld [vmem:[%s3448 + $0x242] sm:$0xff]
  %v10286 = vld [vmem:[%s3448 + $0x24a] sm:$0xff]
  %v10287 = vld [vmem:[%s3448 + $0x25a] sm:$0xff]
  %v10288 = vld [vmem:[%s3448 + $0x262] sm:$0xff]
  %v10289 = vld [vmem:[%s3448 + $0x272] sm:$0xff]
  %v10290 = vld [vmem:[%s3448 + $0x27a] sm:$0xff]
  %v10291 = vld [vmem:[%s3448 + $0x28a] sm:$0xff]
  %v10292 = vld [vmem:[%s3448 + $0x292] sm:$0xff]
  %v10293 = vld [vmem:[%s3448 + $0x2a2] sm:$0xff]
  %v10294 = vld [vmem:[%s3448 + $0x2aa] sm:$0xff]
  %v10295 = vld [vmem:[%s3448 + $0x2ba] sm:$0xff]
  %v10296 = vld [vmem:[%s3448 + $0x2c2] sm:$0xff]
  %v10297 = vld [vmem:[%s3448 + $0x2d2] sm:$0xff]
  %v10298 = vld [vmem:[%s3448 + $0x2da] sm:$0xff]
  %v10299 = vld [vmem:[%s3448 + $0x2ea] sm:$0xff]
  %v10300 = vld [vmem:[%s3448 + $0x2f2] sm:$0xff]
  %v10301 = vld [vmem:[%s3448 + $0x302] sm:$0xff]
  %v10302 = vld [vmem:[%s3448 + $0x30a] sm:$0xff]
  %v10303 = vld [vmem:[%s3448 + $0x31a] sm:$0xff]
  %v10304 = vld [vmem:[%s3448 + $0x322] sm:$0xff]
  %v10305 = vpack.c.bf16 %v10242, %v10241
  %v10306 = vpack.c.bf16 %v10244, %v10243
  %v10307 = vpack.c.bf16 %v10246, %v10245
  %v10308 = vpack.c.bf16 %v10248, %v10247
  %v10309 = vpack.c.bf16 %v10250, %v10249
  %v10310 = vpack.c.bf16 %v10252, %v10251
  %v10311 = vpack.c.bf16 %v10254, %v10253
  %v10312 = vpack.c.bf16 %v10256, %v10255
  %v10313 = vpack.c.bf16 %v10258, %v10257
  %v10314 = vpack.c.bf16 %v10260, %v10259
  %v10315 = vpack.c.bf16 %v10262, %v10261
  %v10316 = vpack.c.bf16 %v10264, %v10263
  %v10317 = vpack.c.bf16 %v10266, %v10265
  %v10318 = vpack.c.bf16 %v10268, %v10267
  %v10319 = vpack.c.bf16 %v10270, %v10269
  %v10320 = vpack.c.bf16 %v10272, %v10271
  %v10321 = vpack.c.bf16 %v10274, %v10273
  %v10322 = vpack.c.bf16 %v10276, %v10275
  %v10323 = vpack.c.bf16 %v10278, %v10277
  %v10324 = vpack.c.bf16 %v10280, %v10279
  %v10325 = vpack.c.bf16 %v10282, %v10281
  %v10326 = vpack.c.bf16 %v10284, %v10283
  %v10327 = vpack.c.bf16 %v10286, %v10285
  %v10328 = vpack.c.bf16 %v10288, %v10287
  %v10329 = vpack.c.bf16 %v10290, %v10289
  %v10330 = vpack.c.bf16 %v10292, %v10291
  %v10331 = vpack.c.bf16 %v10294, %v10293
  %v10332 = vpack.c.bf16 %v10296, %v10295
  %v10333 = vpack.c.bf16 %v10298, %v10297
  %v10334 = vpack.c.bf16 %v10300, %v10299
  %v10335 = vpack.c.bf16 %v10302, %v10301
  %v10336 = vpack.c.bf16 %v10304, %v10303
  %s10337 = scalar_lea.vmem %s5, 16
  %v10338 = vld [vmem:[%s10337] sm:$0x3]
  %v10340 = vsel %vm101, %v10305, 0
  %v10343 = vsel %vm101, %v10306, 0
  %v10346 = vsel %vm101, %v10307, 0
  %v10349 = vsel %vm101, %v10308, 0
  %v10352 = vsel %vm101, %v10309, 0
  %v10355 = vsel %vm101, %v10310, 0
  %v10358 = vsel %vm101, %v10311, 0
  %v10361 = vsel %vm101, %v10312, 0
  %v10364 = vsel %vm101, %v10313, 0
  %v10367 = vsel %vm101, %v10314, 0
  %v10370 = vsel %vm101, %v10315, 0
  %v10373 = vsel %vm101, %v10316, 0
  %v10376 = vsel %vm101, %v10317, 0
  %v10379 = vsel %vm101, %v10318, 0
  %v10382 = vsel %vm101, %v10319, 0
  %v10385 = vsel %vm101, %v10320, 0
  %v10388 = vsel %vm101, %v10321, 0
  %v10391 = vsel %vm101, %v10322, 0
  %v10394 = vsel %vm101, %v10323, 0
  %v10397 = vsel %vm101, %v10324, 0
  %v10400 = vsel %vm101, %v10325, 0
  %v10403 = vsel %vm101, %v10326, 0
  %v10406 = vsel %vm101, %v10327, 0
  %v10409 = vsel %vm101, %v10328, 0
  %v10412 = vsel %vm101, %v10329, 0
  %v10415 = vsel %vm101, %v10330, 0
  %v10418 = vsel %vm101, %v10331, 0
  %v10421 = vsel %vm101, %v10332, 0
  %v10424 = vsel %vm101, %v10333, 0
  %v10427 = vsel %vm101, %v10334, 0
  %v10430 = vsel %vm101, %v10335, 0
  %v10433 = vsel %vm101, %v10336, 0
  %v10436 = vsel %vm567, %v10338, 0
  %10438 = vmatprep.subr.bf16.mxu0 0
  %10439 = vmatpush1.bf16.msra.mxu0 %v10436
  %10440 = vmatprep.subr.bf16.mxu0 0
  %10441 = vmatpush1.bf16.msra.mxu0 0
  %10442 = vmatprep.subr.bf16.mxu0 0
  %10443 = vmatpush1.bf16.msra.mxu0 0
  %10444 = vmatprep.subr.bf16.mxu0 0
  %10445 = vmatpush1.bf16.msra.mxu0 0
  %10446 = vmatprep.subr.bf16.mxu0 0
  %10447 = vmatpush1.bf16.msra.mxu0 0
  %10448 = vmatprep.subr.bf16.mxu0 0
  %10449 = vmatpush1.bf16.msra.mxu0 0
  %10450 = vmatprep.subr.bf16.mxu0 0
  %10451 = vmatpush1.bf16.msra.mxu0 0
  %10452 = vmatprep.subr.bf16.mxu0 0
  %10453 = vmatpush1.bf16.msra.mxu0 0
  %10454 = vmatprep.subr.bf16.mxu0 0
  %10455 = vmatpush1.bf16.msra.mxu0 0
  %10456 = vmatprep.subr.bf16.mxu0 0
  %10457 = vmatpush1.bf16.msra.mxu0 0
  %10458 = vmatprep.subr.bf16.mxu0 0
  %10459 = vmatpush1.bf16.msra.mxu0 0
  %10460 = vmatprep.subr.bf16.mxu0 0
  %10461 = vmatpush1.bf16.msra.mxu0 0
  %10462 = vmatprep.subr.bf16.mxu0 0
  %10463 = vmatpush1.bf16.msra.mxu0 0
  %10464 = vmatprep.subr.bf16.mxu0 0
  %10465 = vmatpush1.bf16.msra.mxu0 0
  %10466 = vmatprep.subr.bf16.mxu0 0
  %10467 = vmatpush1.bf16.msra.mxu0 0
  %10468 = vmatprep.subr.bf16.mxu0 0
  %10469 = vmatpush1.bf16.msra.mxu0 0
  %10470 = vmatprep.mubr.bf16.mxu0 0
  %10471 = vmatmul.mubr.bf16.gmra.mrb[0].mxu0 %v10340
  %v10472 = vpop.f32.mrb[0].mxu0
  %v10473 = vadd.f32 0.0, %v10472
  %v10474 = vpop.f32.mrb[0].mxu0
  %v10475 = vpop.f32.mrb[0].mxu0
  %v10476 = vadd.f32 0.0, %v10475
  %v10477 = vpop.f32.mrb[0].mxu0
  %10478 = vmatprep.mubr.bf16.mxu0 0
  %10479 = vmatmul.mubr.bf16.gmra.mrb[0].mxu0 %v10343
  %v10480 = vpop.f32.mrb[0].mxu0
  %v10481 = vadd.f32 0.0, %v10480
  %v10482 = vpop.f32.mrb[0].mxu0
  %v10483 = vpop.f32.mrb[0].mxu0
  %v10484 = vadd.f32 0.0, %v10483
  %v10485 = vpop.f32.mrb[0].mxu0
  %10486 = vmatprep.mubr.bf16.mxu0 0
  %10487 = vmatmul.mubr.bf16.gmra.mrb[0].mxu0 %v10346
  %v10488 = vpop.f32.mrb[0].mxu0
  %v10489 = vadd.f32 0.0, %v10488
  %v10490 = vpop.f32.mrb[0].mxu0
  %v10491 = vpop.f32.mrb[0].mxu0
  %v10492 = vadd.f32 0.0, %v10491
  %v10493 = vpop.f32.mrb[0].mxu0
  %10494 = vmatprep.mubr.bf16.mxu0 0
  %10495 = vmatmul.mubr.bf16.gmra.mrb[0].mxu0 %v10349
  %v10496 = vpop.f32.mrb[0].mxu0
  %v10497 = vadd.f32 0.0, %v10496
  %v10498 = vpop.f32.mrb[0].mxu0
  %v10499 = vpop.f32.mrb[0].mxu0
  %v10500 = vadd.f32 0.0, %v10499
  %v10501 = vpop.f32.mrb[0].mxu0
  %10502 = vmatprep.mubr.bf16.mxu0 0
  %10503 = vmatmul.mubr.bf16.gmra.mrb[0].mxu0 %v10352
  %v10504 = vpop.f32.mrb[0].mxu0
  %v10505 = vadd.f32 0.0, %v10504
  %v10506 = vpop.f32.mrb[0].mxu0
  %v10507 = vpop.f32.mrb[0].mxu0
  %v10508 = vadd.f32 0.0, %v10507
  %v10509 = vpop.f32.mrb[0].mxu0
  %10510 = vmatprep.mubr.bf16.mxu0 0
  %10511 = vmatmul.mubr.bf16.gmra.mrb[0].mxu0 %v10355
  %v10512 = vpop.f32.mrb[0].mxu0
  %v10513 = vadd.f32 0.0, %v10512
  %v10514 = vpop.f32.mrb[0].mxu0
  %v10515 = vpop.f32.mrb[0].mxu0
  %v10516 = vadd.f32 0.0, %v10515
  %v10517 = vpop.f32.mrb[0].mxu0
  %10518 = vmatprep.mubr.bf16.mxu0 0
  %10519 = vmatmul.mubr.bf16.gmra.mrb[0].mxu0 %v10358
  %v10520 = vpop.f32.mrb[0].mxu0
  %v10521 = vadd.f32 0.0, %v10520
  %v10522 = vpop.f32.mrb[0].mxu0
  %v10523 = vpop.f32.mrb[0].mxu0
  %v10524 = vadd.f32 0.0, %v10523
  %v10525 = vpop.f32.mrb[0].mxu0
  %10526 = vmatprep.mubr.bf16.mxu0 0
  %10527 = vmatmul.mubr.bf16.gmra.mrb[0].mxu0 %v10361
  %v10528 = vpop.f32.mrb[0].mxu0
  %v10529 = vadd.f32 0.0, %v10528
  %v10530 = vpop.f32.mrb[0].mxu0
  %v10531 = vpop.f32.mrb[0].mxu0
  %v10532 = vadd.f32 0.0, %v10531
  %v10533 = vpop.f32.mrb[0].mxu0
  %10534 = vmatprep.mubr.bf16.mxu0 0
  %10535 = vmatmul.mubr.bf16.gmra.mrb[0].mxu0 %v10364
  %v10536 = vpop.f32.mrb[0].mxu0
  %v10537 = vadd.f32 0.0, %v10536
  %v10538 = vpop.f32.mrb[0].mxu0
  %v10539 = vpop.f32.mrb[0].mxu0
  %v10540 = vadd.f32 0.0, %v10539
  %v10541 = vpop.f32.mrb[0].mxu0
  %10542 = vmatprep.mubr.bf16.mxu0 0
  %10543 = vmatmul.mubr.bf16.gmra.mrb[0].mxu0 %v10367
  %v10544 = vpop.f32.mrb[0].mxu0
  %v10545 = vadd.f32 0.0, %v10544
  %v10546 = vpop.f32.mrb[0].mxu0
  %v10547 = vpop.f32.mrb[0].mxu0
  %v10548 = vadd.f32 0.0, %v10547
  %v10549 = vpop.f32.mrb[0].mxu0
  %10550 = vmatprep.mubr.bf16.mxu0 0
  %10551 = vmatmul.mubr.bf16.gmra.mrb[0].mxu0 %v10370
  %v10552 = vpop.f32.mrb[0].mxu0
  %v10553 = vadd.f32 0.0, %v10552
  %v10554 = vpop.f32.mrb[0].mxu0
  %v10555 = vpop.f32.mrb[0].mxu0
  %v10556 = vadd.f32 0.0, %v10555
  %v10557 = vpop.f32.mrb[0].mxu0
  %10558 = vmatprep.mubr.bf16.mxu0 0
  %10559 = vmatmul.mubr.bf16.gmra.mrb[0].mxu0 %v10373
  %v10560 = vpop.f32.mrb[0].mxu0
  %v10561 = vadd.f32 0.0, %v10560
  %v10562 = vpop.f32.mrb[0].mxu0
  %v10563 = vpop.f32.mrb[0].mxu0
  %v10564 = vadd.f32 0.0, %v10563
  %v10565 = vpop.f32.mrb[0].mxu0
  %10566 = vmatprep.mubr.bf16.mxu0 0
  %10567 = vmatmul.mubr.bf16.gmra.mrb[0].mxu0 %v10376
  %v10568 = vpop.f32.mrb[0].mxu0
  %v10569 = vadd.f32 0.0, %v10568
  %v10570 = vpop.f32.mrb[0].mxu0
  %v10571 = vpop.f32.mrb[0].mxu0
  %v10572 = vadd.f32 0.0, %v10571
  %v10573 = vpop.f32.mrb[0].mxu0
  %10574 = vmatprep.mubr.bf16.mxu0 0
  %10575 = vmatmul.mubr.bf16.gmra.mrb[0].mxu0 %v10379
  %v10576 = vpop.f32.mrb[0].mxu0
  %v10577 = vadd.f32 0.0, %v10576
  %v10578 = vpop.f32.mrb[0].mxu0
  %v10579 = vpop.f32.mrb[0].mxu0
  %v10580 = vadd.f32 0.0, %v10579
  %v10581 = vpop.f32.mrb[0].mxu0
  %10582 = vmatprep.mubr.bf16.mxu0 0
  %10583 = vmatmul.mubr.bf16.gmra.mrb[0].mxu0 %v10382
  %v10584 = vpop.f32.mrb[0].mxu0
  %v10585 = vadd.f32 0.0, %v10584
  %v10586 = vpop.f32.mrb[0].mxu0
  %v10587 = vpop.f32.mrb[0].mxu0
  %v10588 = vadd.f32 0.0, %v10587
  %v10589 = vpop.f32.mrb[0].mxu0
  %10590 = vmatprep.mubr.bf16.mxu0 0
  %10591 = vmatmul.mubr.bf16.gmra.mrb[0].mxu0 %v10385
  %v10592 = vpop.f32.mrb[0].mxu0
  %v10593 = vadd.f32 0.0, %v10592
  %v10594 = vpop.f32.mrb[0].mxu0
  %v10595 = vpop.f32.mrb[0].mxu0
  %v10596 = vadd.f32 0.0, %v10595
  %v10597 = vpop.f32.mrb[0].mxu0
  %10598 = vmatprep.mubr.bf16.mxu0 0
  %10599 = vmatmul.mubr.bf16.gmra.mrb[0].mxu0 %v10388
  %v10600 = vpop.f32.mrb[0].mxu0
  %v10601 = vadd.f32 0.0, %v10600
  %v10602 = vpop.f32.mrb[0].mxu0
  %v10603 = vpop.f32.mrb[0].mxu0
  %v10604 = vadd.f32 0.0, %v10603
  %v10605 = vpop.f32.mrb[0].mxu0
  %10606 = vmatprep.mubr.bf16.mxu0 0
  %10607 = vmatmul.mubr.bf16.gmra.mrb[0].mxu0 %v10391
  %v10608 = vpop.f32.mrb[0].mxu0
  %v10609 = vadd.f32 0.0, %v10608
  %v10610 = vpop.f32.mrb[0].mxu0
  %v10611 = vpop.f32.mrb[0].mxu0
  %v10612 = vadd.f32 0.0, %v10611
  %v10613 = vpop.f32.mrb[0].mxu0
  %10614 = vmatprep.mubr.bf16.mxu0 0
  %10615 = vmatmul.mubr.bf16.gmra.mrb[0].mxu0 %v10394
  %v10616 = vpop.f32.mrb[0].mxu0
  %v10617 = vadd.f32 0.0, %v10616
  %v10618 = vpop.f32.mrb[0].mxu0
  %v10619 = vpop.f32.mrb[0].mxu0
  %v10620 = vadd.f32 0.0, %v10619
  %v10621 = vpop.f32.mrb[0].mxu0
  %10622 = vmatprep.mubr.bf16.mxu0 0
  %10623 = vmatmul.mubr.bf16.gmra.mrb[0].mxu0 %v10397
  %v10624 = vpop.f32.mrb[0].mxu0
  %v10625 = vadd.f32 0.0, %v10624
  %v10626 = vpop.f32.mrb[0].mxu0
  %v10627 = vpop.f32.mrb[0].mxu0
  %v10628 = vadd.f32 0.0, %v10627
  %v10629 = vpop.f32.mrb[0].mxu0
  %10630 = vmatprep.mubr.bf16.mxu0 0
  %10631 = vmatmul.mubr.bf16.gmra.mrb[0].mxu0 %v10400
  %v10632 = vpop.f32.mrb[0].mxu0
  %v10633 = vadd.f32 0.0, %v10632
  %v10634 = vpop.f32.mrb[0].mxu0
  %v10635 = vpop.f32.mrb[0].mxu0
  %v10636 = vadd.f32 0.0, %v10635
  %v10637 = vpop.f32.mrb[0].mxu0
  %10638 = vmatprep.mubr.bf16.mxu0 0
  %10639 = vmatmul.mubr.bf16.gmra.mrb[0].mxu0 %v10403
  %v10640 = vpop.f32.mrb[0].mxu0
  %v10641 = vadd.f32 0.0, %v10640
  %v10642 = vpop.f32.mrb[0].mxu0
  %v10643 = vpop.f32.mrb[0].mxu0
  %v10644 = vadd.f32 0.0, %v10643
  %v10645 = vpop.f32.mrb[0].mxu0
  %10646 = vmatprep.mubr.bf16.mxu0 0
  %10647 = vmatmul.mubr.bf16.gmra.mrb[0].mxu0 %v10406
  %v10648 = vpop.f32.mrb[0].mxu0
  %v10649 = vadd.f32 0.0, %v10648
  %v10650 = vpop.f32.mrb[0].mxu0
  %v10651 = vpop.f32.mrb[0].mxu0
  %v10652 = vadd.f32 0.0, %v10651
  %v10653 = vpop.f32.mrb[0].mxu0
  %10654 = vmatprep.mubr.bf16.mxu0 0
  %10655 = vmatmul.mubr.bf16.gmra.mrb[0].mxu0 %v10409
  %v10656 = vpop.f32.mrb[0].mxu0
  %v10657 = vadd.f32 0.0, %v10656
  %v10658 = vpop.f32.mrb[0].mxu0
  %v10659 = vpop.f32.mrb[0].mxu0
  %v10660 = vadd.f32 0.0, %v10659
  %v10661 = vpop.f32.mrb[0].mxu0
  %10662 = vmatprep.mubr.bf16.mxu0 0
  %10663 = vmatmul.mubr.bf16.gmra.mrb[0].mxu0 %v10412
  %v10664 = vpop.f32.mrb[0].mxu0
  %v10665 = vadd.f32 0.0, %v10664
  %v10666 = vpop.f32.mrb[0].mxu0
  %v10667 = vpop.f32.mrb[0].mxu0
  %v10668 = vadd.f32 0.0, %v10667
  %v10669 = vpop.f32.mrb[0].mxu0
  %10670 = vmatprep.mubr.bf16.mxu0 0
  %10671 = vmatmul.mubr.bf16.gmra.mrb[0].mxu0 %v10415
  %v10672 = vpop.f32.mrb[0].mxu0
  %v10673 = vadd.f32 0.0, %v10672
  %v10674 = vpop.f32.mrb[0].mxu0
  %v10675 = vpop.f32.mrb[0].mxu0
  %v10676 = vadd.f32 0.0, %v10675
  %v10677 = vpop.f32.mrb[0].mxu0
  %10678 = vmatprep.mubr.bf16.mxu0 0
  %10679 = vmatmul.mubr.bf16.gmra.mrb[0].mxu0 %v10418
  %v10680 = vpop.f32.mrb[0].mxu0
  %v10681 = vadd.f32 0.0, %v10680
  %v10682 = vpop.f32.mrb[0].mxu0
  %v10683 = vpop.f32.mrb[0].mxu0
  %v10684 = vadd.f32 0.0, %v10683
  %v10685 = vpop.f32.mrb[0].mxu0
  %10686 = vmatprep.mubr.bf16.mxu0 0
  %10687 = vmatmul.mubr.bf16.gmra.mrb[0].mxu0 %v10421
  %v10688 = vpop.f32.mrb[0].mxu0
  %v10689 = vadd.f32 0.0, %v10688
  %v10690 = vpop.f32.mrb[0].mxu0
  %v10691 = vpop.f32.mrb[0].mxu0
  %v10692 = vadd.f32 0.0, %v10691
  %v10693 = vpop.f32.mrb[0].mxu0
  %10694 = vmatprep.mubr.bf16.mxu0 0
  %10695 = vmatmul.mubr.bf16.gmra.mrb[0].mxu0 %v10424
  %v10696 = vpop.f32.mrb[0].mxu0
  %v10697 = vadd.f32 0.0, %v10696
  %v10698 = vpop.f32.mrb[0].mxu0
  %v10699 = vpop.f32.mrb[0].mxu0
  %v10700 = vadd.f32 0.0, %v10699
  %v10701 = vpop.f32.mrb[0].mxu0
  %10702 = vmatprep.mubr.bf16.mxu0 0
  %10703 = vmatmul.mubr.bf16.gmra.mrb[0].mxu0 %v10427
  %v10704 = vpop.f32.mrb[0].mxu0
  %v10705 = vadd.f32 0.0, %v10704
  %v10706 = vpop.f32.mrb[0].mxu0
  %v10707 = vpop.f32.mrb[0].mxu0
  %v10708 = vadd.f32 0.0, %v10707
  %v10709 = vpop.f32.mrb[0].mxu0
  %10710 = vmatprep.mubr.bf16.mxu0 0
  %10711 = vmatmul.mubr.bf16.gmra.mrb[0].mxu0 %v10430
  %v10712 = vpop.f32.mrb[0].mxu0
  %v10713 = vadd.f32 0.0, %v10712
  %v10714 = vpop.f32.mrb[0].mxu0
  %v10715 = vpop.f32.mrb[0].mxu0
  %v10716 = vadd.f32 0.0, %v10715
  %v10717 = vpop.f32.mrb[0].mxu0
  %10718 = vmatprep.mubr.bf16.mxu0 0
  %10719 = vmatmul.mubr.bf16.gmra.mrb[0].mxu0 %v10433
  %v10720 = vpop.f32.mrb[0].mxu0
  %v10721 = vadd.f32 0.0, %v10720
  %v10722 = vpop.f32.mrb[0].mxu0
  %v10723 = vpop.f32.mrb[0].mxu0
  %v10724 = vadd.f32 0.0, %v10723
  %v10725 = vpop.f32.mrb[0].mxu0
  %10726 = vdwg.mxu0
  %v10727 = vadd.f32 %v10177, %v10473
  %v10728 = vadd.f32 %v10178, %v10476
  %v10729 = vadd.f32 %v10179, %v10481
  %v10730 = vadd.f32 %v10180, %v10484
  %v10731 = vadd.f32 %v10181, %v10489
  %v10732 = vadd.f32 %v10182, %v10492
  %v10733 = vadd.f32 %v10183, %v10497
  %v10734 = vadd.f32 %v10184, %v10500
  %v10735 = vadd.f32 %v10185, %v10505
  %v10736 = vadd.f32 %v10186, %v10508
  %v10737 = vadd.f32 %v10187, %v10513
  %v10738 = vadd.f32 %v10188, %v10516
  %v10739 = vadd.f32 %v10189, %v10521
  %v10740 = vadd.f32 %v10190, %v10524
  %v10741 = vadd.f32 %v10191, %v10529
  %v10742 = vadd.f32 %v10192, %v10532
  %v10743 = vadd.f32 %v10193, %v10537
  %v10744 = vadd.f32 %v10194, %v10540
  %v10745 = vadd.f32 %v10195, %v10545
  %v10746 = vadd.f32 %v10196, %v10548
  %v10747 = vadd.f32 %v10197, %v10553
  %v10748 = vadd.f32 %v10198, %v10556
  %v10749 = vadd.f32 %v10199, %v10561
  %v10750 = vadd.f32 %v10200, %v10564
  %v10751 = vadd.f32 %v10201, %v10569
  %v10752 = vadd.f32 %v10202, %v10572
  %v10753 = vadd.f32 %v10203, %v10577
  %v10754 = vadd.f32 %v10204, %v10580
  %v10755 = vadd.f32 %v10205, %v10585
  %v10756 = vadd.f32 %v10206, %v10588
  %v10757 = vadd.f32 %v10207, %v10593
  %v10758 = vadd.f32 %v10208, %v10596
  %v10759 = vadd.f32 %v10209, %v10601
  %v10760 = vadd.f32 %v10210, %v10604
  %v10761 = vadd.f32 %v10211, %v10609
  %v10762 = vadd.f32 %v10212, %v10612
  %v10763 = vadd.f32 %v10213, %v10617
  %v10764 = vadd.f32 %v10214, %v10620
  %v10765 = vadd.f32 %v10215, %v10625
  %v10766 = vadd.f32 %v10216, %v10628
  %v10767 = vadd.f32 %v10217, %v10633
  %v10768 = vadd.f32 %v10218, %v10636
  %v10769 = vadd.f32 %v10219, %v10641
  %v10770 = vadd.f32 %v10220, %v10644
  %v10771 = vadd.f32 %v10221, %v10649
  %v10772 = vadd.f32 %v10222, %v10652
  %v10773 = vadd.f32 %v10223, %v10657
  %v10774 = vadd.f32 %v10224, %v10660
  %v10775 = vadd.f32 %v10225, %v10665
  %v10776 = vadd.f32 %v10226, %v10668
  %v10777 = vadd.f32 %v10227, %v10673
  %v10778 = vadd.f32 %v10228, %v10676
  %v10779 = vadd.f32 %v10229, %v10681
  %v10780 = vadd.f32 %v10230, %v10684
  %v10781 = vadd.f32 %v10231, %v10689
  %v10782 = vadd.f32 %v10232, %v10692
  %v10783 = vadd.f32 %v10233, %v10697
  %v10784 = vadd.f32 %v10234, %v10700
  %v10785 = vadd.f32 %v10235, %v10705
  %v10786 = vadd.f32 %v10236, %v10708
  %v10787 = vadd.f32 %v10237, %v10713
  %v10788 = vadd.f32 %v10238, %v10716
  %v10789 = vadd.f32 %v10239, %v10721
  %v10790 = vadd.f32 %v10240, %v10724
  %v10791 = vld [vmem:[%s6] sm:$0x1]
  %v10793 = vlaneseq
  %v10794 = vshrl.u32 %v10793, 7
  %v10795 = vsub.s32 0, %v10794
  %v10796 = vrot.slane %v10791, %v10795
  %v10798 = vadd.f32 %v10727, %v10796
  %v10799 = vadd.f32 %v10728, %v10796
  %v10800 = vadd.f32 %v10729, %v10796
  %v10801 = vadd.f32 %v10730, %v10796
  %v10802 = vadd.f32 %v10731, %v10796
  %v10803 = vadd.f32 %v10732, %v10796
  %v10804 = vadd.f32 %v10733, %v10796
  %v10805 = vadd.f32 %v10734, %v10796
  %v10806 = vadd.f32 %v10735, %v10796
  %v10807 = vadd.f32 %v10736, %v10796
  %v10808 = vadd.f32 %v10737, %v10796
  %v10809 = vadd.f32 %v10738, %v10796
  %v10810 = vadd.f32 %v10739, %v10796
  %v10811 = vadd.f32 %v10740, %v10796
  %v10812 = vadd.f32 %v10741, %v10796
  %v10813 = vadd.f32 %v10742, %v10796
  %v10814 = vadd.f32 %v10743, %v10796
  %v10815 = vadd.f32 %v10744, %v10796
  %v10816 = vadd.f32 %v10745, %v10796
  %v10817 = vadd.f32 %v10746, %v10796
  %v10818 = vadd.f32 %v10747, %v10796
  %v10819 = vadd.f32 %v10748, %v10796
  %v10820 = vadd.f32 %v10749, %v10796
  %v10821 = vadd.f32 %v10750, %v10796
  %v10822 = vadd.f32 %v10751, %v10796
  %v10823 = vadd.f32 %v10752, %v10796
  %v10824 = vadd.f32 %v10753, %v10796
  %v10825 = vadd.f32 %v10754, %v10796
  %v10826 = vadd.f32 %v10755, %v10796
  %v10827 = vadd.f32 %v10756, %v10796
  %v10828 = vadd.f32 %v10757, %v10796
  %v10829 = vadd.f32 %v10758, %v10796
  %v10830 = vadd.f32 %v10759, %v10796
  %v10831 = vadd.f32 %v10760, %v10796
  %v10832 = vadd.f32 %v10761, %v10796
  %v10833 = vadd.f32 %v10762, %v10796
  %v10834 = vadd.f32 %v10763, %v10796
  %v10835 = vadd.f32 %v10764, %v10796
  %v10836 = vadd.f32 %v10765, %v10796
  %v10837 = vadd.f32 %v10766, %v10796
  %v10838 = vadd.f32 %v10767, %v10796
  %v10839 = vadd.f32 %v10768, %v10796
  %v10840 = vadd.f32 %v10769, %v10796
  %v10841 = vadd.f32 %v10770, %v10796
  %v10842 = vadd.f32 %v10771, %v10796
  %v10843 = vadd.f32 %v10772, %v10796
  %v10844 = vadd.f32 %v10773, %v10796
  %v10845 = vadd.f32 %v10774, %v10796
  %v10846 = vadd.f32 %v10775, %v10796
  %v10847 = vadd.f32 %v10776, %v10796
  %v10848 = vadd.f32 %v10777, %v10796
  %v10849 = vadd.f32 %v10778, %v10796
  %v10850 = vadd.f32 %v10779, %v10796
  %v10851 = vadd.f32 %v10780, %v10796
  %v10852 = vadd.f32 %v10781, %v10796
  %v10853 = vadd.f32 %v10782, %v10796
  %v10854 = vadd.f32 %v10783, %v10796
  %v10855 = vadd.f32 %v10784, %v10796
  %v10856 = vadd.f32 %v10785, %v10796
  %v10857 = vadd.f32 %v10786, %v10796
  %v10858 = vadd.f32 %v10787, %v10796
  %v10859 = vadd.f32 %v10788, %v10796
  %v10860 = vadd.f32 %v10789, %v10796
  %v10861 = vadd.f32 %v10790, %v10796
  %v10862 = vsel %vm101, %v10798, 0.0
  %v10863 = vsel %vm101, %v10799, 0.0
  %v10864 = vadd.f32 %v10862, %v10863
  %v10865 = vsel %vm101, %v10800, 0.0
  %v10866 = vadd.f32 %v10864, %v10865
  %v10867 = vsel %vm101, %v10801, 0.0
  %v10868 = vadd.f32 %v10866, %v10867
  %v10869 = vsel %vm101, %v10802, 0.0
  %v10870 = vadd.f32 %v10868, %v10869
  %v10871 = vsel %vm101, %v10803, 0.0
  %v10872 = vadd.f32 %v10870, %v10871
  %v10873 = vsel %vm101, %v10804, 0.0
  %v10874 = vadd.f32 %v10872, %v10873
  %v10875 = vsel %vm101, %v10805, 0.0
  %v10876 = vadd.f32 %v10874, %v10875
  %v10877 = vsel %vm101, %v10806, 0.0
  %v10878 = vadd.f32 %v10876, %v10877
  %v10879 = vsel %vm101, %v10807, 0.0
  %v10880 = vadd.f32 %v10878, %v10879
  %v10881 = vsel %vm101, %v10808, 0.0
  %v10882 = vadd.f32 %v10880, %v10881
  %v10883 = vsel %vm101, %v10809, 0.0
  %v10884 = vadd.f32 %v10882, %v10883
  %v10885 = vsel %vm101, %v10810, 0.0
  %v10886 = vadd.f32 %v10884, %v10885
  %v10887 = vsel %vm101, %v10811, 0.0
  %v10888 = vadd.f32 %v10886, %v10887
  %v10889 = vsel %vm101, %v10812, 0.0
  %v10890 = vadd.f32 %v10888, %v10889
  %v10891 = vsel %vm101, %v10813, 0.0
  %v10892 = vadd.f32 %v10890, %v10891
  %v10893 = vsel %vm101, %v10814, 0.0
  %v10894 = vadd.f32 %v10892, %v10893
  %v10895 = vsel %vm101, %v10815, 0.0
  %v10896 = vadd.f32 %v10894, %v10895
  %v10897 = vsel %vm101, %v10816, 0.0
  %v10898 = vadd.f32 %v10896, %v10897
  %v10899 = vsel %vm101, %v10817, 0.0
  %v10900 = vadd.f32 %v10898, %v10899
  %v10901 = vsel %vm101, %v10818, 0.0
  %v10902 = vadd.f32 %v10900, %v10901
  %v10903 = vsel %vm101, %v10819, 0.0
  %v10904 = vadd.f32 %v10902, %v10903
  %v10905 = vsel %vm101, %v10820, 0.0
  %v10906 = vadd.f32 %v10904, %v10905
  %v10907 = vsel %vm101, %v10821, 0.0
  %v10908 = vadd.f32 %v10906, %v10907
  %v10909 = vsel %vm101, %v10822, 0.0
  %v10910 = vadd.f32 %v10908, %v10909
  %v10911 = vsel %vm101, %v10823, 0.0
  %v10912 = vadd.f32 %v10910, %v10911
  %v10913 = vsel %vm101, %v10824, 0.0
  %v10914 = vadd.f32 %v10912, %v10913
  %v10915 = vsel %vm101, %v10825, 0.0
  %v10916 = vadd.f32 %v10914, %v10915
  %v10917 = vsel %vm101, %v10826, 0.0
  %v10918 = vadd.f32 %v10916, %v10917
  %v10919 = vsel %vm101, %v10827, 0.0
  %v10920 = vadd.f32 %v10918, %v10919
  %v10921 = vsel %vm101, %v10828, 0.0
  %v10922 = vadd.f32 %v10920, %v10921
  %v10923 = vsel %vm101, %v10829, 0.0
  %v10924 = vadd.f32 %v10922, %v10923
  %v10925 = vsel %vm101, %v10830, 0.0
  %v10926 = vadd.f32 %v10924, %v10925
  %v10927 = vsel %vm101, %v10831, 0.0
  %v10928 = vadd.f32 %v10926, %v10927
  %v10929 = vsel %vm101, %v10832, 0.0
  %v10930 = vadd.f32 %v10928, %v10929
  %v10931 = vsel %vm101, %v10833, 0.0
  %v10932 = vadd.f32 %v10930, %v10931
  %v10933 = vsel %vm101, %v10834, 0.0
  %v10934 = vadd.f32 %v10932, %v10933
  %v10935 = vsel %vm101, %v10835, 0.0
  %v10936 = vadd.f32 %v10934, %v10935
  %v10937 = vsel %vm101, %v10836, 0.0
  %v10938 = vadd.f32 %v10936, %v10937
  %v10939 = vsel %vm101, %v10837, 0.0
  %v10940 = vadd.f32 %v10938, %v10939
  %v10941 = vsel %vm101, %v10838, 0.0
  %v10942 = vadd.f32 %v10940, %v10941
  %v10943 = vsel %vm101, %v10839, 0.0
  %v10944 = vadd.f32 %v10942, %v10943
  %v10945 = vsel %vm101, %v10840, 0.0
  %v10946 = vadd.f32 %v10944, %v10945
  %v10947 = vsel %vm101, %v10841, 0.0
  %v10948 = vadd.f32 %v10946, %v10947
  %v10949 = vsel %vm101, %v10842, 0.0
  %v10950 = vadd.f32 %v10948, %v10949
  %v10951 = vsel %vm101, %v10843, 0.0
  %v10952 = vadd.f32 %v10950, %v10951
  %v10953 = vsel %vm101, %v10844, 0.0
  %v10954 = vadd.f32 %v10952, %v10953
  %v10955 = vsel %vm101, %v10845, 0.0
  %v10956 = vadd.f32 %v10954, %v10955
  %v10957 = vsel %vm101, %v10846, 0.0
  %v10958 = vadd.f32 %v10956, %v10957
  %v10959 = vsel %vm101, %v10847, 0.0
  %v10960 = vadd.f32 %v10958, %v10959
  %v10961 = vsel %vm101, %v10848, 0.0
  %v10962 = vadd.f32 %v10960, %v10961
  %v10963 = vsel %vm101, %v10849, 0.0
  %v10964 = vadd.f32 %v10962, %v10963
  %v10965 = vsel %vm101, %v10850, 0.0
  %v10966 = vadd.f32 %v10964, %v10965
  %v10967 = vsel %vm101, %v10851, 0.0
  %v10968 = vadd.f32 %v10966, %v10967
  %v10969 = vsel %vm101, %v10852, 0.0
  %v10970 = vadd.f32 %v10968, %v10969
  %v10971 = vsel %vm101, %v10853, 0.0
  %v10972 = vadd.f32 %v10970, %v10971
  %v10973 = vsel %vm101, %v10854, 0.0
  %v10974 = vadd.f32 %v10972, %v10973
  %v10975 = vsel %vm101, %v10855, 0.0
  %v10976 = vadd.f32 %v10974, %v10975
  %v10977 = vsel %vm101, %v10856, 0.0
  %v10978 = vadd.f32 %v10976, %v10977
  %v10979 = vsel %vm101, %v10857, 0.0
  %v10980 = vadd.f32 %v10978, %v10979
  %v10981 = vsel %vm101, %v10858, 0.0
  %v10982 = vadd.f32 %v10980, %v10981
  %v10983 = vsel %vm101, %v10859, 0.0
  %v10984 = vadd.f32 %v10982, %v10983
  %v10985 = vsel %vm101, %v10860, 0.0
  %v10986 = vadd.f32 %v10984, %v10985
  %v10987 = vsel %vm101, %v10861, 0.0
  %v10988 = vadd.f32 %v10986, %v10987
  %v10989 = vrot.slane %v10988, 4
  %v10990 = vadd.f32 %v10988, %v10989
  %v10991 = vrot.slane %v10990, 2
  %v10992 = vadd.f32 %v10990, %v10991
  %v10993 = vrot.slane %v10992, 1
  %v10994 = vadd.f32 %v10992, %v10993
  %v10995 = vmul.f32 %v10994, 0.001953125
  %v10996 = vmul.f32 %v10798, %v10798
  %v10997 = vmul.f32 %v10799, %v10799
  %v10998 = vmul.f32 %v10800, %v10800
  %v10999 = vmul.f32 %v10801, %v10801
  %v11000 = vmul.f32 %v10802, %v10802
  %v11001 = vmul.f32 %v10803, %v10803
  %v11002 = vmul.f32 %v10804, %v10804
  %v11003 = vmul.f32 %v10805, %v10805
  %v11004 = vmul.f32 %v10806, %v10806
  %v11005 = vmul.f32 %v10807, %v10807
  %v11006 = vmul.f32 %v10808, %v10808
  %v11007 = vmul.f32 %v10809, %v10809
  %v11008 = vmul.f32 %v10810, %v10810
  %v11009 = vmul.f32 %v10811, %v10811
  %v11010 = vmul.f32 %v10812, %v10812
  %v11011 = vmul.f32 %v10813, %v10813
  %v11012 = vmul.f32 %v10814, %v10814
  %v11013 = vmul.f32 %v10815, %v10815
  %v11014 = vmul.f32 %v10816, %v10816
  %v11015 = vmul.f32 %v10817, %v10817
  %v11016 = vmul.f32 %v10818, %v10818
  %v11017 = vmul.f32 %v10819, %v10819
  %v11018 = vmul.f32 %v10820, %v10820
  %v11019 = vmul.f32 %v10821, %v10821
  %v11020 = vmul.f32 %v10822, %v10822
  %v11021 = vmul.f32 %v10823, %v10823
  %v11022 = vmul.f32 %v10824, %v10824
  %v11023 = vmul.f32 %v10825, %v10825
  %v11024 = vmul.f32 %v10826, %v10826
  %v11025 = vmul.f32 %v10827, %v10827
  %v11026 = vmul.f32 %v10828, %v10828
  %v11027 = vmul.f32 %v10829, %v10829
  %v11028 = vmul.f32 %v10830, %v10830
  %v11029 = vmul.f32 %v10831, %v10831
  %v11030 = vmul.f32 %v10832, %v10832
  %v11031 = vmul.f32 %v10833, %v10833
  %v11032 = vmul.f32 %v10834, %v10834
  %v11033 = vmul.f32 %v10835, %v10835
  %v11034 = vmul.f32 %v10836, %v10836
  %v11035 = vmul.f32 %v10837, %v10837
  %v11036 = vmul.f32 %v10838, %v10838
  %v11037 = vmul.f32 %v10839, %v10839
  %v11038 = vmul.f32 %v10840, %v10840
  %v11039 = vmul.f32 %v10841, %v10841
  %v11040 = vmul.f32 %v10842, %v10842
  %v11041 = vmul.f32 %v10843, %v10843
  %v11042 = vmul.f32 %v10844, %v10844
  %v11043 = vmul.f32 %v10845, %v10845
  %v11044 = vmul.f32 %v10846, %v10846
  %v11045 = vmul.f32 %v10847, %v10847
  %v11046 = vmul.f32 %v10848, %v10848
  %v11047 = vmul.f32 %v10849, %v10849
  %v11048 = vmul.f32 %v10850, %v10850
  %v11049 = vmul.f32 %v10851, %v10851
  %v11050 = vmul.f32 %v10852, %v10852
  %v11051 = vmul.f32 %v10853, %v10853
  %v11052 = vmul.f32 %v10854, %v10854
  %v11053 = vmul.f32 %v10855, %v10855
  %v11054 = vmul.f32 %v10856, %v10856
  %v11055 = vmul.f32 %v10857, %v10857
  %v11056 = vmul.f32 %v10858, %v10858
  %v11057 = vmul.f32 %v10859, %v10859
  %v11058 = vmul.f32 %v10860, %v10860
  %v11059 = vmul.f32 %v10861, %v10861
  %v11060 = vsel %vm101, %v10996, 0.0
  %v11061 = vsel %vm101, %v10997, 0.0
  %v11062 = vadd.f32 %v11060, %v11061
  %v11063 = vsel %vm101, %v10998, 0.0
  %v11064 = vadd.f32 %v11062, %v11063
  %v11065 = vsel %vm101, %v10999, 0.0
  %v11066 = vadd.f32 %v11064, %v11065
  %v11067 = vsel %vm101, %v11000, 0.0
  %v11068 = vadd.f32 %v11066, %v11067
  %v11069 = vsel %vm101, %v11001, 0.0
  %v11070 = vadd.f32 %v11068, %v11069
  %v11071 = vsel %vm101, %v11002, 0.0
  %v11072 = vadd.f32 %v11070, %v11071
  %v11073 = vsel %vm101, %v11003, 0.0
  %v11074 = vadd.f32 %v11072, %v11073
  %v11075 = vsel %vm101, %v11004, 0.0
  %v11076 = vadd.f32 %v11074, %v11075
  %v11077 = vsel %vm101, %v11005, 0.0
  %v11078 = vadd.f32 %v11076, %v11077
  %v11079 = vsel %vm101, %v11006, 0.0
  %v11080 = vadd.f32 %v11078, %v11079
  %v11081 = vsel %vm101, %v11007, 0.0
  %v11082 = vadd.f32 %v11080, %v11081
  %v11083 = vsel %vm101, %v11008, 0.0
  %v11084 = vadd.f32 %v11082, %v11083
  %v11085 = vsel %vm101, %v11009, 0.0
  %v11086 = vadd.f32 %v11084, %v11085
  %v11087 = vsel %vm101, %v11010, 0.0
  %v11088 = vadd.f32 %v11086, %v11087
  %v11089 = vsel %vm101, %v11011, 0.0
  %v11090 = vadd.f32 %v11088, %v11089
  %v11091 = vsel %vm101, %v11012, 0.0
  %v11092 = vadd.f32 %v11090, %v11091
  %v11093 = vsel %vm101, %v11013, 0.0
  %v11094 = vadd.f32 %v11092, %v11093
  %v11095 = vsel %vm101, %v11014, 0.0
  %v11096 = vadd.f32 %v11094, %v11095
  %v11097 = vsel %vm101, %v11015, 0.0
  %v11098 = vadd.f32 %v11096, %v11097
  %v11099 = vsel %vm101, %v11016, 0.0
  %v11100 = vadd.f32 %v11098, %v11099
  %v11101 = vsel %vm101, %v11017, 0.0
  %v11102 = vadd.f32 %v11100, %v11101
  %v11103 = vsel %vm101, %v11018, 0.0
  %v11104 = vadd.f32 %v11102, %v11103
  %v11105 = vsel %vm101, %v11019, 0.0
  %v11106 = vadd.f32 %v11104, %v11105
  %v11107 = vsel %vm101, %v11020, 0.0
  %v11108 = vadd.f32 %v11106, %v11107
  %v11109 = vsel %vm101, %v11021, 0.0
  %v11110 = vadd.f32 %v11108, %v11109
  %v11111 = vsel %vm101, %v11022, 0.0
  %v11112 = vadd.f32 %v11110, %v11111
  %v11113 = vsel %vm101, %v11023, 0.0
  %v11114 = vadd.f32 %v11112, %v11113
  %v11115 = vsel %vm101, %v11024, 0.0
  %v11116 = vadd.f32 %v11114, %v11115
  %v11117 = vsel %vm101, %v11025, 0.0
  %v11118 = vadd.f32 %v11116, %v11117
  %v11119 = vsel %vm101, %v11026, 0.0
  %v11120 = vadd.f32 %v11118, %v11119
  %v11121 = vsel %vm101, %v11027, 0.0
  %v11122 = vadd.f32 %v11120, %v11121
  %v11123 = vsel %vm101, %v11028, 0.0
  %v11124 = vadd.f32 %v11122, %v11123
  %v11125 = vsel %vm101, %v11029, 0.0
  %v11126 = vadd.f32 %v11124, %v11125
  %v11127 = vsel %vm101, %v11030, 0.0
  %v11128 = vadd.f32 %v11126, %v11127
  %v11129 = vsel %vm101, %v11031, 0.0
  %v11130 = vadd.f32 %v11128, %v11129
  %v11131 = vsel %vm101, %v11032, 0.0
  %v11132 = vadd.f32 %v11130, %v11131
  %v11133 = vsel %vm101, %v11033, 0.0
  %v11134 = vadd.f32 %v11132, %v11133
  %v11135 = vsel %vm101, %v11034, 0.0
  %v11136 = vadd.f32 %v11134, %v11135
  %v11137 = vsel %vm101, %v11035, 0.0
  %v11138 = vadd.f32 %v11136, %v11137
  %v11139 = vsel %vm101, %v11036, 0.0
  %v11140 = vadd.f32 %v11138, %v11139
  %v11141 = vsel %vm101, %v11037, 0.0
  %v11142 = vadd.f32 %v11140, %v11141
  %v11143 = vsel %vm101, %v11038, 0.0
  %v11144 = vadd.f32 %v11142, %v11143
  %v11145 = vsel %vm101, %v11039, 0.0
  %v11146 = vadd.f32 %v11144, %v11145
  %v11147 = vsel %vm101, %v11040, 0.0
  %v11148 = vadd.f32 %v11146, %v11147
  %v11149 = vsel %vm101, %v11041, 0.0
  %v11150 = vadd.f32 %v11148, %v11149
  %v11151 = vsel %vm101, %v11042, 0.0
  %v11152 = vadd.f32 %v11150, %v11151
  %v11153 = vsel %vm101, %v11043, 0.0
  %v11154 = vadd.f32 %v11152, %v11153
  %v11155 = vsel %vm101, %v11044, 0.0
  %v11156 = vadd.f32 %v11154, %v11155
  %v11157 = vsel %vm101, %v11045, 0.0
  %v11158 = vadd.f32 %v11156, %v11157
  %v11159 = vsel %vm101, %v11046, 0.0
  %v11160 = vadd.f32 %v11158, %v11159
  %v11161 = vsel %vm101, %v11047, 0.0
  %v11162 = vadd.f32 %v11160, %v11161
  %v11163 = vsel %vm101, %v11048, 0.0
  %v11164 = vadd.f32 %v11162, %v11163
  %v11165 = vsel %vm101, %v11049, 0.0
  %v11166 = vadd.f32 %v11164, %v11165
  %v11167 = vsel %vm101, %v11050, 0.0
  %v11168 = vadd.f32 %v11166, %v11167
  %v11169 = vsel %vm101, %v11051, 0.0
  %v11170 = vadd.f32 %v11168, %v11169
  %v11171 = vsel %vm101, %v11052, 0.0
  %v11172 = vadd.f32 %v11170, %v11171
  %v11173 = vsel %vm101, %v11053, 0.0
  %v11174 = vadd.f32 %v11172, %v11173
  %v11175 = vsel %vm101, %v11054, 0.0
  %v11176 = vadd.f32 %v11174, %v11175
  %v11177 = vsel %vm101, %v11055, 0.0
  %v11178 = vadd.f32 %v11176, %v11177
  %v11179 = vsel %vm101, %v11056, 0.0
  %v11180 = vadd.f32 %v11178, %v11179
  %v11181 = vsel %vm101, %v11057, 0.0
  %v11182 = vadd.f32 %v11180, %v11181
  %v11183 = vsel %vm101, %v11058, 0.0
  %v11184 = vadd.f32 %v11182, %v11183
  %v11185 = vsel %vm101, %v11059, 0.0
  %v11186 = vadd.f32 %v11184, %v11185
  %v11187 = vrot.slane %v11186, 4
  %v11188 = vadd.f32 %v11186, %v11187
  %v11189 = vrot.slane %v11188, 2
  %v11190 = vadd.f32 %v11188, %v11189
  %v11191 = vrot.slane %v11190, 1
  %v11192 = vadd.f32 %v11190, %v11191
  %v11193 = vmul.f32 %v11192, 0.001953125
  %v11194 = vmul.f32 %v10995, %v10995
  %v11195 = vsub.f32 %v11193, %v11194
  %v11196 = vmax.f32 %v11195, 0.0
  %v11197 = vadd.f32 %v11196, 1e-05
  %v11198 = vrsqrt.pop %v11197
  %v11199 = vld [vmem:[%s7] sm:$0x1]
  %v11200 = vmul.f32 %v11198, %v11199
  %v11201 = vsub.f32 %v10798, %v10995
  %v11202 = vsub.f32 %v10799, %v10995
  %v11203 = vsub.f32 %v10800, %v10995
  %v11204 = vsub.f32 %v10801, %v10995
  %v11205 = vsub.f32 %v10802, %v10995
  %v11206 = vsub.f32 %v10803, %v10995
  %v11207 = vsub.f32 %v10804, %v10995
  %v11208 = vsub.f32 %v10805, %v10995
  %v11209 = vsub.f32 %v10806, %v10995
  %v11210 = vsub.f32 %v10807, %v10995
  %v11211 = vsub.f32 %v10808, %v10995
  %v11212 = vsub.f32 %v10809, %v10995
  %v11213 = vsub.f32 %v10810, %v10995
  %v11214 = vsub.f32 %v10811, %v10995
  %v11215 = vsub.f32 %v10812, %v10995
  %v11216 = vsub.f32 %v10813, %v10995
  %v11217 = vsub.f32 %v10814, %v10995
  %v11218 = vsub.f32 %v10815, %v10995
  %v11219 = vsub.f32 %v10816, %v10995
  %v11220 = vsub.f32 %v10817, %v10995
  %v11221 = vsub.f32 %v10818, %v10995
  %v11222 = vsub.f32 %v10819, %v10995
  %v11223 = vsub.f32 %v10820, %v10995
  %v11224 = vsub.f32 %v10821, %v10995
  %v11225 = vsub.f32 %v10822, %v10995
  %v11226 = vsub.f32 %v10823, %v10995
  %v11227 = vsub.f32 %v10824, %v10995
  %v11228 = vsub.f32 %v10825, %v10995
  %v11229 = vsub.f32 %v10826, %v10995
  %v11230 = vsub.f32 %v10827, %v10995
  %v11231 = vsub.f32 %v10828, %v10995
  %v11232 = vsub.f32 %v10829, %v10995
  %v11233 = vsub.f32 %v10830, %v10995
  %v11234 = vsub.f32 %v10831, %v10995
  %v11235 = vsub.f32 %v10832, %v10995
  %v11236 = vsub.f32 %v10833, %v10995
  %v11237 = vsub.f32 %v10834, %v10995
  %v11238 = vsub.f32 %v10835, %v10995
  %v11239 = vsub.f32 %v10836, %v10995
  %v11240 = vsub.f32 %v10837, %v10995
  %v11241 = vsub.f32 %v10838, %v10995
  %v11242 = vsub.f32 %v10839, %v10995
  %v11243 = vsub.f32 %v10840, %v10995
  %v11244 = vsub.f32 %v10841, %v10995
  %v11245 = vsub.f32 %v10842, %v10995
  %v11246 = vsub.f32 %v10843, %v10995
  %v11247 = vsub.f32 %v10844, %v10995
  %v11248 = vsub.f32 %v10845, %v10995
  %v11249 = vsub.f32 %v10846, %v10995
  %v11250 = vsub.f32 %v10847, %v10995
  %v11251 = vsub.f32 %v10848, %v10995
  %v11252 = vsub.f32 %v10849, %v10995
  %v11253 = vsub.f32 %v10850, %v10995
  %v11254 = vsub.f32 %v10851, %v10995
  %v11255 = vsub.f32 %v10852, %v10995
  %v11256 = vsub.f32 %v10853, %v10995
  %v11257 = vsub.f32 %v10854, %v10995
  %v11258 = vsub.f32 %v10855, %v10995
  %v11259 = vsub.f32 %v10856, %v10995
  %v11260 = vsub.f32 %v10857, %v10995
  %v11261 = vsub.f32 %v10858, %v10995
  %v11262 = vsub.f32 %v10859, %v10995
  %v11263 = vsub.f32 %v10860, %v10995
  %v11264 = vsub.f32 %v10861, %v10995
  %v11265 = vlaneseq
  %v11266 = vshrl.u32 %v11265, 7
  %v11267 = vsub.s32 0, %v11266
  %v11268 = vrot.slane %v11200, %v11267
  %v11269 = vmul.f32 %v11201, %v11268
  %v11270 = vmul.f32 %v11202, %v11268
  %v11271 = vmul.f32 %v11203, %v11268
  %v11272 = vmul.f32 %v11204, %v11268
  %v11273 = vmul.f32 %v11205, %v11268
  %v11274 = vmul.f32 %v11206, %v11268
  %v11275 = vmul.f32 %v11207, %v11268
  %v11276 = vmul.f32 %v11208, %v11268
  %v11277 = vmul.f32 %v11209, %v11268
  %v11278 = vmul.f32 %v11210, %v11268
  %v11279 = vmul.f32 %v11211, %v11268
  %v11280 = vmul.f32 %v11212, %v11268
  %v11281 = vmul.f32 %v11213, %v11268
  %v11282 = vmul.f32 %v11214, %v11268
  %v11283 = vmul.f32 %v11215, %v11268
  %v11284 = vmul.f32 %v11216, %v11268
  %v11285 = vmul.f32 %v11217, %v11268
  %v11286 = vmul.f32 %v11218, %v11268
  %v11287 = vmul.f32 %v11219, %v11268
  %v11288 = vmul.f32 %v11220, %v11268
  %v11289 = vmul.f32 %v11221, %v11268
  %v11290 = vmul.f32 %v11222, %v11268
  %v11291 = vmul.f32 %v11223, %v11268
  %v11292 = vmul.f32 %v11224, %v11268
  %v11293 = vmul.f32 %v11225, %v11268
  %v11294 = vmul.f32 %v11226, %v11268
  %v11295 = vmul.f32 %v11227, %v11268
  %v11296 = vmul.f32 %v11228, %v11268
  %v11297 = vmul.f32 %v11229, %v11268
  %v11298 = vmul.f32 %v11230, %v11268
  %v11299 = vmul.f32 %v11231, %v11268
  %v11300 = vmul.f32 %v11232, %v11268
  %v11301 = vmul.f32 %v11233, %v11268
  %v11302 = vmul.f32 %v11234, %v11268
  %v11303 = vmul.f32 %v11235, %v11268
  %v11304 = vmul.f32 %v11236, %v11268
  %v11305 = vmul.f32 %v11237, %v11268
  %v11306 = vmul.f32 %v11238, %v11268
  %v11307 = vmul.f32 %v11239, %v11268
  %v11308 = vmul.f32 %v11240, %v11268
  %v11309 = vmul.f32 %v11241, %v11268
  %v11310 = vmul.f32 %v11242, %v11268
  %v11311 = vmul.f32 %v11243, %v11268
  %v11312 = vmul.f32 %v11244, %v11268
  %v11313 = vmul.f32 %v11245, %v11268
  %v11314 = vmul.f32 %v11246, %v11268
  %v11315 = vmul.f32 %v11247, %v11268
  %v11316 = vmul.f32 %v11248, %v11268
  %v11317 = vmul.f32 %v11249, %v11268
  %v11318 = vmul.f32 %v11250, %v11268
  %v11319 = vmul.f32 %v11251, %v11268
  %v11320 = vmul.f32 %v11252, %v11268
  %v11321 = vmul.f32 %v11253, %v11268
  %v11322 = vmul.f32 %v11254, %v11268
  %v11323 = vmul.f32 %v11255, %v11268
  %v11324 = vmul.f32 %v11256, %v11268
  %v11325 = vmul.f32 %v11257, %v11268
  %v11326 = vmul.f32 %v11258, %v11268
  %v11327 = vmul.f32 %v11259, %v11268
  %v11328 = vmul.f32 %v11260, %v11268
  %v11329 = vmul.f32 %v11261, %v11268
  %v11330 = vmul.f32 %v11262, %v11268
  %v11331 = vmul.f32 %v11263, %v11268
  %v11332 = vmul.f32 %v11264, %v11268
  %v11333 = vld [vmem:[%s8] sm:$0x1]
  %v11335 = vlaneseq
  %v11336 = vshrl.u32 %v11335, 7
  %v11337 = vsub.s32 0, %v11336
  %v11338 = vrot.slane %v11333, %v11337
  %v11340 = vadd.f32 %v11269, %v11338
  %v11341 = vadd.f32 %v11270, %v11338
  %v11342 = vadd.f32 %v11271, %v11338
  %v11343 = vadd.f32 %v11272, %v11338
  %v11344 = vadd.f32 %v11273, %v11338
  %v11345 = vadd.f32 %v11274, %v11338
  %v11346 = vadd.f32 %v11275, %v11338
  %v11347 = vadd.f32 %v11276, %v11338
  %v11348 = vadd.f32 %v11277, %v11338
  %v11349 = vadd.f32 %v11278, %v11338
  %v11350 = vadd.f32 %v11279, %v11338
  %v11351 = vadd.f32 %v11280, %v11338
  %v11352 = vadd.f32 %v11281, %v11338
  %v11353 = vadd.f32 %v11282, %v11338
  %v11354 = vadd.f32 %v11283, %v11338
  %v11355 = vadd.f32 %v11284, %v11338
  %v11356 = vadd.f32 %v11285, %v11338
  %v11357 = vadd.f32 %v11286, %v11338
  %v11358 = vadd.f32 %v11287, %v11338
  %v11359 = vadd.f32 %v11288, %v11338
  %v11360 = vadd.f32 %v11289, %v11338
  %v11361 = vadd.f32 %v11290, %v11338
  %v11362 = vadd.f32 %v11291, %v11338
  %v11363 = vadd.f32 %v11292, %v11338
  %v11364 = vadd.f32 %v11293, %v11338
  %v11365 = vadd.f32 %v11294, %v11338
  %v11366 = vadd.f32 %v11295, %v11338
  %v11367 = vadd.f32 %v11296, %v11338
  %v11368 = vadd.f32 %v11297, %v11338
  %v11369 = vadd.f32 %v11298, %v11338
  %v11370 = vadd.f32 %v11299, %v11338
  %v11371 = vadd.f32 %v11300, %v11338
  %v11372 = vadd.f32 %v11301, %v11338
  %v11373 = vadd.f32 %v11302, %v11338
  %v11374 = vadd.f32 %v11303, %v11338
  %v11375 = vadd.f32 %v11304, %v11338
  %v11376 = vadd.f32 %v11305, %v11338
  %v11377 = vadd.f32 %v11306, %v11338
  %v11378 = vadd.f32 %v11307, %v11338
  %v11379 = vadd.f32 %v11308, %v11338
  %v11380 = vadd.f32 %v11309, %v11338
  %v11381 = vadd.f32 %v11310, %v11338
  %v11382 = vadd.f32 %v11311, %v11338
  %v11383 = vadd.f32 %v11312, %v11338
  %v11384 = vadd.f32 %v11313, %v11338
  %v11385 = vadd.f32 %v11314, %v11338
  %v11386 = vadd.f32 %v11315, %v11338
  %v11387 = vadd.f32 %v11316, %v11338
  %v11388 = vadd.f32 %v11317, %v11338
  %v11389 = vadd.f32 %v11318, %v11338
  %v11390 = vadd.f32 %v11319, %v11338
  %v11391 = vadd.f32 %v11320, %v11338
  %v11392 = vadd.f32 %v11321, %v11338
  %v11393 = vadd.f32 %v11322, %v11338
  %v11394 = vadd.f32 %v11323, %v11338
  %v11395 = vadd.f32 %v11324, %v11338
  %v11396 = vadd.f32 %v11325, %v11338
  %v11397 = vadd.f32 %v11326, %v11338
  %v11398 = vadd.f32 %v11327, %v11338
  %v11399 = vadd.f32 %v11328, %v11338
  %v11400 = vadd.f32 %v11329, %v11338
  %v11401 = vadd.f32 %v11330, %v11338
  %v11402 = vadd.f32 %v11331, %v11338
  %v11403 = vadd.f32 %v11332, %v11338
  %v11404 = vadd.f32 %v37, %v11340
  %v11405 = vadd.f32 %v38, %v11341
  %v11406 = vadd.f32 %v39, %v11342
  %v11407 = vadd.f32 %v40, %v11343
  %v11408 = vadd.f32 %v41, %v11344
  %v11409 = vadd.f32 %v42, %v11345
  %v11410 = vadd.f32 %v43, %v11346
  %v11411 = vadd.f32 %v44, %v11347
  %v11412 = vadd.f32 %v45, %v11348
  %v11413 = vadd.f32 %v46, %v11349
  %v11414 = vadd.f32 %v47, %v11350
  %v11415 = vadd.f32 %v48, %v11351
  %v11416 = vadd.f32 %v49, %v11352
  %v11417 = vadd.f32 %v50, %v11353
  %v11418 = vadd.f32 %v51, %v11354
  %v11419 = vadd.f32 %v52, %v11355
  %v11420 = vadd.f32 %v53, %v11356
  %v11421 = vadd.f32 %v54, %v11357
  %v11422 = vadd.f32 %v55, %v11358
  %v11423 = vadd.f32 %v56, %v11359
  %v11424 = vadd.f32 %v57, %v11360
  %v11425 = vadd.f32 %v58, %v11361
  %v11426 = vadd.f32 %v59, %v11362
  %v11427 = vadd.f32 %v60, %v11363
  %v11428 = vadd.f32 %v61, %v11364
  %v11429 = vadd.f32 %v62, %v11365
  %v11430 = vadd.f32 %v63, %v11366
  %v11431 = vadd.f32 %v64, %v11367
  %v11432 = vadd.f32 %v65, %v11368
  %v11433 = vadd.f32 %v66, %v11369
  %v11434 = vadd.f32 %v67, %v11370
  %v11435 = vadd.f32 %v68, %v11371
  %v11436 = vadd.f32 %v69, %v11372
  %v11437 = vadd.f32 %v70, %v11373
  %v11438 = vadd.f32 %v71, %v11374
  %v11439 = vadd.f32 %v72, %v11375
  %v11440 = vadd.f32 %v73, %v11376
  %v11441 = vadd.f32 %v74, %v11377
  %v11442 = vadd.f32 %v75, %v11378
  %v11443 = vadd.f32 %v76, %v11379
  %v11444 = vadd.f32 %v77, %v11380
  %v11445 = vadd.f32 %v78, %v11381
  %v11446 = vadd.f32 %v79, %v11382
  %v11447 = vadd.f32 %v80, %v11383
  %v11448 = vadd.f32 %v81, %v11384
  %v11449 = vadd.f32 %v82, %v11385
  %v11450 = vadd.f32 %v83, %v11386
  %v11451 = vadd.f32 %v84, %v11387
  %v11452 = vadd.f32 %v85, %v11388
  %v11453 = vadd.f32 %v86, %v11389
  %v11454 = vadd.f32 %v87, %v11390
  %v11455 = vadd.f32 %v88, %v11391
  %v11456 = vadd.f32 %v89, %v11392
  %v11457 = vadd.f32 %v90, %v11393
  %v11458 = vadd.f32 %v91, %v11394
  %v11459 = vadd.f32 %v92, %v11395
  %v11460 = vadd.f32 %v93, %v11396
  %v11461 = vadd.f32 %v94, %v11397
  %v11462 = vadd.f32 %v95, %v11398
  %v11463 = vadd.f32 %v96, %v11399
  %v11464 = vadd.f32 %v97, %v11400
  %v11465 = vadd.f32 %v98, %v11401
  %v11466 = vadd.f32 %v99, %v11402
  %v11467 = vadd.f32 %v100, %v11403
  %11468 = vst.msk [vmem:[%s10] sm:$0xff] %vm101, %v11404
  %11469 = vst.msk [vmem:[%s10 + $0x8] sm:$0xff] %vm101, %v11405
  %11470 = vst.msk [vmem:[%s10 + $0x10] sm:$0xff] %vm101, %v11406
  %11471 = vst.msk [vmem:[%s10 + $0x18] sm:$0xff] %vm101, %v11407
  %11472 = vst.msk [vmem:[%s10 + $0x20] sm:$0xff] %vm101, %v11408
  %11473 = vst.msk [vmem:[%s10 + $0x28] sm:$0xff] %vm101, %v11409
  %11474 = vst.msk [vmem:[%s10 + $0x30] sm:$0xff] %vm101, %v11410
  %11475 = vst.msk [vmem:[%s10 + $0x38] sm:$0xff] %vm101, %v11411
  %11476 = vst.msk [vmem:[%s10 + $0x40] sm:$0xff] %vm101, %v11412
  %11477 = vst.msk [vmem:[%s10 + $0x48] sm:$0xff] %vm101, %v11413
  %11478 = vst.msk [vmem:[%s10 + $0x50] sm:$0xff] %vm101, %v11414
  %11479 = vst.msk [vmem:[%s10 + $0x58] sm:$0xff] %vm101, %v11415
  %11480 = vst.msk [vmem:[%s10 + $0x60] sm:$0xff] %vm101, %v11416
  %11481 = vst.msk [vmem:[%s10 + $0x68] sm:$0xff] %vm101, %v11417
  %11482 = vst.msk [vmem:[%s10 + $0x70] sm:$0xff] %vm101, %v11418
  %11483 = vst.msk [vmem:[%s10 + $0x78] sm:$0xff] %vm101, %v11419
  %11484 = vst.msk [vmem:[%s10 + $0x80] sm:$0xff] %vm101, %v11420
  %11485 = vst.msk [vmem:[%s10 + $0x88] sm:$0xff] %vm101, %v11421
  %11486 = vst.msk [vmem:[%s10 + $0x90] sm:$0xff] %vm101, %v11422
  %11487 = vst.msk [vmem:[%s10 + $0x98] sm:$0xff] %vm101, %v11423
  %11488 = vst.msk [vmem:[%s10 + $0xa0] sm:$0xff] %vm101, %v11424
  %11489 = vst.msk [vmem:[%s10 + $0xa8] sm:$0xff] %vm101, %v11425
  %11490 = vst.msk [vmem:[%s10 + $0xb0] sm:$0xff] %vm101, %v11426
  %11491 = vst.msk [vmem:[%s10 + $0xb8] sm:$0xff] %vm101, %v11427
  %11492 = vst.msk [vmem:[%s10 + $0xc0] sm:$0xff] %vm101, %v11428
  %11493 = vst.msk [vmem:[%s10 + $0xc8] sm:$0xff] %vm101, %v11429
  %11494 = vst.msk [vmem:[%s10 + $0xd0] sm:$0xff] %vm101, %v11430
  %11495 = vst.msk [vmem:[%s10 + $0xd8] sm:$0xff] %vm101, %v11431
  %11496 = vst.msk [vmem:[%s10 + $0xe0] sm:$0xff] %vm101, %v11432
  %11497 = vst.msk [vmem:[%s10 + $0xe8] sm:$0xff] %vm101, %v11433
  %11498 = vst.msk [vmem:[%s10 + $0xf0] sm:$0xff] %vm101, %v11434
  %11499 = vst.msk [vmem:[%s10 + $0xf8] sm:$0xff] %vm101, %v11435
  %11500 = vst.msk [vmem:[%s10 + $0x100] sm:$0xff] %vm101, %v11436
  %11501 = vst.msk [vmem:[%s10 + $0x108] sm:$0xff] %vm101, %v11437
  %11502 = vst.msk [vmem:[%s10 + $0x110] sm:$0xff] %vm101, %v11438
  %11503 = vst.msk [vmem:[%s10 + $0x118] sm:$0xff] %vm101, %v11439
  %11504 = vst.msk [vmem:[%s10 + $0x120] sm:$0xff] %vm101, %v11440
  %11505 = vst.msk [vmem:[%s10 + $0x128] sm:$0xff] %vm101, %v11441
  %11506 = vst.msk [vmem:[%s10 + $0x130] sm:$0xff] %vm101, %v11442
  %11507 = vst.msk [vmem:[%s10 + $0x138] sm:$0xff] %vm101, %v11443
  %11508 = vst.msk [vmem:[%s10 + $0x140] sm:$0xff] %vm101, %v11444
  %11509 = vst.msk [vmem:[%s10 + $0x148] sm:$0xff] %vm101, %v11445
  %11510 = vst.msk [vmem:[%s10 + $0x150] sm:$0xff] %vm101, %v11446
  %11511 = vst.msk [vmem:[%s10 + $0x158] sm:$0xff] %vm101, %v11447
  %11512 = vst.msk [vmem:[%s10 + $0x160] sm:$0xff] %vm101, %v11448
  %11513 = vst.msk [vmem:[%s10 + $0x168] sm:$0xff] %vm101, %v11449
  %11514 = vst.msk [vmem:[%s10 + $0x170] sm:$0xff] %vm101, %v11450
  %11515 = vst.msk [vmem:[%s10 + $0x178] sm:$0xff] %vm101, %v11451
  %11516 = vst.msk [vmem:[%s10 + $0x180] sm:$0xff] %vm101, %v11452
  %11517 = vst.msk [vmem:[%s10 + $0x188] sm:$0xff] %vm101, %v11453
  %11518 = vst.msk [vmem:[%s10 + $0x190] sm:$0xff] %vm101, %v11454
  %11519 = vst.msk [vmem:[%s10 + $0x198] sm:$0xff] %vm101, %v11455
  %11520 = vst.msk [vmem:[%s10 + $0x1a0] sm:$0xff] %vm101, %v11456
  %11521 = vst.msk [vmem:[%s10 + $0x1a8] sm:$0xff] %vm101, %v11457
  %11522 = vst.msk [vmem:[%s10 + $0x1b0] sm:$0xff] %vm101, %v11458
  %11523 = vst.msk [vmem:[%s10 + $0x1b8] sm:$0xff] %vm101, %v11459
  %11524 = vst.msk [vmem:[%s10 + $0x1c0] sm:$0xff] %vm101, %v11460
  %11525 = vst.msk [vmem:[%s10 + $0x1c8] sm:$0xff] %vm101, %v11461
  %11526 = vst.msk [vmem:[%s10 + $0x1d0] sm:$0xff] %vm101, %v11462
  %11527 = vst.msk [vmem:[%s10 + $0x1d8] sm:$0xff] %vm101, %v11463
  %11528 = vst.msk [vmem:[%s10 + $0x1e0] sm:$0xff] %vm101, %v11464
  %11529 = vst.msk [vmem:[%s10 + $0x1e8] sm:$0xff] %vm101, %v11465
  %11530 = vst.msk [vmem:[%s10 + $0x1f0] sm:$0xff] %vm101, %v11466
  %11531 = vst.msk [vmem:[%s10 + $0x1f8] sm:$0xff] %vm101, %v11467
  // Predicated region
  $region42: #{tpu_custom_call.1} parent=0 // pred_check
    _
  $region43: #{tpu_custom_call.1} parent=0 // pred_check_branch
    %11533 = sbr.rel (0) target = $region45
  $region44: #{tpu_custom_call.1} parent=0 // pred_region
    _
  $region45: #{tpu_custom_call.1} parent=0 // pred_fallthru
    _
  // Predicated region
  $region46: #{tpu_custom_call.1} parent=0 // pred_check
    _
  $region47: #{tpu_custom_call.1} parent=0 // pred_check_branch
    %11535 = sbr.rel (0) target = $region49
  $region48: #{tpu_custom_call.1} parent=0 // pred_region
    _
  $region49: #{tpu_custom_call.1} parent=0 // pred_fallthru
    _

</llo_original>
